<compile_context>
chip_gen: v7x
topology: tpu7x:2x2x1
jax: 0.10.0
libtpu: 0.0.40
codegen_flags: <defaults>
</compile_context>

<pallas_src>
import functools

import jax
import jax.numpy as jnp
from jax import lax
from jax.experimental import pallas as pl
from jax.experimental.pallas import tpu as pltpu


# ---------------------------------------------------------------------------
# Model dimensions
# ---------------------------------------------------------------------------
C_LAT, C_LAT_PAD = 4, 8            # latent channels (padded to 8 sublanes)
C0, C1 = 32, 16                    # conv_in out / up-block channels
CS1, CS2 = 16, 8                   # encoder skip-activation channels
C_OUT, C_OUT_PAD = 3, 8            # rgb out (padded to 8 sublanes in-kernel)
SCALING_FACTOR = 0.18215
GAMMA = 1.0


# ---------------------------------------------------------------------------
# Layout helpers (wrapper-side XLA glue)
# ---------------------------------------------------------------------------
def _padded_width(H, W):
    """Smallest Wp >= W+2 with H*Wp a multiple of 128 (lane-dense output rows)."""
    Wp = W + 2
    while (H * Wp) % 128:
        Wp += 1
    return Wp


def _tap_starts(Wp):
    # Flat offsets of the 9 conv taps.  Input is zero-padded with 2 rows
    # top/bottom and 1 col left (remaining width padding on the right), so
    # tap (ky, kx) of output flat index m lives at m + (ky+1)*Wp + (kx-1).
    return tuple((ky + 1) * Wp + kx - 1 for ky in range(3) for kx in range(3))


def _prep_conv_input(x_nchw, c_pad, Wp):
    """(N,C,H,W) -> channel-pad to c_pad, zero-pad rows(2,2)/cols(1, Wp-W-1),
    flatten spatial -> (N, c_pad, (H+4)*Wp) in the transposed layout."""
    N, C, H, W = x_nchw.shape
    xp = jnp.pad(x_nchw, ((0, 0), (0, c_pad - C), (2, 2), (1, Wp - W - 1)))
    return xp.reshape(N, c_pad, (H + 4) * Wp)


def _prep_skip(s_nchw, Wp):
    """Skip activations in the same flat layout as the conv *output* grid."""
    N, C, H, W = s_nchw.shape
    sp = jnp.pad(s_nchw, ((0, 0), (0, 0), (0, 0), (1, Wp - W - 1)))
    return sp.reshape(N, C, H * Wp)


def _unflatten(y_flat, H, W, Wp):
    """(N, C, H*Wp) -> (N, C, H, W): drop padded / garbage columns."""
    N, C, _ = y_flat.shape
    return y_flat.reshape(N, C, H, Wp)[:, :, :, 1:W + 1]


def _upsample2x(x_nchw):
    """Nearest-neighbor 2x upsample (XLA glue between fused kernels)."""
    N, C, H, W = x_nchw.shape
    x = jnp.broadcast_to(x_nchw[:, :, :, None, :, None], (N, C, H, 2, W, 2))
    return x.reshape(N, C, 2 * H, 2 * W)


def _pq_bias_map(pq_b, H, W, Wp):
    """post_quant bias masked to the valid (un-padded) region, so the fused
    conv_in 3x3 sees exact zeros in the padding (matches zero-pad semantics)."""
    rows = jnp.arange(H + 4)
    cols = jnp.arange(Wp)
    valid = ((rows[:, None] >= 2) & (rows[:, None] < H + 2)
             & (cols[None, :] >= 1) & (cols[None, :] < W + 1)).astype(jnp.float32)
    return pq_b[:, None] * valid.reshape(1, (H + 4) * Wp)


# ---------------------------------------------------------------------------
# Pallas kernels (transposed layout: channels on sublanes, pixels on lanes)
# ---------------------------------------------------------------------------
def _gather_taps(src, starts, mo):
    """im2col: 9 lane-shifted views stacked along sublanes -> (9*Cin, mo).
    Cin is a multiple of 8, so the sublane concat offsets are aligned; the
    single following matmul has K = 9*Cin instead of 9 tiny K=Cin dots."""
    return jnp.concatenate([src[:, s:s + mo] for s in starts], axis=0)


def _stage_in_kernel(x_ref, wq_ref, bmap_ref, w_ref, b_ref, o_ref, *, starts, mo):
    """Fused post_quant 1x1 (1/scaling folded into wq) + conv_in 3x3 + SiLU.
    Output (C0, mo) with mo a multiple of 128 -> lane-dense stores."""
    h1 = jnp.dot(wq_ref[...], x_ref[...],
                 preferred_element_type=jnp.float32) + bmap_ref[...]
    patches = _gather_taps(h1, starts, mo)                       # (9*Cin, mo)
    acc = jnp.dot(w_ref[...], patches,
                  preferred_element_type=jnp.float32) + b_ref[...]
    y = acc * jax.nn.sigmoid(acc)                                # SiLU
    o_ref[...] = y.astype(o_ref.dtype)


def _up_block_kernel(x_ref, s_ref, w_ref, ws_ref, b_ref, o_ref, *, starts, mo):
    """Fused up-block tail: 3x3 conv (one K-packed matmul) + skip 1x1 + SiLU.
    gamma and the skip-conv bias are folded into ws / b at pack time."""
    patches = _gather_taps(x_ref, starts, mo)                    # (9*Cin, mo)
    acc = jnp.dot(w_ref[...], patches, preferred_element_type=jnp.float32)
    acc = acc + jnp.dot(ws_ref[...], s_ref[...], preferred_element_type=jnp.float32)
    acc = acc + b_ref[...]
    y = acc * jax.nn.sigmoid(acc)
    o_ref[...] = y.astype(o_ref.dtype)


def _conv_out_kernel(x_ref, w_ref, b_ref, o_ref, *, starts, mo):
    """conv_out 3x3 + clamp(-1, 1). Output channels padded to 8 sublanes."""
    patches = _gather_taps(x_ref, starts, mo)
    acc = jnp.dot(w_ref[...], patches,
                  preferred_element_type=jnp.float32) + b_ref[...]
    o_ref[...] = jnp.clip(acc, -1.0, 1.0).astype(o_ref.dtype)


# ---------------------------------------------------------------------------
# pallas_call wrappers
# ---------------------------------------------------------------------------
_PARALLEL = pltpu.CompilerParams(dimension_semantics=("parallel",))


def _stage_in_call(xf, wq_t, bmap, w_pk, b, *, H, W, Wp, c_out):
    N, c_in, P = xf.shape
    mo = H * Wp
    kern = functools.partial(_stage_in_kernel, starts=_tap_starts(Wp), mo=mo)
    return pl.pallas_call(
        kern,
        out_shape=jax.ShapeDtypeStruct((N, c_out, mo), jnp.float32),
        grid=(N,),
        in_specs=[
            pl.BlockSpec((None, c_in, P), lambda n: (n, 0, 0)),
            pl.BlockSpec((c_in, c_in), lambda n: (0, 0)),
            pl.BlockSpec((c_in, P), lambda n: (0, 0)),
            pl.BlockSpec((c_out, 9 * c_in), lambda n: (0, 0)),
            pl.BlockSpec((c_out, 1), lambda n: (0, 0)),
        ],
        out_specs=pl.BlockSpec((None, c_out, mo), lambda n: (n, 0, 0)),
        compiler_params=_PARALLEL,
    )(xf, wq_t, bmap, w_pk, b)


def _up_block_call(xf, sf, w_pk, ws_t, b, *, H, W, Wp, c_out):
    N, c_in, P = xf.shape
    cs = sf.shape[1]
    mo = H * Wp
    kern = functools.partial(_up_block_kernel, starts=_tap_starts(Wp), mo=mo)
    return pl.pallas_call(
        kern,
        out_shape=jax.ShapeDtypeStruct((N, c_out, mo), jnp.float32),
        grid=(N,),
        in_specs=[
            pl.BlockSpec((None, c_in, P), lambda n: (n, 0, 0)),
            pl.BlockSpec((None, cs, mo), lambda n: (n, 0, 0)),
            pl.BlockSpec((c_out, 9 * c_in), lambda n: (0, 0)),
            pl.BlockSpec((c_out, cs), lambda n: (0, 0)),
            pl.BlockSpec((c_out, 1), lambda n: (0, 0)),
        ],
        out_specs=pl.BlockSpec((None, c_out, mo), lambda n: (n, 0, 0)),
        compiler_params=_PARALLEL,
    )(xf, sf, w_pk, ws_t, b)


def _conv_out_call(xf, w_pk, b, *, H, W, Wp, c_out):
    N, c_in, P = xf.shape
    mo = H * Wp
    kern = functools.partial(_conv_out_kernel, starts=_tap_starts(Wp), mo=mo)
    return pl.pallas_call(
        kern,
        out_shape=jax.ShapeDtypeStruct((N, c_out, mo), jnp.float32),
        grid=(N,),
        in_specs=[
            pl.BlockSpec((None, c_in, P), lambda n: (n, 0, 0)),
            pl.BlockSpec((c_out, 9 * c_in), lambda n: (0, 0)),
            pl.BlockSpec((c_out, 1), lambda n: (0, 0)),
        ],
        out_specs=pl.BlockSpec((None, c_out, mo), lambda n: (n, 0, 0)),
        compiler_params=_PARALLEL,
    )(xf, w_pk, b)


# ---------------------------------------------------------------------------
# Synthetic VAE decoder parameters, packing & forward
# ---------------------------------------------------------------------------
def init_vae_params(key):
    ks = jax.random.split(key, 16)

    def w(k, shape, fan_in):
        return jax.random.normal(k, shape, jnp.float32) / jnp.sqrt(fan_in)

    def b(k, n):
        return 0.05 * jax.random.normal(k, (n,), jnp.float32)

    return {
        "post_quant_w": w(ks[0], (C_LAT, C_LAT), C_LAT),
        "post_quant_b": b(ks[1], C_LAT),
        "conv_in_w": w(ks[2], (3, 3, C_LAT, C0), 9 * C_LAT),
        "conv_in_b": b(ks[3], C0),
        "up1_w": w(ks[4], (3, 3, C0, C1), 9 * C0),
        "up1_b": b(ks[5], C1),
        "skip1_w": w(ks[6], (CS1, C1), CS1),
        "skip1_b": b(ks[7], C1),
        "up2_w": w(ks[8], (3, 3, C1, C1), 9 * C1),
        "up2_b": b(ks[9], C1),
        "skip2_w": w(ks[10], (CS2, C1), CS2),
        "skip2_b": b(ks[11], C1),
        "conv_out_w": w(ks[12], (3, 3, C1, C_OUT), 9 * C1),
        "conv_out_b": b(ks[13], C_OUT),
    }


def _pack_conv3(w, cin_pad, cout_pad=None):
    """(3,3,Cin,Cout) -> (Cout_pad, 9*Cin_pad) with K ordered as (tap, channel)."""
    kh, kw, cin, cout = w.shape
    cout_pad = cout if cout_pad is None else cout_pad
    wp = jnp.pad(w, ((0, 0), (0, 0), (0, cin_pad - cin), (0, cout_pad - cout)))
    return jnp.transpose(wp, (3, 0, 1, 2)).reshape(cout_pad, kh * kw * cin_pad)


def _pack_params(p):
    """Trace-time weight packing: transpose for the (Cout, M) layout, fold
    1/scaling_factor and gamma into weights, fold skip bias into conv bias."""
    inv_s = jnp.float32(1.0 / SCALING_FACTOR)
    wq_t = jnp.zeros((C_LAT_PAD, C_LAT_PAD), jnp.float32)
    wq_t = wq_t.at[:C_LAT, :C_LAT].set(p["post_quant_w"].T * inv_s)
    pq_b = jnp.zeros((C_LAT_PAD,), jnp.float32).at[:C_LAT].set(p["post_quant_b"])
    cob = jnp.zeros((C_OUT_PAD, 1), jnp.float32).at[:C_OUT, 0].set(p["conv_out_b"])
    return {
        "pq_w_t": wq_t,
        "pq_b": pq_b,
        "conv_in_w": _pack_conv3(p["conv_in_w"], C_LAT_PAD),
        "conv_in_b": p["conv_in_b"].reshape(-1, 1),
        "up1_w": _pack_conv3(p["up1_w"], C0),
        "skip1_w_t": GAMMA * p["skip1_w"].T,
        "up1_b": (p["up1_b"] + GAMMA * p["skip1_b"]).reshape(-1, 1),
        "up2_w": _pack_conv3(p["up2_w"], C1),
        "skip2_w_t": GAMMA * p["skip2_w"].T,
        "up2_b": (p["up2_b"] + GAMMA * p["skip2_b"]).reshape(-1, 1),
        "conv_out_w": _pack_conv3(p["conv_out_w"], C1, cout_pad=C_OUT_PAD),
        "conv_out_b": cob,
    }


def _decode(pk, x_nchw, skip1_nchw, skip2_nchw):
    N, _, H0, W0 = x_nchw.shape
    H1, W1 = 2 * H0, 2 * W0
    H2, W2 = 2 * H1, 2 * W1
    Wp0 = _padded_width(H0, W0)
    Wp1 = _padded_width(H1, W1)
    Wp2 = _padded_width(H2, W2)

    # post_quant 1x1 (x / scaling_factor folded into weights) + conv_in + SiLU
    xf = _prep_conv_input(x_nchw, C_LAT_PAD, Wp0)
    bmap = _pq_bias_map(pk["pq_b"], H0, W0, Wp0)
    h = _stage_in_call(xf, pk["pq_w_t"], bmap, pk["conv_in_w"], pk["conv_in_b"],
                       H=H0, W=W0, Wp=Wp0, c_out=C0)

    # up block 1: nearest 2x upsample (glue) + fused [3x3 + skip 1x1 + SiLU]
    h = _upsample2x(_unflatten(h, H0, W0, Wp0))
    h = _up_block_call(_prep_conv_input(h, C0, Wp1), _prep_skip(skip1_nchw, Wp1),
                       pk["up1_w"], pk["skip1_w_t"], pk["up1_b"],
                       H=H1, W=W1, Wp=Wp1, c_out=C1)

    # up block 2
    h = _upsample2x(_unflatten(h, H1, W1, Wp1))
    h = _up_block_call(_prep_conv_input(h, C1, Wp2), _prep_skip(skip2_nchw, Wp2),
                       pk["up2_w"], pk["skip2_w_t"], pk["up2_b"],
                       H=H2, W=W2, Wp=Wp2, c_out=C1)

    # conv_out + clamp(-1, 1)
    # TODO(synk): fuse conv_out into the up2 kernel to drop this same-resolution
    #             relayout round trip through HBM.
    h = _unflatten(h, H2, W2, Wp2)
    y = _conv_out_call(_prep_conv_input(h, C1, Wp2),
                       pk["conv_out_w"], pk["conv_out_b"],
                       H=H2, W=W2, Wp=Wp2, c_out=C_OUT_PAD)
    return _unflatten(y, H2, W2, Wp2)[:, :C_OUT]        # NCHW, 3 channels


class VAEDecodePallas:
    """JAX/Pallas equivalent of cyclegan_turbo.VAE_decode (synthetic decoder)."""

    def __init__(self, params_vae, params_vae_b2a):
        self.packed = {"a2b": _pack_params(params_vae),
                       "b2a": _pack_params(params_vae_b2a)}
        self._fn = jax.jit(_decode)

    def __call__(self, x, direction, skip_acts):
        assert direction in ("a2b", "b2a")
        # skip_acts plays the role of encoder.current_down_blocks
        assert skip_acts is not None and len(skip_acts) == 2
        return self._fn(self.packed[direction], x, skip_acts[0], skip_acts[1])


# ---------------------------------------------------------------------------
# Pure-JAX reference (same synthetic decoder) for a numerical check
# ---------------------------------------------------------------------------
def _decode_reference(p, x, s1, s2):
    hp = lax.Precision.HIGHEST

    def conv1x1(t, w, b):
        return jnp.einsum("nchw,cd->ndhw", t, w, precision=hp) + b[None, :, None, None]

    def conv3x3(t, w, b):
        y = lax.conv_general_dilated(t, w, (1, 1), "SAME",
                                     dimension_numbers=("NCHW", "HWIO", "NCHW"),
                                     precision=hp)
        return y + b[None, :, None, None]

    def silu(t):
        return t * jax.nn.sigmoid(t)

    h = conv1x1(x / SCALING_FACTOR, p["post_quant_w"], p["post_quant_b"])
    h = silu(conv3x3(h, p["conv_in_w"], p["conv_in_b"]))
    h = _upsample2x(h)
    sk1 = GAMMA * conv1x1(s1, p["skip1_w"], p["skip1_b"])
    h = silu(conv3x3(h, p["up1_w"], p["up1_b"]) + sk1)
    h = _upsample2x(h)
    sk2 = GAMMA * conv1x1(s2, p["skip2_w"], p["skip2_b"])
    h = silu(conv3x3(h, p["up2_w"], p["up2_b"]) + sk2)
    return jnp.clip(conv3x3(h, p["conv_out_w"], p["conv_out_b"]), -1.0, 1.0)


# ---------------------------------------------------------------------------
if __name__ == "__main__":
    key = jax.random.PRNGKey(0)
    k_pa, k_pb, k_x, k_s1, k_s2 = jax.random.split(key, 5)

    params_a = init_vae_params(k_pa)
    params_b = init_vae_params(k_pb)
    model = VAEDecodePallas(params_a, params_b)

    N, H0, W0 = 2, 8, 8
    x = jax.random.normal(k_x, (N, C_LAT, H0, W0), jnp.float32)              # latent, NCHW
    skip1 = jax.random.normal(k_s1, (N, CS1, 2 * H0, 2 * W0), jnp.float32)   # encoder act @16x16
    skip2 = jax.random.normal(k_s2, (N, CS2, 4 * H0, 4 * W0), jnp.float32)   # encoder act @32x32

    out_a2b = jax.block_until_ready(model(x, "a2b", [skip1, skip2]))
    out_b2a = jax.block_until_ready(model(x, "b2a", [skip1, skip2]))

    assert out_a2b.shape == (N, C_OUT, 4 * H0, 4 * W0), out_a2b.shape
    assert out_b2a.shape == (N, C_OUT, 4 * H0, 4 * W0), out_b2a.shape
    assert bool(jnp.all(jnp.isfinite(out_a2b))) and bool(jnp.all(jnp.isfinite(out_b2a)))
    assert bool(jnp.all(jnp.abs(out_a2b) <= 1.0)) and bool(jnp.all(jnp.abs(out_b2a) <= 1.0))

    # numerical check against a pure-JAX reference of the same decoder
    ref_a2b = _decode_reference(params_a, x, skip1, skip2)
    ref_b2a = _decode_reference(params_b, x, skip1, skip2)
    assert bool(jnp.max(jnp.abs(out_a2b - ref_a2b)) < 1e-2)
    assert bool(jnp.max(jnp.abs(out_b2a - ref_b2a)) < 1e-2)

    print("KERNEL_OK")
</pallas_src>

<mosaic_0001>
module attributes {stable_mosaic.version = 11 : i64} {
  func.func @_stage_in_kernel(%arg0: i32, %arg1: memref<1x8x192xf32, #tpu.memory_space<vmem>>, %arg2: memref<8x8xf32, #tpu.memory_space<vmem>>, %arg3: memref<8x192xf32, #tpu.memory_space<vmem>>, %arg4: memref<32x72xf32, #tpu.memory_space<vmem>>, %arg5: memref<32x1xf32, #tpu.memory_space<vmem>>, %arg6: memref<1x32x128xf32, #tpu.memory_space<vmem>>) attributes {dimension_semantics = [#tpu.dimension_semantics<parallel>], iteration_bounds = array<i64: 2>, scalar_prefetch = 0 : i64, scratch_operands = 0 : i64, tpu.core_type = #tpu.core_type<tc>, window_params = [{transform_indices = @transform_0, window_bounds = array<i64: 1, 8, 192>}, {pipeline_mode = #tpu.pipeline_mode<synchronous>, transform_indices = @transform_1, window_bounds = array<i64: 8, 8>}, {pipeline_mode = #tpu.pipeline_mode<synchronous>, transform_indices = @transform_2, window_bounds = array<i64: 8, 192>}, {pipeline_mode = #tpu.pipeline_mode<synchronous>, transform_indices = @transform_3, window_bounds = array<i64: 32, 72>}, {pipeline_mode = #tpu.pipeline_mode<synchronous>, transform_indices = @transform_4, window_bounds = array<i64: 32, 1>}, {transform_indices = @transform_5, window_bounds = array<i64: 1, 32, 128>}]} {
    %c0 = arith.constant 0 : index
    %c0_0 = arith.constant 0 : index
    %0 = vector.load %arg2[%c0, %c0_0] : memref<8x8xf32, #tpu.memory_space<vmem>>, vector<8x8xf32>
    %c0_1 = arith.constant 0 : index
    %c0_2 = arith.constant 0 : index
    %c0_3 = arith.constant 0 : index
    %1 = vector.load %arg1[%c0_1, %c0_2, %c0_3] : memref<1x8x192xf32, #tpu.memory_space<vmem>>, vector<1x8x192xf32>
    %2 = vector.shape_cast %1 : vector<1x8x192xf32> to vector<8x192xf32>
    %cst = arith.constant dense<0.000000e+00> : vector<8x192xf32>
    %3 = tpu.matmul %0, %2, %cst {dimension_numbers = #tpu.dot_dimension_numbers<[1], [0], [0], [1], [0, 0, 1, 1], [], []>} : vector<8x8xf32>, vector<8x192xf32>, vector<8x192xf32> -> vector<8x192xf32>
    %c0_4 = arith.constant 0 : index
    %c0_5 = arith.constant 0 : index
    %4 = vector.load %arg3[%c0_4, %c0_5] : memref<8x192xf32, #tpu.memory_space<vmem>>, vector<8x192xf32>
    %5 = arith.addf %3, %4 : vector<8x192xf32>
    %6 = vector.extract_strided_slice %5 {offsets = [0, 15], sizes = [8, 128], strides = [1, 1]} : vector<8x192xf32> to vector<8x128xf32>
    %7 = vector.extract_strided_slice %5 {offsets = [0, 16], sizes = [8, 128], strides = [1, 1]} : vector<8x192xf32> to vector<8x128xf32>
    %8 = vector.extract_strided_slice %5 {offsets = [0, 17], sizes = [8, 128], strides = [1, 1]} : vector<8x192xf32> to vector<8x128xf32>
    %9 = vector.extract_strided_slice %5 {offsets = [0, 31], sizes = [8, 128], strides = [1, 1]} : vector<8x192xf32> to vector<8x128xf32>
    %10 = vector.extract_strided_slice %5 {offsets = [0, 32], sizes = [8, 128], strides = [1, 1]} : vector<8x192xf32> to vector<8x128xf32>
    %11 = vector.extract_strided_slice %5 {offsets = [0, 33], sizes = [8, 128], strides = [1, 1]} : vector<8x192xf32> to vector<8x128xf32>
    %12 = vector.extract_strided_slice %5 {offsets = [0, 47], sizes = [8, 128], strides = [1, 1]} : vector<8x192xf32> to vector<8x128xf32>
    %13 = vector.extract_strided_slice %5 {offsets = [0, 48], sizes = [8, 128], strides = [1, 1]} : vector<8x192xf32> to vector<8x128xf32>
    %14 = vector.extract_strided_slice %5 {offsets = [0, 49], sizes = [8, 128], strides = [1, 1]} : vector<8x192xf32> to vector<8x128xf32>
    %15 = tpu.concatenate %6, %7, %8, %9, %10, %11, %12, %13, %14 in 0 : vector<8x128xf32>, vector<8x128xf32>, vector<8x128xf32>, vector<8x128xf32>, vector<8x128xf32>, vector<8x128xf32>, vector<8x128xf32>, vector<8x128xf32>, vector<8x128xf32> -> vector<72x128xf32>
    %c0_6 = arith.constant 0 : index
    %c0_7 = arith.constant 0 : index
    %16 = vector.load %arg4[%c0_6, %c0_7] : memref<32x72xf32, #tpu.memory_space<vmem>>, vector<32x72xf32>
    %cst_8 = arith.constant dense<0.000000e+00> : vector<32x128xf32>
    %17 = tpu.matmul %16, %15, %cst_8 {dimension_numbers = #tpu.dot_dimension_numbers<[1], [0], [0], [1], [0, 0, 1, 1], [], []>} : vector<32x72xf32>, vector<72x128xf32>, vector<32x128xf32> -> vector<32x128xf32>
    %c0_9 = arith.constant 0 : index
    %c0_10 = arith.constant 0 : index
    %18 = vector.load %arg5[%c0_9, %c0_10] : memref<32x1xf32, #tpu.memory_space<vmem>>, vector<32x1xf32>
    %19 = vector.broadcast %18 : vector<32x1xf32> to vector<32x128xf32>
    %20 = arith.addf %17, %19 : vector<32x128xf32>
    %21 = arith.negf %20 : vector<32x128xf32>
    %22 = math.exp %21 : vector<32x128xf32>
    %cst_11 = arith.constant 1.000000e+00 : f32
    %23 = vector.broadcast %cst_11 : f32 to vector<32x128xf32>
    %24 = arith.addf %23, %22 : vector<32x128xf32>
    %25 = arith.divf %23, %24 : vector<32x128xf32>
    %26 = arith.mulf %20, %25 : vector<32x128xf32>
    %c0_12 = arith.constant 0 : index
    %c0_13 = arith.constant 0 : index
    %c0_14 = arith.constant 0 : index
    %27 = vector.load %arg6[%c0_12, %c0_13, %c0_14] : memref<1x32x128xf32, #tpu.memory_space<vmem>>, vector<1x32x128xf32>
    %28 = vector.shape_cast %27 : vector<1x32x128xf32> to vector<32x128xf32>
    %29 = vector.shape_cast %26 : vector<32x128xf32> to vector<1x32x128xf32>
    tpu.vector_store %arg6[%c0_12, %c0_13, %c0_14], %29 {strides = array<i32>} : memref<1x32x128xf32, #tpu.memory_space<vmem>>, vector<1x32x128xf32>,
    return
  }
  func.func @transform_0(%arg0: i32) -> (i32, i32, i32) {
    %c0_i32 = arith.constant 0 : i32
    %c0_i32_0 = arith.constant 0 : i32
    %c0_i32_1 = arith.constant 0 : i32
    return %arg0, %c0_i32, %c0_i32_0 : i32, i32, i32
  }
  func.func @transform_1(%arg0: i32) -> (i32, i32) {
    %c0_i32 = arith.constant 0 : i32
    %c0_i32_0 = arith.constant 0 : i32
    %c0_i32_1 = arith.constant 0 : i32
    return %c0_i32, %c0_i32_0 : i32, i32
  }
  func.func @transform_2(%arg0: i32) -> (i32, i32) {
    %c0_i32 = arith.constant 0 : i32
    %c0_i32_0 = arith.constant 0 : i32
    %c0_i32_1 = arith.constant 0 : i32
    return %c0_i32, %c0_i32_0 : i32, i32
  }
  func.func @transform_3(%arg0: i32) -> (i32, i32) {
    %c0_i32 = arith.constant 0 : i32
    %c0_i32_0 = arith.constant 0 : i32
    %c0_i32_1 = arith.constant 0 : i32
    return %c0_i32, %c0_i32_0 : i32, i32
  }
  func.func @transform_4(%arg0: i32) -> (i32, i32) {
    %c0_i32 = arith.constant 0 : i32
    %c0_i32_0 = arith.constant 0 : i32
    %c0_i32_1 = arith.constant 0 : i32
    return %c0_i32, %c0_i32_0 : i32, i32
  }
  func.func @transform_5(%arg0: i32) -> (i32, i32, i32) {
    %c0_i32 = arith.constant 0 : i32
    %c0_i32_0 = arith.constant 0 : i32
    %c0_i32_1 = arith.constant 0 : i32
    return %arg0, %c0_i32, %c0_i32_0 : i32, i32, i32
  }
}

module attributes {stable_mosaic.version = 11 : i64} {
  func.func @_up_block_kernel(%arg0: i32, %arg1: memref<1x32x480xf32, #tpu.memory_space<vmem>>, %arg2: memref<1x16x384xf32, #tpu.memory_space<vmem>>, %arg3: memref<16x288xf32, #tpu.memory_space<vmem>>, %arg4: memref<16x16xf32, #tpu.memory_space<vmem>>, %arg5: memref<16x1xf32, #tpu.memory_space<vmem>>, %arg6: memref<1x16x384xf32, #tpu.memory_space<vmem>>) attributes {dimension_semantics = [#tpu.dimension_semantics<parallel>], iteration_bounds = array<i64: 2>, scalar_prefetch = 0 : i64, scratch_operands = 0 : i64, tpu.core_type = #tpu.core_type<tc>, window_params = [{transform_indices = @transform_0, window_bounds = array<i64: 1, 32, 480>}, {transform_indices = @transform_1, window_bounds = array<i64: 1, 16, 384>}, {pipeline_mode = #tpu.pipeline_mode<synchronous>, transform_indices = @transform_2, window_bounds = array<i64: 16, 288>}, {pipeline_mode = #tpu.pipeline_mode<synchronous>, transform_indices = @transform_3, window_bounds = array<i64: 16, 16>}, {pipeline_mode = #tpu.pipeline_mode<synchronous>, transform_indices = @transform_4, window_bounds = array<i64: 16, 1>}, {transform_indices = @transform_5, window_bounds = array<i64: 1, 16, 384>}]} {
    %c0 = arith.constant 0 : index
    %c0_0 = arith.constant 0 : index
    %c23 = arith.constant 23 : index
    %0 = vector.load %arg1[%c0, %c0_0, %c23] : memref<1x32x480xf32, #tpu.memory_space<vmem>>, vector<1x32x384xf32>
    %1 = vector.shape_cast %0 : vector<1x32x384xf32> to vector<32x384xf32>
    %c0_1 = arith.constant 0 : index
    %c0_2 = arith.constant 0 : index
    %c24 = arith.constant 24 : index
    %2 = vector.load %arg1[%c0_1, %c0_2, %c24] : memref<1x32x480xf32, #tpu.memory_space<vmem>>, vector<1x32x384xf32>
    %3 = vector.shape_cast %2 : vector<1x32x384xf32> to vector<32x384xf32>
    %c0_3 = arith.constant 0 : index
    %c0_4 = arith.constant 0 : index
    %c25 = arith.constant 25 : index
    %4 = vector.load %arg1[%c0_3, %c0_4, %c25] : memref<1x32x480xf32, #tpu.memory_space<vmem>>, vector<1x32x384xf32>
    %5 = vector.shape_cast %4 : vector<1x32x384xf32> to vector<32x384xf32>
    %c0_5 = arith.constant 0 : index
    %c0_6 = arith.constant 0 : index
    %c47 = arith.constant 47 : index
    %6 = vector.load %arg1[%c0_5, %c0_6, %c47] : memref<1x32x480xf32, #tpu.memory_space<vmem>>, vector<1x32x384xf32>
    %7 = vector.shape_cast %6 : vector<1x32x384xf32> to vector<32x384xf32>
    %c0_7 = arith.constant 0 : index
    %c0_8 = arith.constant 0 : index
    %c48 = arith.constant 48 : index
    %8 = vector.load %arg1[%c0_7, %c0_8, %c48] : memref<1x32x480xf32, #tpu.memory_space<vmem>>, vector<1x32x384xf32>
    %9 = vector.shape_cast %8 : vector<1x32x384xf32> to vector<32x384xf32>
    %c0_9 = arith.constant 0 : index
    %c0_10 = arith.constant 0 : index
    %c49 = arith.constant 49 : index
    %10 = vector.load %arg1[%c0_9, %c0_10, %c49] : memref<1x32x480xf32, #tpu.memory_space<vmem>>, vector<1x32x384xf32>
    %11 = vector.shape_cast %10 : vector<1x32x384xf32> to vector<32x384xf32>
    %c0_11 = arith.constant 0 : index
    %c0_12 = arith.constant 0 : index
    %c71 = arith.constant 71 : index
    %12 = vector.load %arg1[%c0_11, %c0_12, %c71] : memref<1x32x480xf32, #tpu.memory_space<vmem>>, vector<1x32x384xf32>
    %13 = vector.shape_cast %12 : vector<1x32x384xf32> to vector<32x384xf32>
    %c0_13 = arith.constant 0 : index
    %c0_14 = arith.constant 0 : index
    %c72 = arith.constant 72 : index
    %14 = vector.load %arg1[%c0_13, %c0_14, %c72] : memref<1x32x480xf32, #tpu.memory_space<vmem>>, vector<1x32x384xf32>
    %15 = vector.shape_cast %14 : vector<1x32x384xf32> to vector<32x384xf32>
    %c0_15 = arith.constant 0 : index
    %c0_16 = arith.constant 0 : index
    %c73 = arith.constant 73 : index
    %16 = vector.load %arg1[%c0_15, %c0_16, %c73] : memref<1x32x480xf32, #tpu.memory_space<vmem>>, vector<1x32x384xf32>
    %17 = vector.shape_cast %16 : vector<1x32x384xf32> to vector<32x384xf32>
    %18 = tpu.concatenate %1, %3, %5, %7, %9, %11, %13, %15, %17 in 0 : vector<32x384xf32>, vector<32x384xf32>, vector<32x384xf32>, vector<32x384xf32>, vector<32x384xf32>, vector<32x384xf32>, vector<32x384xf32>, vector<32x384xf32>, vector<32x384xf32> -> vector<288x384xf32>
    %c0_17 = arith.constant 0 : index
    %c0_18 = arith.constant 0 : index
    %19 = vector.load %arg3[%c0_17, %c0_18] : memref<16x288xf32, #tpu.memory_space<vmem>>, vector<16x288xf32>
    %cst = arith.constant dense<0.000000e+00> : vector<16x384xf32>
    %20 = tpu.matmul %19, %18, %cst {dimension_numbers = #tpu.dot_dimension_numbers<[1], [0], [0], [1], [0, 0, 1, 1], [], []>} : vector<16x288xf32>, vector<288x384xf32>, vector<16x384xf32> -> vector<16x384xf32>
    %c0_19 = arith.constant 0 : index
    %c0_20 = arith.constant 0 : index
    %21 = vector.load %arg4[%c0_19, %c0_20] : memref<16x16xf32, #tpu.memory_space<vmem>>, vector<16x16xf32>
    %c0_21 = arith.constant 0 : index
    %c0_22 = arith.constant 0 : index
    %c0_23 = arith.constant 0 : index
    %22 = vector.load %arg2[%c0_21, %c0_22, %c0_23] : memref<1x16x384xf32, #tpu.memory_space<vmem>>, vector<1x16x384xf32>
    %23 = vector.shape_cast %22 : vector<1x16x384xf32> to vector<16x384xf32>
    %cst_24 = arith.constant dense<0.000000e+00> : vector<16x384xf32>
    %24 = tpu.matmul %21, %23, %cst_24 {dimension_numbers = #tpu.dot_dimension_numbers<[1], [0], [0], [1], [0, 0, 1, 1], [], []>} : vector<16x16xf32>, vector<16x384xf32>, vector<16x384xf32> -> vector<16x384xf32>
    %25 = arith.addf %20, %24 : vector<16x384xf32>
    %c0_25 = arith.constant 0 : index
    %c0_26 = arith.constant 0 : index
    %26 = vector.load %arg5[%c0_25, %c0_26] : memref<16x1xf32, #tpu.memory_space<vmem>>, vector<16x1xf32>
    %27 = vector.broadcast %26 : vector<16x1xf32> to vector<16x384xf32>
    %28 = arith.addf %25, %27 : vector<16x384xf32>
    %29 = arith.negf %28 : vector<16x384xf32>
    %30 = math.exp %29 : vector<16x384xf32>
    %cst_27 = arith.constant 1.000000e+00 : f32
    %31 = vector.broadcast %cst_27 : f32 to vector<16x384xf32>
    %32 = arith.addf %31, %30 : vector<16x384xf32>
    %33 = arith.divf %31, %32 : vector<16x384xf32>
    %34 = arith.mulf %28, %33 : vector<16x384xf32>
    %c0_28 = arith.constant 0 : index
    %c0_29 = arith.constant 0 : index
    %c0_30 = arith.constant 0 : index
    %35 = vector.load %arg6[%c0_28, %c0_29, %c0_30] : memref<1x16x384xf32, #tpu.memory_space<vmem>>, vector<1x16x384xf32>
    %36 = vector.shape_cast %35 : vector<1x16x384xf32> to vector<16x384xf32>
    %37 = vector.shape_cast %34 : vector<16x384xf32> to vector<1x16x384xf32>
    tpu.vector_store %arg6[%c0_28, %c0_29, %c0_30], %37 {strides = array<i32>} : memref<1x16x384xf32, #tpu.memory_space<vmem>>, vector<1x16x384xf32>,
    return
  }
  func.func @transform_0(%arg0: i32) -> (i32, i32, i32) {
    %c0_i32 = arith.constant 0 : i32
    %c0_i32_0 = arith.constant 0 : i32
    %c0_i32_1 = arith.constant 0 : i32
    return %arg0, %c0_i32, %c0_i32_0 : i32, i32, i32
  }
  func.func @transform_1(%arg0: i32) -> (i32, i32, i32) {
    %c0_i32 = arith.constant 0 : i32
    %c0_i32_0 = arith.constant 0 : i32
    %c0_i32_1 = arith.constant 0 : i32
    return %arg0, %c0_i32, %c0_i32_0 : i32, i32, i32
  }
  func.func @transform_2(%arg0: i32) -> (i32, i32) {
    %c0_i32 = arith.constant 0 : i32
    %c0_i32_0 = arith.constant 0 : i32
    %c0_i32_1 = arith.constant 0 : i32
    return %c0_i32, %c0_i32_0 : i32, i32
  }
  func.func @transform_3(%arg0: i32) -> (i32, i32) {
    %c0_i32 = arith.constant 0 : i32
    %c0_i32_0 = arith.constant 0 : i32
    %c0_i32_1 = arith.constant 0 : i32
    return %c0_i32, %c0_i32_0 : i32, i32
  }
  func.func @transform_4(%arg0: i32) -> (i32, i32) {
    %c0_i32 = arith.constant 0 : i32
    %c0_i32_0 = arith.constant 0 : i32
    %c0_i32_1 = arith.constant 0 : i32
    return %c0_i32, %c0_i32_0 : i32, i32
  }
  func.func @transform_5(%arg0: i32) -> (i32, i32, i32) {
    %c0_i32 = arith.constant 0 : i32
    %c0_i32_0 = arith.constant 0 : i32
    %c0_i32_1 = arith.constant 0 : i32
    return %arg0, %c0_i32, %c0_i32_0 : i32, i32, i32
  }
}

module attributes {stable_mosaic.version = 11 : i64} {
  func.func @_up_block_kernel(%arg0: i32, %arg1: memref<1x16x1296xf32, #tpu.memory_space<vmem>>, %arg2: memref<1x8x1152xf32, #tpu.memory_space<vmem>>, %arg3: memref<16x144xf32, #tpu.memory_space<vmem>>, %arg4: memref<16x8xf32, #tpu.memory_space<vmem>>, %arg5: memref<16x1xf32, #tpu.memory_space<vmem>>, %arg6: memref<1x16x1152xf32, #tpu.memory_space<vmem>>) attributes {dimension_semantics = [#tpu.dimension_semantics<parallel>], iteration_bounds = array<i64: 2>, scalar_prefetch = 0 : i64, scratch_operands = 0 : i64, tpu.core_type = #tpu.core_type<tc>, window_params = [{transform_indices = @transform_0, window_bounds = array<i64: 1, 16, 1296>}, {transform_indices = @transform_1, window_bounds = array<i64: 1, 8, 1152>}, {pipeline_mode = #tpu.pipeline_mode<synchronous>, transform_indices = @transform_2, window_bounds = array<i64: 16, 144>}, {pipeline_mode = #tpu.pipeline_mode<synchronous>, transform_indices = @transform_3, window_bounds = array<i64: 16, 8>}, {pipeline_mode = #tpu.pipeline_mode<synchronous>, transform_indices = @transform_4, window_bounds = array<i64: 16, 1>}, {transform_indices = @transform_5, window_bounds = array<i64: 1, 16, 1152>}]} {
    %c0 = arith.constant 0 : index
    %c0_0 = arith.constant 0 : index
    %c35 = arith.constant 35 : index
    %0 = vector.load %arg1[%c0, %c0_0, %c35] : memref<1x16x1296xf32, #tpu.memory_space<vmem>>, vector<1x16x1152xf32>
    %1 = vector.shape_cast %0 : vector<1x16x1152xf32> to vector<16x1152xf32>
    %c0_1 = arith.constant 0 : index
    %c0_2 = arith.constant 0 : index
    %c36 = arith.constant 36 : index
    %2 = vector.load %arg1[%c0_1, %c0_2, %c36] : memref<1x16x1296xf32, #tpu.memory_space<vmem>>, vector<1x16x1152xf32>
    %3 = vector.shape_cast %2 : vector<1x16x1152xf32> to vector<16x1152xf32>
    %c0_3 = arith.constant 0 : index
    %c0_4 = arith.constant 0 : index
    %c37 = arith.constant 37 : index
    %4 = vector.load %arg1[%c0_3, %c0_4, %c37] : memref<1x16x1296xf32, #tpu.memory_space<vmem>>, vector<1x16x1152xf32>
    %5 = vector.shape_cast %4 : vector<1x16x1152xf32> to vector<16x1152xf32>
    %c0_5 = arith.constant 0 : index
    %c0_6 = arith.constant 0 : index
    %c71 = arith.constant 71 : index
    %6 = vector.load %arg1[%c0_5, %c0_6, %c71] : memref<1x16x1296xf32, #tpu.memory_space<vmem>>, vector<1x16x1152xf32>
    %7 = vector.shape_cast %6 : vector<1x16x1152xf32> to vector<16x1152xf32>
    %c0_7 = arith.constant 0 : index
    %c0_8 = arith.constant 0 : index
    %c72 = arith.constant 72 : index
    %8 = vector.load %arg1[%c0_7, %c0_8, %c72] : memref<1x16x1296xf32, #tpu.memory_space<vmem>>, vector<1x16x1152xf32>
    %9 = vector.shape_cast %8 : vector<1x16x1152xf32> to vector<16x1152xf32>
    %c0_9 = arith.constant 0 : index
    %c0_10 = arith.constant 0 : index
    %c73 = arith.constant 73 : index
    %10 = vector.load %arg1[%c0_9, %c0_10, %c73] : memref<1x16x1296xf32, #tpu.memory_space<vmem>>, vector<1x16x1152xf32>
    %11 = vector.shape_cast %10 : vector<1x16x1152xf32> to vector<16x1152xf32>
    %c0_11 = arith.constant 0 : index
    %c0_12 = arith.constant 0 : index
    %c107 = arith.constant 107 : index
    %12 = vector.load %arg1[%c0_11, %c0_12, %c107] : memref<1x16x1296xf32, #tpu.memory_space<vmem>>, vector<1x16x1152xf32>
    %13 = vector.shape_cast %12 : vector<1x16x1152xf32> to vector<16x1152xf32>
    %c0_13 = arith.constant 0 : index
    %c0_14 = arith.constant 0 : index
    %c108 = arith.constant 108 : index
    %14 = vector.load %arg1[%c0_13, %c0_14, %c108] : memref<1x16x1296xf32, #tpu.memory_space<vmem>>, vector<1x16x1152xf32>
    %15 = vector.shape_cast %14 : vector<1x16x1152xf32> to vector<16x1152xf32>
    %c0_15 = arith.constant 0 : index
    %c0_16 = arith.constant 0 : index
    %c109 = arith.constant 109 : index
    %16 = vector.load %arg1[%c0_15, %c0_16, %c109] : memref<1x16x1296xf32, #tpu.memory_space<vmem>>, vector<1x16x1152xf32>
    %17 = vector.shape_cast %16 : vector<1x16x1152xf32> to vector<16x1152xf32>
    %18 = tpu.concatenate %1, %3, %5, %7, %9, %11, %13, %15, %17 in 0 : vector<16x1152xf32>, vector<16x1152xf32>, vector<16x1152xf32>, vector<16x1152xf32>, vector<16x1152xf32>, vector<16x1152xf32>, vector<16x1152xf32>, vector<16x1152xf32>, vector<16x1152xf32> -> vector<144x1152xf32>
    %c0_17 = arith.constant 0 : index
    %c0_18 = arith.constant 0 : index
    %19 = vector.load %arg3[%c0_17, %c0_18] : memref<16x144xf32, #tpu.memory_space<vmem>>, vector<16x144xf32>
    %cst = arith.constant dense<0.000000e+00> : vector<16x1152xf32>
    %20 = tpu.matmul %19, %18, %cst {dimension_numbers = #tpu.dot_dimension_numbers<[1], [0], [0], [1], [0, 0, 1, 1], [], []>} : vector<16x144xf32>, vector<144x1152xf32>, vector<16x1152xf32> -> vector<16x1152xf32>
    %c0_19 = arith.constant 0 : index
    %c0_20 = arith.constant 0 : index
    %21 = vector.load %arg4[%c0_19, %c0_20] : memref<16x8xf32, #tpu.memory_space<vmem>>, vector<16x8xf32>
    %c0_21 = arith.constant 0 : index
    %c0_22 = arith.constant 0 : index
    %c0_23 = arith.constant 0 : index
    %22 = vector.load %arg2[%c0_21, %c0_22, %c0_23] : memref<1x8x1152xf32, #tpu.memory_space<vmem>>, vector<1x8x1152xf32>
    %23 = vector.shape_cast %22 : vector<1x8x1152xf32> to vector<8x1152xf32>
    %cst_24 = arith.constant dense<0.000000e+00> : vector<16x1152xf32>
    %24 = tpu.matmul %21, %23, %cst_24 {dimension_numbers = #tpu.dot_dimension_numbers<[1], [0], [0], [1], [0, 0, 1, 1], [], []>} : vector<16x8xf32>, vector<8x1152xf32>, vector<16x1152xf32> -> vector<16x1152xf32>
    %25 = arith.addf %20, %24 : vector<16x1152xf32>
    %c0_25 = arith.constant 0 : index
    %c0_26 = arith.constant 0 : index
    %26 = vector.load %arg5[%c0_25, %c0_26] : memref<16x1xf32, #tpu.memory_space<vmem>>, vector<16x1xf32>
    %27 = vector.broadcast %26 : vector<16x1xf32> to vector<16x1152xf32>
    %28 = arith.addf %25, %27 : vector<16x1152xf32>
    %29 = arith.negf %28 : vector<16x1152xf32>
    %30 = math.exp %29 : vector<16x1152xf32>
    %cst_27 = arith.constant 1.000000e+00 : f32
    %31 = vector.broadcast %cst_27 : f32 to vector<16x1152xf32>
    %32 = arith.addf %31, %30 : vector<16x1152xf32>
    %33 = arith.divf %31, %32 : vector<16x1152xf32>
    %34 = arith.mulf %28, %33 : vector<16x1152xf32>
    %c0_28 = arith.constant 0 : index
    %c0_29 = arith.constant 0 : index
    %c0_30 = arith.constant 0 : index
    %35 = vector.load %arg6[%c0_28, %c0_29, %c0_30] : memref<1x16x1152xf32, #tpu.memory_space<vmem>>, vector<1x16x1152xf32>
    %36 = vector.shape_cast %35 : vector<1x16x1152xf32> to vector<16x1152xf32>
    %37 = vector.shape_cast %34 : vector<16x1152xf32> to vector<1x16x1152xf32>
    tpu.vector_store %arg6[%c0_28, %c0_29, %c0_30], %37 {strides = array<i32>} : memref<1x16x1152xf32, #tpu.memory_space<vmem>>, vector<1x16x1152xf32>,
    return
  }
  func.func @transform_0(%arg0: i32) -> (i32, i32, i32) {
    %c0_i32 = arith.constant 0 : i32
    %c0_i32_0 = arith.constant 0 : i32
    %c0_i32_1 = arith.constant 0 : i32
    return %arg0, %c0_i32, %c0_i32_0 : i32, i32, i32
  }
  func.func @transform_1(%arg0: i32) -> (i32, i32, i32) {
    %c0_i32 = arith.constant 0 : i32
    %c0_i32_0 = arith.constant 0 : i32
    %c0_i32_1 = arith.constant 0 : i32
    return %arg0, %c0_i32, %c0_i32_0 : i32, i32, i32
  }
  func.func @transform_2(%arg0: i32) -> (i32, i32) {
    %c0_i32 = arith.constant 0 : i32
    %c0_i32_0 = arith.constant 0 : i32
    %c0_i32_1 = arith.constant 0 : i32
    return %c0_i32, %c0_i32_0 : i32, i32
  }
  func.func @transform_3(%arg0: i32) -> (i32, i32) {
    %c0_i32 = arith.constant 0 : i32
    %c0_i32_0 = arith.constant 0 : i32
    %c0_i32_1 = arith.constant 0 : i32
    return %c0_i32, %c0_i32_0 : i32, i32
  }
  func.func @transform_4(%arg0: i32) -> (i32, i32) {
    %c0_i32 = arith.constant 0 : i32
    %c0_i32_0 = arith.constant 0 : i32
    %c0_i32_1 = arith.constant 0 : i32
    return %c0_i32, %c0_i32_0 : i32, i32
  }
  func.func @transform_5(%arg0: i32) -> (i32, i32, i32) {
    %c0_i32 = arith.constant 0 : i32
    %c0_i32_0 = arith.constant 0 : i32
    %c0_i32_1 = arith.constant 0 : i32
    return %arg0, %c0_i32, %c0_i32_0 : i32, i32, i32
  }
}

module attributes {stable_mosaic.version = 11 : i64} {
  func.func @_conv_out_kernel(%arg0: i32, %arg1: memref<1x16x1296xf32, #tpu.memory_space<vmem>>, %arg2: memref<8x144xf32, #tpu.memory_space<vmem>>, %arg3: memref<8x1xf32, #tpu.memory_space<vmem>>, %arg4: memref<1x8x1152xf32, #tpu.memory_space<vmem>>) attributes {dimension_semantics = [#tpu.dimension_semantics<parallel>], iteration_bounds = array<i64: 2>, scalar_prefetch = 0 : i64, scratch_operands = 0 : i64, tpu.core_type = #tpu.core_type<tc>, window_params = [{transform_indices = @transform_0, window_bounds = array<i64: 1, 16, 1296>}, {pipeline_mode = #tpu.pipeline_mode<synchronous>, transform_indices = @transform_1, window_bounds = array<i64: 8, 144>}, {pipeline_mode = #tpu.pipeline_mode<synchronous>, transform_indices = @transform_2, window_bounds = array<i64: 8, 1>}, {transform_indices = @transform_3, window_bounds = array<i64: 1, 8, 1152>}]} {
    %c0 = arith.constant 0 : index
    %c0_0 = arith.constant 0 : index
    %c35 = arith.constant 35 : index
    %0 = vector.load %arg1[%c0, %c0_0, %c35] : memref<1x16x1296xf32, #tpu.memory_space<vmem>>, vector<1x16x1152xf32>
    %1 = vector.shape_cast %0 : vector<1x16x1152xf32> to vector<16x1152xf32>
    %c0_1 = arith.constant 0 : index
    %c0_2 = arith.constant 0 : index
    %c36 = arith.constant 36 : index
    %2 = vector.load %arg1[%c0_1, %c0_2, %c36] : memref<1x16x1296xf32, #tpu.memory_space<vmem>>, vector<1x16x1152xf32>
    %3 = vector.shape_cast %2 : vector<1x16x1152xf32> to vector<16x1152xf32>
    %c0_3 = arith.constant 0 : index
    %c0_4 = arith.constant 0 : index
    %c37 = arith.constant 37 : index
    %4 = vector.load %arg1[%c0_3, %c0_4, %c37] : memref<1x16x1296xf32, #tpu.memory_space<vmem>>, vector<1x16x1152xf32>
    %5 = vector.shape_cast %4 : vector<1x16x1152xf32> to vector<16x1152xf32>
    %c0_5 = arith.constant 0 : index
    %c0_6 = arith.constant 0 : index
    %c71 = arith.constant 71 : index
    %6 = vector.load %arg1[%c0_5, %c0_6, %c71] : memref<1x16x1296xf32, #tpu.memory_space<vmem>>, vector<1x16x1152xf32>
    %7 = vector.shape_cast %6 : vector<1x16x1152xf32> to vector<16x1152xf32>
    %c0_7 = arith.constant 0 : index
    %c0_8 = arith.constant 0 : index
    %c72 = arith.constant 72 : index
    %8 = vector.load %arg1[%c0_7, %c0_8, %c72] : memref<1x16x1296xf32, #tpu.memory_space<vmem>>, vector<1x16x1152xf32>
    %9 = vector.shape_cast %8 : vector<1x16x1152xf32> to vector<16x1152xf32>
    %c0_9 = arith.constant 0 : index
    %c0_10 = arith.constant 0 : index
    %c73 = arith.constant 73 : index
    %10 = vector.load %arg1[%c0_9, %c0_10, %c73] : memref<1x16x1296xf32, #tpu.memory_space<vmem>>, vector<1x16x1152xf32>
    %11 = vector.shape_cast %10 : vector<1x16x1152xf32> to vector<16x1152xf32>
    %c0_11 = arith.constant 0 : index
    %c0_12 = arith.constant 0 : index
    %c107 = arith.constant 107 : index
    %12 = vector.load %arg1[%c0_11, %c0_12, %c107] : memref<1x16x1296xf32, #tpu.memory_space<vmem>>, vector<1x16x1152xf32>
    %13 = vector.shape_cast %12 : vector<1x16x1152xf32> to vector<16x1152xf32>
    %c0_13 = arith.constant 0 : index
    %c0_14 = arith.constant 0 : index
    %c108 = arith.constant 108 : index
    %14 = vector.load %arg1[%c0_13, %c0_14, %c108] : memref<1x16x1296xf32, #tpu.memory_space<vmem>>, vector<1x16x1152xf32>
    %15 = vector.shape_cast %14 : vector<1x16x1152xf32> to vector<16x1152xf32>
    %c0_15 = arith.constant 0 : index
    %c0_16 = arith.constant 0 : index
    %c109 = arith.constant 109 : index
    %16 = vector.load %arg1[%c0_15, %c0_16, %c109] : memref<1x16x1296xf32, #tpu.memory_space<vmem>>, vector<1x16x1152xf32>
    %17 = vector.shape_cast %16 : vector<1x16x1152xf32> to vector<16x1152xf32>
    %18 = tpu.concatenate %1, %3, %5, %7, %9, %11, %13, %15, %17 in 0 : vector<16x1152xf32>, vector<16x1152xf32>, vector<16x1152xf32>, vector<16x1152xf32>, vector<16x1152xf32>, vector<16x1152xf32>, vector<16x1152xf32>, vector<16x1152xf32>, vector<16x1152xf32> -> vector<144x1152xf32>
    %c0_17 = arith.constant 0 : index
    %c0_18 = arith.constant 0 : index
    %19 = vector.load %arg2[%c0_17, %c0_18] : memref<8x144xf32, #tpu.memory_space<vmem>>, vector<8x144xf32>
    %cst = arith.constant dense<0.000000e+00> : vector<8x1152xf32>
    %20 = tpu.matmul %19, %18, %cst {dimension_numbers = #tpu.dot_dimension_numbers<[1], [0], [0], [1], [0, 0, 1, 1], [], []>} : vector<8x144xf32>, vector<144x1152xf32>, vector<8x1152xf32> -> vector<8x1152xf32>
    %c0_19 = arith.constant 0 : index
    %c0_20 = arith.constant 0 : index
    %21 = vector.load %arg3[%c0_19, %c0_20] : memref<8x1xf32, #tpu.memory_space<vmem>>, vector<8x1xf32>
    %22 = vector.broadcast %21 : vector<8x1xf32> to vector<8x1152xf32>
    %23 = arith.addf %20, %22 : vector<8x1152xf32>
    %cst_21 = arith.constant -1.000000e+00 : f32
    %cst_22 = arith.constant 1.000000e+00 : f32
    %24 = vector.broadcast %cst_21 : f32 to vector<8x1152xf32>
    %25 = arith.maximumf %24, %23 : vector<8x1152xf32>
    %26 = vector.broadcast %cst_22 : f32 to vector<8x1152xf32>
    %27 = arith.minimumf %26, %25 : vector<8x1152xf32>
    %c0_23 = arith.constant 0 : index
    %c0_24 = arith.constant 0 : index
    %c0_25 = arith.constant 0 : index
    %28 = vector.load %arg4[%c0_23, %c0_24, %c0_25] : memref<1x8x1152xf32, #tpu.memory_space<vmem>>, vector<1x8x1152xf32>
    %29 = vector.shape_cast %28 : vector<1x8x1152xf32> to vector<8x1152xf32>
    %30 = vector.shape_cast %27 : vector<8x1152xf32> to vector<1x8x1152xf32>
    tpu.vector_store %arg4[%c0_23, %c0_24, %c0_25], %30 {strides = array<i32>} : memref<1x8x1152xf32, #tpu.memory_space<vmem>>, vector<1x8x1152xf32>,
    return
  }
  func.func @transform_0(%arg0: i32) -> (i32, i32, i32) {
    %c0_i32 = arith.constant 0 : i32
    %c0_i32_0 = arith.constant 0 : i32
    %c0_i32_1 = arith.constant 0 : i32
    return %arg0, %c0_i32, %c0_i32_0 : i32, i32, i32
  }
  func.func @transform_1(%arg0: i32) -> (i32, i32) {
    %c0_i32 = arith.constant 0 : i32
    %c0_i32_0 = arith.constant 0 : i32
    %c0_i32_1 = arith.constant 0 : i32
    return %c0_i32, %c0_i32_0 : i32, i32
  }
  func.func @transform_2(%arg0: i32) -> (i32, i32) {
    %c0_i32 = arith.constant 0 : i32
    %c0_i32_0 = arith.constant 0 : i32
    %c0_i32_1 = arith.constant 0 : i32
    return %c0_i32, %c0_i32_0 : i32, i32
  }
  func.func @transform_3(%arg0: i32) -> (i32, i32, i32) {
    %c0_i32 = arith.constant 0 : i32
    %c0_i32_0 = arith.constant 0 : i32
    %c0_i32_1 = arith.constant 0 : i32
    return %arg0, %c0_i32, %c0_i32_0 : i32, i32, i32
  }
}

</mosaic_0001>

<llo_original>
// kernel: _decode.4
$region0: #{_decode.4}
  #allocation0 [shape = 'u32[]', space=smem, size = 0x4, offset = 0x4, fixed_abs, tag = 'smem constant byte address 0x4 - core index']
  #allocation1 [shape = 'u32[144,128]{1,0:T(1,128)}', space=vmem, size = 0x12000, scoped, tag = 'internal scratch']
  %s0 = inlined_call_operand.vmem [shape: f32[2,8,192], index: 0, kind: input, shape index: {}]
  %s1 = inlined_call_operand.vmem [shape: f32[8,8], index: 1, kind: input, shape index: {}]
  %s2 = inlined_call_operand.vmem [shape: f32[8,192], index: 2, kind: input, shape index: {}]
  %s3 = inlined_call_operand.vmem [shape: f32[32,72], index: 3, kind: input, shape index: {}]
  %s4 = inlined_call_operand.vmem [shape: f32[32,1], index: 4, kind: input, shape index: {}]
  %s5 = inlined_call_operand.vmem [shape: f32[2,32,128], index: 5, kind: output, shape index: {}]
  %s6 = sld [smem:[#allocation0]]
  $region53: #{_decode.4} parent=0
    _
  %s8 = ssub.s32 1, %s6
  %s9 = scalar_select 0, %s8, %s6
  loop: start=0, step=1, limit=4
  $region2: #{_decode.4} parent=0 // loop_pre_header
    _
  $region3: #{_decode.4} parent=0 // loop_header
    %s11 = sphi 0, %s15
    %p12 = scmp.ge.s32.totalorder %s11, 4
    %s21 = sphi 0, %s23
    %s24 = sphi 0, %s21
    %s25 = sphi 0, %s24
    %s41 = sphi 0, %s25
    %s45 = sphi 0, %s45
    %s47 = sphi 0, %s45
    %s48 = sphi 0, %s47
    %s62 = sphi 0, %s48
    %s66 = sphi 0, %s66
    %s68 = sphi 0, %s66
    %s69 = sphi 0, %s68
    %s83 = sphi 0, %s69
    %s87 = sphi 0, %s87
    %s89 = sphi 0, %s87
    %s90 = sphi 0, %s89
    %s104 = sphi 0, %s90
    %s108 = sphi 0, %s108
    %s110 = sphi 0, %s108
    %s111 = sphi 0, %s110
    %s125 = sphi 0, %s111
    %s131 = sphi 0, %s133
    %s134 = sphi 0, %s131
    %s135 = sphi 0, %s134
    %s151 = sphi 0, %s135
  $region4: #{_decode.4} parent=0 // loop_header_branch
    %14 = sbr.rel (%p12) target = $region8
  $region5: #{_decode.4} parent=0 // loop_body
    %s16 = ssub.s32 %s11, 1
    %s17 = ssub.s32 %s11, 2
    %s18 = sadd.s32 %s11, 1
    %s19 = ssub.s32 %s11, %s18
    %p20 = scmp.eq.s32.totalorder %s19, 0
    %s22 = sadd.s32 %s21, 1
    %s23 = scalar_select %p20, %s21, %s22
    %p26 = pneg %p20
    %p27 = scmp.eq.s32.totalorder %s11, 1
    %p28 = por %p26, %p27
    %p29 = scmp.ne.s32.totalorder %s21, %s24
    %p30 = scmp.eq.s32.totalorder %s11, 0
    %p31 = por %p29, %p30
    %p32 = scmp.ne.s32.totalorder %s21, %s24
    %p33 = scmp.eq.s32.totalorder %s16, 1
    %p34 = por %p32, %p33
    %p35 = scmp.ne.s32.totalorder %s24, %s25
    %p36 = scmp.eq.s32.totalorder %s16, 0
    %p37 = por %p35, %p36
    %p38 = scmp.ne.s32.totalorder %s24, %s25
    %p39 = scmp.eq.s32.totalorder %s17, 1
    %p40 = por %p38, %p39
    %p42 = scmp.ne.s32.totalorder %s25, %s41
    %p43 = scmp.eq.s32.totalorder %s17, 0
    %p44 = por %p42, %p43
    %s46 = sadd.s32 %s45, 1
    %p49 = scmp.eq.s32.totalorder %s11, 1
    %p50 = scmp.ne.s32.totalorder %s45, %s47
    %p51 = scmp.eq.s32.totalorder %s11, 0
    %p52 = por %p50, %p51
    %p53 = scmp.ne.s32.totalorder %s45, %s47
    %p54 = scmp.eq.s32.totalorder %s16, 1
    %p55 = por %p53, %p54
    %p56 = scmp.ne.s32.totalorder %s47, %s48
    %p57 = scmp.eq.s32.totalorder %s16, 0
    %p58 = por %p56, %p57
    %p59 = scmp.ne.s32.totalorder %s47, %s48
    %p60 = scmp.eq.s32.totalorder %s17, 1
    %p61 = por %p59, %p60
    %p63 = scmp.ne.s32.totalorder %s48, %s62
    %p64 = scmp.eq.s32.totalorder %s17, 0
    %p65 = por %p63, %p64
    %s67 = sadd.s32 %s66, 1
    %p70 = scmp.eq.s32.totalorder %s11, 1
    %p71 = scmp.ne.s32.totalorder %s66, %s68
    %p72 = scmp.eq.s32.totalorder %s11, 0
    %p73 = por %p71, %p72
    %p74 = scmp.ne.s32.totalorder %s66, %s68
    %p75 = scmp.eq.s32.totalorder %s16, 1
    %p76 = por %p74, %p75
    %p77 = scmp.ne.s32.totalorder %s68, %s69
    %p78 = scmp.eq.s32.totalorder %s16, 0
    %p79 = por %p77, %p78
    %p80 = scmp.ne.s32.totalorder %s68, %s69
    %p81 = scmp.eq.s32.totalorder %s17, 1
    %p82 = por %p80, %p81
    %p84 = scmp.ne.s32.totalorder %s69, %s83
    %p85 = scmp.eq.s32.totalorder %s17, 0
    %p86 = por %p84, %p85
    %s88 = sadd.s32 %s87, 1
    %p91 = scmp.eq.s32.totalorder %s11, 1
    %p92 = scmp.ne.s32.totalorder %s87, %s89
    %p93 = scmp.eq.s32.totalorder %s11, 0
    %p94 = por %p92, %p93
    %p95 = scmp.ne.s32.totalorder %s87, %s89
    %p96 = scmp.eq.s32.totalorder %s16, 1
    %p97 = por %p95, %p96
    %p98 = scmp.ne.s32.totalorder %s89, %s90
    %p99 = scmp.eq.s32.totalorder %s16, 0
    %p100 = por %p98, %p99
    %p101 = scmp.ne.s32.totalorder %s89, %s90
    %p102 = scmp.eq.s32.totalorder %s17, 1
    %p103 = por %p101, %p102
    %p105 = scmp.ne.s32.totalorder %s90, %s104
    %p106 = scmp.eq.s32.totalorder %s17, 0
    %p107 = por %p105, %p106
    %s109 = sadd.s32 %s108, 1
    %p112 = scmp.eq.s32.totalorder %s11, 1
    %p113 = scmp.ne.s32.totalorder %s108, %s110
    %p114 = scmp.eq.s32.totalorder %s11, 0
    %p115 = por %p113, %p114
    %p116 = scmp.ne.s32.totalorder %s108, %s110
    %p117 = scmp.eq.s32.totalorder %s16, 1
    %p118 = por %p116, %p117
    %p119 = scmp.ne.s32.totalorder %s110, %s111
    %p120 = scmp.eq.s32.totalorder %s16, 0
    %p121 = por %p119, %p120
    %p122 = scmp.ne.s32.totalorder %s110, %s111
    %p123 = scmp.eq.s32.totalorder %s17, 1
    %p124 = por %p122, %p123
    %p126 = scmp.ne.s32.totalorder %s111, %s125
    %p127 = scmp.eq.s32.totalorder %s17, 0
    %p128 = por %p126, %p127
    %s129 = ssub.s32 %s11, %s18
    %p130 = scmp.eq.s32.totalorder %s129, 0
    %s132 = sadd.s32 %s131, 1
    %s133 = scalar_select %p130, %s131, %s132
    %p136 = pneg %p130
    %p137 = scmp.eq.s32.totalorder %s11, 1
    %p138 = por %p136, %p137
    %p139 = scmp.ne.s32.totalorder %s131, %s134
    %p140 = scmp.eq.s32.totalorder %s11, 0
    %p141 = por %p139, %p140
    %p142 = scmp.ne.s32.totalorder %s131, %s134
    %p143 = scmp.eq.s32.totalorder %s16, 1
    %p144 = por %p142, %p143
    %p145 = scmp.ne.s32.totalorder %s134, %s135
    %p146 = scmp.eq.s32.totalorder %s16, 0
    %p147 = por %p145, %p146
    %p148 = scmp.ne.s32.totalorder %s134, %s135
    %p149 = scmp.eq.s32.totalorder %s17, 1
    %p150 = por %p148, %p149
    %p152 = scmp.ne.s32.totalorder %s135, %s151
    %p153 = scmp.eq.s32.totalorder %s17, 0
    %p154 = por %p152, %p153
    %p155 = scmp.le.s32.totalorder 1, %s11
    %p156 = scmp.lt.s32.totalorder %s11, 3
    %p157 = pnand %p155, %p156
    %p158 = pneg %p157
    // Predicated region
    $region9: #{_decode.4} parent=5 // pred_check
      _
    $region10: #{_decode.4} parent=5 // pred_check_branch
      %160 = sbr.rel (%p157) target = $region12
    $region11: #{_decode.4} parent=5 // pred_region
      %s161 = ssub.s32 %s11, 1
      // Predicated region
      $region13: #{_decode.4} parent=11 // pred_check
        %p162 = pneg %p58
      $region14: #{_decode.4} parent=11 // pred_check_branch
        %164 = sbr.rel (%p162) target = $region16
      $region15: #{_decode.4} parent=11 // pred_region
        _
      $region16: #{_decode.4} parent=11 // pred_fallthru
        _
      // Predicated region
      $region17: #{_decode.4} parent=11 // pred_check
        %p165 = pneg %p79
      $region18: #{_decode.4} parent=11 // pred_check_branch
        %167 = sbr.rel (%p165) target = $region20
      $region19: #{_decode.4} parent=11 // pred_region
        _
      $region20: #{_decode.4} parent=11 // pred_fallthru
        _
      // Predicated region
      $region21: #{_decode.4} parent=11 // pred_check
        %p168 = pneg %p100
      $region22: #{_decode.4} parent=11 // pred_check_branch
        %170 = sbr.rel (%p168) target = $region24
      $region23: #{_decode.4} parent=11 // pred_region
        _
      $region24: #{_decode.4} parent=11 // pred_fallthru
        _
      // Predicated region
      $region25: #{_decode.4} parent=11 // pred_check
        %p171 = pneg %p121
      $region26: #{_decode.4} parent=11 // pred_check_branch
        %173 = sbr.rel (%p171) target = $region28
      $region27: #{_decode.4} parent=11 // pred_region
        _
      $region28: #{_decode.4} parent=11 // pred_fallthru
        _
    $region12: #{_decode.4} parent=5 // pred_fallthru
      _
    %p174 = scmp.lt.s32.totalorder %s11, 2
    // Predicated region
    $region29: #{_decode.4} parent=5 // pred_check
      %p175 = pneg %p174
    $region30: #{_decode.4} parent=5 // pred_check_branch
      %177 = sbr.rel (%p175) target = $region32
    $region31: #{_decode.4} parent=5 // pred_region
      // Predicated region
      $region33: #{_decode.4} parent=31 // pred_check
        %p178 = pneg %p31
      $region34: #{_decode.4} parent=31 // pred_check_branch
        %180 = sbr.rel (%p178) target = $region36
      $region35: #{_decode.4} parent=31 // pred_region
        %p181 = scmp.lt.s32.totalorder %s11, 1
        %s182 = scalar_select %p181, %s11, 1
        %s183 = smul.addr %s182, 2
        %s184 = smul.addr %s183, 8
        %s185 = scalar_lea.vmem %s0, %s184
      $region36: #{_decode.4} parent=31 // pred_fallthru
        _
    $region32: #{_decode.4} parent=5 // pred_fallthru
      _
    %p186 = scmp.le.s32.totalorder 1, %s11
    %p187 = scmp.lt.s32.totalorder %s11, 3
    %p188 = pnand %p186, %p187
    %p189 = pneg %p188
    // Predicated region
    $region37: #{_decode.4} parent=5 // pred_check
      _
    $region38: #{_decode.4} parent=5 // pred_check_branch
      %191 = sbr.rel (%p188) target = $region40
    $region39: #{_decode.4} parent=5 // pred_region
      %s192 = ssub.s32 %s11, 1
      %p193 = scmp.lt.s32.totalorder %s16, 1
      %s194 = scalar_select %p193, %s16, 1
      %s195 = smul.addr %s194, 2
      %s196 = smul.addr %s195, 8
      %s197 = scalar_lea.vmem %s0, %s196
      %p198 = pneg %p37
      %p199 = pneg %p34
      %p200 = pneg %p58
      %p201 = pneg %p55
      %p202 = pneg %p79
      %p203 = pneg %p76
      %p204 = pneg %p100
      %p205 = pneg %p97
      %p206 = pneg %p121
      %p207 = pneg %p118
      %p208 = pneg %p147
      %p209 = pneg %p144
      %p210 = scmp.lt.s32.totalorder %s16, 1
      %s211 = scalar_select %p210, %s16, 1
      %s212 = smul.addr %s211, 4
      %s213 = smul.addr %s212, 8
      %s214 = scalar_lea.vmem %s5, %s213
      %p215 = scmp.lt.s32.totalorder %s16, 1
      %s216 = scalar_select %p215, %s16, 1
      %s217 = smul.addr %s216, 2
      %s218 = smul.addr %s217, 8
      %s219 = scalar_lea.vmem %s0, %s218
      %p220 = scmp.lt.s32.totalorder %s16, 1
      %s221 = scalar_select %p220, %s16, 1
      %s222 = smul.addr %s221, 4
      %s223 = smul.addr %s222, 8
      %s224 = scalar_lea.vmem %s5, %s223
      %v225 = vld [vmem:[%s1] sm:$0xff]
      %v226 = vld [vmem:[%s219] sm:$0xff]
      %v227 = vld [vmem:[%s219 + $0x8] sm:$0xff]
      %v228 = vld [vmem:[%s2] sm:$0xff]
      %v229 = vld [vmem:[%s2 + $0x8] sm:$0xff]
      %vm230 = vcmask 64512
      %v232 = vsel %vm230, %v225, 0
      %234 = vmatprep.subr.mxu0 %v227
      %235 = vmatpush1.msra.mxu0 %v226
      %236 = vmatprep.subr.mxu0 0.0
      %237 = vmatpush1.msra.mxu0 0.0
      %238 = vmatprep.subr.mxu0 0.0
      %239 = vmatpush1.msra.mxu0 0.0
      %240 = vmatprep.subr.mxu0 0.0
      %241 = vmatpush1.msra.mxu0 0.0
      %242 = vmatprep.subr.mxu0 0.0
      %243 = vmatpush1.msra.mxu0 0.0
      %244 = vmatprep.subr.mxu0 0.0
      %245 = vmatpush1.msra.mxu0 0.0
      %246 = vmatprep.subr.mxu0 0.0
      %247 = vmatpush1.msra.mxu0 0.0
      %248 = vmatprep.subr.mxu0 0.0
      %249 = vmatpush1.msra.mxu0 0.0
      %250 = vmatprep.subr.mxu0 0.0
      %251 = vmatpush1.msra.mxu0 0.0
      %252 = vmatprep.subr.mxu0 0.0
      %253 = vmatpush1.msra.mxu0 0.0
      %254 = vmatprep.subr.mxu0 0.0
      %255 = vmatpush1.msra.mxu0 0.0
      %256 = vmatprep.subr.mxu0 0.0
      %257 = vmatpush1.msra.mxu0 0.0
      %258 = vmatprep.subr.mxu0 0.0
      %259 = vmatpush1.msra.mxu0 0.0
      %260 = vmatprep.subr.mxu0 0.0
      %261 = vmatpush1.msra.mxu0 0.0
      %262 = vmatprep.subr.mxu0 0.0
      %263 = vmatpush1.msra.mxu0 0.0
      %264 = vmatprep.subr.mxu0 0.0
      %265 = vmatpush1.msra.mxu0 0.0
      %266 = vmatprep.subr.mxu0 0.0
      %267 = vmatpush1.msra.mxu0 0.0
      %268 = vmatprep.subr.mxu0 0.0
      %269 = vmatpush1.msra.mxu0 0.0
      %270 = vmatprep.subr.mxu0 0.0
      %271 = vmatpush1.msra.mxu0 0.0
      %272 = vmatprep.subr.mxu0 0.0
      %273 = vmatpush1.msra.mxu0 0.0
      %274 = vmatprep.subr.mxu0 0.0
      %275 = vmatpush1.msra.mxu0 0.0
      %276 = vmatprep.subr.mxu0 0.0
      %277 = vmatpush1.msra.mxu0 0.0
      %278 = vmatprep.subr.mxu0 0.0
      %279 = vmatpush1.msra.mxu0 0.0
      %280 = vmatprep.subr.mxu0 0.0
      %281 = vmatpush1.msra.mxu0 0.0
      %282 = vmatprep.subr.mxu0 0.0
      %283 = vmatpush1.msra.mxu0 0.0
      %284 = vmatprep.subr.mxu0 0.0
      %285 = vmatpush1.msra.mxu0 0.0
      %286 = vmatprep.subr.mxu0 0.0
      %287 = vmatpush1.msra.mxu0 0.0
      %288 = vmatprep.subr.mxu0 0.0
      %289 = vmatpush1.msra.mxu0 0.0
      %290 = vmatprep.subr.mxu0 0.0
      %291 = vmatpush1.msra.mxu0 0.0
      %292 = vmatprep.subr.mxu0 0.0
      %293 = vmatpush1.msra.mxu0 0.0
      %294 = vmatprep.subr.mxu0 0.0
      %295 = vmatpush1.msra.mxu0 0.0
      %296 = vmatprep.subr.mxu0 0.0
      %297 = vmatpush1.msra.mxu0 0.0
      %298 = vmatprep.mubr.f32.mxu0 0.0
      %299 = vmatmul.mubr.f32.gmra.mrb[0].mxu0 %v232
      %v300 = vpop.f32.mrb[0].mxu0
      %v301 = vadd.f32 %v228, %v300
      %v302 = vpop.f32.mrb[0].mxu0
      %v303 = vadd.f32 %v229, %v302
      %304 = vdwg.mxu0
      %307 = vrot.lane.b32.xlu0 %v301, 127
      %v308 = vpop.permute.xlu0 %307
      %309 = vrot.lane.b32.xlu0 %v303, 127
      %v310 = vpop.permute.xlu0 %309
      %vm311 = vcmask 1039360
      %v312 = vsel %vm311, %v308, %v310
      %313 = vrot.lane.b32.xlu0 %v301, 126
      %v314 = vpop.permute.xlu0 %313
      %315 = vrot.lane.b32.xlu0 %v303, 126
      %v316 = vpop.permute.xlu0 %315
      %vm317 = vcmask 1031168
      %v318 = vsel %vm317, %v314, %v316
      %319 = vrot.lane.b32.xlu0 %v301, 112
      %v320 = vpop.permute.xlu0 %319
      %321 = vrot.lane.b32.xlu0 %v303, 112
      %v322 = vpop.permute.xlu0 %321
      %vm323 = vcmask 916480
      %v324 = vsel %vm323, %v320, %v322
      %325 = vrot.lane.b32.xlu0 %v301, 111
      %v326 = vpop.permute.xlu0 %325
      %327 = vrot.lane.b32.xlu0 %v303, 111
      %v328 = vpop.permute.xlu0 %327
      %vm329 = vcmask 908288
      %v330 = vsel %vm329, %v326, %v328
      %331 = vrot.lane.b32.xlu0 %v301, 110
      %v332 = vpop.permute.xlu0 %331
      %333 = vrot.lane.b32.xlu0 %v303, 110
      %v334 = vpop.permute.xlu0 %333
      %vm335 = vcmask 900096
      %v336 = vsel %vm335, %v332, %v334
      %337 = vrot.lane.b32.xlu0 %v301, 96
      %v338 = vpop.permute.xlu0 %337
      %339 = vrot.lane.b32.xlu0 %v303, 96
      %v340 = vpop.permute.xlu0 %339
      %vm341 = vcmask 785408
      %v342 = vsel %vm341, %v338, %v340
      %343 = vrot.lane.b32.xlu0 %v301, 95
      %v344 = vpop.permute.xlu0 %343
      %345 = vrot.lane.b32.xlu0 %v303, 95
      %v346 = vpop.permute.xlu0 %345
      %vm347 = vcmask 777216
      %v348 = vsel %vm347, %v344, %v346
      %349 = vrot.lane.b32.xlu0 %v301, 94
      %v350 = vpop.permute.xlu0 %349
      %351 = vrot.lane.b32.xlu0 %v303, 94
      %v352 = vpop.permute.xlu0 %351
      %vm353 = vcmask 769024
      %v354 = vsel %vm353, %v350, %v352
      %v355 = vld [vmem:[%s3] sm:$0xff]
      %v356 = vld [vmem:[%s3 + $0x8] sm:$0xff]
      %v357 = vld [vmem:[%s3 + $0x10] sm:$0xff]
      %v358 = vld [vmem:[%s3 + $0x18] sm:$0xff]
      %v359 = vld [vmem:[%s4] sm:$0xff]
      %v360 = vld [vmem:[%s4 + $0x8] sm:$0xff]
      %v361 = vld [vmem:[%s4 + $0x10] sm:$0xff]
      %v362 = vld [vmem:[%s4 + $0x18] sm:$0xff]
      %364 = vset.pattern.permute.xlu0 0
      %365 = vperm.xlu0 %364, %v359
      %v366 = vpop.permute.xlu0 %365
      %369 = vset.pattern.permute.xlu0 0
      %370 = vperm.xlu0 %369, %v360
      %v371 = vpop.permute.xlu0 %370
      %374 = vset.pattern.permute.xlu0 0
      %375 = vperm.xlu0 %374, %v361
      %v376 = vpop.permute.xlu0 %375
      %379 = vset.pattern.permute.xlu0 0
      %380 = vperm.xlu0 %379, %v362
      %v381 = vpop.permute.xlu0 %380
      %383 = vrot.lane.b32.xlu0 %v301, 113
      %v384 = vpop.permute.xlu0 %383
      %385 = vrot.lane.b32.xlu0 %v303, 113
      %v386 = vpop.permute.xlu0 %385
      %387 = vrot.lane.b32.xlu0 %v312, 113
      %v388 = vpop.permute.xlu0 %387
      %389 = vrot.lane.b32.xlu0 %v310, 113
      %v390 = vpop.permute.xlu0 %389
      %391 = vrot.lane.b32.xlu0 %v318, 113
      %v392 = vpop.permute.xlu0 %391
      %393 = vrot.lane.b32.xlu0 %v316, 113
      %v394 = vpop.permute.xlu0 %393
      %395 = vrot.lane.b32.xlu0 %v324, 113
      %v396 = vpop.permute.xlu0 %395
      %397 = vrot.lane.b32.xlu0 %v322, 113
      %v398 = vpop.permute.xlu0 %397
      %399 = vrot.lane.b32.xlu0 %v330, 113
      %v400 = vpop.permute.xlu0 %399
      %401 = vrot.lane.b32.xlu0 %v328, 113
      %v402 = vpop.permute.xlu0 %401
      %403 = vrot.lane.b32.xlu0 %v336, 113
      %v404 = vpop.permute.xlu0 %403
      %405 = vrot.lane.b32.xlu0 %v334, 113
      %v406 = vpop.permute.xlu0 %405
      %407 = vrot.lane.b32.xlu0 %v342, 113
      %v408 = vpop.permute.xlu0 %407
      %409 = vrot.lane.b32.xlu0 %v340, 113
      %v410 = vpop.permute.xlu0 %409
      %411 = vrot.lane.b32.xlu0 %v348, 113
      %v412 = vpop.permute.xlu0 %411
      %413 = vrot.lane.b32.xlu0 %v346, 113
      %v414 = vpop.permute.xlu0 %413
      %415 = vrot.lane.b32.xlu0 %v354, 113
      %v416 = vpop.permute.xlu0 %415
      %417 = vrot.lane.b32.xlu0 %v352, 113
      %v418 = vpop.permute.xlu0 %417
      %vm419 = vcmask 924672
      %v420 = vsel %vm419, %v384, %v386
      %v421 = vsel %vm419, %v388, %v390
      %v422 = vsel %vm419, %v392, %v394
      %v423 = vsel %vm419, %v396, %v398
      %v424 = vsel %vm419, %v400, %v402
      %v425 = vsel %vm419, %v404, %v406
      %v426 = vsel %vm419, %v408, %v410
      %v427 = vsel %vm419, %v412, %v414
      %v428 = vsel %vm419, %v416, %v418
      %vm438 = vcmask 588800
      %v440 = vsel %vm438, %v355, 0
      %v443 = vsel %vm438, %v356, 0
      %v446 = vsel %vm438, %v357, 0
      %v449 = vsel %vm438, %v358, 0
      %451 = vmatprep.subr.mxu0 0.0
      %452 = vmatpush1.msra.mxu0 %v420
      %453 = vmatprep.subr.mxu0 0.0
      %454 = vmatpush1.msra.mxu0 %v421
      %455 = vmatprep.subr.mxu0 0.0
      %456 = vmatpush1.msra.mxu0 %v422
      %457 = vmatprep.subr.mxu0 0.0
      %458 = vmatpush1.msra.mxu0 %v423
      %459 = vmatprep.subr.mxu0 0.0
      %460 = vmatpush1.msra.mxu0 %v424
      %461 = vmatprep.subr.mxu0 0.0
      %462 = vmatpush1.msra.mxu0 %v425
      %463 = vmatprep.subr.mxu0 0.0
      %464 = vmatpush1.msra.mxu0 %v426
      %465 = vmatprep.subr.mxu0 0.0
      %466 = vmatpush1.msra.mxu0 %v427
      %467 = vmatprep.subr.mxu0 0.0
      %468 = vmatpush1.msra.mxu0 %v428
      %469 = vmatprep.subr.mxu0 0.0
      %470 = vmatpush1.msra.mxu0 0.0
      %471 = vmatprep.subr.mxu0 0.0
      %472 = vmatpush1.msra.mxu0 0.0
      %473 = vmatprep.subr.mxu0 0.0
      %474 = vmatpush1.msra.mxu0 0.0
      %475 = vmatprep.subr.mxu0 0.0
      %476 = vmatpush1.msra.mxu0 0.0
      %477 = vmatprep.subr.mxu0 0.0
      %478 = vmatpush1.msra.mxu0 0.0
      %479 = vmatprep.subr.mxu0 0.0
      %480 = vmatpush1.msra.mxu0 0.0
      %481 = vmatprep.subr.mxu0 0.0
      %482 = vmatpush1.msra.mxu0 0.0
      %483 = vmatprep.subr.mxu0 0.0
      %484 = vmatpush1.msra.mxu0 0.0
      %485 = vmatprep.subr.mxu0 0.0
      %486 = vmatpush1.msra.mxu0 0.0
      %487 = vmatprep.subr.mxu0 0.0
      %488 = vmatpush1.msra.mxu0 0.0
      %489 = vmatprep.subr.mxu0 0.0
      %490 = vmatpush1.msra.mxu0 0.0
      %491 = vmatprep.subr.mxu0 0.0
      %492 = vmatpush1.msra.mxu0 0.0
      %493 = vmatprep.subr.mxu0 0.0
      %494 = vmatpush1.msra.mxu0 0.0
      %495 = vmatprep.subr.mxu0 0.0
      %496 = vmatpush1.msra.mxu0 0.0
      %497 = vmatprep.subr.mxu0 0.0
      %498 = vmatpush1.msra.mxu0 0.0
      %499 = vmatprep.subr.mxu0 0.0
      %500 = vmatpush1.msra.mxu0 0.0
      %501 = vmatprep.subr.mxu0 0.0
      %502 = vmatpush1.msra.mxu0 0.0
      %503 = vmatprep.subr.mxu0 0.0
      %504 = vmatpush1.msra.mxu0 0.0
      %505 = vmatprep.subr.mxu0 0.0
      %506 = vmatpush1.msra.mxu0 0.0
      %507 = vmatprep.subr.mxu0 0.0
      %508 = vmatpush1.msra.mxu0 0.0
      %509 = vmatprep.subr.mxu0 0.0
      %510 = vmatpush1.msra.mxu0 0.0
      %511 = vmatprep.subr.mxu0 0.0
      %512 = vmatpush1.msra.mxu0 0.0
      %513 = vmatprep.subr.mxu0 0.0
      %514 = vmatpush1.msra.mxu0 0.0
      %515 = vmatprep.mubr.f32.mxu0 0.0
      %516 = vmatmul.mubr.f32.gmra.mrb[0].mxu0 %v440
      %v517 = vpop.f32.mrb[0].mxu0
      %v518 = vadd.f32 %v366, %v517
      %v519 = vpop.f32.mrb[0].mxu0
      %520 = vmatprep.mubr.f32.mxu0 0.0
      %521 = vmatmul.mubr.f32.gmra.mrb[0].mxu0 %v443
      %v522 = vpop.f32.mrb[0].mxu0
      %v523 = vadd.f32 %v371, %v522
      %v524 = vpop.f32.mrb[0].mxu0
      %525 = vmatprep.mubr.f32.mxu0 0.0
      %526 = vmatmul.mubr.f32.gmra.mrb[0].mxu0 %v446
      %v527 = vpop.f32.mrb[0].mxu0
      %v528 = vadd.f32 %v376, %v527
      %v529 = vpop.f32.mrb[0].mxu0
      %530 = vmatprep.mubr.f32.mxu0 0.0
      %531 = vmatmul.mubr.f32.gmra.mrb[0].mxu0 %v449
      %v532 = vpop.f32.mrb[0].mxu0
      %v533 = vadd.f32 %v381, %v532
      %v534 = vpop.f32.mrb[0].mxu0
      %535 = vdwg.mxu0
      %v536 = vxor.u32 %v518, 2147483648
      %v537 = vxor.u32 %v523, 2147483648
      %v538 = vxor.u32 %v528, 2147483648
      %v539 = vxor.u32 %v533, 2147483648
      %v540 = vmul.f32 %v536, 1.442695
      %v541 = vpow.pop %v540
      %v542 = vmul.f32 %v537, 1.442695
      %v543 = vpow.pop %v542
      %v544 = vmul.f32 %v538, 1.442695
      %v545 = vpow.pop %v544
      %v546 = vmul.f32 %v539, 1.442695
      %v547 = vpow.pop %v546
      %v548 = vadd.f32 %v541, 1.0
      %v549 = vadd.f32 %v543, 1.0
      %v550 = vadd.f32 %v545, 1.0
      %v551 = vadd.f32 %v547, 1.0
      %v552 = vrcp.pop %v548
      %v553 = vmul.f32 1.0, %v552
      %v554 = vrcp.pop %v549
      %v555 = vmul.f32 1.0, %v554
      %v556 = vrcp.pop %v550
      %v557 = vmul.f32 1.0, %v556
      %v558 = vrcp.pop %v551
      %v559 = vmul.f32 1.0, %v558
      %v560 = vmul.f32 %v518, %v553
      %v561 = vmul.f32 %v523, %v555
      %v562 = vmul.f32 %v528, %v557
      %v563 = vmul.f32 %v533, %v559
      %564 = vst [vmem:[%s224] sm:$0xff] %v560
      %565 = vst [vmem:[%s224 + $0x8] sm:$0xff] %v561
      %566 = vst [vmem:[%s224 + $0x10] sm:$0xff] %v562
      %567 = vst [vmem:[%s224 + $0x18] sm:$0xff] %v563
      %p568 = scmp.lt.s32.totalorder %s16, 1
      %s569 = scalar_select %p568, %s16, 1
      %s570 = smul.addr %s569, 4
      %s571 = smul.addr %s570, 8
      %s572 = scalar_lea.vmem %s5, %s571
      // Predicated region
      $region41: #{_decode.4} parent=39 // pred_check
        %p573 = pneg %p144
      $region42: #{_decode.4} parent=39 // pred_check_branch
        %575 = sbr.rel (%p573) target = $region44
      $region43: #{_decode.4} parent=39 // pred_region
        _
      $region44: #{_decode.4} parent=39 // pred_fallthru
        _
    $region40: #{_decode.4} parent=5 // pred_fallthru
      _
    %p576 = scmp.le.s32.totalorder 2, %s11
    // Predicated region
    $region45: #{_decode.4} parent=5 // pred_check
      %p577 = pneg %p576
    $region46: #{_decode.4} parent=5 // pred_check_branch
      %579 = sbr.rel (%p577) target = $region48
    $region47: #{_decode.4} parent=5 // pred_region
      %s580 = ssub.s32 %s11, 2
      // Predicated region
      $region49: #{_decode.4} parent=47 // pred_check
        %p581 = pneg %p150
      $region50: #{_decode.4} parent=47 // pred_check_branch
        %583 = sbr.rel (%p581) target = $region52
      $region51: #{_decode.4} parent=47 // pred_region
        %p584 = scmp.lt.s32.totalorder %s17, 1
        %s585 = scalar_select %p584, %s17, 1
        %s586 = smul.addr %s585, 4
        %s587 = smul.addr %s586, 8
        %s588 = scalar_lea.vmem %s5, %s587
      $region52: #{_decode.4} parent=47 // pred_fallthru
        _
    $region48: #{_decode.4} parent=5 // pred_fallthru
      _
  $region6: #{_decode.4} parent=0 // loop_footer
    %s15 = sadd.s32 1, %s11
  $region7: #{_decode.4} parent=0 // loop_footer_branch
    %10 = sbr.rel target = $region3
  $region8: #{_decode.4} parent=0 // loop_exit
    _

// kernel: _decode.5
$region0: #{_decode.5}
  #allocation0 [shape = 'u32[]', space=smem, size = 0x4, offset = 0x4, fixed_abs, tag = 'smem constant byte address 0x4 - core index']
  #allocation1 [shape = 'u32[144,128]{1,0:T(1,128)}', space=vmem, size = 0x12000, scoped, tag = 'internal scratch']
  %s0 = inlined_call_operand.vmem [shape: f32[2,32,480], index: 0, kind: input, shape index: {}]
  %s1 = inlined_call_operand.vmem [shape: f32[2,16,384], index: 1, kind: input, shape index: {}]
  %s2 = inlined_call_operand.vmem [shape: f32[16,288], index: 2, kind: input, shape index: {}]
  %s3 = inlined_call_operand.vmem [shape: f32[16,16], index: 3, kind: input, shape index: {}]
  %s4 = inlined_call_operand.vmem [shape: f32[16,1], index: 4, kind: input, shape index: {}]
  %s5 = inlined_call_operand.vmem [shape: f32[2,16,384], index: 5, kind: output, shape index: {}]
  %s6 = sld [smem:[#allocation0]]
  $region53: #{_decode.5} parent=0
    _
  %s8 = ssub.s32 1, %s6
  %s9 = scalar_select 0, %s8, %s6
  loop: start=0, step=1, limit=4
  $region2: #{_decode.5} parent=0 // loop_pre_header
    _
  $region3: #{_decode.5} parent=0 // loop_header
    %s11 = sphi 0, %s15
    %p12 = scmp.ge.s32.totalorder %s11, 4
    %s21 = sphi 0, %s23
    %s24 = sphi 0, %s21
    %s25 = sphi 0, %s24
    %s41 = sphi 0, %s25
    %s47 = sphi 0, %s49
    %s50 = sphi 0, %s47
    %s51 = sphi 0, %s50
    %s67 = sphi 0, %s51
    %s71 = sphi 0, %s71
    %s73 = sphi 0, %s71
    %s74 = sphi 0, %s73
    %s88 = sphi 0, %s74
    %s92 = sphi 0, %s92
    %s94 = sphi 0, %s92
    %s95 = sphi 0, %s94
    %s109 = sphi 0, %s95
    %s113 = sphi 0, %s113
    %s115 = sphi 0, %s113
    %s116 = sphi 0, %s115
    %s130 = sphi 0, %s116
    %s136 = sphi 0, %s138
    %s139 = sphi 0, %s136
    %s140 = sphi 0, %s139
    %s156 = sphi 0, %s140
  $region4: #{_decode.5} parent=0 // loop_header_branch
    %14 = sbr.rel (%p12) target = $region8
  $region5: #{_decode.5} parent=0 // loop_body
    %s16 = ssub.s32 %s11, 1
    %s17 = ssub.s32 %s11, 2
    %s18 = sadd.s32 %s11, 1
    %s19 = ssub.s32 %s11, %s18
    %p20 = scmp.eq.s32.totalorder %s19, 0
    %s22 = sadd.s32 %s21, 1
    %s23 = scalar_select %p20, %s21, %s22
    %p26 = pneg %p20
    %p27 = scmp.eq.s32.totalorder %s11, 1
    %p28 = por %p26, %p27
    %p29 = scmp.ne.s32.totalorder %s21, %s24
    %p30 = scmp.eq.s32.totalorder %s11, 0
    %p31 = por %p29, %p30
    %p32 = scmp.ne.s32.totalorder %s21, %s24
    %p33 = scmp.eq.s32.totalorder %s16, 1
    %p34 = por %p32, %p33
    %p35 = scmp.ne.s32.totalorder %s24, %s25
    %p36 = scmp.eq.s32.totalorder %s16, 0
    %p37 = por %p35, %p36
    %p38 = scmp.ne.s32.totalorder %s24, %s25
    %p39 = scmp.eq.s32.totalorder %s17, 1
    %p40 = por %p38, %p39
    %p42 = scmp.ne.s32.totalorder %s25, %s41
    %p43 = scmp.eq.s32.totalorder %s17, 0
    %p44 = por %p42, %p43
    %s45 = ssub.s32 %s11, %s18
    %p46 = scmp.eq.s32.totalorder %s45, 0
    %s48 = sadd.s32 %s47, 1
    %s49 = scalar_select %p46, %s47, %s48
    %p52 = pneg %p46
    %p53 = scmp.eq.s32.totalorder %s11, 1
    %p54 = por %p52, %p53
    %p55 = scmp.ne.s32.totalorder %s47, %s50
    %p56 = scmp.eq.s32.totalorder %s11, 0
    %p57 = por %p55, %p56
    %p58 = scmp.ne.s32.totalorder %s47, %s50
    %p59 = scmp.eq.s32.totalorder %s16, 1
    %p60 = por %p58, %p59
    %p61 = scmp.ne.s32.totalorder %s50, %s51
    %p62 = scmp.eq.s32.totalorder %s16, 0
    %p63 = por %p61, %p62
    %p64 = scmp.ne.s32.totalorder %s50, %s51
    %p65 = scmp.eq.s32.totalorder %s17, 1
    %p66 = por %p64, %p65
    %p68 = scmp.ne.s32.totalorder %s51, %s67
    %p69 = scmp.eq.s32.totalorder %s17, 0
    %p70 = por %p68, %p69
    %s72 = sadd.s32 %s71, 1
    %p75 = scmp.eq.s32.totalorder %s11, 1
    %p76 = scmp.ne.s32.totalorder %s71, %s73
    %p77 = scmp.eq.s32.totalorder %s11, 0
    %p78 = por %p76, %p77
    %p79 = scmp.ne.s32.totalorder %s71, %s73
    %p80 = scmp.eq.s32.totalorder %s16, 1
    %p81 = por %p79, %p80
    %p82 = scmp.ne.s32.totalorder %s73, %s74
    %p83 = scmp.eq.s32.totalorder %s16, 0
    %p84 = por %p82, %p83
    %p85 = scmp.ne.s32.totalorder %s73, %s74
    %p86 = scmp.eq.s32.totalorder %s17, 1
    %p87 = por %p85, %p86
    %p89 = scmp.ne.s32.totalorder %s74, %s88
    %p90 = scmp.eq.s32.totalorder %s17, 0
    %p91 = por %p89, %p90
    %s93 = sadd.s32 %s92, 1
    %p96 = scmp.eq.s32.totalorder %s11, 1
    %p97 = scmp.ne.s32.totalorder %s92, %s94
    %p98 = scmp.eq.s32.totalorder %s11, 0
    %p99 = por %p97, %p98
    %p100 = scmp.ne.s32.totalorder %s92, %s94
    %p101 = scmp.eq.s32.totalorder %s16, 1
    %p102 = por %p100, %p101
    %p103 = scmp.ne.s32.totalorder %s94, %s95
    %p104 = scmp.eq.s32.totalorder %s16, 0
    %p105 = por %p103, %p104
    %p106 = scmp.ne.s32.totalorder %s94, %s95
    %p107 = scmp.eq.s32.totalorder %s17, 1
    %p108 = por %p106, %p107
    %p110 = scmp.ne.s32.totalorder %s95, %s109
    %p111 = scmp.eq.s32.totalorder %s17, 0
    %p112 = por %p110, %p111
    %s114 = sadd.s32 %s113, 1
    %p117 = scmp.eq.s32.totalorder %s11, 1
    %p118 = scmp.ne.s32.totalorder %s113, %s115
    %p119 = scmp.eq.s32.totalorder %s11, 0
    %p120 = por %p118, %p119
    %p121 = scmp.ne.s32.totalorder %s113, %s115
    %p122 = scmp.eq.s32.totalorder %s16, 1
    %p123 = por %p121, %p122
    %p124 = scmp.ne.s32.totalorder %s115, %s116
    %p125 = scmp.eq.s32.totalorder %s16, 0
    %p126 = por %p124, %p125
    %p127 = scmp.ne.s32.totalorder %s115, %s116
    %p128 = scmp.eq.s32.totalorder %s17, 1
    %p129 = por %p127, %p128
    %p131 = scmp.ne.s32.totalorder %s116, %s130
    %p132 = scmp.eq.s32.totalorder %s17, 0
    %p133 = por %p131, %p132
    %s134 = ssub.s32 %s11, %s18
    %p135 = scmp.eq.s32.totalorder %s134, 0
    %s137 = sadd.s32 %s136, 1
    %s138 = scalar_select %p135, %s136, %s137
    %p141 = pneg %p135
    %p142 = scmp.eq.s32.totalorder %s11, 1
    %p143 = por %p141, %p142
    %p144 = scmp.ne.s32.totalorder %s136, %s139
    %p145 = scmp.eq.s32.totalorder %s11, 0
    %p146 = por %p144, %p145
    %p147 = scmp.ne.s32.totalorder %s136, %s139
    %p148 = scmp.eq.s32.totalorder %s16, 1
    %p149 = por %p147, %p148
    %p150 = scmp.ne.s32.totalorder %s139, %s140
    %p151 = scmp.eq.s32.totalorder %s16, 0
    %p152 = por %p150, %p151
    %p153 = scmp.ne.s32.totalorder %s139, %s140
    %p154 = scmp.eq.s32.totalorder %s17, 1
    %p155 = por %p153, %p154
    %p157 = scmp.ne.s32.totalorder %s140, %s156
    %p158 = scmp.eq.s32.totalorder %s17, 0
    %p159 = por %p157, %p158
    %p160 = scmp.le.s32.totalorder 1, %s11
    %p161 = scmp.lt.s32.totalorder %s11, 3
    %p162 = pnand %p160, %p161
    %p163 = pneg %p162
    // Predicated region
    $region9: #{_decode.5} parent=5 // pred_check
      _
    $region10: #{_decode.5} parent=5 // pred_check_branch
      %165 = sbr.rel (%p162) target = $region12
    $region11: #{_decode.5} parent=5 // pred_region
      %s166 = ssub.s32 %s11, 1
      // Predicated region
      $region13: #{_decode.5} parent=11 // pred_check
        %p167 = pneg %p84
      $region14: #{_decode.5} parent=11 // pred_check_branch
        %169 = sbr.rel (%p167) target = $region16
      $region15: #{_decode.5} parent=11 // pred_region
        _
      $region16: #{_decode.5} parent=11 // pred_fallthru
        _
      // Predicated region
      $region17: #{_decode.5} parent=11 // pred_check
        %p170 = pneg %p105
      $region18: #{_decode.5} parent=11 // pred_check_branch
        %172 = sbr.rel (%p170) target = $region20
      $region19: #{_decode.5} parent=11 // pred_region
        _
      $region20: #{_decode.5} parent=11 // pred_fallthru
        _
      // Predicated region
      $region21: #{_decode.5} parent=11 // pred_check
        %p173 = pneg %p126
      $region22: #{_decode.5} parent=11 // pred_check_branch
        %175 = sbr.rel (%p173) target = $region24
      $region23: #{_decode.5} parent=11 // pred_region
        _
      $region24: #{_decode.5} parent=11 // pred_fallthru
        _
    $region12: #{_decode.5} parent=5 // pred_fallthru
      _
    %p176 = scmp.lt.s32.totalorder %s11, 2
    // Predicated region
    $region25: #{_decode.5} parent=5 // pred_check
      %p177 = pneg %p176
    $region26: #{_decode.5} parent=5 // pred_check_branch
      %179 = sbr.rel (%p177) target = $region28
    $region27: #{_decode.5} parent=5 // pred_region
      // Predicated region
      $region29: #{_decode.5} parent=27 // pred_check
        %p180 = pneg %p31
      $region30: #{_decode.5} parent=27 // pred_check_branch
        %182 = sbr.rel (%p180) target = $region32
      $region31: #{_decode.5} parent=27 // pred_region
        %p183 = scmp.lt.s32.totalorder %s11, 1
        %s184 = scalar_select %p183, %s11, 1
        %s185 = smul.addr %s184, 16
        %s186 = smul.addr %s185, 8
        %s187 = scalar_lea.vmem %s0, %s186
      $region32: #{_decode.5} parent=27 // pred_fallthru
        _
      // Predicated region
      $region33: #{_decode.5} parent=27 // pred_check
        %p188 = pneg %p57
      $region34: #{_decode.5} parent=27 // pred_check_branch
        %190 = sbr.rel (%p188) target = $region36
      $region35: #{_decode.5} parent=27 // pred_region
        %p191 = scmp.lt.s32.totalorder %s11, 1
        %s192 = scalar_select %p191, %s11, 1
        %s193 = smul.addr %s192, 6
        %s194 = smul.addr %s193, 8
        %s195 = scalar_lea.vmem %s1, %s194
      $region36: #{_decode.5} parent=27 // pred_fallthru
        _
    $region28: #{_decode.5} parent=5 // pred_fallthru
      _
    %p196 = scmp.le.s32.totalorder 1, %s11
    %p197 = scmp.lt.s32.totalorder %s11, 3
    %p198 = pnand %p196, %p197
    %p199 = pneg %p198
    // Predicated region
    $region37: #{_decode.5} parent=5 // pred_check
      _
    $region38: #{_decode.5} parent=5 // pred_check_branch
      %201 = sbr.rel (%p198) target = $region40
    $region39: #{_decode.5} parent=5 // pred_region
      %s202 = ssub.s32 %s11, 1
      %p203 = scmp.lt.s32.totalorder %s16, 1
      %s204 = scalar_select %p203, %s16, 1
      %s205 = smul.addr %s204, 16
      %s206 = smul.addr %s205, 8
      %s207 = scalar_lea.vmem %s0, %s206
      %p208 = pneg %p37
      %p209 = pneg %p34
      %p210 = scmp.lt.s32.totalorder %s16, 1
      %s211 = scalar_select %p210, %s16, 1
      %s212 = smul.addr %s211, 6
      %s213 = smul.addr %s212, 8
      %s214 = scalar_lea.vmem %s1, %s213
      %p215 = pneg %p63
      %p216 = pneg %p60
      %p217 = pneg %p84
      %p218 = pneg %p81
      %p219 = pneg %p105
      %p220 = pneg %p102
      %p221 = pneg %p126
      %p222 = pneg %p123
      %p223 = pneg %p152
      %p224 = pneg %p149
      %p225 = scmp.lt.s32.totalorder %s16, 1
      %s226 = scalar_select %p225, %s16, 1
      %s227 = smul.addr %s226, 6
      %s228 = smul.addr %s227, 8
      %s229 = scalar_lea.vmem %s5, %s228
      %p230 = scmp.lt.s32.totalorder %s16, 1
      %s231 = scalar_select %p230, %s16, 1
      %s232 = smul.addr %s231, 16
      %s233 = smul.addr %s232, 8
      %s234 = scalar_lea.vmem %s0, %s233
      %p235 = scmp.lt.s32.totalorder %s16, 1
      %s236 = scalar_select %p235, %s16, 1
      %s237 = smul.addr %s236, 6
      %s238 = smul.addr %s237, 8
      %s239 = scalar_lea.vmem %s1, %s238
      %p240 = scmp.lt.s32.totalorder %s16, 1
      %s241 = scalar_select %p240, %s16, 1
      %s242 = smul.addr %s241, 6
      %s243 = smul.addr %s242, 8
      %s244 = scalar_lea.vmem %s5, %s243
      %v245 = vld [vmem:[%s234] sm:$0xff]
      %v246 = vld [vmem:[%s234 + $0x8] sm:$0xff]
      %v247 = vld [vmem:[%s234 + $0x10] sm:$0xff]
      %v248 = vld [vmem:[%s234 + $0x18] sm:$0xff]
      %v249 = vld [vmem:[%s234 + $0x20] sm:$0xff]
      %v250 = vld [vmem:[%s234 + $0x28] sm:$0xff]
      %v251 = vld [vmem:[%s234 + $0x30] sm:$0xff]
      %v252 = vld [vmem:[%s234 + $0x38] sm:$0xff]
      %v253 = vld [vmem:[%s234 + $0x40] sm:$0xff]
      %v254 = vld [vmem:[%s234 + $0x48] sm:$0xff]
      %v255 = vld [vmem:[%s234 + $0x50] sm:$0xff]
      %v256 = vld [vmem:[%s234 + $0x58] sm:$0xff]
      %v257 = vld [vmem:[%s234 + $0x60] sm:$0xff]
      %v258 = vld [vmem:[%s234 + $0x68] sm:$0xff]
      %v259 = vld [vmem:[%s234 + $0x70] sm:$0xff]
      %v260 = vld [vmem:[%s234 + $0x78] sm:$0xff]
      %277 = vrot.lane.b32.xlu0 %v245, 127
      %v278 = vpop.permute.xlu0 %277
      %279 = vrot.lane.b32.xlu0 %v246, 127
      %v280 = vpop.permute.xlu0 %279
      %281 = vrot.lane.b32.xlu0 %v247, 127
      %v282 = vpop.permute.xlu0 %281
      %283 = vrot.lane.b32.xlu0 %v248, 127
      %v284 = vpop.permute.xlu0 %283
      %285 = vrot.lane.b32.xlu0 %v249, 127
      %v286 = vpop.permute.xlu0 %285
      %287 = vrot.lane.b32.xlu0 %v250, 127
      %v288 = vpop.permute.xlu0 %287
      %289 = vrot.lane.b32.xlu0 %v251, 127
      %v290 = vpop.permute.xlu0 %289
      %291 = vrot.lane.b32.xlu0 %v252, 127
      %v292 = vpop.permute.xlu0 %291
      %293 = vrot.lane.b32.xlu0 %v253, 127
      %v294 = vpop.permute.xlu0 %293
      %295 = vrot.lane.b32.xlu0 %v254, 127
      %v296 = vpop.permute.xlu0 %295
      %297 = vrot.lane.b32.xlu0 %v255, 127
      %v298 = vpop.permute.xlu0 %297
      %299 = vrot.lane.b32.xlu0 %v256, 127
      %v300 = vpop.permute.xlu0 %299
      %301 = vrot.lane.b32.xlu0 %v257, 127
      %v302 = vpop.permute.xlu0 %301
      %303 = vrot.lane.b32.xlu0 %v258, 127
      %v304 = vpop.permute.xlu0 %303
      %305 = vrot.lane.b32.xlu0 %v259, 127
      %v306 = vpop.permute.xlu0 %305
      %307 = vrot.lane.b32.xlu0 %v260, 127
      %v308 = vpop.permute.xlu0 %307
      %vm309 = vcmask 1039360
      %v310 = vsel %vm309, %v278, %v280
      %v311 = vsel %vm309, %v280, %v282
      %v312 = vsel %vm309, %v282, %v284
      %v313 = vsel %vm309, %v286, %v288
      %v314 = vsel %vm309, %v288, %v290
      %v315 = vsel %vm309, %v290, %v292
      %v316 = vsel %vm309, %v294, %v296
      %v317 = vsel %vm309, %v296, %v298
      %v318 = vsel %vm309, %v298, %v300
      %v319 = vsel %vm309, %v302, %v304
      %v320 = vsel %vm309, %v304, %v306
      %v321 = vsel %vm309, %v306, %v308
      %322 = vrot.lane.b32.xlu0 %v245, 126
      %v323 = vpop.permute.xlu0 %322
      %324 = vrot.lane.b32.xlu0 %v246, 126
      %v325 = vpop.permute.xlu0 %324
      %326 = vrot.lane.b32.xlu0 %v247, 126
      %v327 = vpop.permute.xlu0 %326
      %328 = vrot.lane.b32.xlu0 %v248, 126
      %v329 = vpop.permute.xlu0 %328
      %330 = vrot.lane.b32.xlu0 %v249, 126
      %v331 = vpop.permute.xlu0 %330
      %332 = vrot.lane.b32.xlu0 %v250, 126
      %v333 = vpop.permute.xlu0 %332
      %334 = vrot.lane.b32.xlu0 %v251, 126
      %v335 = vpop.permute.xlu0 %334
      %336 = vrot.lane.b32.xlu0 %v252, 126
      %v337 = vpop.permute.xlu0 %336
      %338 = vrot.lane.b32.xlu0 %v253, 126
      %v339 = vpop.permute.xlu0 %338
      %340 = vrot.lane.b32.xlu0 %v254, 126
      %v341 = vpop.permute.xlu0 %340
      %342 = vrot.lane.b32.xlu0 %v255, 126
      %v343 = vpop.permute.xlu0 %342
      %344 = vrot.lane.b32.xlu0 %v256, 126
      %v345 = vpop.permute.xlu0 %344
      %346 = vrot.lane.b32.xlu0 %v257, 126
      %v347 = vpop.permute.xlu0 %346
      %348 = vrot.lane.b32.xlu0 %v258, 126
      %v349 = vpop.permute.xlu0 %348
      %350 = vrot.lane.b32.xlu0 %v259, 126
      %v351 = vpop.permute.xlu0 %350
      %352 = vrot.lane.b32.xlu0 %v260, 126
      %v353 = vpop.permute.xlu0 %352
      %vm354 = vcmask 1031168
      %v355 = vsel %vm354, %v323, %v325
      %v356 = vsel %vm354, %v325, %v327
      %v357 = vsel %vm354, %v327, %v329
      %v358 = vsel %vm354, %v331, %v333
      %v359 = vsel %vm354, %v333, %v335
      %v360 = vsel %vm354, %v335, %v337
      %v361 = vsel %vm354, %v339, %v341
      %v362 = vsel %vm354, %v341, %v343
      %v363 = vsel %vm354, %v343, %v345
      %v364 = vsel %vm354, %v347, %v349
      %v365 = vsel %vm354, %v349, %v351
      %v366 = vsel %vm354, %v351, %v353
      %367 = vrot.lane.b32.xlu0 %v245, 104
      %v368 = vpop.permute.xlu0 %367
      %369 = vrot.lane.b32.xlu0 %v246, 104
      %v370 = vpop.permute.xlu0 %369
      %371 = vrot.lane.b32.xlu0 %v247, 104
      %v372 = vpop.permute.xlu0 %371
      %373 = vrot.lane.b32.xlu0 %v248, 104
      %v374 = vpop.permute.xlu0 %373
      %375 = vrot.lane.b32.xlu0 %v249, 104
      %v376 = vpop.permute.xlu0 %375
      %377 = vrot.lane.b32.xlu0 %v250, 104
      %v378 = vpop.permute.xlu0 %377
      %379 = vrot.lane.b32.xlu0 %v251, 104
      %v380 = vpop.permute.xlu0 %379
      %381 = vrot.lane.b32.xlu0 %v252, 104
      %v382 = vpop.permute.xlu0 %381
      %383 = vrot.lane.b32.xlu0 %v253, 104
      %v384 = vpop.permute.xlu0 %383
      %385 = vrot.lane.b32.xlu0 %v254, 104
      %v386 = vpop.permute.xlu0 %385
      %387 = vrot.lane.b32.xlu0 %v255, 104
      %v388 = vpop.permute.xlu0 %387
      %389 = vrot.lane.b32.xlu0 %v256, 104
      %v390 = vpop.permute.xlu0 %389
      %391 = vrot.lane.b32.xlu0 %v257, 104
      %v392 = vpop.permute.xlu0 %391
      %393 = vrot.lane.b32.xlu0 %v258, 104
      %v394 = vpop.permute.xlu0 %393
      %395 = vrot.lane.b32.xlu0 %v259, 104
      %v396 = vpop.permute.xlu0 %395
      %397 = vrot.lane.b32.xlu0 %v260, 104
      %v398 = vpop.permute.xlu0 %397
      %vm399 = vcmask 850944
      %v400 = vsel %vm399, %v368, %v370
      %v401 = vsel %vm399, %v370, %v372
      %v402 = vsel %vm399, %v372, %v374
      %v403 = vsel %vm399, %v376, %v378
      %v404 = vsel %vm399, %v378, %v380
      %v405 = vsel %vm399, %v380, %v382
      %v406 = vsel %vm399, %v384, %v386
      %v407 = vsel %vm399, %v386, %v388
      %v408 = vsel %vm399, %v388, %v390
      %v409 = vsel %vm399, %v392, %v394
      %v410 = vsel %vm399, %v394, %v396
      %v411 = vsel %vm399, %v396, %v398
      %412 = vrot.lane.b32.xlu0 %v245, 103
      %v413 = vpop.permute.xlu0 %412
      %414 = vrot.lane.b32.xlu0 %v246, 103
      %v415 = vpop.permute.xlu0 %414
      %416 = vrot.lane.b32.xlu0 %v247, 103
      %v417 = vpop.permute.xlu0 %416
      %418 = vrot.lane.b32.xlu0 %v248, 103
      %v419 = vpop.permute.xlu0 %418
      %420 = vrot.lane.b32.xlu0 %v249, 103
      %v421 = vpop.permute.xlu0 %420
      %422 = vrot.lane.b32.xlu0 %v250, 103
      %v423 = vpop.permute.xlu0 %422
      %424 = vrot.lane.b32.xlu0 %v251, 103
      %v425 = vpop.permute.xlu0 %424
      %426 = vrot.lane.b32.xlu0 %v252, 103
      %v427 = vpop.permute.xlu0 %426
      %428 = vrot.lane.b32.xlu0 %v253, 103
      %v429 = vpop.permute.xlu0 %428
      %430 = vrot.lane.b32.xlu0 %v254, 103
      %v431 = vpop.permute.xlu0 %430
      %432 = vrot.lane.b32.xlu0 %v255, 103
      %v433 = vpop.permute.xlu0 %432
      %434 = vrot.lane.b32.xlu0 %v256, 103
      %v435 = vpop.permute.xlu0 %434
      %436 = vrot.lane.b32.xlu0 %v257, 103
      %v437 = vpop.permute.xlu0 %436
      %438 = vrot.lane.b32.xlu0 %v258, 103
      %v439 = vpop.permute.xlu0 %438
      %440 = vrot.lane.b32.xlu0 %v259, 103
      %v441 = vpop.permute.xlu0 %440
      %442 = vrot.lane.b32.xlu0 %v260, 103
      %v443 = vpop.permute.xlu0 %442
      %vm444 = vcmask 842752
      %v445 = vsel %vm444, %v413, %v415
      %v446 = vsel %vm444, %v415, %v417
      %v447 = vsel %vm444, %v417, %v419
      %v448 = vsel %vm444, %v421, %v423
      %v449 = vsel %vm444, %v423, %v425
      %v450 = vsel %vm444, %v425, %v427
      %v451 = vsel %vm444, %v429, %v431
      %v452 = vsel %vm444, %v431, %v433
      %v453 = vsel %vm444, %v433, %v435
      %v454 = vsel %vm444, %v437, %v439
      %v455 = vsel %vm444, %v439, %v441
      %v456 = vsel %vm444, %v441, %v443
      %457 = vrot.lane.b32.xlu0 %v245, 102
      %v458 = vpop.permute.xlu0 %457
      %459 = vrot.lane.b32.xlu0 %v246, 102
      %v460 = vpop.permute.xlu0 %459
      %461 = vrot.lane.b32.xlu0 %v247, 102
      %v462 = vpop.permute.xlu0 %461
      %463 = vrot.lane.b32.xlu0 %v248, 102
      %v464 = vpop.permute.xlu0 %463
      %465 = vrot.lane.b32.xlu0 %v249, 102
      %v466 = vpop.permute.xlu0 %465
      %467 = vrot.lane.b32.xlu0 %v250, 102
      %v468 = vpop.permute.xlu0 %467
      %469 = vrot.lane.b32.xlu0 %v251, 102
      %v470 = vpop.permute.xlu0 %469
      %471 = vrot.lane.b32.xlu0 %v252, 102
      %v472 = vpop.permute.xlu0 %471
      %473 = vrot.lane.b32.xlu0 %v253, 102
      %v474 = vpop.permute.xlu0 %473
      %475 = vrot.lane.b32.xlu0 %v254, 102
      %v476 = vpop.permute.xlu0 %475
      %477 = vrot.lane.b32.xlu0 %v255, 102
      %v478 = vpop.permute.xlu0 %477
      %479 = vrot.lane.b32.xlu0 %v256, 102
      %v480 = vpop.permute.xlu0 %479
      %481 = vrot.lane.b32.xlu0 %v257, 102
      %v482 = vpop.permute.xlu0 %481
      %483 = vrot.lane.b32.xlu0 %v258, 102
      %v484 = vpop.permute.xlu0 %483
      %485 = vrot.lane.b32.xlu0 %v259, 102
      %v486 = vpop.permute.xlu0 %485
      %487 = vrot.lane.b32.xlu0 %v260, 102
      %v488 = vpop.permute.xlu0 %487
      %vm489 = vcmask 834560
      %v490 = vsel %vm489, %v458, %v460
      %v491 = vsel %vm489, %v460, %v462
      %v492 = vsel %vm489, %v462, %v464
      %v493 = vsel %vm489, %v466, %v468
      %v494 = vsel %vm489, %v468, %v470
      %v495 = vsel %vm489, %v470, %v472
      %v496 = vsel %vm489, %v474, %v476
      %v497 = vsel %vm489, %v476, %v478
      %v498 = vsel %vm489, %v478, %v480
      %v499 = vsel %vm489, %v482, %v484
      %v500 = vsel %vm489, %v484, %v486
      %v501 = vsel %vm489, %v486, %v488
      %502 = vrot.lane.b32.xlu0 %v245, 80
      %v503 = vpop.permute.xlu0 %502
      %504 = vrot.lane.b32.xlu0 %v246, 80
      %v505 = vpop.permute.xlu0 %504
      %506 = vrot.lane.b32.xlu0 %v247, 80
      %v507 = vpop.permute.xlu0 %506
      %508 = vrot.lane.b32.xlu0 %v248, 80
      %v509 = vpop.permute.xlu0 %508
      %510 = vrot.lane.b32.xlu0 %v249, 80
      %v511 = vpop.permute.xlu0 %510
      %512 = vrot.lane.b32.xlu0 %v250, 80
      %v513 = vpop.permute.xlu0 %512
      %514 = vrot.lane.b32.xlu0 %v251, 80
      %v515 = vpop.permute.xlu0 %514
      %516 = vrot.lane.b32.xlu0 %v252, 80
      %v517 = vpop.permute.xlu0 %516
      %518 = vrot.lane.b32.xlu0 %v253, 80
      %v519 = vpop.permute.xlu0 %518
      %520 = vrot.lane.b32.xlu0 %v254, 80
      %v521 = vpop.permute.xlu0 %520
      %522 = vrot.lane.b32.xlu0 %v255, 80
      %v523 = vpop.permute.xlu0 %522
      %524 = vrot.lane.b32.xlu0 %v256, 80
      %v525 = vpop.permute.xlu0 %524
      %526 = vrot.lane.b32.xlu0 %v257, 80
      %v527 = vpop.permute.xlu0 %526
      %528 = vrot.lane.b32.xlu0 %v258, 80
      %v529 = vpop.permute.xlu0 %528
      %530 = vrot.lane.b32.xlu0 %v259, 80
      %v531 = vpop.permute.xlu0 %530
      %532 = vrot.lane.b32.xlu0 %v260, 80
      %v533 = vpop.permute.xlu0 %532
      %vm534 = vcmask 654336
      %v535 = vsel %vm534, %v503, %v505
      %v536 = vsel %vm534, %v505, %v507
      %v537 = vsel %vm534, %v507, %v509
      %v538 = vsel %vm534, %v511, %v513
      %v539 = vsel %vm534, %v513, %v515
      %v540 = vsel %vm534, %v515, %v517
      %v541 = vsel %vm534, %v519, %v521
      %v542 = vsel %vm534, %v521, %v523
      %v543 = vsel %vm534, %v523, %v525
      %v544 = vsel %vm534, %v527, %v529
      %v545 = vsel %vm534, %v529, %v531
      %v546 = vsel %vm534, %v531, %v533
      %547 = vrot.lane.b32.xlu0 %v245, 79
      %v548 = vpop.permute.xlu0 %547
      %549 = vrot.lane.b32.xlu0 %v246, 79
      %v550 = vpop.permute.xlu0 %549
      %551 = vrot.lane.b32.xlu0 %v247, 79
      %v552 = vpop.permute.xlu0 %551
      %553 = vrot.lane.b32.xlu0 %v248, 79
      %v554 = vpop.permute.xlu0 %553
      %555 = vrot.lane.b32.xlu0 %v249, 79
      %v556 = vpop.permute.xlu0 %555
      %557 = vrot.lane.b32.xlu0 %v250, 79
      %v558 = vpop.permute.xlu0 %557
      %559 = vrot.lane.b32.xlu0 %v251, 79
      %v560 = vpop.permute.xlu0 %559
      %561 = vrot.lane.b32.xlu0 %v252, 79
      %v562 = vpop.permute.xlu0 %561
      %563 = vrot.lane.b32.xlu0 %v253, 79
      %v564 = vpop.permute.xlu0 %563
      %565 = vrot.lane.b32.xlu0 %v254, 79
      %v566 = vpop.permute.xlu0 %565
      %567 = vrot.lane.b32.xlu0 %v255, 79
      %v568 = vpop.permute.xlu0 %567
      %569 = vrot.lane.b32.xlu0 %v256, 79
      %v570 = vpop.permute.xlu0 %569
      %571 = vrot.lane.b32.xlu0 %v257, 79
      %v572 = vpop.permute.xlu0 %571
      %573 = vrot.lane.b32.xlu0 %v258, 79
      %v574 = vpop.permute.xlu0 %573
      %575 = vrot.lane.b32.xlu0 %v259, 79
      %v576 = vpop.permute.xlu0 %575
      %577 = vrot.lane.b32.xlu0 %v260, 79
      %v578 = vpop.permute.xlu0 %577
      %vm579 = vcmask 646144
      %v580 = vsel %vm579, %v548, %v550
      %v581 = vsel %vm579, %v550, %v552
      %v582 = vsel %vm579, %v552, %v554
      %v583 = vsel %vm579, %v556, %v558
      %v584 = vsel %vm579, %v558, %v560
      %v585 = vsel %vm579, %v560, %v562
      %v586 = vsel %vm579, %v564, %v566
      %v587 = vsel %vm579, %v566, %v568
      %v588 = vsel %vm579, %v568, %v570
      %v589 = vsel %vm579, %v572, %v574
      %v590 = vsel %vm579, %v574, %v576
      %v591 = vsel %vm579, %v576, %v578
      %592 = vrot.lane.b32.xlu0 %v245, 78
      %v593 = vpop.permute.xlu0 %592
      %594 = vrot.lane.b32.xlu0 %v246, 78
      %v595 = vpop.permute.xlu0 %594
      %596 = vrot.lane.b32.xlu0 %v247, 78
      %v597 = vpop.permute.xlu0 %596
      %598 = vrot.lane.b32.xlu0 %v248, 78
      %v599 = vpop.permute.xlu0 %598
      %600 = vrot.lane.b32.xlu0 %v249, 78
      %v601 = vpop.permute.xlu0 %600
      %602 = vrot.lane.b32.xlu0 %v250, 78
      %v603 = vpop.permute.xlu0 %602
      %604 = vrot.lane.b32.xlu0 %v251, 78
      %v605 = vpop.permute.xlu0 %604
      %606 = vrot.lane.b32.xlu0 %v252, 78
      %v607 = vpop.permute.xlu0 %606
      %608 = vrot.lane.b32.xlu0 %v253, 78
      %v609 = vpop.permute.xlu0 %608
      %610 = vrot.lane.b32.xlu0 %v254, 78
      %v611 = vpop.permute.xlu0 %610
      %612 = vrot.lane.b32.xlu0 %v255, 78
      %v613 = vpop.permute.xlu0 %612
      %614 = vrot.lane.b32.xlu0 %v256, 78
      %v615 = vpop.permute.xlu0 %614
      %616 = vrot.lane.b32.xlu0 %v257, 78
      %v617 = vpop.permute.xlu0 %616
      %618 = vrot.lane.b32.xlu0 %v258, 78
      %v619 = vpop.permute.xlu0 %618
      %620 = vrot.lane.b32.xlu0 %v259, 78
      %v621 = vpop.permute.xlu0 %620
      %622 = vrot.lane.b32.xlu0 %v260, 78
      %v623 = vpop.permute.xlu0 %622
      %vm624 = vcmask 637952
      %v625 = vsel %vm624, %v593, %v595
      %v626 = vsel %vm624, %v595, %v597
      %v627 = vsel %vm624, %v597, %v599
      %v628 = vsel %vm624, %v601, %v603
      %v629 = vsel %vm624, %v603, %v605
      %v630 = vsel %vm624, %v605, %v607
      %v631 = vsel %vm624, %v609, %v611
      %v632 = vsel %vm624, %v611, %v613
      %v633 = vsel %vm624, %v613, %v615
      %v634 = vsel %vm624, %v617, %v619
      %v635 = vsel %vm624, %v619, %v621
      %v636 = vsel %vm624, %v621, %v623
      %v637 = vld [vmem:[%s2] sm:$0xff]
      %v638 = vld [vmem:[%s2 + $0x8] sm:$0xff]
      %v639 = vld [vmem:[%s2 + $0x10] sm:$0xff]
      %v640 = vld [vmem:[%s2 + $0x18] sm:$0xff]
      %v641 = vld [vmem:[%s2 + $0x20] sm:$0xff]
      %v642 = vld [vmem:[%s2 + $0x28] sm:$0xff]
      %v643 = vld [vmem:[%s3] sm:$0xff]
      %v644 = vld [vmem:[%s3 + $0x8] sm:$0xff]
      %v645 = vld [vmem:[%s239] sm:$0xff]
      %v646 = vld [vmem:[%s239 + $0x8] sm:$0xff]
      %v647 = vld [vmem:[%s239 + $0x10] sm:$0xff]
      %v648 = vld [vmem:[%s239 + $0x18] sm:$0xff]
      %v649 = vld [vmem:[%s239 + $0x20] sm:$0xff]
      %v650 = vld [vmem:[%s239 + $0x28] sm:$0xff]
      %vm651 = vcmask 130048
      %v653 = vsel %vm651, %v643, 0
      %v656 = vsel %vm651, %v644, 0
      %658 = vmatprep.subr.mxu0 %v646
      %659 = vmatpush1.msra.mxu0 %v645
      %660 = vmatprep.subr.mxu0 %v649
      %661 = vmatpush1.msra.mxu0 %v648
      %662 = vmatprep.subr.mxu0 0.0
      %663 = vmatpush1.msra.mxu0 0.0
      %664 = vmatprep.subr.mxu0 0.0
      %665 = vmatpush1.msra.mxu0 0.0
      %666 = vmatprep.subr.mxu0 0.0
      %667 = vmatpush1.msra.mxu0 0.0
      %668 = vmatprep.subr.mxu0 0.0
      %669 = vmatpush1.msra.mxu0 0.0
      %670 = vmatprep.subr.mxu0 0.0
      %671 = vmatpush1.msra.mxu0 0.0
      %672 = vmatprep.subr.mxu0 0.0
      %673 = vmatpush1.msra.mxu0 0.0
      %674 = vmatprep.subr.mxu0 0.0
      %675 = vmatpush1.msra.mxu0 0.0
      %676 = vmatprep.subr.mxu0 0.0
      %677 = vmatpush1.msra.mxu0 0.0
      %678 = vmatprep.subr.mxu0 0.0
      %679 = vmatpush1.msra.mxu0 0.0
      %680 = vmatprep.subr.mxu0 0.0
      %681 = vmatpush1.msra.mxu0 0.0
      %682 = vmatprep.subr.mxu0 0.0
      %683 = vmatpush1.msra.mxu0 0.0
      %684 = vmatprep.subr.mxu0 0.0
      %685 = vmatpush1.msra.mxu0 0.0
      %686 = vmatprep.subr.mxu0 0.0
      %687 = vmatpush1.msra.mxu0 0.0
      %688 = vmatprep.subr.mxu0 0.0
      %689 = vmatpush1.msra.mxu0 0.0
      %690 = vmatprep.subr.mxu0 0.0
      %691 = vmatpush1.msra.mxu0 0.0
      %692 = vmatprep.subr.mxu0 0.0
      %693 = vmatpush1.msra.mxu0 0.0
      %694 = vmatprep.subr.mxu0 0.0
      %695 = vmatpush1.msra.mxu0 0.0
      %696 = vmatprep.subr.mxu0 0.0
      %697 = vmatpush1.msra.mxu0 0.0
      %698 = vmatprep.subr.mxu0 0.0
      %699 = vmatpush1.msra.mxu0 0.0
      %700 = vmatprep.subr.mxu0 0.0
      %701 = vmatpush1.msra.mxu0 0.0
      %702 = vmatprep.subr.mxu0 0.0
      %703 = vmatpush1.msra.mxu0 0.0
      %704 = vmatprep.subr.mxu0 0.0
      %705 = vmatpush1.msra.mxu0 0.0
      %706 = vmatprep.subr.mxu0 0.0
      %707 = vmatpush1.msra.mxu0 0.0
      %708 = vmatprep.subr.mxu0 0.0
      %709 = vmatpush1.msra.mxu0 0.0
      %710 = vmatprep.subr.mxu0 0.0
      %711 = vmatpush1.msra.mxu0 0.0
      %712 = vmatprep.subr.mxu0 0.0
      %713 = vmatpush1.msra.mxu0 0.0
      %714 = vmatprep.subr.mxu0 0.0
      %715 = vmatpush1.msra.mxu0 0.0
      %716 = vmatprep.subr.mxu0 0.0
      %717 = vmatpush1.msra.mxu0 0.0
      %718 = vmatprep.subr.mxu0 0.0
      %719 = vmatpush1.msra.mxu0 0.0
      %720 = vmatprep.subr.mxu0 0.0
      %721 = vmatpush1.msra.mxu0 0.0
      %722 = vmatprep.mubr.f32.mxu0 0.0
      %723 = vmatmul.mubr.f32.gmra.mrb[0].mxu0 %v653
      %v724 = vpop.f32.mrb[0].mxu0
      %v725 = vadd.f32 0.0, %v724
      %v726 = vpop.f32.mrb[0].mxu0
      %v727 = vadd.f32 0.0, %v726
      %728 = vmatprep.mubr.f32.mxu0 0.0
      %729 = vmatmul.mubr.f32.gmra.mrb[0].mxu0 %v656
      %v730 = vpop.f32.mrb[0].mxu0
      %v731 = vadd.f32 0.0, %v730
      %v732 = vpop.f32.mrb[0].mxu0
      %v733 = vadd.f32 0.0, %v732
      %734 = vdwg.mxu0
      %735 = vmatprep.subr.mxu0 0.0
      %736 = vmatpush1.msra.mxu0 %v647
      %737 = vmatprep.subr.mxu0 0.0
      %738 = vmatpush1.msra.mxu0 %v650
      %739 = vmatprep.subr.mxu0 0.0
      %740 = vmatpush1.msra.mxu0 0.0
      %741 = vmatprep.subr.mxu0 0.0
      %742 = vmatpush1.msra.mxu0 0.0
      %743 = vmatprep.subr.mxu0 0.0
      %744 = vmatpush1.msra.mxu0 0.0
      %745 = vmatprep.subr.mxu0 0.0
      %746 = vmatpush1.msra.mxu0 0.0
      %747 = vmatprep.subr.mxu0 0.0
      %748 = vmatpush1.msra.mxu0 0.0
      %749 = vmatprep.subr.mxu0 0.0
      %750 = vmatpush1.msra.mxu0 0.0
      %751 = vmatprep.subr.mxu0 0.0
      %752 = vmatpush1.msra.mxu0 0.0
      %753 = vmatprep.subr.mxu0 0.0
      %754 = vmatpush1.msra.mxu0 0.0
      %755 = vmatprep.subr.mxu0 0.0
      %756 = vmatpush1.msra.mxu0 0.0
      %757 = vmatprep.subr.mxu0 0.0
      %758 = vmatpush1.msra.mxu0 0.0
      %759 = vmatprep.subr.mxu0 0.0
      %760 = vmatpush1.msra.mxu0 0.0
      %761 = vmatprep.subr.mxu0 0.0
      %762 = vmatpush1.msra.mxu0 0.0
      %763 = vmatprep.subr.mxu0 0.0
      %764 = vmatpush1.msra.mxu0 0.0
      %765 = vmatprep.subr.mxu0 0.0
      %766 = vmatpush1.msra.mxu0 0.0
      %767 = vmatprep.subr.mxu0 0.0
      %768 = vmatpush1.msra.mxu0 0.0
      %769 = vmatprep.subr.mxu0 0.0
      %770 = vmatpush1.msra.mxu0 0.0
      %771 = vmatprep.subr.mxu0 0.0
      %772 = vmatpush1.msra.mxu0 0.0
      %773 = vmatprep.subr.mxu0 0.0
      %774 = vmatpush1.msra.mxu0 0.0
      %775 = vmatprep.subr.mxu0 0.0
      %776 = vmatpush1.msra.mxu0 0.0
      %777 = vmatprep.subr.mxu0 0.0
      %778 = vmatpush1.msra.mxu0 0.0
      %779 = vmatprep.subr.mxu0 0.0
      %780 = vmatpush1.msra.mxu0 0.0
      %781 = vmatprep.subr.mxu0 0.0
      %782 = vmatpush1.msra.mxu0 0.0
      %783 = vmatprep.subr.mxu0 0.0
      %784 = vmatpush1.msra.mxu0 0.0
      %785 = vmatprep.subr.mxu0 0.0
      %786 = vmatpush1.msra.mxu0 0.0
      %787 = vmatprep.subr.mxu0 0.0
      %788 = vmatpush1.msra.mxu0 0.0
      %789 = vmatprep.subr.mxu0 0.0
      %790 = vmatpush1.msra.mxu0 0.0
      %791 = vmatprep.subr.mxu0 0.0
      %792 = vmatpush1.msra.mxu0 0.0
      %793 = vmatprep.subr.mxu0 0.0
      %794 = vmatpush1.msra.mxu0 0.0
      %795 = vmatprep.subr.mxu0 0.0
      %796 = vmatpush1.msra.mxu0 0.0
      %797 = vmatprep.subr.mxu0 0.0
      %798 = vmatpush1.msra.mxu0 0.0
      %799 = vmatprep.mubr.f32.mxu0 0.0
      %800 = vmatmul.mubr.f32.gmra.mrb[0].mxu0 %v653
      %v801 = vpop.f32.mrb[0].mxu0
      %v802 = vadd.f32 0.0, %v801
      %v803 = vpop.f32.mrb[0].mxu0
      %804 = vmatprep.mubr.f32.mxu0 0.0
      %805 = vmatmul.mubr.f32.gmra.mrb[0].mxu0 %v656
      %v806 = vpop.f32.mrb[0].mxu0
      %v807 = vadd.f32 0.0, %v806
      %v808 = vpop.f32.mrb[0].mxu0
      %809 = vdwg.mxu0
      %810 = vrot.lane.b32.xlu0 %v245, 105
      %v811 = vpop.permute.xlu0 %810
      %812 = vrot.lane.b32.xlu0 %v246, 105
      %v813 = vpop.permute.xlu0 %812
      %814 = vrot.lane.b32.xlu0 %v247, 105
      %v815 = vpop.permute.xlu0 %814
      %816 = vrot.lane.b32.xlu0 %v248, 105
      %v817 = vpop.permute.xlu0 %816
      %818 = vrot.lane.b32.xlu0 %v249, 105
      %v819 = vpop.permute.xlu0 %818
      %820 = vrot.lane.b32.xlu0 %v250, 105
      %v821 = vpop.permute.xlu0 %820
      %822 = vrot.lane.b32.xlu0 %v251, 105
      %v823 = vpop.permute.xlu0 %822
      %824 = vrot.lane.b32.xlu0 %v252, 105
      %v825 = vpop.permute.xlu0 %824
      %826 = vrot.lane.b32.xlu0 %v253, 105
      %v827 = vpop.permute.xlu0 %826
      %828 = vrot.lane.b32.xlu0 %v254, 105
      %v829 = vpop.permute.xlu0 %828
      %830 = vrot.lane.b32.xlu0 %v255, 105
      %v831 = vpop.permute.xlu0 %830
      %832 = vrot.lane.b32.xlu0 %v256, 105
      %v833 = vpop.permute.xlu0 %832
      %834 = vrot.lane.b32.xlu0 %v257, 105
      %v835 = vpop.permute.xlu0 %834
      %836 = vrot.lane.b32.xlu0 %v258, 105
      %v837 = vpop.permute.xlu0 %836
      %838 = vrot.lane.b32.xlu0 %v259, 105
      %v839 = vpop.permute.xlu0 %838
      %840 = vrot.lane.b32.xlu0 %v260, 105
      %v841 = vpop.permute.xlu0 %840
      %842 = vrot.lane.b32.xlu0 %v310, 105
      %v843 = vpop.permute.xlu0 %842
      %844 = vrot.lane.b32.xlu0 %v311, 105
      %v845 = vpop.permute.xlu0 %844
      %846 = vrot.lane.b32.xlu0 %v312, 105
      %v847 = vpop.permute.xlu0 %846
      %848 = vrot.lane.b32.xlu0 %v284, 105
      %v849 = vpop.permute.xlu0 %848
      %850 = vrot.lane.b32.xlu0 %v313, 105
      %v851 = vpop.permute.xlu0 %850
      %852 = vrot.lane.b32.xlu0 %v314, 105
      %v853 = vpop.permute.xlu0 %852
      %854 = vrot.lane.b32.xlu0 %v315, 105
      %v855 = vpop.permute.xlu0 %854
      %856 = vrot.lane.b32.xlu0 %v292, 105
      %v857 = vpop.permute.xlu0 %856
      %858 = vrot.lane.b32.xlu0 %v316, 105
      %v859 = vpop.permute.xlu0 %858
      %860 = vrot.lane.b32.xlu0 %v317, 105
      %v861 = vpop.permute.xlu0 %860
      %862 = vrot.lane.b32.xlu0 %v318, 105
      %v863 = vpop.permute.xlu0 %862
      %864 = vrot.lane.b32.xlu0 %v300, 105
      %v865 = vpop.permute.xlu0 %864
      %866 = vrot.lane.b32.xlu0 %v319, 105
      %v867 = vpop.permute.xlu0 %866
      %868 = vrot.lane.b32.xlu0 %v320, 105
      %v869 = vpop.permute.xlu0 %868
      %870 = vrot.lane.b32.xlu0 %v321, 105
      %v871 = vpop.permute.xlu0 %870
      %872 = vrot.lane.b32.xlu0 %v308, 105
      %v873 = vpop.permute.xlu0 %872
      %874 = vrot.lane.b32.xlu0 %v355, 105
      %v875 = vpop.permute.xlu0 %874
      %876 = vrot.lane.b32.xlu0 %v356, 105
      %v877 = vpop.permute.xlu0 %876
      %878 = vrot.lane.b32.xlu0 %v357, 105
      %v879 = vpop.permute.xlu0 %878
      %880 = vrot.lane.b32.xlu0 %v329, 105
      %v881 = vpop.permute.xlu0 %880
      %882 = vrot.lane.b32.xlu0 %v358, 105
      %v883 = vpop.permute.xlu0 %882
      %884 = vrot.lane.b32.xlu0 %v359, 105
      %v885 = vpop.permute.xlu0 %884
      %886 = vrot.lane.b32.xlu0 %v360, 105
      %v887 = vpop.permute.xlu0 %886
      %888 = vrot.lane.b32.xlu0 %v337, 105
      %v889 = vpop.permute.xlu0 %888
      %890 = vrot.lane.b32.xlu0 %v361, 105
      %v891 = vpop.permute.xlu0 %890
      %892 = vrot.lane.b32.xlu0 %v362, 105
      %v893 = vpop.permute.xlu0 %892
      %894 = vrot.lane.b32.xlu0 %v363, 105
      %v895 = vpop.permute.xlu0 %894
      %896 = vrot.lane.b32.xlu0 %v345, 105
      %v897 = vpop.permute.xlu0 %896
      %898 = vrot.lane.b32.xlu0 %v364, 105
      %v899 = vpop.permute.xlu0 %898
      %900 = vrot.lane.b32.xlu0 %v365, 105
      %v901 = vpop.permute.xlu0 %900
      %902 = vrot.lane.b32.xlu0 %v366, 105
      %v903 = vpop.permute.xlu0 %902
      %904 = vrot.lane.b32.xlu0 %v353, 105
      %v905 = vpop.permute.xlu0 %904
      %906 = vrot.lane.b32.xlu0 %v400, 105
      %v907 = vpop.permute.xlu0 %906
      %908 = vrot.lane.b32.xlu0 %v401, 105
      %v909 = vpop.permute.xlu0 %908
      %910 = vrot.lane.b32.xlu0 %v402, 105
      %v911 = vpop.permute.xlu0 %910
      %912 = vrot.lane.b32.xlu0 %v374, 105
      %v913 = vpop.permute.xlu0 %912
      %914 = vrot.lane.b32.xlu0 %v403, 105
      %v915 = vpop.permute.xlu0 %914
      %916 = vrot.lane.b32.xlu0 %v404, 105
      %v917 = vpop.permute.xlu0 %916
      %918 = vrot.lane.b32.xlu0 %v405, 105
      %v919 = vpop.permute.xlu0 %918
      %920 = vrot.lane.b32.xlu0 %v382, 105
      %v921 = vpop.permute.xlu0 %920
      %922 = vrot.lane.b32.xlu0 %v406, 105
      %v923 = vpop.permute.xlu0 %922
      %924 = vrot.lane.b32.xlu0 %v407, 105
      %v925 = vpop.permute.xlu0 %924
      %926 = vrot.lane.b32.xlu0 %v408, 105
      %v927 = vpop.permute.xlu0 %926
      %928 = vrot.lane.b32.xlu0 %v390, 105
      %v929 = vpop.permute.xlu0 %928
      %930 = vrot.lane.b32.xlu0 %v409, 105
      %v931 = vpop.permute.xlu0 %930
      %932 = vrot.lane.b32.xlu0 %v410, 105
      %v933 = vpop.permute.xlu0 %932
      %934 = vrot.lane.b32.xlu0 %v411, 105
      %v935 = vpop.permute.xlu0 %934
      %936 = vrot.lane.b32.xlu0 %v398, 105
      %v937 = vpop.permute.xlu0 %936
      %938 = vrot.lane.b32.xlu0 %v445, 105
      %v939 = vpop.permute.xlu0 %938
      %940 = vrot.lane.b32.xlu0 %v446, 105
      %v941 = vpop.permute.xlu0 %940
      %942 = vrot.lane.b32.xlu0 %v447, 105
      %v943 = vpop.permute.xlu0 %942
      %944 = vrot.lane.b32.xlu0 %v419, 105
      %v945 = vpop.permute.xlu0 %944
      %946 = vrot.lane.b32.xlu0 %v448, 105
      %v947 = vpop.permute.xlu0 %946
      %948 = vrot.lane.b32.xlu0 %v449, 105
      %v949 = vpop.permute.xlu0 %948
      %950 = vrot.lane.b32.xlu0 %v450, 105
      %v951 = vpop.permute.xlu0 %950
      %952 = vrot.lane.b32.xlu0 %v427, 105
      %v953 = vpop.permute.xlu0 %952
      %954 = vrot.lane.b32.xlu0 %v451, 105
      %v955 = vpop.permute.xlu0 %954
      %956 = vrot.lane.b32.xlu0 %v452, 105
      %v957 = vpop.permute.xlu0 %956
      %958 = vrot.lane.b32.xlu0 %v453, 105
      %v959 = vpop.permute.xlu0 %958
      %960 = vrot.lane.b32.xlu0 %v435, 105
      %v961 = vpop.permute.xlu0 %960
      %962 = vrot.lane.b32.xlu0 %v454, 105
      %v963 = vpop.permute.xlu0 %962
      %964 = vrot.lane.b32.xlu0 %v455, 105
      %v965 = vpop.permute.xlu0 %964
      %966 = vrot.lane.b32.xlu0 %v456, 105
      %v967 = vpop.permute.xlu0 %966
      %968 = vrot.lane.b32.xlu0 %v443, 105
      %v969 = vpop.permute.xlu0 %968
      %970 = vrot.lane.b32.xlu0 %v490, 105
      %v971 = vpop.permute.xlu0 %970
      %972 = vrot.lane.b32.xlu0 %v491, 105
      %v973 = vpop.permute.xlu0 %972
      %974 = vrot.lane.b32.xlu0 %v492, 105
      %v975 = vpop.permute.xlu0 %974
      %976 = vrot.lane.b32.xlu0 %v464, 105
      %v977 = vpop.permute.xlu0 %976
      %978 = vrot.lane.b32.xlu0 %v493, 105
      %v979 = vpop.permute.xlu0 %978
      %980 = vrot.lane.b32.xlu0 %v494, 105
      %v981 = vpop.permute.xlu0 %980
      %982 = vrot.lane.b32.xlu0 %v495, 105
      %v983 = vpop.permute.xlu0 %982
      %984 = vrot.lane.b32.xlu0 %v472, 105
      %v985 = vpop.permute.xlu0 %984
      %986 = vrot.lane.b32.xlu0 %v496, 105
      %v987 = vpop.permute.xlu0 %986
      %988 = vrot.lane.b32.xlu0 %v497, 105
      %v989 = vpop.permute.xlu0 %988
      %990 = vrot.lane.b32.xlu0 %v498, 105
      %v991 = vpop.permute.xlu0 %990
      %992 = vrot.lane.b32.xlu0 %v480, 105
      %v993 = vpop.permute.xlu0 %992
      %994 = vrot.lane.b32.xlu0 %v499, 105
      %v995 = vpop.permute.xlu0 %994
      %996 = vrot.lane.b32.xlu0 %v500, 105
      %v997 = vpop.permute.xlu0 %996
      %998 = vrot.lane.b32.xlu0 %v501, 105
      %v999 = vpop.permute.xlu0 %998
      %1000 = vrot.lane.b32.xlu0 %v488, 105
      %v1001 = vpop.permute.xlu0 %1000
      %1002 = vrot.lane.b32.xlu0 %v535, 105
      %v1003 = vpop.permute.xlu0 %1002
      %1004 = vrot.lane.b32.xlu0 %v536, 105
      %v1005 = vpop.permute.xlu0 %1004
      %1006 = vrot.lane.b32.xlu0 %v537, 105
      %v1007 = vpop.permute.xlu0 %1006
      %1008 = vrot.lane.b32.xlu0 %v509, 105
      %v1009 = vpop.permute.xlu0 %1008
      %1010 = vrot.lane.b32.xlu0 %v538, 105
      %v1011 = vpop.permute.xlu0 %1010
      %1012 = vrot.lane.b32.xlu0 %v539, 105
      %v1013 = vpop.permute.xlu0 %1012
      %1014 = vrot.lane.b32.xlu0 %v540, 105
      %v1015 = vpop.permute.xlu0 %1014
      %1016 = vrot.lane.b32.xlu0 %v517, 105
      %v1017 = vpop.permute.xlu0 %1016
      %1018 = vrot.lane.b32.xlu0 %v541, 105
      %v1019 = vpop.permute.xlu0 %1018
      %1020 = vrot.lane.b32.xlu0 %v542, 105
      %v1021 = vpop.permute.xlu0 %1020
      %1022 = vrot.lane.b32.xlu0 %v543, 105
      %v1023 = vpop.permute.xlu0 %1022
      %1024 = vrot.lane.b32.xlu0 %v525, 105
      %v1025 = vpop.permute.xlu0 %1024
      %1026 = vrot.lane.b32.xlu0 %v544, 105
      %v1027 = vpop.permute.xlu0 %1026
      %1028 = vrot.lane.b32.xlu0 %v545, 105
      %v1029 = vpop.permute.xlu0 %1028
      %1030 = vrot.lane.b32.xlu0 %v546, 105
      %v1031 = vpop.permute.xlu0 %1030
      %1032 = vrot.lane.b32.xlu0 %v533, 105
      %v1033 = vpop.permute.xlu0 %1032
      %1034 = vrot.lane.b32.xlu0 %v580, 105
      %v1035 = vpop.permute.xlu0 %1034
      %1036 = vrot.lane.b32.xlu0 %v581, 105
      %v1037 = vpop.permute.xlu0 %1036
      %1038 = vrot.lane.b32.xlu0 %v582, 105
      %v1039 = vpop.permute.xlu0 %1038
      %1040 = vrot.lane.b32.xlu0 %v554, 105
      %v1041 = vpop.permute.xlu0 %1040
      %1042 = vrot.lane.b32.xlu0 %v583, 105
      %v1043 = vpop.permute.xlu0 %1042
      %1044 = vrot.lane.b32.xlu0 %v584, 105
      %v1045 = vpop.permute.xlu0 %1044
      %1046 = vrot.lane.b32.xlu0 %v585, 105
      %v1047 = vpop.permute.xlu0 %1046
      %1048 = vrot.lane.b32.xlu0 %v562, 105
      %v1049 = vpop.permute.xlu0 %1048
      %1050 = vrot.lane.b32.xlu0 %v586, 105
      %v1051 = vpop.permute.xlu0 %1050
      %1052 = vrot.lane.b32.xlu0 %v587, 105
      %v1053 = vpop.permute.xlu0 %1052
      %1054 = vrot.lane.b32.xlu0 %v588, 105
      %v1055 = vpop.permute.xlu0 %1054
      %1056 = vrot.lane.b32.xlu0 %v570, 105
      %v1057 = vpop.permute.xlu0 %1056
      %1058 = vrot.lane.b32.xlu0 %v589, 105
      %v1059 = vpop.permute.xlu0 %1058
      %1060 = vrot.lane.b32.xlu0 %v590, 105
      %v1061 = vpop.permute.xlu0 %1060
      %1062 = vrot.lane.b32.xlu0 %v591, 105
      %v1063 = vpop.permute.xlu0 %1062
      %1064 = vrot.lane.b32.xlu0 %v578, 105
      %v1065 = vpop.permute.xlu0 %1064
      %1066 = vrot.lane.b32.xlu0 %v625, 105
      %v1067 = vpop.permute.xlu0 %1066
      %1068 = vrot.lane.b32.xlu0 %v626, 105
      %v1069 = vpop.permute.xlu0 %1068
      %1070 = vrot.lane.b32.xlu0 %v627, 105
      %v1071 = vpop.permute.xlu0 %1070
      %1072 = vrot.lane.b32.xlu0 %v599, 105
      %v1073 = vpop.permute.xlu0 %1072
      %1074 = vrot.lane.b32.xlu0 %v628, 105
      %v1075 = vpop.permute.xlu0 %1074
      %1076 = vrot.lane.b32.xlu0 %v629, 105
      %v1077 = vpop.permute.xlu0 %1076
      %1078 = vrot.lane.b32.xlu0 %v630, 105
      %v1079 = vpop.permute.xlu0 %1078
      %1080 = vrot.lane.b32.xlu0 %v607, 105
      %v1081 = vpop.permute.xlu0 %1080
      %1082 = vrot.lane.b32.xlu0 %v631, 105
      %v1083 = vpop.permute.xlu0 %1082
      %1084 = vrot.lane.b32.xlu0 %v632, 105
      %v1085 = vpop.permute.xlu0 %1084
      %1086 = vrot.lane.b32.xlu0 %v633, 105
      %v1087 = vpop.permute.xlu0 %1086
      %1088 = vrot.lane.b32.xlu0 %v615, 105
      %v1089 = vpop.permute.xlu0 %1088
      %1090 = vrot.lane.b32.xlu0 %v634, 105
      %v1091 = vpop.permute.xlu0 %1090
      %1092 = vrot.lane.b32.xlu0 %v635, 105
      %v1093 = vpop.permute.xlu0 %1092
      %1094 = vrot.lane.b32.xlu0 %v636, 105
      %v1095 = vpop.permute.xlu0 %1094
      %1096 = vrot.lane.b32.xlu0 %v623, 105
      %v1097 = vpop.permute.xlu0 %1096
      %vm1098 = vcmask 859136
      %v1099 = vsel %vm1098, %v811, %v813
      %v1100 = vsel %vm1098, %v813, %v815
      %v1101 = vsel %vm1098, %v815, %v817
      %v1102 = vsel %vm1098, %v819, %v821
      %v1103 = vsel %vm1098, %v821, %v823
      %v1104 = vsel %vm1098, %v823, %v825
      %v1105 = vsel %vm1098, %v827, %v829
      %v1106 = vsel %vm1098, %v829, %v831
      %v1107 = vsel %vm1098, %v831, %v833
      %v1108 = vsel %vm1098, %v835, %v837
      %v1109 = vsel %vm1098, %v837, %v839
      %v1110 = vsel %vm1098, %v839, %v841
      %v1111 = vsel %vm1098, %v843, %v845
      %v1112 = vsel %vm1098, %v845, %v847
      %v1113 = vsel %vm1098, %v847, %v849
      %v1114 = vsel %vm1098, %v851, %v853
      %v1115 = vsel %vm1098, %v853, %v855
      %v1116 = vsel %vm1098, %v855, %v857
      %v1117 = vsel %vm1098, %v859, %v861
      %v1118 = vsel %vm1098, %v861, %v863
      %v1119 = vsel %vm1098, %v863, %v865
      %v1120 = vsel %vm1098, %v867, %v869
      %v1121 = vsel %vm1098, %v869, %v871
      %v1122 = vsel %vm1098, %v871, %v873
      %v1123 = vsel %vm1098, %v875, %v877
      %v1124 = vsel %vm1098, %v877, %v879
      %v1125 = vsel %vm1098, %v879, %v881
      %v1126 = vsel %vm1098, %v883, %v885
      %v1127 = vsel %vm1098, %v885, %v887
      %v1128 = vsel %vm1098, %v887, %v889
      %v1129 = vsel %vm1098, %v891, %v893
      %v1130 = vsel %vm1098, %v893, %v895
      %v1131 = vsel %vm1098, %v895, %v897
      %v1132 = vsel %vm1098, %v899, %v901
      %v1133 = vsel %vm1098, %v901, %v903
      %v1134 = vsel %vm1098, %v903, %v905
      %v1135 = vsel %vm1098, %v907, %v909
      %v1136 = vsel %vm1098, %v909, %v911
      %v1137 = vsel %vm1098, %v911, %v913
      %v1138 = vsel %vm1098, %v915, %v917
      %v1139 = vsel %vm1098, %v917, %v919
      %v1140 = vsel %vm1098, %v919, %v921
      %v1141 = vsel %vm1098, %v923, %v925
      %v1142 = vsel %vm1098, %v925, %v927
      %v1143 = vsel %vm1098, %v927, %v929
      %v1144 = vsel %vm1098, %v931, %v933
      %v1145 = vsel %vm1098, %v933, %v935
      %v1146 = vsel %vm1098, %v935, %v937
      %v1147 = vsel %vm1098, %v939, %v941
      %v1148 = vsel %vm1098, %v941, %v943
      %v1149 = vsel %vm1098, %v943, %v945
      %v1150 = vsel %vm1098, %v947, %v949
      %v1151 = vsel %vm1098, %v949, %v951
      %v1152 = vsel %vm1098, %v951, %v953
      %v1153 = vsel %vm1098, %v955, %v957
      %v1154 = vsel %vm1098, %v957, %v959
      %v1155 = vsel %vm1098, %v959, %v961
      %v1156 = vsel %vm1098, %v963, %v965
      %v1157 = vsel %vm1098, %v965, %v967
      %v1158 = vsel %vm1098, %v967, %v969
      %v1159 = vsel %vm1098, %v971, %v973
      %v1160 = vsel %vm1098, %v973, %v975
      %v1161 = vsel %vm1098, %v975, %v977
      %v1162 = vsel %vm1098, %v979, %v981
      %v1163 = vsel %vm1098, %v981, %v983
      %v1164 = vsel %vm1098, %v983, %v985
      %v1165 = vsel %vm1098, %v987, %v989
      %v1166 = vsel %vm1098, %v989, %v991
      %v1167 = vsel %vm1098, %v991, %v993
      %v1168 = vsel %vm1098, %v995, %v997
      %v1169 = vsel %vm1098, %v997, %v999
      %v1170 = vsel %vm1098, %v999, %v1001
      %v1171 = vsel %vm1098, %v1003, %v1005
      %v1172 = vsel %vm1098, %v1005, %v1007
      %v1173 = vsel %vm1098, %v1007, %v1009
      %v1174 = vsel %vm1098, %v1011, %v1013
      %v1175 = vsel %vm1098, %v1013, %v1015
      %v1176 = vsel %vm1098, %v1015, %v1017
      %v1177 = vsel %vm1098, %v1019, %v1021
      %v1178 = vsel %vm1098, %v1021, %v1023
      %v1179 = vsel %vm1098, %v1023, %v1025
      %v1180 = vsel %vm1098, %v1027, %v1029
      %v1181 = vsel %vm1098, %v1029, %v1031
      %v1182 = vsel %vm1098, %v1031, %v1033
      %v1183 = vsel %vm1098, %v1035, %v1037
      %v1184 = vsel %vm1098, %v1037, %v1039
      %v1185 = vsel %vm1098, %v1039, %v1041
      %v1186 = vsel %vm1098, %v1043, %v1045
      %v1187 = vsel %vm1098, %v1045, %v1047
      %v1188 = vsel %vm1098, %v1047, %v1049
      %v1189 = vsel %vm1098, %v1051, %v1053
      %v1190 = vsel %vm1098, %v1053, %v1055
      %v1191 = vsel %vm1098, %v1055, %v1057
      %v1192 = vsel %vm1098, %v1059, %v1061
      %v1193 = vsel %vm1098, %v1061, %v1063
      %v1194 = vsel %vm1098, %v1063, %v1065
      %v1195 = vsel %vm1098, %v1067, %v1069
      %v1196 = vsel %vm1098, %v1069, %v1071
      %v1197 = vsel %vm1098, %v1071, %v1073
      %v1198 = vsel %vm1098, %v1075, %v1077
      %v1199 = vsel %vm1098, %v1077, %v1079
      %v1200 = vsel %vm1098, %v1079, %v1081
      %v1201 = vsel %vm1098, %v1083, %v1085
      %v1202 = vsel %vm1098, %v1085, %v1087
      %v1203 = vsel %vm1098, %v1087, %v1089
      %v1204 = vsel %vm1098, %v1091, %v1093
      %v1205 = vsel %vm1098, %v1093, %v1095
      %v1206 = vsel %vm1098, %v1095, %v1097
      %vm1315 = vcmask 261120
      %v1317 = vsel %vm1315, %v639, 0
      %v1320 = vsel %vm1315, %v642, 0
      %1322 = vmatprep.subr.mxu0 %v1100
      %1323 = vmatpush1.msra.mxu0 %v1099
      %1324 = vmatprep.subr.mxu0 %v1103
      %1325 = vmatpush1.msra.mxu0 %v1102
      %1326 = vmatprep.subr.mxu0 %v1106
      %1327 = vmatpush1.msra.mxu0 %v1105
      %1328 = vmatprep.subr.mxu0 %v1109
      %1329 = vmatpush1.msra.mxu0 %v1108
      %1330 = vmatprep.subr.mxu0 %v1112
      %1331 = vmatpush1.msra.mxu0 %v1111
      %1332 = vmatprep.subr.mxu0 %v1115
      %1333 = vmatpush1.msra.mxu0 %v1114
      %1334 = vmatprep.subr.mxu0 %v1118
      %1335 = vmatpush1.msra.mxu0 %v1117
      %1336 = vmatprep.subr.mxu0 %v1121
      %1337 = vmatpush1.msra.mxu0 %v1120
      %1338 = vmatprep.subr.mxu0 %v1124
      %1339 = vmatpush1.msra.mxu0 %v1123
      %1340 = vmatprep.subr.mxu0 %v1127
      %1341 = vmatpush1.msra.mxu0 %v1126
      %1342 = vmatprep.subr.mxu0 %v1130
      %1343 = vmatpush1.msra.mxu0 %v1129
      %1344 = vmatprep.subr.mxu0 %v1133
      %1345 = vmatpush1.msra.mxu0 %v1132
      %1346 = vmatprep.subr.mxu0 %v1136
      %1347 = vmatpush1.msra.mxu0 %v1135
      %1348 = vmatprep.subr.mxu0 %v1139
      %1349 = vmatpush1.msra.mxu0 %v1138
      %1350 = vmatprep.subr.mxu0 %v1142
      %1351 = vmatpush1.msra.mxu0 %v1141
      %1352 = vmatprep.subr.mxu0 %v1145
      %1353 = vmatpush1.msra.mxu0 %v1144
      %1354 = vmatprep.subr.mxu0 %v1148
      %1355 = vmatpush1.msra.mxu0 %v1147
      %1356 = vmatprep.subr.mxu0 %v1151
      %1357 = vmatpush1.msra.mxu0 %v1150
      %1358 = vmatprep.subr.mxu0 %v1154
      %1359 = vmatpush1.msra.mxu0 %v1153
      %1360 = vmatprep.subr.mxu0 %v1157
      %1361 = vmatpush1.msra.mxu0 %v1156
      %1362 = vmatprep.subr.mxu0 %v1160
      %1363 = vmatpush1.msra.mxu0 %v1159
      %1364 = vmatprep.subr.mxu0 %v1163
      %1365 = vmatpush1.msra.mxu0 %v1162
      %1366 = vmatprep.subr.mxu0 %v1166
      %1367 = vmatpush1.msra.mxu0 %v1165
      %1368 = vmatprep.subr.mxu0 %v1169
      %1369 = vmatpush1.msra.mxu0 %v1168
      %1370 = vmatprep.subr.mxu0 %v1172
      %1371 = vmatpush1.msra.mxu0 %v1171
      %1372 = vmatprep.subr.mxu0 %v1175
      %1373 = vmatpush1.msra.mxu0 %v1174
      %1374 = vmatprep.subr.mxu0 %v1178
      %1375 = vmatpush1.msra.mxu0 %v1177
      %1376 = vmatprep.subr.mxu0 %v1181
      %1377 = vmatpush1.msra.mxu0 %v1180
      %1378 = vmatprep.subr.mxu0 %v1184
      %1379 = vmatpush1.msra.mxu0 %v1183
      %1380 = vmatprep.subr.mxu0 %v1187
      %1381 = vmatpush1.msra.mxu0 %v1186
      %1382 = vmatprep.subr.mxu0 %v1190
      %1383 = vmatpush1.msra.mxu0 %v1189
      %1384 = vmatprep.subr.mxu0 %v1193
      %1385 = vmatpush1.msra.mxu0 %v1192
      %1386 = vmatprep.mubr.f32.mxu0 %v638
      %1387 = vmatmul.mubr.f32.gmra.mrb[0].mxu0 %v637
      %v1388 = vpop.f32.mrb[0].mxu0
      %v1389 = vadd.f32 %v725, %v1388
      %v1390 = vpop.f32.mrb[0].mxu0
      %v1391 = vadd.f32 %v727, %v1390
      %1392 = vmatprep.mubr.f32.mxu0 %v641
      %1393 = vmatmul.mubr.f32.gmra.mrb[0].mxu0 %v640
      %v1394 = vpop.f32.mrb[0].mxu0
      %v1395 = vadd.f32 %v731, %v1394
      %v1396 = vpop.f32.mrb[0].mxu0
      %v1397 = vadd.f32 %v733, %v1396
      %1398 = vdwg.mxu0
      %1399 = vmatprep.subr.mxu0 %v1196
      %1400 = vmatpush1.msra.mxu0 %v1195
      %1401 = vmatprep.subr.mxu0 %v1199
      %1402 = vmatpush1.msra.mxu0 %v1198
      %1403 = vmatprep.subr.mxu0 %v1202
      %1404 = vmatpush1.msra.mxu0 %v1201
      %1405 = vmatprep.subr.mxu0 %v1205
      %1406 = vmatpush1.msra.mxu0 %v1204
      %1407 = vmatprep.subr.mxu0 0.0
      %1408 = vmatpush1.msra.mxu0 0.0
      %1409 = vmatprep.subr.mxu0 0.0
      %1410 = vmatpush1.msra.mxu0 0.0
      %1411 = vmatprep.subr.mxu0 0.0
      %1412 = vmatpush1.msra.mxu0 0.0
      %1413 = vmatprep.subr.mxu0 0.0
      %1414 = vmatpush1.msra.mxu0 0.0
      %1415 = vmatprep.subr.mxu0 0.0
      %1416 = vmatpush1.msra.mxu0 0.0
      %1417 = vmatprep.subr.mxu0 0.0
      %1418 = vmatpush1.msra.mxu0 0.0
      %1419 = vmatprep.subr.mxu0 0.0
      %1420 = vmatpush1.msra.mxu0 0.0
      %1421 = vmatprep.subr.mxu0 0.0
      %1422 = vmatpush1.msra.mxu0 0.0
      %1423 = vmatprep.subr.mxu0 0.0
      %1424 = vmatpush1.msra.mxu0 0.0
      %1425 = vmatprep.subr.mxu0 0.0
      %1426 = vmatpush1.msra.mxu0 0.0
      %1427 = vmatprep.subr.mxu0 0.0
      %1428 = vmatpush1.msra.mxu0 0.0
      %1429 = vmatprep.subr.mxu0 0.0
      %1430 = vmatpush1.msra.mxu0 0.0
      %1431 = vmatprep.subr.mxu0 0.0
      %1432 = vmatpush1.msra.mxu0 0.0
      %1433 = vmatprep.subr.mxu0 0.0
      %1434 = vmatpush1.msra.mxu0 0.0
      %1435 = vmatprep.subr.mxu0 0.0
      %1436 = vmatpush1.msra.mxu0 0.0
      %1437 = vmatprep.subr.mxu0 0.0
      %1438 = vmatpush1.msra.mxu0 0.0
      %1439 = vmatprep.subr.mxu0 0.0
      %1440 = vmatpush1.msra.mxu0 0.0
      %1441 = vmatprep.subr.mxu0 0.0
      %1442 = vmatpush1.msra.mxu0 0.0
      %1443 = vmatprep.subr.mxu0 0.0
      %1444 = vmatpush1.msra.mxu0 0.0
      %1445 = vmatprep.subr.mxu0 0.0
      %1446 = vmatpush1.msra.mxu0 0.0
      %1447 = vmatprep.subr.mxu0 0.0
      %1448 = vmatpush1.msra.mxu0 0.0
      %1449 = vmatprep.subr.mxu0 0.0
      %1450 = vmatpush1.msra.mxu0 0.0
      %1451 = vmatprep.subr.mxu0 0.0
      %1452 = vmatpush1.msra.mxu0 0.0
      %1453 = vmatprep.subr.mxu0 0.0
      %1454 = vmatpush1.msra.mxu0 0.0
      %1455 = vmatprep.subr.mxu0 0.0
      %1456 = vmatpush1.msra.mxu0 0.0
      %1457 = vmatprep.subr.mxu0 0.0
      %1458 = vmatpush1.msra.mxu0 0.0
      %1459 = vmatprep.subr.mxu0 0.0
      %1460 = vmatpush1.msra.mxu0 0.0
      %1461 = vmatprep.subr.mxu0 0.0
      %1462 = vmatpush1.msra.mxu0 0.0
      %1463 = vmatprep.mubr.f32.mxu0 0.0
      %1464 = vmatmul.mubr.f32.gmra.mrb[0].mxu0 %v1317
      %v1465 = vpop.f32.mrb[0].mxu0
      %v1466 = vadd.f32 %v1389, %v1465
      %v1467 = vpop.f32.mrb[0].mxu0
      %v1468 = vadd.f32 %v1391, %v1467
      %1469 = vmatprep.mubr.f32.mxu0 0.0
      %1470 = vmatmul.mubr.f32.gmra.mrb[0].mxu0 %v1320
      %v1471 = vpop.f32.mrb[0].mxu0
      %v1472 = vadd.f32 %v1395, %v1471
      %v1473 = vpop.f32.mrb[0].mxu0
      %v1474 = vadd.f32 %v1397, %v1473
      %1475 = vdwg.mxu0
      %1476 = vmatprep.subr.mxu0 0.0
      %1477 = vmatpush1.msra.mxu0 %v1101
      %1478 = vmatprep.subr.mxu0 0.0
      %1479 = vmatpush1.msra.mxu0 %v1104
      %1480 = vmatprep.subr.mxu0 0.0
      %1481 = vmatpush1.msra.mxu0 %v1107
      %1482 = vmatprep.subr.mxu0 0.0
      %1483 = vmatpush1.msra.mxu0 %v1110
      %1484 = vmatprep.subr.mxu0 0.0
      %1485 = vmatpush1.msra.mxu0 %v1113
      %1486 = vmatprep.subr.mxu0 0.0
      %1487 = vmatpush1.msra.mxu0 %v1116
      %1488 = vmatprep.subr.mxu0 0.0
      %1489 = vmatpush1.msra.mxu0 %v1119
      %1490 = vmatprep.subr.mxu0 0.0
      %1491 = vmatpush1.msra.mxu0 %v1122
      %1492 = vmatprep.subr.mxu0 0.0
      %1493 = vmatpush1.msra.mxu0 %v1125
      %1494 = vmatprep.subr.mxu0 0.0
      %1495 = vmatpush1.msra.mxu0 %v1128
      %1496 = vmatprep.subr.mxu0 0.0
      %1497 = vmatpush1.msra.mxu0 %v1131
      %1498 = vmatprep.subr.mxu0 0.0
      %1499 = vmatpush1.msra.mxu0 %v1134
      %1500 = vmatprep.subr.mxu0 0.0
      %1501 = vmatpush1.msra.mxu0 %v1137
      %1502 = vmatprep.subr.mxu0 0.0
      %1503 = vmatpush1.msra.mxu0 %v1140
      %1504 = vmatprep.subr.mxu0 0.0
      %1505 = vmatpush1.msra.mxu0 %v1143
      %1506 = vmatprep.subr.mxu0 0.0
      %1507 = vmatpush1.msra.mxu0 %v1146
      %1508 = vmatprep.subr.mxu0 0.0
      %1509 = vmatpush1.msra.mxu0 %v1149
      %1510 = vmatprep.subr.mxu0 0.0
      %1511 = vmatpush1.msra.mxu0 %v1152
      %1512 = vmatprep.subr.mxu0 0.0
      %1513 = vmatpush1.msra.mxu0 %v1155
      %1514 = vmatprep.subr.mxu0 0.0
      %1515 = vmatpush1.msra.mxu0 %v1158
      %1516 = vmatprep.subr.mxu0 0.0
      %1517 = vmatpush1.msra.mxu0 %v1161
      %1518 = vmatprep.subr.mxu0 0.0
      %1519 = vmatpush1.msra.mxu0 %v1164
      %1520 = vmatprep.subr.mxu0 0.0
      %1521 = vmatpush1.msra.mxu0 %v1167
      %1522 = vmatprep.subr.mxu0 0.0
      %1523 = vmatpush1.msra.mxu0 %v1170
      %1524 = vmatprep.subr.mxu0 0.0
      %1525 = vmatpush1.msra.mxu0 %v1173
      %1526 = vmatprep.subr.mxu0 0.0
      %1527 = vmatpush1.msra.mxu0 %v1176
      %1528 = vmatprep.subr.mxu0 0.0
      %1529 = vmatpush1.msra.mxu0 %v1179
      %1530 = vmatprep.subr.mxu0 0.0
      %1531 = vmatpush1.msra.mxu0 %v1182
      %1532 = vmatprep.subr.mxu0 0.0
      %1533 = vmatpush1.msra.mxu0 %v1185
      %1534 = vmatprep.subr.mxu0 0.0
      %1535 = vmatpush1.msra.mxu0 %v1188
      %1536 = vmatprep.subr.mxu0 0.0
      %1537 = vmatpush1.msra.mxu0 %v1191
      %1538 = vmatprep.subr.mxu0 0.0
      %1539 = vmatpush1.msra.mxu0 %v1194
      %1540 = vmatprep.mubr.f32.mxu0 %v638
      %1541 = vmatmul.mubr.f32.gmra.mrb[0].mxu0 %v637
      %v1542 = vpop.f32.mrb[0].mxu0
      %v1543 = vadd.f32 %v802, %v1542
      %v1544 = vpop.f32.mrb[0].mxu0
      %1545 = vmatprep.mubr.f32.mxu0 %v641
      %1546 = vmatmul.mubr.f32.gmra.mrb[0].mxu0 %v640
      %v1547 = vpop.f32.mrb[0].mxu0
      %v1548 = vadd.f32 %v807, %v1547
      %v1549 = vpop.f32.mrb[0].mxu0
      %1550 = vdwg.mxu0
      %1551 = vmatprep.subr.mxu0 0.0
      %1552 = vmatpush1.msra.mxu0 %v1197
      %1553 = vmatprep.subr.mxu0 0.0
      %1554 = vmatpush1.msra.mxu0 %v1200
      %1555 = vmatprep.subr.mxu0 0.0
      %1556 = vmatpush1.msra.mxu0 %v1203
      %1557 = vmatprep.subr.mxu0 0.0
      %1558 = vmatpush1.msra.mxu0 %v1206
      %1559 = vmatprep.subr.mxu0 0.0
      %1560 = vmatpush1.msra.mxu0 0.0
      %1561 = vmatprep.subr.mxu0 0.0
      %1562 = vmatpush1.msra.mxu0 0.0
      %1563 = vmatprep.subr.mxu0 0.0
      %1564 = vmatpush1.msra.mxu0 0.0
      %1565 = vmatprep.subr.mxu0 0.0
      %1566 = vmatpush1.msra.mxu0 0.0
      %1567 = vmatprep.subr.mxu0 0.0
      %1568 = vmatpush1.msra.mxu0 0.0
      %1569 = vmatprep.subr.mxu0 0.0
      %1570 = vmatpush1.msra.mxu0 0.0
      %1571 = vmatprep.subr.mxu0 0.0
      %1572 = vmatpush1.msra.mxu0 0.0
      %1573 = vmatprep.subr.mxu0 0.0
      %1574 = vmatpush1.msra.mxu0 0.0
      %1575 = vmatprep.subr.mxu0 0.0
      %1576 = vmatpush1.msra.mxu0 0.0
      %1577 = vmatprep.subr.mxu0 0.0
      %1578 = vmatpush1.msra.mxu0 0.0
      %1579 = vmatprep.subr.mxu0 0.0
      %1580 = vmatpush1.msra.mxu0 0.0
      %1581 = vmatprep.subr.mxu0 0.0
      %1582 = vmatpush1.msra.mxu0 0.0
      %1583 = vmatprep.subr.mxu0 0.0
      %1584 = vmatpush1.msra.mxu0 0.0
      %1585 = vmatprep.subr.mxu0 0.0
      %1586 = vmatpush1.msra.mxu0 0.0
      %1587 = vmatprep.subr.mxu0 0.0
      %1588 = vmatpush1.msra.mxu0 0.0
      %1589 = vmatprep.subr.mxu0 0.0
      %1590 = vmatpush1.msra.mxu0 0.0
      %1591 = vmatprep.subr.mxu0 0.0
      %1592 = vmatpush1.msra.mxu0 0.0
      %1593 = vmatprep.subr.mxu0 0.0
      %1594 = vmatpush1.msra.mxu0 0.0
      %1595 = vmatprep.subr.mxu0 0.0
      %1596 = vmatpush1.msra.mxu0 0.0
      %1597 = vmatprep.subr.mxu0 0.0
      %1598 = vmatpush1.msra.mxu0 0.0
      %1599 = vmatprep.subr.mxu0 0.0
      %1600 = vmatpush1.msra.mxu0 0.0
      %1601 = vmatprep.subr.mxu0 0.0
      %1602 = vmatpush1.msra.mxu0 0.0
      %1603 = vmatprep.subr.mxu0 0.0
      %1604 = vmatpush1.msra.mxu0 0.0
      %1605 = vmatprep.subr.mxu0 0.0
      %1606 = vmatpush1.msra.mxu0 0.0
      %1607 = vmatprep.subr.mxu0 0.0
      %1608 = vmatpush1.msra.mxu0 0.0
      %1609 = vmatprep.subr.mxu0 0.0
      %1610 = vmatpush1.msra.mxu0 0.0
      %1611 = vmatprep.subr.mxu0 0.0
      %1612 = vmatpush1.msra.mxu0 0.0
      %1613 = vmatprep.subr.mxu0 0.0
      %1614 = vmatpush1.msra.mxu0 0.0
      %1615 = vmatprep.mubr.f32.mxu0 0.0
      %1616 = vmatmul.mubr.f32.gmra.mrb[0].mxu0 %v1317
      %v1617 = vpop.f32.mrb[0].mxu0
      %v1618 = vadd.f32 %v1543, %v1617
      %v1619 = vpop.f32.mrb[0].mxu0
      %1620 = vmatprep.mubr.f32.mxu0 0.0
      %1621 = vmatmul.mubr.f32.gmra.mrb[0].mxu0 %v1320
      %v1622 = vpop.f32.mrb[0].mxu0
      %v1623 = vadd.f32 %v1548, %v1622
      %v1624 = vpop.f32.mrb[0].mxu0
      %1625 = vdwg.mxu0
      %v1626 = vld [vmem:[%s4] sm:$0xff]
      %v1627 = vld [vmem:[%s4 + $0x8] sm:$0xff]
      %1629 = vset.pattern.permute.xlu0 0
      %1630 = vperm.xlu0 %1629, %v1626
      %v1631 = vpop.permute.xlu0 %1630
      %1634 = vset.pattern.permute.xlu0 0
      %1635 = vperm.xlu0 %1634, %v1627
      %v1636 = vpop.permute.xlu0 %1635
      %v1638 = vadd.f32 %v1466, %v1631
      %v1639 = vadd.f32 %v1468, %v1631
      %v1640 = vadd.f32 %v1618, %v1631
      %v1641 = vadd.f32 %v1472, %v1636
      %v1642 = vadd.f32 %v1474, %v1636
      %v1643 = vadd.f32 %v1623, %v1636
      %v1644 = vxor.u32 %v1638, 2147483648
      %v1645 = vxor.u32 %v1639, 2147483648
      %v1646 = vxor.u32 %v1640, 2147483648
      %v1647 = vxor.u32 %v1641, 2147483648
      %v1648 = vxor.u32 %v1642, 2147483648
      %v1649 = vxor.u32 %v1643, 2147483648
      %v1650 = vmul.f32 %v1644, 1.442695
      %v1651 = vpow.pop %v1650
      %v1652 = vmul.f32 %v1645, 1.442695
      %v1653 = vpow.pop %v1652
      %v1654 = vmul.f32 %v1646, 1.442695
      %v1655 = vpow.pop %v1654
      %v1656 = vmul.f32 %v1647, 1.442695
      %v1657 = vpow.pop %v1656
      %v1658 = vmul.f32 %v1648, 1.442695
      %v1659 = vpow.pop %v1658
      %v1660 = vmul.f32 %v1649, 1.442695
      %v1661 = vpow.pop %v1660
      %v1662 = vadd.f32 %v1651, 1.0
      %v1663 = vadd.f32 %v1653, 1.0
      %v1664 = vadd.f32 %v1655, 1.0
      %v1665 = vadd.f32 %v1657, 1.0
      %v1666 = vadd.f32 %v1659, 1.0
      %v1667 = vadd.f32 %v1661, 1.0
      %v1668 = vrcp.pop %v1662
      %v1669 = vmul.f32 1.0, %v1668
      %v1670 = vrcp.pop %v1663
      %v1671 = vmul.f32 1.0, %v1670
      %v1672 = vrcp.pop %v1664
      %v1673 = vmul.f32 1.0, %v1672
      %v1674 = vrcp.pop %v1665
      %v1675 = vmul.f32 1.0, %v1674
      %v1676 = vrcp.pop %v1666
      %v1677 = vmul.f32 1.0, %v1676
      %v1678 = vrcp.pop %v1667
      %v1679 = vmul.f32 1.0, %v1678
      %v1680 = vmul.f32 %v1638, %v1669
      %v1681 = vmul.f32 %v1639, %v1671
      %v1682 = vmul.f32 %v1640, %v1673
      %v1683 = vmul.f32 %v1641, %v1675
      %v1684 = vmul.f32 %v1642, %v1677
      %v1685 = vmul.f32 %v1643, %v1679
      %1686 = vst [vmem:[%s244] sm:$0xff] %v1680
      %1687 = vst [vmem:[%s244 + $0x8] sm:$0xff] %v1681
      %1688 = vst [vmem:[%s244 + $0x10] sm:$0xff] %v1682
      %1689 = vst [vmem:[%s244 + $0x18] sm:$0xff] %v1683
      %1690 = vst [vmem:[%s244 + $0x20] sm:$0xff] %v1684
      %1691 = vst [vmem:[%s244 + $0x28] sm:$0xff] %v1685
      %p1692 = scmp.lt.s32.totalorder %s16, 1
      %s1693 = scalar_select %p1692, %s16, 1
      %s1694 = smul.addr %s1693, 6
      %s1695 = smul.addr %s1694, 8
      %s1696 = scalar_lea.vmem %s5, %s1695
      // Predicated region
      $region41: #{_decode.5} parent=39 // pred_check
        %p1697 = pneg %p149
      $region42: #{_decode.5} parent=39 // pred_check_branch
        %1699 = sbr.rel (%p1697) target = $region44
      $region43: #{_decode.5} parent=39 // pred_region
        _
      $region44: #{_decode.5} parent=39 // pred_fallthru
        _
    $region40: #{_decode.5} parent=5 // pred_fallthru
      _
    %p1700 = scmp.le.s32.totalorder 2, %s11
    // Predicated region
    $region45: #{_decode.5} parent=5 // pred_check
      %p1701 = pneg %p1700
    $region46: #{_decode.5} parent=5 // pred_check_branch
      %1703 = sbr.rel (%p1701) target = $region48
    $region47: #{_decode.5} parent=5 // pred_region
      %s1704 = ssub.s32 %s11, 2
      // Predicated region
      $region49: #{_decode.5} parent=47 // pred_check
        %p1705 = pneg %p155
      $region50: #{_decode.5} parent=47 // pred_check_branch
        %1707 = sbr.rel (%p1705) target = $region52
      $region51: #{_decode.5} parent=47 // pred_region
        %p1708 = scmp.lt.s32.totalorder %s17, 1
        %s1709 = scalar_select %p1708, %s17, 1
        %s1710 = smul.addr %s1709, 6
        %s1711 = smul.addr %s1710, 8
        %s1712 = scalar_lea.vmem %s5, %s1711
      $region52: #{_decode.5} parent=47 // pred_fallthru
        _
    $region48: #{_decode.5} parent=5 // pred_fallthru
      _
  $region6: #{_decode.5} parent=0 // loop_footer
    %s15 = sadd.s32 1, %s11
  $region7: #{_decode.5} parent=0 // loop_footer_branch
    %10 = sbr.rel target = $region3
  $region8: #{_decode.5} parent=0 // loop_exit
    _

// kernel: _decode.6
$region0: #{_decode.6}
  #allocation0 [shape = 'u32[]', space=smem, size = 0x4, offset = 0x4, fixed_abs, tag = 'smem constant byte address 0x4 - core index']
  #allocation1 [shape = 'u32[144,128]{1,0:T(1,128)}', space=vmem, size = 0x12000, scoped, tag = 'internal scratch']
  %s0 = inlined_call_operand.vmem [shape: f32[2,16,1296], index: 0, kind: input, shape index: {}]
  %s1 = inlined_call_operand.vmem [shape: f32[2,8,1152], index: 1, kind: input, shape index: {}]
  %s2 = inlined_call_operand.vmem [shape: f32[16,144], index: 2, kind: input, shape index: {}]
  %s3 = inlined_call_operand.vmem [shape: f32[16,8], index: 3, kind: input, shape index: {}]
  %s4 = inlined_call_operand.vmem [shape: f32[16,1], index: 4, kind: input, shape index: {}]
  %s5 = inlined_call_operand.vmem [shape: f32[2,16,1152], index: 5, kind: output, shape index: {}]
  %s6 = sld [smem:[#allocation0]]
  $region53: #{_decode.6} parent=0
    _
  %s8 = ssub.s32 1, %s6
  %s9 = scalar_select 0, %s8, %s6
  loop: start=0, step=1, limit=4
  $region2: #{_decode.6} parent=0 // loop_pre_header
    _
  $region3: #{_decode.6} parent=0 // loop_header
    %s11 = sphi 0, %s15
    %p12 = scmp.ge.s32.totalorder %s11, 4
    %s21 = sphi 0, %s23
    %s24 = sphi 0, %s21
    %s25 = sphi 0, %s24
    %s41 = sphi 0, %s25
    %s47 = sphi 0, %s49
    %s50 = sphi 0, %s47
    %s51 = sphi 0, %s50
    %s67 = sphi 0, %s51
    %s71 = sphi 0, %s71
    %s73 = sphi 0, %s71
    %s74 = sphi 0, %s73
    %s88 = sphi 0, %s74
    %s92 = sphi 0, %s92
    %s94 = sphi 0, %s92
    %s95 = sphi 0, %s94
    %s109 = sphi 0, %s95
    %s113 = sphi 0, %s113
    %s115 = sphi 0, %s113
    %s116 = sphi 0, %s115
    %s130 = sphi 0, %s116
    %s136 = sphi 0, %s138
    %s139 = sphi 0, %s136
    %s140 = sphi 0, %s139
    %s156 = sphi 0, %s140
  $region4: #{_decode.6} parent=0 // loop_header_branch
    %14 = sbr.rel (%p12) target = $region8
  $region5: #{_decode.6} parent=0 // loop_body
    %s16 = ssub.s32 %s11, 1
    %s17 = ssub.s32 %s11, 2
    %s18 = sadd.s32 %s11, 1
    %s19 = ssub.s32 %s11, %s18
    %p20 = scmp.eq.s32.totalorder %s19, 0
    %s22 = sadd.s32 %s21, 1
    %s23 = scalar_select %p20, %s21, %s22
    %p26 = pneg %p20
    %p27 = scmp.eq.s32.totalorder %s11, 1
    %p28 = por %p26, %p27
    %p29 = scmp.ne.s32.totalorder %s21, %s24
    %p30 = scmp.eq.s32.totalorder %s11, 0
    %p31 = por %p29, %p30
    %p32 = scmp.ne.s32.totalorder %s21, %s24
    %p33 = scmp.eq.s32.totalorder %s16, 1
    %p34 = por %p32, %p33
    %p35 = scmp.ne.s32.totalorder %s24, %s25
    %p36 = scmp.eq.s32.totalorder %s16, 0
    %p37 = por %p35, %p36
    %p38 = scmp.ne.s32.totalorder %s24, %s25
    %p39 = scmp.eq.s32.totalorder %s17, 1
    %p40 = por %p38, %p39
    %p42 = scmp.ne.s32.totalorder %s25, %s41
    %p43 = scmp.eq.s32.totalorder %s17, 0
    %p44 = por %p42, %p43
    %s45 = ssub.s32 %s11, %s18
    %p46 = scmp.eq.s32.totalorder %s45, 0
    %s48 = sadd.s32 %s47, 1
    %s49 = scalar_select %p46, %s47, %s48
    %p52 = pneg %p46
    %p53 = scmp.eq.s32.totalorder %s11, 1
    %p54 = por %p52, %p53
    %p55 = scmp.ne.s32.totalorder %s47, %s50
    %p56 = scmp.eq.s32.totalorder %s11, 0
    %p57 = por %p55, %p56
    %p58 = scmp.ne.s32.totalorder %s47, %s50
    %p59 = scmp.eq.s32.totalorder %s16, 1
    %p60 = por %p58, %p59
    %p61 = scmp.ne.s32.totalorder %s50, %s51
    %p62 = scmp.eq.s32.totalorder %s16, 0
    %p63 = por %p61, %p62
    %p64 = scmp.ne.s32.totalorder %s50, %s51
    %p65 = scmp.eq.s32.totalorder %s17, 1
    %p66 = por %p64, %p65
    %p68 = scmp.ne.s32.totalorder %s51, %s67
    %p69 = scmp.eq.s32.totalorder %s17, 0
    %p70 = por %p68, %p69
    %s72 = sadd.s32 %s71, 1
    %p75 = scmp.eq.s32.totalorder %s11, 1
    %p76 = scmp.ne.s32.totalorder %s71, %s73
    %p77 = scmp.eq.s32.totalorder %s11, 0
    %p78 = por %p76, %p77
    %p79 = scmp.ne.s32.totalorder %s71, %s73
    %p80 = scmp.eq.s32.totalorder %s16, 1
    %p81 = por %p79, %p80
    %p82 = scmp.ne.s32.totalorder %s73, %s74
    %p83 = scmp.eq.s32.totalorder %s16, 0
    %p84 = por %p82, %p83
    %p85 = scmp.ne.s32.totalorder %s73, %s74
    %p86 = scmp.eq.s32.totalorder %s17, 1
    %p87 = por %p85, %p86
    %p89 = scmp.ne.s32.totalorder %s74, %s88
    %p90 = scmp.eq.s32.totalorder %s17, 0
    %p91 = por %p89, %p90
    %s93 = sadd.s32 %s92, 1
    %p96 = scmp.eq.s32.totalorder %s11, 1
    %p97 = scmp.ne.s32.totalorder %s92, %s94
    %p98 = scmp.eq.s32.totalorder %s11, 0
    %p99 = por %p97, %p98
    %p100 = scmp.ne.s32.totalorder %s92, %s94
    %p101 = scmp.eq.s32.totalorder %s16, 1
    %p102 = por %p100, %p101
    %p103 = scmp.ne.s32.totalorder %s94, %s95
    %p104 = scmp.eq.s32.totalorder %s16, 0
    %p105 = por %p103, %p104
    %p106 = scmp.ne.s32.totalorder %s94, %s95
    %p107 = scmp.eq.s32.totalorder %s17, 1
    %p108 = por %p106, %p107
    %p110 = scmp.ne.s32.totalorder %s95, %s109
    %p111 = scmp.eq.s32.totalorder %s17, 0
    %p112 = por %p110, %p111
    %s114 = sadd.s32 %s113, 1
    %p117 = scmp.eq.s32.totalorder %s11, 1
    %p118 = scmp.ne.s32.totalorder %s113, %s115
    %p119 = scmp.eq.s32.totalorder %s11, 0
    %p120 = por %p118, %p119
    %p121 = scmp.ne.s32.totalorder %s113, %s115
    %p122 = scmp.eq.s32.totalorder %s16, 1
    %p123 = por %p121, %p122
    %p124 = scmp.ne.s32.totalorder %s115, %s116
    %p125 = scmp.eq.s32.totalorder %s16, 0
    %p126 = por %p124, %p125
    %p127 = scmp.ne.s32.totalorder %s115, %s116
    %p128 = scmp.eq.s32.totalorder %s17, 1
    %p129 = por %p127, %p128
    %p131 = scmp.ne.s32.totalorder %s116, %s130
    %p132 = scmp.eq.s32.totalorder %s17, 0
    %p133 = por %p131, %p132
    %s134 = ssub.s32 %s11, %s18
    %p135 = scmp.eq.s32.totalorder %s134, 0
    %s137 = sadd.s32 %s136, 1
    %s138 = scalar_select %p135, %s136, %s137
    %p141 = pneg %p135
    %p142 = scmp.eq.s32.totalorder %s11, 1
    %p143 = por %p141, %p142
    %p144 = scmp.ne.s32.totalorder %s136, %s139
    %p145 = scmp.eq.s32.totalorder %s11, 0
    %p146 = por %p144, %p145
    %p147 = scmp.ne.s32.totalorder %s136, %s139
    %p148 = scmp.eq.s32.totalorder %s16, 1
    %p149 = por %p147, %p148
    %p150 = scmp.ne.s32.totalorder %s139, %s140
    %p151 = scmp.eq.s32.totalorder %s16, 0
    %p152 = por %p150, %p151
    %p153 = scmp.ne.s32.totalorder %s139, %s140
    %p154 = scmp.eq.s32.totalorder %s17, 1
    %p155 = por %p153, %p154
    %p157 = scmp.ne.s32.totalorder %s140, %s156
    %p158 = scmp.eq.s32.totalorder %s17, 0
    %p159 = por %p157, %p158
    %p160 = scmp.le.s32.totalorder 1, %s11
    %p161 = scmp.lt.s32.totalorder %s11, 3
    %p162 = pnand %p160, %p161
    %p163 = pneg %p162
    // Predicated region
    $region9: #{_decode.6} parent=5 // pred_check
      _
    $region10: #{_decode.6} parent=5 // pred_check_branch
      %165 = sbr.rel (%p162) target = $region12
    $region11: #{_decode.6} parent=5 // pred_region
      %s166 = ssub.s32 %s11, 1
      // Predicated region
      $region13: #{_decode.6} parent=11 // pred_check
        %p167 = pneg %p84
      $region14: #{_decode.6} parent=11 // pred_check_branch
        %169 = sbr.rel (%p167) target = $region16
      $region15: #{_decode.6} parent=11 // pred_region
        _
      $region16: #{_decode.6} parent=11 // pred_fallthru
        _
      // Predicated region
      $region17: #{_decode.6} parent=11 // pred_check
        %p170 = pneg %p105
      $region18: #{_decode.6} parent=11 // pred_check_branch
        %172 = sbr.rel (%p170) target = $region20
      $region19: #{_decode.6} parent=11 // pred_region
        _
      $region20: #{_decode.6} parent=11 // pred_fallthru
        _
      // Predicated region
      $region21: #{_decode.6} parent=11 // pred_check
        %p173 = pneg %p126
      $region22: #{_decode.6} parent=11 // pred_check_branch
        %175 = sbr.rel (%p173) target = $region24
      $region23: #{_decode.6} parent=11 // pred_region
        _
      $region24: #{_decode.6} parent=11 // pred_fallthru
        _
    $region12: #{_decode.6} parent=5 // pred_fallthru
      _
    %p176 = scmp.lt.s32.totalorder %s11, 2
    // Predicated region
    $region25: #{_decode.6} parent=5 // pred_check
      %p177 = pneg %p176
    $region26: #{_decode.6} parent=5 // pred_check_branch
      %179 = sbr.rel (%p177) target = $region28
    $region27: #{_decode.6} parent=5 // pred_region
      // Predicated region
      $region29: #{_decode.6} parent=27 // pred_check
        %p180 = pneg %p31
      $region30: #{_decode.6} parent=27 // pred_check_branch
        %182 = sbr.rel (%p180) target = $region32
      $region31: #{_decode.6} parent=27 // pred_region
        %p183 = scmp.lt.s32.totalorder %s11, 1
        %s184 = scalar_select %p183, %s11, 1
        %s185 = smul.addr %s184, 22
        %s186 = smul.addr %s185, 8
        %s187 = scalar_lea.vmem %s0, %s186
      $region32: #{_decode.6} parent=27 // pred_fallthru
        _
      // Predicated region
      $region33: #{_decode.6} parent=27 // pred_check
        %p188 = pneg %p57
      $region34: #{_decode.6} parent=27 // pred_check_branch
        %190 = sbr.rel (%p188) target = $region36
      $region35: #{_decode.6} parent=27 // pred_region
        %p191 = scmp.lt.s32.totalorder %s11, 1
        %s192 = scalar_select %p191, %s11, 1
        %s193 = smul.addr %s192, 9
        %s194 = smul.addr %s193, 8
        %s195 = scalar_lea.vmem %s1, %s194
      $region36: #{_decode.6} parent=27 // pred_fallthru
        _
    $region28: #{_decode.6} parent=5 // pred_fallthru
      _
    %p196 = scmp.le.s32.totalorder 1, %s11
    %p197 = scmp.lt.s32.totalorder %s11, 3
    %p198 = pnand %p196, %p197
    %p199 = pneg %p198
    // Predicated region
    $region37: #{_decode.6} parent=5 // pred_check
      _
    $region38: #{_decode.6} parent=5 // pred_check_branch
      %201 = sbr.rel (%p198) target = $region40
    $region39: #{_decode.6} parent=5 // pred_region
      %s202 = ssub.s32 %s11, 1
      %p203 = scmp.lt.s32.totalorder %s16, 1
      %s204 = scalar_select %p203, %s16, 1
      %s205 = smul.addr %s204, 22
      %s206 = smul.addr %s205, 8
      %s207 = scalar_lea.vmem %s0, %s206
      %p208 = pneg %p37
      %p209 = pneg %p34
      %p210 = scmp.lt.s32.totalorder %s16, 1
      %s211 = scalar_select %p210, %s16, 1
      %s212 = smul.addr %s211, 9
      %s213 = smul.addr %s212, 8
      %s214 = scalar_lea.vmem %s1, %s213
      %p215 = pneg %p63
      %p216 = pneg %p60
      %p217 = pneg %p84
      %p218 = pneg %p81
      %p219 = pneg %p105
      %p220 = pneg %p102
      %p221 = pneg %p126
      %p222 = pneg %p123
      %p223 = pneg %p152
      %p224 = pneg %p149
      %p225 = scmp.lt.s32.totalorder %s16, 1
      %s226 = scalar_select %p225, %s16, 1
      %s227 = smul.addr %s226, 18
      %s228 = smul.addr %s227, 8
      %s229 = scalar_lea.vmem %s5, %s228
      %p230 = scmp.lt.s32.totalorder %s16, 1
      %s231 = scalar_select %p230, %s16, 1
      %s232 = smul.addr %s231, 22
      %s233 = smul.addr %s232, 8
      %s234 = scalar_lea.vmem %s0, %s233
      %p235 = scmp.lt.s32.totalorder %s16, 1
      %s236 = scalar_select %p235, %s16, 1
      %s237 = smul.addr %s236, 9
      %s238 = smul.addr %s237, 8
      %s239 = scalar_lea.vmem %s1, %s238
      %p240 = scmp.lt.s32.totalorder %s16, 1
      %s241 = scalar_select %p240, %s16, 1
      %s242 = smul.addr %s241, 18
      %s243 = smul.addr %s242, 8
      %s244 = scalar_lea.vmem %s5, %s243
      %v245 = vld [vmem:[%s234] sm:$0xff]
      %v246 = vld [vmem:[%s234 + $0x8] sm:$0xff]
      %v247 = vld [vmem:[%s234 + $0x10] sm:$0xff]
      %v248 = vld [vmem:[%s234 + $0x18] sm:$0xff]
      %v249 = vld [vmem:[%s234 + $0x20] sm:$0xff]
      %v250 = vld [vmem:[%s234 + $0x28] sm:$0xff]
      %v251 = vld [vmem:[%s234 + $0x30] sm:$0xff]
      %v252 = vld [vmem:[%s234 + $0x38] sm:$0xff]
      %v253 = vld [vmem:[%s234 + $0x40] sm:$0xff]
      %v254 = vld [vmem:[%s234 + $0x48] sm:$0xff]
      %v255 = vld [vmem:[%s234 + $0x58] sm:$0xff]
      %v256 = vld [vmem:[%s234 + $0x60] sm:$0xff]
      %v257 = vld [vmem:[%s234 + $0x68] sm:$0xff]
      %v258 = vld [vmem:[%s234 + $0x70] sm:$0xff]
      %v259 = vld [vmem:[%s234 + $0x78] sm:$0xff]
      %v260 = vld [vmem:[%s234 + $0x80] sm:$0xff]
      %v261 = vld [vmem:[%s234 + $0x88] sm:$0xff]
      %v262 = vld [vmem:[%s234 + $0x90] sm:$0xff]
      %v263 = vld [vmem:[%s234 + $0x98] sm:$0xff]
      %v264 = vld [vmem:[%s234 + $0xa0] sm:$0xff]
      %285 = vrot.lane.b32.xlu0 %v245, 127
      %v286 = vpop.permute.xlu0 %285
      %287 = vrot.lane.b32.xlu0 %v246, 127
      %v288 = vpop.permute.xlu0 %287
      %289 = vrot.lane.b32.xlu0 %v247, 127
      %v290 = vpop.permute.xlu0 %289
      %291 = vrot.lane.b32.xlu0 %v248, 127
      %v292 = vpop.permute.xlu0 %291
      %293 = vrot.lane.b32.xlu0 %v249, 127
      %v294 = vpop.permute.xlu0 %293
      %295 = vrot.lane.b32.xlu0 %v250, 127
      %v296 = vpop.permute.xlu0 %295
      %297 = vrot.lane.b32.xlu0 %v251, 127
      %v298 = vpop.permute.xlu0 %297
      %299 = vrot.lane.b32.xlu0 %v252, 127
      %v300 = vpop.permute.xlu0 %299
      %301 = vrot.lane.b32.xlu0 %v253, 127
      %v302 = vpop.permute.xlu0 %301
      %303 = vrot.lane.b32.xlu0 %v254, 127
      %v304 = vpop.permute.xlu0 %303
      %305 = vrot.lane.b32.xlu0 %v255, 127
      %v306 = vpop.permute.xlu0 %305
      %307 = vrot.lane.b32.xlu0 %v256, 127
      %v308 = vpop.permute.xlu0 %307
      %309 = vrot.lane.b32.xlu0 %v257, 127
      %v310 = vpop.permute.xlu0 %309
      %311 = vrot.lane.b32.xlu0 %v258, 127
      %v312 = vpop.permute.xlu0 %311
      %313 = vrot.lane.b32.xlu0 %v259, 127
      %v314 = vpop.permute.xlu0 %313
      %315 = vrot.lane.b32.xlu0 %v260, 127
      %v316 = vpop.permute.xlu0 %315
      %317 = vrot.lane.b32.xlu0 %v261, 127
      %v318 = vpop.permute.xlu0 %317
      %319 = vrot.lane.b32.xlu0 %v262, 127
      %v320 = vpop.permute.xlu0 %319
      %321 = vrot.lane.b32.xlu0 %v263, 127
      %v322 = vpop.permute.xlu0 %321
      %323 = vrot.lane.b32.xlu0 %v264, 127
      %v324 = vpop.permute.xlu0 %323
      %vm325 = vcmask 1039360
      %v326 = vsel %vm325, %v286, %v288
      %v327 = vsel %vm325, %v288, %v290
      %v328 = vsel %vm325, %v290, %v292
      %v329 = vsel %vm325, %v292, %v294
      %v330 = vsel %vm325, %v294, %v296
      %v331 = vsel %vm325, %v296, %v298
      %v332 = vsel %vm325, %v298, %v300
      %v333 = vsel %vm325, %v300, %v302
      %v334 = vsel %vm325, %v302, %v304
      %v335 = vsel %vm325, %v306, %v308
      %v336 = vsel %vm325, %v308, %v310
      %v337 = vsel %vm325, %v310, %v312
      %v338 = vsel %vm325, %v312, %v314
      %v339 = vsel %vm325, %v314, %v316
      %v340 = vsel %vm325, %v316, %v318
      %v341 = vsel %vm325, %v318, %v320
      %v342 = vsel %vm325, %v320, %v322
      %v343 = vsel %vm325, %v322, %v324
      %344 = vrot.lane.b32.xlu0 %v245, 126
      %v345 = vpop.permute.xlu0 %344
      %346 = vrot.lane.b32.xlu0 %v246, 126
      %v347 = vpop.permute.xlu0 %346
      %348 = vrot.lane.b32.xlu0 %v247, 126
      %v349 = vpop.permute.xlu0 %348
      %350 = vrot.lane.b32.xlu0 %v248, 126
      %v351 = vpop.permute.xlu0 %350
      %352 = vrot.lane.b32.xlu0 %v249, 126
      %v353 = vpop.permute.xlu0 %352
      %354 = vrot.lane.b32.xlu0 %v250, 126
      %v355 = vpop.permute.xlu0 %354
      %356 = vrot.lane.b32.xlu0 %v251, 126
      %v357 = vpop.permute.xlu0 %356
      %358 = vrot.lane.b32.xlu0 %v252, 126
      %v359 = vpop.permute.xlu0 %358
      %360 = vrot.lane.b32.xlu0 %v253, 126
      %v361 = vpop.permute.xlu0 %360
      %362 = vrot.lane.b32.xlu0 %v254, 126
      %v363 = vpop.permute.xlu0 %362
      %364 = vrot.lane.b32.xlu0 %v255, 126
      %v365 = vpop.permute.xlu0 %364
      %366 = vrot.lane.b32.xlu0 %v256, 126
      %v367 = vpop.permute.xlu0 %366
      %368 = vrot.lane.b32.xlu0 %v257, 126
      %v369 = vpop.permute.xlu0 %368
      %370 = vrot.lane.b32.xlu0 %v258, 126
      %v371 = vpop.permute.xlu0 %370
      %372 = vrot.lane.b32.xlu0 %v259, 126
      %v373 = vpop.permute.xlu0 %372
      %374 = vrot.lane.b32.xlu0 %v260, 126
      %v375 = vpop.permute.xlu0 %374
      %376 = vrot.lane.b32.xlu0 %v261, 126
      %v377 = vpop.permute.xlu0 %376
      %378 = vrot.lane.b32.xlu0 %v262, 126
      %v379 = vpop.permute.xlu0 %378
      %380 = vrot.lane.b32.xlu0 %v263, 126
      %v381 = vpop.permute.xlu0 %380
      %382 = vrot.lane.b32.xlu0 %v264, 126
      %v383 = vpop.permute.xlu0 %382
      %vm384 = vcmask 1031168
      %v385 = vsel %vm384, %v345, %v347
      %v386 = vsel %vm384, %v347, %v349
      %v387 = vsel %vm384, %v349, %v351
      %v388 = vsel %vm384, %v351, %v353
      %v389 = vsel %vm384, %v353, %v355
      %v390 = vsel %vm384, %v355, %v357
      %v391 = vsel %vm384, %v357, %v359
      %v392 = vsel %vm384, %v359, %v361
      %v393 = vsel %vm384, %v361, %v363
      %v394 = vsel %vm384, %v365, %v367
      %v395 = vsel %vm384, %v367, %v369
      %v396 = vsel %vm384, %v369, %v371
      %v397 = vsel %vm384, %v371, %v373
      %v398 = vsel %vm384, %v373, %v375
      %v399 = vsel %vm384, %v375, %v377
      %v400 = vsel %vm384, %v377, %v379
      %v401 = vsel %vm384, %v379, %v381
      %v402 = vsel %vm384, %v381, %v383
      %403 = vrot.lane.b32.xlu0 %v245, 92
      %v404 = vpop.permute.xlu0 %403
      %405 = vrot.lane.b32.xlu0 %v246, 92
      %v406 = vpop.permute.xlu0 %405
      %407 = vrot.lane.b32.xlu0 %v247, 92
      %v408 = vpop.permute.xlu0 %407
      %409 = vrot.lane.b32.xlu0 %v248, 92
      %v410 = vpop.permute.xlu0 %409
      %411 = vrot.lane.b32.xlu0 %v249, 92
      %v412 = vpop.permute.xlu0 %411
      %413 = vrot.lane.b32.xlu0 %v250, 92
      %v414 = vpop.permute.xlu0 %413
      %415 = vrot.lane.b32.xlu0 %v251, 92
      %v416 = vpop.permute.xlu0 %415
      %417 = vrot.lane.b32.xlu0 %v252, 92
      %v418 = vpop.permute.xlu0 %417
      %419 = vrot.lane.b32.xlu0 %v253, 92
      %v420 = vpop.permute.xlu0 %419
      %421 = vrot.lane.b32.xlu0 %v254, 92
      %v422 = vpop.permute.xlu0 %421
      %423 = vrot.lane.b32.xlu0 %v255, 92
      %v424 = vpop.permute.xlu0 %423
      %425 = vrot.lane.b32.xlu0 %v256, 92
      %v426 = vpop.permute.xlu0 %425
      %427 = vrot.lane.b32.xlu0 %v257, 92
      %v428 = vpop.permute.xlu0 %427
      %429 = vrot.lane.b32.xlu0 %v258, 92
      %v430 = vpop.permute.xlu0 %429
      %431 = vrot.lane.b32.xlu0 %v259, 92
      %v432 = vpop.permute.xlu0 %431
      %433 = vrot.lane.b32.xlu0 %v260, 92
      %v434 = vpop.permute.xlu0 %433
      %435 = vrot.lane.b32.xlu0 %v261, 92
      %v436 = vpop.permute.xlu0 %435
      %437 = vrot.lane.b32.xlu0 %v262, 92
      %v438 = vpop.permute.xlu0 %437
      %439 = vrot.lane.b32.xlu0 %v263, 92
      %v440 = vpop.permute.xlu0 %439
      %441 = vrot.lane.b32.xlu0 %v264, 92
      %v442 = vpop.permute.xlu0 %441
      %vm443 = vcmask 752640
      %v444 = vsel %vm443, %v404, %v406
      %v445 = vsel %vm443, %v406, %v408
      %v446 = vsel %vm443, %v408, %v410
      %v447 = vsel %vm443, %v410, %v412
      %v448 = vsel %vm443, %v412, %v414
      %v449 = vsel %vm443, %v414, %v416
      %v450 = vsel %vm443, %v416, %v418
      %v451 = vsel %vm443, %v418, %v420
      %v452 = vsel %vm443, %v420, %v422
      %v453 = vsel %vm443, %v424, %v426
      %v454 = vsel %vm443, %v426, %v428
      %v455 = vsel %vm443, %v428, %v430
      %v456 = vsel %vm443, %v430, %v432
      %v457 = vsel %vm443, %v432, %v434
      %v458 = vsel %vm443, %v434, %v436
      %v459 = vsel %vm443, %v436, %v438
      %v460 = vsel %vm443, %v438, %v440
      %v461 = vsel %vm443, %v440, %v442
      %462 = vrot.lane.b32.xlu0 %v245, 91
      %v463 = vpop.permute.xlu0 %462
      %464 = vrot.lane.b32.xlu0 %v246, 91
      %v465 = vpop.permute.xlu0 %464
      %466 = vrot.lane.b32.xlu0 %v247, 91
      %v467 = vpop.permute.xlu0 %466
      %468 = vrot.lane.b32.xlu0 %v248, 91
      %v469 = vpop.permute.xlu0 %468
      %470 = vrot.lane.b32.xlu0 %v249, 91
      %v471 = vpop.permute.xlu0 %470
      %472 = vrot.lane.b32.xlu0 %v250, 91
      %v473 = vpop.permute.xlu0 %472
      %474 = vrot.lane.b32.xlu0 %v251, 91
      %v475 = vpop.permute.xlu0 %474
      %476 = vrot.lane.b32.xlu0 %v252, 91
      %v477 = vpop.permute.xlu0 %476
      %478 = vrot.lane.b32.xlu0 %v253, 91
      %v479 = vpop.permute.xlu0 %478
      %480 = vrot.lane.b32.xlu0 %v254, 91
      %v481 = vpop.permute.xlu0 %480
      %482 = vrot.lane.b32.xlu0 %v255, 91
      %v483 = vpop.permute.xlu0 %482
      %484 = vrot.lane.b32.xlu0 %v256, 91
      %v485 = vpop.permute.xlu0 %484
      %486 = vrot.lane.b32.xlu0 %v257, 91
      %v487 = vpop.permute.xlu0 %486
      %488 = vrot.lane.b32.xlu0 %v258, 91
      %v489 = vpop.permute.xlu0 %488
      %490 = vrot.lane.b32.xlu0 %v259, 91
      %v491 = vpop.permute.xlu0 %490
      %492 = vrot.lane.b32.xlu0 %v260, 91
      %v493 = vpop.permute.xlu0 %492
      %494 = vrot.lane.b32.xlu0 %v261, 91
      %v495 = vpop.permute.xlu0 %494
      %496 = vrot.lane.b32.xlu0 %v262, 91
      %v497 = vpop.permute.xlu0 %496
      %498 = vrot.lane.b32.xlu0 %v263, 91
      %v499 = vpop.permute.xlu0 %498
      %500 = vrot.lane.b32.xlu0 %v264, 91
      %v501 = vpop.permute.xlu0 %500
      %vm502 = vcmask 744448
      %v503 = vsel %vm502, %v463, %v465
      %v504 = vsel %vm502, %v465, %v467
      %v505 = vsel %vm502, %v467, %v469
      %v506 = vsel %vm502, %v469, %v471
      %v507 = vsel %vm502, %v471, %v473
      %v508 = vsel %vm502, %v473, %v475
      %v509 = vsel %vm502, %v475, %v477
      %v510 = vsel %vm502, %v477, %v479
      %v511 = vsel %vm502, %v479, %v481
      %v512 = vsel %vm502, %v483, %v485
      %v513 = vsel %vm502, %v485, %v487
      %v514 = vsel %vm502, %v487, %v489
      %v515 = vsel %vm502, %v489, %v491
      %v516 = vsel %vm502, %v491, %v493
      %v517 = vsel %vm502, %v493, %v495
      %v518 = vsel %vm502, %v495, %v497
      %v519 = vsel %vm502, %v497, %v499
      %v520 = vsel %vm502, %v499, %v501
      %521 = vrot.lane.b32.xlu0 %v245, 90
      %v522 = vpop.permute.xlu0 %521
      %523 = vrot.lane.b32.xlu0 %v246, 90
      %v524 = vpop.permute.xlu0 %523
      %525 = vrot.lane.b32.xlu0 %v247, 90
      %v526 = vpop.permute.xlu0 %525
      %527 = vrot.lane.b32.xlu0 %v248, 90
      %v528 = vpop.permute.xlu0 %527
      %529 = vrot.lane.b32.xlu0 %v249, 90
      %v530 = vpop.permute.xlu0 %529
      %531 = vrot.lane.b32.xlu0 %v250, 90
      %v532 = vpop.permute.xlu0 %531
      %533 = vrot.lane.b32.xlu0 %v251, 90
      %v534 = vpop.permute.xlu0 %533
      %535 = vrot.lane.b32.xlu0 %v252, 90
      %v536 = vpop.permute.xlu0 %535
      %537 = vrot.lane.b32.xlu0 %v253, 90
      %v538 = vpop.permute.xlu0 %537
      %539 = vrot.lane.b32.xlu0 %v254, 90
      %v540 = vpop.permute.xlu0 %539
      %541 = vrot.lane.b32.xlu0 %v255, 90
      %v542 = vpop.permute.xlu0 %541
      %543 = vrot.lane.b32.xlu0 %v256, 90
      %v544 = vpop.permute.xlu0 %543
      %545 = vrot.lane.b32.xlu0 %v257, 90
      %v546 = vpop.permute.xlu0 %545
      %547 = vrot.lane.b32.xlu0 %v258, 90
      %v548 = vpop.permute.xlu0 %547
      %549 = vrot.lane.b32.xlu0 %v259, 90
      %v550 = vpop.permute.xlu0 %549
      %551 = vrot.lane.b32.xlu0 %v260, 90
      %v552 = vpop.permute.xlu0 %551
      %553 = vrot.lane.b32.xlu0 %v261, 90
      %v554 = vpop.permute.xlu0 %553
      %555 = vrot.lane.b32.xlu0 %v262, 90
      %v556 = vpop.permute.xlu0 %555
      %557 = vrot.lane.b32.xlu0 %v263, 90
      %v558 = vpop.permute.xlu0 %557
      %559 = vrot.lane.b32.xlu0 %v264, 90
      %v560 = vpop.permute.xlu0 %559
      %vm561 = vcmask 736256
      %v562 = vsel %vm561, %v522, %v524
      %v563 = vsel %vm561, %v524, %v526
      %v564 = vsel %vm561, %v526, %v528
      %v565 = vsel %vm561, %v528, %v530
      %v566 = vsel %vm561, %v530, %v532
      %v567 = vsel %vm561, %v532, %v534
      %v568 = vsel %vm561, %v534, %v536
      %v569 = vsel %vm561, %v536, %v538
      %v570 = vsel %vm561, %v538, %v540
      %v571 = vsel %vm561, %v542, %v544
      %v572 = vsel %vm561, %v544, %v546
      %v573 = vsel %vm561, %v546, %v548
      %v574 = vsel %vm561, %v548, %v550
      %v575 = vsel %vm561, %v550, %v552
      %v576 = vsel %vm561, %v552, %v554
      %v577 = vsel %vm561, %v554, %v556
      %v578 = vsel %vm561, %v556, %v558
      %v579 = vsel %vm561, %v558, %v560
      %580 = vrot.lane.b32.xlu0 %v245, 56
      %v581 = vpop.permute.xlu0 %580
      %582 = vrot.lane.b32.xlu0 %v246, 56
      %v583 = vpop.permute.xlu0 %582
      %584 = vrot.lane.b32.xlu0 %v247, 56
      %v585 = vpop.permute.xlu0 %584
      %586 = vrot.lane.b32.xlu0 %v248, 56
      %v587 = vpop.permute.xlu0 %586
      %588 = vrot.lane.b32.xlu0 %v249, 56
      %v589 = vpop.permute.xlu0 %588
      %590 = vrot.lane.b32.xlu0 %v250, 56
      %v591 = vpop.permute.xlu0 %590
      %592 = vrot.lane.b32.xlu0 %v251, 56
      %v593 = vpop.permute.xlu0 %592
      %594 = vrot.lane.b32.xlu0 %v252, 56
      %v595 = vpop.permute.xlu0 %594
      %596 = vrot.lane.b32.xlu0 %v253, 56
      %v597 = vpop.permute.xlu0 %596
      %598 = vrot.lane.b32.xlu0 %v254, 56
      %v599 = vpop.permute.xlu0 %598
      %600 = vrot.lane.b32.xlu0 %v255, 56
      %v601 = vpop.permute.xlu0 %600
      %602 = vrot.lane.b32.xlu0 %v256, 56
      %v603 = vpop.permute.xlu0 %602
      %604 = vrot.lane.b32.xlu0 %v257, 56
      %v605 = vpop.permute.xlu0 %604
      %606 = vrot.lane.b32.xlu0 %v258, 56
      %v607 = vpop.permute.xlu0 %606
      %608 = vrot.lane.b32.xlu0 %v259, 56
      %v609 = vpop.permute.xlu0 %608
      %610 = vrot.lane.b32.xlu0 %v260, 56
      %v611 = vpop.permute.xlu0 %610
      %612 = vrot.lane.b32.xlu0 %v261, 56
      %v613 = vpop.permute.xlu0 %612
      %614 = vrot.lane.b32.xlu0 %v262, 56
      %v615 = vpop.permute.xlu0 %614
      %616 = vrot.lane.b32.xlu0 %v263, 56
      %v617 = vpop.permute.xlu0 %616
      %618 = vrot.lane.b32.xlu0 %v264, 56
      %v619 = vpop.permute.xlu0 %618
      %vm620 = vcmask 457728
      %v621 = vsel %vm620, %v581, %v583
      %v622 = vsel %vm620, %v583, %v585
      %v623 = vsel %vm620, %v585, %v587
      %v624 = vsel %vm620, %v587, %v589
      %v625 = vsel %vm620, %v589, %v591
      %v626 = vsel %vm620, %v591, %v593
      %v627 = vsel %vm620, %v593, %v595
      %v628 = vsel %vm620, %v595, %v597
      %v629 = vsel %vm620, %v597, %v599
      %v630 = vsel %vm620, %v601, %v603
      %v631 = vsel %vm620, %v603, %v605
      %v632 = vsel %vm620, %v605, %v607
      %v633 = vsel %vm620, %v607, %v609
      %v634 = vsel %vm620, %v609, %v611
      %v635 = vsel %vm620, %v611, %v613
      %v636 = vsel %vm620, %v613, %v615
      %v637 = vsel %vm620, %v615, %v617
      %v638 = vsel %vm620, %v617, %v619
      %639 = vrot.lane.b32.xlu0 %v245, 55
      %v640 = vpop.permute.xlu0 %639
      %641 = vrot.lane.b32.xlu0 %v246, 55
      %v642 = vpop.permute.xlu0 %641
      %643 = vrot.lane.b32.xlu0 %v247, 55
      %v644 = vpop.permute.xlu0 %643
      %645 = vrot.lane.b32.xlu0 %v248, 55
      %v646 = vpop.permute.xlu0 %645
      %647 = vrot.lane.b32.xlu0 %v249, 55
      %v648 = vpop.permute.xlu0 %647
      %649 = vrot.lane.b32.xlu0 %v250, 55
      %v650 = vpop.permute.xlu0 %649
      %651 = vrot.lane.b32.xlu0 %v251, 55
      %v652 = vpop.permute.xlu0 %651
      %653 = vrot.lane.b32.xlu0 %v252, 55
      %v654 = vpop.permute.xlu0 %653
      %655 = vrot.lane.b32.xlu0 %v253, 55
      %v656 = vpop.permute.xlu0 %655
      %657 = vrot.lane.b32.xlu0 %v254, 55
      %v658 = vpop.permute.xlu0 %657
      %659 = vrot.lane.b32.xlu0 %v255, 55
      %v660 = vpop.permute.xlu0 %659
      %661 = vrot.lane.b32.xlu0 %v256, 55
      %v662 = vpop.permute.xlu0 %661
      %663 = vrot.lane.b32.xlu0 %v257, 55
      %v664 = vpop.permute.xlu0 %663
      %665 = vrot.lane.b32.xlu0 %v258, 55
      %v666 = vpop.permute.xlu0 %665
      %667 = vrot.lane.b32.xlu0 %v259, 55
      %v668 = vpop.permute.xlu0 %667
      %669 = vrot.lane.b32.xlu0 %v260, 55
      %v670 = vpop.permute.xlu0 %669
      %671 = vrot.lane.b32.xlu0 %v261, 55
      %v672 = vpop.permute.xlu0 %671
      %673 = vrot.lane.b32.xlu0 %v262, 55
      %v674 = vpop.permute.xlu0 %673
      %675 = vrot.lane.b32.xlu0 %v263, 55
      %v676 = vpop.permute.xlu0 %675
      %677 = vrot.lane.b32.xlu0 %v264, 55
      %v678 = vpop.permute.xlu0 %677
      %vm679 = vcmask 449536
      %v680 = vsel %vm679, %v640, %v642
      %v681 = vsel %vm679, %v642, %v644
      %v682 = vsel %vm679, %v644, %v646
      %v683 = vsel %vm679, %v646, %v648
      %v684 = vsel %vm679, %v648, %v650
      %v685 = vsel %vm679, %v650, %v652
      %v686 = vsel %vm679, %v652, %v654
      %v687 = vsel %vm679, %v654, %v656
      %v688 = vsel %vm679, %v656, %v658
      %v689 = vsel %vm679, %v660, %v662
      %v690 = vsel %vm679, %v662, %v664
      %v691 = vsel %vm679, %v664, %v666
      %v692 = vsel %vm679, %v666, %v668
      %v693 = vsel %vm679, %v668, %v670
      %v694 = vsel %vm679, %v670, %v672
      %v695 = vsel %vm679, %v672, %v674
      %v696 = vsel %vm679, %v674, %v676
      %v697 = vsel %vm679, %v676, %v678
      %698 = vrot.lane.b32.xlu0 %v245, 54
      %v699 = vpop.permute.xlu0 %698
      %700 = vrot.lane.b32.xlu0 %v246, 54
      %v701 = vpop.permute.xlu0 %700
      %702 = vrot.lane.b32.xlu0 %v247, 54
      %v703 = vpop.permute.xlu0 %702
      %704 = vrot.lane.b32.xlu0 %v248, 54
      %v705 = vpop.permute.xlu0 %704
      %706 = vrot.lane.b32.xlu0 %v249, 54
      %v707 = vpop.permute.xlu0 %706
      %708 = vrot.lane.b32.xlu0 %v250, 54
      %v709 = vpop.permute.xlu0 %708
      %710 = vrot.lane.b32.xlu0 %v251, 54
      %v711 = vpop.permute.xlu0 %710
      %712 = vrot.lane.b32.xlu0 %v252, 54
      %v713 = vpop.permute.xlu0 %712
      %714 = vrot.lane.b32.xlu0 %v253, 54
      %v715 = vpop.permute.xlu0 %714
      %716 = vrot.lane.b32.xlu0 %v254, 54
      %v717 = vpop.permute.xlu0 %716
      %718 = vrot.lane.b32.xlu0 %v255, 54
      %v719 = vpop.permute.xlu0 %718
      %720 = vrot.lane.b32.xlu0 %v256, 54
      %v721 = vpop.permute.xlu0 %720
      %722 = vrot.lane.b32.xlu0 %v257, 54
      %v723 = vpop.permute.xlu0 %722
      %724 = vrot.lane.b32.xlu0 %v258, 54
      %v725 = vpop.permute.xlu0 %724
      %726 = vrot.lane.b32.xlu0 %v259, 54
      %v727 = vpop.permute.xlu0 %726
      %728 = vrot.lane.b32.xlu0 %v260, 54
      %v729 = vpop.permute.xlu0 %728
      %730 = vrot.lane.b32.xlu0 %v261, 54
      %v731 = vpop.permute.xlu0 %730
      %732 = vrot.lane.b32.xlu0 %v262, 54
      %v733 = vpop.permute.xlu0 %732
      %734 = vrot.lane.b32.xlu0 %v263, 54
      %v735 = vpop.permute.xlu0 %734
      %736 = vrot.lane.b32.xlu0 %v264, 54
      %v737 = vpop.permute.xlu0 %736
      %vm738 = vcmask 441344
      %v739 = vsel %vm738, %v699, %v701
      %v740 = vsel %vm738, %v701, %v703
      %v741 = vsel %vm738, %v703, %v705
      %v742 = vsel %vm738, %v705, %v707
      %v743 = vsel %vm738, %v707, %v709
      %v744 = vsel %vm738, %v709, %v711
      %v745 = vsel %vm738, %v711, %v713
      %v746 = vsel %vm738, %v713, %v715
      %v747 = vsel %vm738, %v715, %v717
      %v748 = vsel %vm738, %v719, %v721
      %v749 = vsel %vm738, %v721, %v723
      %v750 = vsel %vm738, %v723, %v725
      %v751 = vsel %vm738, %v725, %v727
      %v752 = vsel %vm738, %v727, %v729
      %v753 = vsel %vm738, %v729, %v731
      %v754 = vsel %vm738, %v731, %v733
      %v755 = vsel %vm738, %v733, %v735
      %v756 = vsel %vm738, %v735, %v737
      %v757 = vld [vmem:[%s2] sm:$0xff]
      %v758 = vld [vmem:[%s2 + $0x8] sm:$0xff]
      %v759 = vld [vmem:[%s2 + $0x10] sm:$0xff]
      %v760 = vld [vmem:[%s2 + $0x18] sm:$0xff]
      %v761 = vld [vmem:[%s3] sm:$0xff]
      %v762 = vld [vmem:[%s3 + $0x8] sm:$0xff]
      %v763 = vld [vmem:[%s239] sm:$0xff]
      %v764 = vld [vmem:[%s239 + $0x8] sm:$0xff]
      %v765 = vld [vmem:[%s239 + $0x10] sm:$0xff]
      %v766 = vld [vmem:[%s239 + $0x18] sm:$0xff]
      %v767 = vld [vmem:[%s239 + $0x20] sm:$0xff]
      %v768 = vld [vmem:[%s239 + $0x28] sm:$0xff]
      %v769 = vld [vmem:[%s239 + $0x30] sm:$0xff]
      %v770 = vld [vmem:[%s239 + $0x38] sm:$0xff]
      %v771 = vld [vmem:[%s239 + $0x40] sm:$0xff]
      %vm772 = vcmask 64512
      %v774 = vsel %vm772, %v761, 0
      %v777 = vsel %vm772, %v762, 0
      %779 = vmatprep.subr.mxu0 %v764
      %780 = vmatpush1.msra.mxu0 %v763
      %781 = vmatprep.subr.mxu0 0.0
      %782 = vmatpush1.msra.mxu0 0.0
      %783 = vmatprep.subr.mxu0 0.0
      %784 = vmatpush1.msra.mxu0 0.0
      %785 = vmatprep.subr.mxu0 0.0
      %786 = vmatpush1.msra.mxu0 0.0
      %787 = vmatprep.subr.mxu0 0.0
      %788 = vmatpush1.msra.mxu0 0.0
      %789 = vmatprep.subr.mxu0 0.0
      %790 = vmatpush1.msra.mxu0 0.0
      %791 = vmatprep.subr.mxu0 0.0
      %792 = vmatpush1.msra.mxu0 0.0
      %793 = vmatprep.subr.mxu0 0.0
      %794 = vmatpush1.msra.mxu0 0.0
      %795 = vmatprep.subr.mxu0 0.0
      %796 = vmatpush1.msra.mxu0 0.0
      %797 = vmatprep.subr.mxu0 0.0
      %798 = vmatpush1.msra.mxu0 0.0
      %799 = vmatprep.subr.mxu0 0.0
      %800 = vmatpush1.msra.mxu0 0.0
      %801 = vmatprep.subr.mxu0 0.0
      %802 = vmatpush1.msra.mxu0 0.0
      %803 = vmatprep.subr.mxu0 0.0
      %804 = vmatpush1.msra.mxu0 0.0
      %805 = vmatprep.subr.mxu0 0.0
      %806 = vmatpush1.msra.mxu0 0.0
      %807 = vmatprep.subr.mxu0 0.0
      %808 = vmatpush1.msra.mxu0 0.0
      %809 = vmatprep.subr.mxu0 0.0
      %810 = vmatpush1.msra.mxu0 0.0
      %811 = vmatprep.subr.mxu0 0.0
      %812 = vmatpush1.msra.mxu0 0.0
      %813 = vmatprep.subr.mxu0 0.0
      %814 = vmatpush1.msra.mxu0 0.0
      %815 = vmatprep.subr.mxu0 0.0
      %816 = vmatpush1.msra.mxu0 0.0
      %817 = vmatprep.subr.mxu0 0.0
      %818 = vmatpush1.msra.mxu0 0.0
      %819 = vmatprep.subr.mxu0 0.0
      %820 = vmatpush1.msra.mxu0 0.0
      %821 = vmatprep.subr.mxu0 0.0
      %822 = vmatpush1.msra.mxu0 0.0
      %823 = vmatprep.subr.mxu0 0.0
      %824 = vmatpush1.msra.mxu0 0.0
      %825 = vmatprep.subr.mxu0 0.0
      %826 = vmatpush1.msra.mxu0 0.0
      %827 = vmatprep.subr.mxu0 0.0
      %828 = vmatpush1.msra.mxu0 0.0
      %829 = vmatprep.subr.mxu0 0.0
      %830 = vmatpush1.msra.mxu0 0.0
      %831 = vmatprep.subr.mxu0 0.0
      %832 = vmatpush1.msra.mxu0 0.0
      %833 = vmatprep.subr.mxu0 0.0
      %834 = vmatpush1.msra.mxu0 0.0
      %835 = vmatprep.subr.mxu0 0.0
      %836 = vmatpush1.msra.mxu0 0.0
      %837 = vmatprep.subr.mxu0 0.0
      %838 = vmatpush1.msra.mxu0 0.0
      %839 = vmatprep.subr.mxu0 0.0
      %840 = vmatpush1.msra.mxu0 0.0
      %841 = vmatprep.subr.mxu0 0.0
      %842 = vmatpush1.msra.mxu0 0.0
      %843 = vmatprep.mubr.f32.mxu0 0.0
      %844 = vmatmul.mubr.f32.gmra.mrb[0].mxu0 %v774
      %v845 = vpop.f32.mrb[0].mxu0
      %v846 = vadd.f32 0.0, %v845
      %v847 = vpop.f32.mrb[0].mxu0
      %v848 = vadd.f32 0.0, %v847
      %849 = vmatprep.mubr.f32.mxu0 0.0
      %850 = vmatmul.mubr.f32.gmra.mrb[0].mxu0 %v777
      %v851 = vpop.f32.mrb[0].mxu0
      %v852 = vadd.f32 0.0, %v851
      %v853 = vpop.f32.mrb[0].mxu0
      %v854 = vadd.f32 0.0, %v853
      %855 = vdwg.mxu0
      %856 = vmatprep.subr.mxu0 %v766
      %857 = vmatpush1.msra.mxu0 %v765
      %858 = vmatprep.subr.mxu0 0.0
      %859 = vmatpush1.msra.mxu0 0.0
      %860 = vmatprep.subr.mxu0 0.0
      %861 = vmatpush1.msra.mxu0 0.0
      %862 = vmatprep.subr.mxu0 0.0
      %863 = vmatpush1.msra.mxu0 0.0
      %864 = vmatprep.subr.mxu0 0.0
      %865 = vmatpush1.msra.mxu0 0.0
      %866 = vmatprep.subr.mxu0 0.0
      %867 = vmatpush1.msra.mxu0 0.0
      %868 = vmatprep.subr.mxu0 0.0
      %869 = vmatpush1.msra.mxu0 0.0
      %870 = vmatprep.subr.mxu0 0.0
      %871 = vmatpush1.msra.mxu0 0.0
      %872 = vmatprep.subr.mxu0 0.0
      %873 = vmatpush1.msra.mxu0 0.0
      %874 = vmatprep.subr.mxu0 0.0
      %875 = vmatpush1.msra.mxu0 0.0
      %876 = vmatprep.subr.mxu0 0.0
      %877 = vmatpush1.msra.mxu0 0.0
      %878 = vmatprep.subr.mxu0 0.0
      %879 = vmatpush1.msra.mxu0 0.0
      %880 = vmatprep.subr.mxu0 0.0
      %881 = vmatpush1.msra.mxu0 0.0
      %882 = vmatprep.subr.mxu0 0.0
      %883 = vmatpush1.msra.mxu0 0.0
      %884 = vmatprep.subr.mxu0 0.0
      %885 = vmatpush1.msra.mxu0 0.0
      %886 = vmatprep.subr.mxu0 0.0
      %887 = vmatpush1.msra.mxu0 0.0
      %888 = vmatprep.subr.mxu0 0.0
      %889 = vmatpush1.msra.mxu0 0.0
      %890 = vmatprep.subr.mxu0 0.0
      %891 = vmatpush1.msra.mxu0 0.0
      %892 = vmatprep.subr.mxu0 0.0
      %893 = vmatpush1.msra.mxu0 0.0
      %894 = vmatprep.subr.mxu0 0.0
      %895 = vmatpush1.msra.mxu0 0.0
      %896 = vmatprep.subr.mxu0 0.0
      %897 = vmatpush1.msra.mxu0 0.0
      %898 = vmatprep.subr.mxu0 0.0
      %899 = vmatpush1.msra.mxu0 0.0
      %900 = vmatprep.subr.mxu0 0.0
      %901 = vmatpush1.msra.mxu0 0.0
      %902 = vmatprep.subr.mxu0 0.0
      %903 = vmatpush1.msra.mxu0 0.0
      %904 = vmatprep.subr.mxu0 0.0
      %905 = vmatpush1.msra.mxu0 0.0
      %906 = vmatprep.subr.mxu0 0.0
      %907 = vmatpush1.msra.mxu0 0.0
      %908 = vmatprep.subr.mxu0 0.0
      %909 = vmatpush1.msra.mxu0 0.0
      %910 = vmatprep.subr.mxu0 0.0
      %911 = vmatpush1.msra.mxu0 0.0
      %912 = vmatprep.subr.mxu0 0.0
      %913 = vmatpush1.msra.mxu0 0.0
      %914 = vmatprep.subr.mxu0 0.0
      %915 = vmatpush1.msra.mxu0 0.0
      %916 = vmatprep.subr.mxu0 0.0
      %917 = vmatpush1.msra.mxu0 0.0
      %918 = vmatprep.subr.mxu0 0.0
      %919 = vmatpush1.msra.mxu0 0.0
      %920 = vmatprep.mubr.f32.mxu0 0.0
      %921 = vmatmul.mubr.f32.gmra.mrb[0].mxu0 %v774
      %v922 = vpop.f32.mrb[0].mxu0
      %v923 = vadd.f32 0.0, %v922
      %v924 = vpop.f32.mrb[0].mxu0
      %v925 = vadd.f32 0.0, %v924
      %926 = vmatprep.mubr.f32.mxu0 0.0
      %927 = vmatmul.mubr.f32.gmra.mrb[0].mxu0 %v777
      %v928 = vpop.f32.mrb[0].mxu0
      %v929 = vadd.f32 0.0, %v928
      %v930 = vpop.f32.mrb[0].mxu0
      %v931 = vadd.f32 0.0, %v930
      %932 = vdwg.mxu0
      %933 = vmatprep.subr.mxu0 %v768
      %934 = vmatpush1.msra.mxu0 %v767
      %935 = vmatprep.subr.mxu0 0.0
      %936 = vmatpush1.msra.mxu0 0.0
      %937 = vmatprep.subr.mxu0 0.0
      %938 = vmatpush1.msra.mxu0 0.0
      %939 = vmatprep.subr.mxu0 0.0
      %940 = vmatpush1.msra.mxu0 0.0
      %941 = vmatprep.subr.mxu0 0.0
      %942 = vmatpush1.msra.mxu0 0.0
      %943 = vmatprep.subr.mxu0 0.0
      %944 = vmatpush1.msra.mxu0 0.0
      %945 = vmatprep.subr.mxu0 0.0
      %946 = vmatpush1.msra.mxu0 0.0
      %947 = vmatprep.subr.mxu0 0.0
      %948 = vmatpush1.msra.mxu0 0.0
      %949 = vmatprep.subr.mxu0 0.0
      %950 = vmatpush1.msra.mxu0 0.0
      %951 = vmatprep.subr.mxu0 0.0
      %952 = vmatpush1.msra.mxu0 0.0
      %953 = vmatprep.subr.mxu0 0.0
      %954 = vmatpush1.msra.mxu0 0.0
      %955 = vmatprep.subr.mxu0 0.0
      %956 = vmatpush1.msra.mxu0 0.0
      %957 = vmatprep.subr.mxu0 0.0
      %958 = vmatpush1.msra.mxu0 0.0
      %959 = vmatprep.subr.mxu0 0.0
      %960 = vmatpush1.msra.mxu0 0.0
      %961 = vmatprep.subr.mxu0 0.0
      %962 = vmatpush1.msra.mxu0 0.0
      %963 = vmatprep.subr.mxu0 0.0
      %964 = vmatpush1.msra.mxu0 0.0
      %965 = vmatprep.subr.mxu0 0.0
      %966 = vmatpush1.msra.mxu0 0.0
      %967 = vmatprep.subr.mxu0 0.0
      %968 = vmatpush1.msra.mxu0 0.0
      %969 = vmatprep.subr.mxu0 0.0
      %970 = vmatpush1.msra.mxu0 0.0
      %971 = vmatprep.subr.mxu0 0.0
      %972 = vmatpush1.msra.mxu0 0.0
      %973 = vmatprep.subr.mxu0 0.0
      %974 = vmatpush1.msra.mxu0 0.0
      %975 = vmatprep.subr.mxu0 0.0
      %976 = vmatpush1.msra.mxu0 0.0
      %977 = vmatprep.subr.mxu0 0.0
      %978 = vmatpush1.msra.mxu0 0.0
      %979 = vmatprep.subr.mxu0 0.0
      %980 = vmatpush1.msra.mxu0 0.0
      %981 = vmatprep.subr.mxu0 0.0
      %982 = vmatpush1.msra.mxu0 0.0
      %983 = vmatprep.subr.mxu0 0.0
      %984 = vmatpush1.msra.mxu0 0.0
      %985 = vmatprep.subr.mxu0 0.0
      %986 = vmatpush1.msra.mxu0 0.0
      %987 = vmatprep.subr.mxu0 0.0
      %988 = vmatpush1.msra.mxu0 0.0
      %989 = vmatprep.subr.mxu0 0.0
      %990 = vmatpush1.msra.mxu0 0.0
      %991 = vmatprep.subr.mxu0 0.0
      %992 = vmatpush1.msra.mxu0 0.0
      %993 = vmatprep.subr.mxu0 0.0
      %994 = vmatpush1.msra.mxu0 0.0
      %995 = vmatprep.subr.mxu0 0.0
      %996 = vmatpush1.msra.mxu0 0.0
      %997 = vmatprep.mubr.f32.mxu0 0.0
      %998 = vmatmul.mubr.f32.gmra.mrb[0].mxu0 %v774
      %v999 = vpop.f32.mrb[0].mxu0
      %v1000 = vadd.f32 0.0, %v999
      %v1001 = vpop.f32.mrb[0].mxu0
      %v1002 = vadd.f32 0.0, %v1001
      %1003 = vmatprep.mubr.f32.mxu0 0.0
      %1004 = vmatmul.mubr.f32.gmra.mrb[0].mxu0 %v777
      %v1005 = vpop.f32.mrb[0].mxu0
      %v1006 = vadd.f32 0.0, %v1005
      %v1007 = vpop.f32.mrb[0].mxu0
      %v1008 = vadd.f32 0.0, %v1007
      %1009 = vdwg.mxu0
      %1010 = vmatprep.subr.mxu0 %v770
      %1011 = vmatpush1.msra.mxu0 %v769
      %1012 = vmatprep.subr.mxu0 0.0
      %1013 = vmatpush1.msra.mxu0 0.0
      %1014 = vmatprep.subr.mxu0 0.0
      %1015 = vmatpush1.msra.mxu0 0.0
      %1016 = vmatprep.subr.mxu0 0.0
      %1017 = vmatpush1.msra.mxu0 0.0
      %1018 = vmatprep.subr.mxu0 0.0
      %1019 = vmatpush1.msra.mxu0 0.0
      %1020 = vmatprep.subr.mxu0 0.0
      %1021 = vmatpush1.msra.mxu0 0.0
      %1022 = vmatprep.subr.mxu0 0.0
      %1023 = vmatpush1.msra.mxu0 0.0
      %1024 = vmatprep.subr.mxu0 0.0
      %1025 = vmatpush1.msra.mxu0 0.0
      %1026 = vmatprep.subr.mxu0 0.0
      %1027 = vmatpush1.msra.mxu0 0.0
      %1028 = vmatprep.subr.mxu0 0.0
      %1029 = vmatpush1.msra.mxu0 0.0
      %1030 = vmatprep.subr.mxu0 0.0
      %1031 = vmatpush1.msra.mxu0 0.0
      %1032 = vmatprep.subr.mxu0 0.0
      %1033 = vmatpush1.msra.mxu0 0.0
      %1034 = vmatprep.subr.mxu0 0.0
      %1035 = vmatpush1.msra.mxu0 0.0
      %1036 = vmatprep.subr.mxu0 0.0
      %1037 = vmatpush1.msra.mxu0 0.0
      %1038 = vmatprep.subr.mxu0 0.0
      %1039 = vmatpush1.msra.mxu0 0.0
      %1040 = vmatprep.subr.mxu0 0.0
      %1041 = vmatpush1.msra.mxu0 0.0
      %1042 = vmatprep.subr.mxu0 0.0
      %1043 = vmatpush1.msra.mxu0 0.0
      %1044 = vmatprep.subr.mxu0 0.0
      %1045 = vmatpush1.msra.mxu0 0.0
      %1046 = vmatprep.subr.mxu0 0.0
      %1047 = vmatpush1.msra.mxu0 0.0
      %1048 = vmatprep.subr.mxu0 0.0
      %1049 = vmatpush1.msra.mxu0 0.0
      %1050 = vmatprep.subr.mxu0 0.0
      %1051 = vmatpush1.msra.mxu0 0.0
      %1052 = vmatprep.subr.mxu0 0.0
      %1053 = vmatpush1.msra.mxu0 0.0
      %1054 = vmatprep.subr.mxu0 0.0
      %1055 = vmatpush1.msra.mxu0 0.0
      %1056 = vmatprep.subr.mxu0 0.0
      %1057 = vmatpush1.msra.mxu0 0.0
      %1058 = vmatprep.subr.mxu0 0.0
      %1059 = vmatpush1.msra.mxu0 0.0
      %1060 = vmatprep.subr.mxu0 0.0
      %1061 = vmatpush1.msra.mxu0 0.0
      %1062 = vmatprep.subr.mxu0 0.0
      %1063 = vmatpush1.msra.mxu0 0.0
      %1064 = vmatprep.subr.mxu0 0.0
      %1065 = vmatpush1.msra.mxu0 0.0
      %1066 = vmatprep.subr.mxu0 0.0
      %1067 = vmatpush1.msra.mxu0 0.0
      %1068 = vmatprep.subr.mxu0 0.0
      %1069 = vmatpush1.msra.mxu0 0.0
      %1070 = vmatprep.subr.mxu0 0.0
      %1071 = vmatpush1.msra.mxu0 0.0
      %1072 = vmatprep.subr.mxu0 0.0
      %1073 = vmatpush1.msra.mxu0 0.0
      %1074 = vmatprep.mubr.f32.mxu0 0.0
      %1075 = vmatmul.mubr.f32.gmra.mrb[0].mxu0 %v774
      %v1076 = vpop.f32.mrb[0].mxu0
      %v1077 = vadd.f32 0.0, %v1076
      %v1078 = vpop.f32.mrb[0].mxu0
      %v1079 = vadd.f32 0.0, %v1078
      %1080 = vmatprep.mubr.f32.mxu0 0.0
      %1081 = vmatmul.mubr.f32.gmra.mrb[0].mxu0 %v777
      %v1082 = vpop.f32.mrb[0].mxu0
      %v1083 = vadd.f32 0.0, %v1082
      %v1084 = vpop.f32.mrb[0].mxu0
      %v1085 = vadd.f32 0.0, %v1084
      %1086 = vdwg.mxu0
      %1087 = vmatprep.subr.mxu0 0.0
      %1088 = vmatpush1.msra.mxu0 %v771
      %1089 = vmatprep.subr.mxu0 0.0
      %1090 = vmatpush1.msra.mxu0 0.0
      %1091 = vmatprep.subr.mxu0 0.0
      %1092 = vmatpush1.msra.mxu0 0.0
      %1093 = vmatprep.subr.mxu0 0.0
      %1094 = vmatpush1.msra.mxu0 0.0
      %1095 = vmatprep.subr.mxu0 0.0
      %1096 = vmatpush1.msra.mxu0 0.0
      %1097 = vmatprep.subr.mxu0 0.0
      %1098 = vmatpush1.msra.mxu0 0.0
      %1099 = vmatprep.subr.mxu0 0.0
      %1100 = vmatpush1.msra.mxu0 0.0
      %1101 = vmatprep.subr.mxu0 0.0
      %1102 = vmatpush1.msra.mxu0 0.0
      %1103 = vmatprep.subr.mxu0 0.0
      %1104 = vmatpush1.msra.mxu0 0.0
      %1105 = vmatprep.subr.mxu0 0.0
      %1106 = vmatpush1.msra.mxu0 0.0
      %1107 = vmatprep.subr.mxu0 0.0
      %1108 = vmatpush1.msra.mxu0 0.0
      %1109 = vmatprep.subr.mxu0 0.0
      %1110 = vmatpush1.msra.mxu0 0.0
      %1111 = vmatprep.subr.mxu0 0.0
      %1112 = vmatpush1.msra.mxu0 0.0
      %1113 = vmatprep.subr.mxu0 0.0
      %1114 = vmatpush1.msra.mxu0 0.0
      %1115 = vmatprep.subr.mxu0 0.0
      %1116 = vmatpush1.msra.mxu0 0.0
      %1117 = vmatprep.subr.mxu0 0.0
      %1118 = vmatpush1.msra.mxu0 0.0
      %1119 = vmatprep.subr.mxu0 0.0
      %1120 = vmatpush1.msra.mxu0 0.0
      %1121 = vmatprep.subr.mxu0 0.0
      %1122 = vmatpush1.msra.mxu0 0.0
      %1123 = vmatprep.subr.mxu0 0.0
      %1124 = vmatpush1.msra.mxu0 0.0
      %1125 = vmatprep.subr.mxu0 0.0
      %1126 = vmatpush1.msra.mxu0 0.0
      %1127 = vmatprep.subr.mxu0 0.0
      %1128 = vmatpush1.msra.mxu0 0.0
      %1129 = vmatprep.subr.mxu0 0.0
      %1130 = vmatpush1.msra.mxu0 0.0
      %1131 = vmatprep.subr.mxu0 0.0
      %1132 = vmatpush1.msra.mxu0 0.0
      %1133 = vmatprep.subr.mxu0 0.0
      %1134 = vmatpush1.msra.mxu0 0.0
      %1135 = vmatprep.subr.mxu0 0.0
      %1136 = vmatpush1.msra.mxu0 0.0
      %1137 = vmatprep.subr.mxu0 0.0
      %1138 = vmatpush1.msra.mxu0 0.0
      %1139 = vmatprep.subr.mxu0 0.0
      %1140 = vmatpush1.msra.mxu0 0.0
      %1141 = vmatprep.subr.mxu0 0.0
      %1142 = vmatpush1.msra.mxu0 0.0
      %1143 = vmatprep.subr.mxu0 0.0
      %1144 = vmatpush1.msra.mxu0 0.0
      %1145 = vmatprep.subr.mxu0 0.0
      %1146 = vmatpush1.msra.mxu0 0.0
      %1147 = vmatprep.subr.mxu0 0.0
      %1148 = vmatpush1.msra.mxu0 0.0
      %1149 = vmatprep.subr.mxu0 0.0
      %1150 = vmatpush1.msra.mxu0 0.0
      %1151 = vmatprep.mubr.f32.mxu0 0.0
      %1152 = vmatmul.mubr.f32.gmra.mrb[0].mxu0 %v774
      %v1153 = vpop.f32.mrb[0].mxu0
      %v1154 = vadd.f32 0.0, %v1153
      %v1155 = vpop.f32.mrb[0].mxu0
      %1156 = vmatprep.mubr.f32.mxu0 0.0
      %1157 = vmatmul.mubr.f32.gmra.mrb[0].mxu0 %v777
      %v1158 = vpop.f32.mrb[0].mxu0
      %v1159 = vadd.f32 0.0, %v1158
      %v1160 = vpop.f32.mrb[0].mxu0
      %1161 = vdwg.mxu0
      %1162 = vrot.lane.b32.xlu0 %v245, 93
      %v1163 = vpop.permute.xlu0 %1162
      %1164 = vrot.lane.b32.xlu0 %v246, 93
      %v1165 = vpop.permute.xlu0 %1164
      %1166 = vrot.lane.b32.xlu0 %v247, 93
      %v1167 = vpop.permute.xlu0 %1166
      %1168 = vrot.lane.b32.xlu0 %v248, 93
      %v1169 = vpop.permute.xlu0 %1168
      %1170 = vrot.lane.b32.xlu0 %v249, 93
      %v1171 = vpop.permute.xlu0 %1170
      %1172 = vrot.lane.b32.xlu0 %v250, 93
      %v1173 = vpop.permute.xlu0 %1172
      %1174 = vrot.lane.b32.xlu0 %v251, 93
      %v1175 = vpop.permute.xlu0 %1174
      %1176 = vrot.lane.b32.xlu0 %v252, 93
      %v1177 = vpop.permute.xlu0 %1176
      %1178 = vrot.lane.b32.xlu0 %v253, 93
      %v1179 = vpop.permute.xlu0 %1178
      %1180 = vrot.lane.b32.xlu0 %v254, 93
      %v1181 = vpop.permute.xlu0 %1180
      %1182 = vrot.lane.b32.xlu0 %v255, 93
      %v1183 = vpop.permute.xlu0 %1182
      %1184 = vrot.lane.b32.xlu0 %v256, 93
      %v1185 = vpop.permute.xlu0 %1184
      %1186 = vrot.lane.b32.xlu0 %v257, 93
      %v1187 = vpop.permute.xlu0 %1186
      %1188 = vrot.lane.b32.xlu0 %v258, 93
      %v1189 = vpop.permute.xlu0 %1188
      %1190 = vrot.lane.b32.xlu0 %v259, 93
      %v1191 = vpop.permute.xlu0 %1190
      %1192 = vrot.lane.b32.xlu0 %v260, 93
      %v1193 = vpop.permute.xlu0 %1192
      %1194 = vrot.lane.b32.xlu0 %v261, 93
      %v1195 = vpop.permute.xlu0 %1194
      %1196 = vrot.lane.b32.xlu0 %v262, 93
      %v1197 = vpop.permute.xlu0 %1196
      %1198 = vrot.lane.b32.xlu0 %v263, 93
      %v1199 = vpop.permute.xlu0 %1198
      %1200 = vrot.lane.b32.xlu0 %v264, 93
      %v1201 = vpop.permute.xlu0 %1200
      %1202 = vrot.lane.b32.xlu0 %v326, 93
      %v1203 = vpop.permute.xlu0 %1202
      %1204 = vrot.lane.b32.xlu0 %v327, 93
      %v1205 = vpop.permute.xlu0 %1204
      %1206 = vrot.lane.b32.xlu0 %v328, 93
      %v1207 = vpop.permute.xlu0 %1206
      %1208 = vrot.lane.b32.xlu0 %v329, 93
      %v1209 = vpop.permute.xlu0 %1208
      %1210 = vrot.lane.b32.xlu0 %v330, 93
      %v1211 = vpop.permute.xlu0 %1210
      %1212 = vrot.lane.b32.xlu0 %v331, 93
      %v1213 = vpop.permute.xlu0 %1212
      %1214 = vrot.lane.b32.xlu0 %v332, 93
      %v1215 = vpop.permute.xlu0 %1214
      %1216 = vrot.lane.b32.xlu0 %v333, 93
      %v1217 = vpop.permute.xlu0 %1216
      %1218 = vrot.lane.b32.xlu0 %v334, 93
      %v1219 = vpop.permute.xlu0 %1218
      %1220 = vrot.lane.b32.xlu0 %v304, 93
      %v1221 = vpop.permute.xlu0 %1220
      %1222 = vrot.lane.b32.xlu0 %v335, 93
      %v1223 = vpop.permute.xlu0 %1222
      %1224 = vrot.lane.b32.xlu0 %v336, 93
      %v1225 = vpop.permute.xlu0 %1224
      %1226 = vrot.lane.b32.xlu0 %v337, 93
      %v1227 = vpop.permute.xlu0 %1226
      %1228 = vrot.lane.b32.xlu0 %v338, 93
      %v1229 = vpop.permute.xlu0 %1228
      %1230 = vrot.lane.b32.xlu0 %v339, 93
      %v1231 = vpop.permute.xlu0 %1230
      %1232 = vrot.lane.b32.xlu0 %v340, 93
      %v1233 = vpop.permute.xlu0 %1232
      %1234 = vrot.lane.b32.xlu0 %v341, 93
      %v1235 = vpop.permute.xlu0 %1234
      %1236 = vrot.lane.b32.xlu0 %v342, 93
      %v1237 = vpop.permute.xlu0 %1236
      %1238 = vrot.lane.b32.xlu0 %v343, 93
      %v1239 = vpop.permute.xlu0 %1238
      %1240 = vrot.lane.b32.xlu0 %v324, 93
      %v1241 = vpop.permute.xlu0 %1240
      %1242 = vrot.lane.b32.xlu0 %v385, 93
      %v1243 = vpop.permute.xlu0 %1242
      %1244 = vrot.lane.b32.xlu0 %v386, 93
      %v1245 = vpop.permute.xlu0 %1244
      %1246 = vrot.lane.b32.xlu0 %v387, 93
      %v1247 = vpop.permute.xlu0 %1246
      %1248 = vrot.lane.b32.xlu0 %v388, 93
      %v1249 = vpop.permute.xlu0 %1248
      %1250 = vrot.lane.b32.xlu0 %v389, 93
      %v1251 = vpop.permute.xlu0 %1250
      %1252 = vrot.lane.b32.xlu0 %v390, 93
      %v1253 = vpop.permute.xlu0 %1252
      %1254 = vrot.lane.b32.xlu0 %v391, 93
      %v1255 = vpop.permute.xlu0 %1254
      %1256 = vrot.lane.b32.xlu0 %v392, 93
      %v1257 = vpop.permute.xlu0 %1256
      %1258 = vrot.lane.b32.xlu0 %v393, 93
      %v1259 = vpop.permute.xlu0 %1258
      %1260 = vrot.lane.b32.xlu0 %v363, 93
      %v1261 = vpop.permute.xlu0 %1260
      %1262 = vrot.lane.b32.xlu0 %v394, 93
      %v1263 = vpop.permute.xlu0 %1262
      %1264 = vrot.lane.b32.xlu0 %v395, 93
      %v1265 = vpop.permute.xlu0 %1264
      %1266 = vrot.lane.b32.xlu0 %v396, 93
      %v1267 = vpop.permute.xlu0 %1266
      %1268 = vrot.lane.b32.xlu0 %v397, 93
      %v1269 = vpop.permute.xlu0 %1268
      %1270 = vrot.lane.b32.xlu0 %v398, 93
      %v1271 = vpop.permute.xlu0 %1270
      %1272 = vrot.lane.b32.xlu0 %v399, 93
      %v1273 = vpop.permute.xlu0 %1272
      %1274 = vrot.lane.b32.xlu0 %v400, 93
      %v1275 = vpop.permute.xlu0 %1274
      %1276 = vrot.lane.b32.xlu0 %v401, 93
      %v1277 = vpop.permute.xlu0 %1276
      %1278 = vrot.lane.b32.xlu0 %v402, 93
      %v1279 = vpop.permute.xlu0 %1278
      %1280 = vrot.lane.b32.xlu0 %v383, 93
      %v1281 = vpop.permute.xlu0 %1280
      %1282 = vrot.lane.b32.xlu0 %v444, 93
      %v1283 = vpop.permute.xlu0 %1282
      %1284 = vrot.lane.b32.xlu0 %v445, 93
      %v1285 = vpop.permute.xlu0 %1284
      %1286 = vrot.lane.b32.xlu0 %v446, 93
      %v1287 = vpop.permute.xlu0 %1286
      %1288 = vrot.lane.b32.xlu0 %v447, 93
      %v1289 = vpop.permute.xlu0 %1288
      %1290 = vrot.lane.b32.xlu0 %v448, 93
      %v1291 = vpop.permute.xlu0 %1290
      %1292 = vrot.lane.b32.xlu0 %v449, 93
      %v1293 = vpop.permute.xlu0 %1292
      %1294 = vrot.lane.b32.xlu0 %v450, 93
      %v1295 = vpop.permute.xlu0 %1294
      %1296 = vrot.lane.b32.xlu0 %v451, 93
      %v1297 = vpop.permute.xlu0 %1296
      %1298 = vrot.lane.b32.xlu0 %v452, 93
      %v1299 = vpop.permute.xlu0 %1298
      %1300 = vrot.lane.b32.xlu0 %v422, 93
      %v1301 = vpop.permute.xlu0 %1300
      %1302 = vrot.lane.b32.xlu0 %v453, 93
      %v1303 = vpop.permute.xlu0 %1302
      %1304 = vrot.lane.b32.xlu0 %v454, 93
      %v1305 = vpop.permute.xlu0 %1304
      %1306 = vrot.lane.b32.xlu0 %v455, 93
      %v1307 = vpop.permute.xlu0 %1306
      %1308 = vrot.lane.b32.xlu0 %v456, 93
      %v1309 = vpop.permute.xlu0 %1308
      %1310 = vrot.lane.b32.xlu0 %v457, 93
      %v1311 = vpop.permute.xlu0 %1310
      %1312 = vrot.lane.b32.xlu0 %v458, 93
      %v1313 = vpop.permute.xlu0 %1312
      %1314 = vrot.lane.b32.xlu0 %v459, 93
      %v1315 = vpop.permute.xlu0 %1314
      %1316 = vrot.lane.b32.xlu0 %v460, 93
      %v1317 = vpop.permute.xlu0 %1316
      %1318 = vrot.lane.b32.xlu0 %v461, 93
      %v1319 = vpop.permute.xlu0 %1318
      %1320 = vrot.lane.b32.xlu0 %v442, 93
      %v1321 = vpop.permute.xlu0 %1320
      %1322 = vrot.lane.b32.xlu0 %v503, 93
      %v1323 = vpop.permute.xlu0 %1322
      %1324 = vrot.lane.b32.xlu0 %v504, 93
      %v1325 = vpop.permute.xlu0 %1324
      %1326 = vrot.lane.b32.xlu0 %v505, 93
      %v1327 = vpop.permute.xlu0 %1326
      %1328 = vrot.lane.b32.xlu0 %v506, 93
      %v1329 = vpop.permute.xlu0 %1328
      %1330 = vrot.lane.b32.xlu0 %v507, 93
      %v1331 = vpop.permute.xlu0 %1330
      %1332 = vrot.lane.b32.xlu0 %v508, 93
      %v1333 = vpop.permute.xlu0 %1332
      %1334 = vrot.lane.b32.xlu0 %v509, 93
      %v1335 = vpop.permute.xlu0 %1334
      %1336 = vrot.lane.b32.xlu0 %v510, 93
      %v1337 = vpop.permute.xlu0 %1336
      %1338 = vrot.lane.b32.xlu0 %v511, 93
      %v1339 = vpop.permute.xlu0 %1338
      %1340 = vrot.lane.b32.xlu0 %v481, 93
      %v1341 = vpop.permute.xlu0 %1340
      %1342 = vrot.lane.b32.xlu0 %v512, 93
      %v1343 = vpop.permute.xlu0 %1342
      %1344 = vrot.lane.b32.xlu0 %v513, 93
      %v1345 = vpop.permute.xlu0 %1344
      %1346 = vrot.lane.b32.xlu0 %v514, 93
      %v1347 = vpop.permute.xlu0 %1346
      %1348 = vrot.lane.b32.xlu0 %v515, 93
      %v1349 = vpop.permute.xlu0 %1348
      %1350 = vrot.lane.b32.xlu0 %v516, 93
      %v1351 = vpop.permute.xlu0 %1350
      %1352 = vrot.lane.b32.xlu0 %v517, 93
      %v1353 = vpop.permute.xlu0 %1352
      %1354 = vrot.lane.b32.xlu0 %v518, 93
      %v1355 = vpop.permute.xlu0 %1354
      %1356 = vrot.lane.b32.xlu0 %v519, 93
      %v1357 = vpop.permute.xlu0 %1356
      %1358 = vrot.lane.b32.xlu0 %v520, 93
      %v1359 = vpop.permute.xlu0 %1358
      %1360 = vrot.lane.b32.xlu0 %v501, 93
      %v1361 = vpop.permute.xlu0 %1360
      %1362 = vrot.lane.b32.xlu0 %v562, 93
      %v1363 = vpop.permute.xlu0 %1362
      %1364 = vrot.lane.b32.xlu0 %v563, 93
      %v1365 = vpop.permute.xlu0 %1364
      %1366 = vrot.lane.b32.xlu0 %v564, 93
      %v1367 = vpop.permute.xlu0 %1366
      %1368 = vrot.lane.b32.xlu0 %v565, 93
      %v1369 = vpop.permute.xlu0 %1368
      %1370 = vrot.lane.b32.xlu0 %v566, 93
      %v1371 = vpop.permute.xlu0 %1370
      %1372 = vrot.lane.b32.xlu0 %v567, 93
      %v1373 = vpop.permute.xlu0 %1372
      %1374 = vrot.lane.b32.xlu0 %v568, 93
      %v1375 = vpop.permute.xlu0 %1374
      %1376 = vrot.lane.b32.xlu0 %v569, 93
      %v1377 = vpop.permute.xlu0 %1376
      %1378 = vrot.lane.b32.xlu0 %v570, 93
      %v1379 = vpop.permute.xlu0 %1378
      %1380 = vrot.lane.b32.xlu0 %v540, 93
      %v1381 = vpop.permute.xlu0 %1380
      %1382 = vrot.lane.b32.xlu0 %v571, 93
      %v1383 = vpop.permute.xlu0 %1382
      %1384 = vrot.lane.b32.xlu0 %v572, 93
      %v1385 = vpop.permute.xlu0 %1384
      %1386 = vrot.lane.b32.xlu0 %v573, 93
      %v1387 = vpop.permute.xlu0 %1386
      %1388 = vrot.lane.b32.xlu0 %v574, 93
      %v1389 = vpop.permute.xlu0 %1388
      %1390 = vrot.lane.b32.xlu0 %v575, 93
      %v1391 = vpop.permute.xlu0 %1390
      %1392 = vrot.lane.b32.xlu0 %v576, 93
      %v1393 = vpop.permute.xlu0 %1392
      %1394 = vrot.lane.b32.xlu0 %v577, 93
      %v1395 = vpop.permute.xlu0 %1394
      %1396 = vrot.lane.b32.xlu0 %v578, 93
      %v1397 = vpop.permute.xlu0 %1396
      %1398 = vrot.lane.b32.xlu0 %v579, 93
      %v1399 = vpop.permute.xlu0 %1398
      %1400 = vrot.lane.b32.xlu0 %v560, 93
      %v1401 = vpop.permute.xlu0 %1400
      %1402 = vrot.lane.b32.xlu0 %v621, 93
      %v1403 = vpop.permute.xlu0 %1402
      %1404 = vrot.lane.b32.xlu0 %v622, 93
      %v1405 = vpop.permute.xlu0 %1404
      %1406 = vrot.lane.b32.xlu0 %v623, 93
      %v1407 = vpop.permute.xlu0 %1406
      %1408 = vrot.lane.b32.xlu0 %v624, 93
      %v1409 = vpop.permute.xlu0 %1408
      %1410 = vrot.lane.b32.xlu0 %v625, 93
      %v1411 = vpop.permute.xlu0 %1410
      %1412 = vrot.lane.b32.xlu0 %v626, 93
      %v1413 = vpop.permute.xlu0 %1412
      %1414 = vrot.lane.b32.xlu0 %v627, 93
      %v1415 = vpop.permute.xlu0 %1414
      %1416 = vrot.lane.b32.xlu0 %v628, 93
      %v1417 = vpop.permute.xlu0 %1416
      %1418 = vrot.lane.b32.xlu0 %v629, 93
      %v1419 = vpop.permute.xlu0 %1418
      %1420 = vrot.lane.b32.xlu0 %v599, 93
      %v1421 = vpop.permute.xlu0 %1420
      %1422 = vrot.lane.b32.xlu0 %v630, 93
      %v1423 = vpop.permute.xlu0 %1422
      %1424 = vrot.lane.b32.xlu0 %v631, 93
      %v1425 = vpop.permute.xlu0 %1424
      %1426 = vrot.lane.b32.xlu0 %v632, 93
      %v1427 = vpop.permute.xlu0 %1426
      %1428 = vrot.lane.b32.xlu0 %v633, 93
      %v1429 = vpop.permute.xlu0 %1428
      %1430 = vrot.lane.b32.xlu0 %v634, 93
      %v1431 = vpop.permute.xlu0 %1430
      %1432 = vrot.lane.b32.xlu0 %v635, 93
      %v1433 = vpop.permute.xlu0 %1432
      %1434 = vrot.lane.b32.xlu0 %v636, 93
      %v1435 = vpop.permute.xlu0 %1434
      %1436 = vrot.lane.b32.xlu0 %v637, 93
      %v1437 = vpop.permute.xlu0 %1436
      %1438 = vrot.lane.b32.xlu0 %v638, 93
      %v1439 = vpop.permute.xlu0 %1438
      %1440 = vrot.lane.b32.xlu0 %v619, 93
      %v1441 = vpop.permute.xlu0 %1440
      %1442 = vrot.lane.b32.xlu0 %v680, 93
      %v1443 = vpop.permute.xlu0 %1442
      %1444 = vrot.lane.b32.xlu0 %v681, 93
      %v1445 = vpop.permute.xlu0 %1444
      %1446 = vrot.lane.b32.xlu0 %v682, 93
      %v1447 = vpop.permute.xlu0 %1446
      %1448 = vrot.lane.b32.xlu0 %v683, 93
      %v1449 = vpop.permute.xlu0 %1448
      %1450 = vrot.lane.b32.xlu0 %v684, 93
      %v1451 = vpop.permute.xlu0 %1450
      %1452 = vrot.lane.b32.xlu0 %v685, 93
      %v1453 = vpop.permute.xlu0 %1452
      %1454 = vrot.lane.b32.xlu0 %v686, 93
      %v1455 = vpop.permute.xlu0 %1454
      %1456 = vrot.lane.b32.xlu0 %v687, 93
      %v1457 = vpop.permute.xlu0 %1456
      %1458 = vrot.lane.b32.xlu0 %v688, 93
      %v1459 = vpop.permute.xlu0 %1458
      %1460 = vrot.lane.b32.xlu0 %v658, 93
      %v1461 = vpop.permute.xlu0 %1460
      %1462 = vrot.lane.b32.xlu0 %v689, 93
      %v1463 = vpop.permute.xlu0 %1462
      %1464 = vrot.lane.b32.xlu0 %v690, 93
      %v1465 = vpop.permute.xlu0 %1464
      %1466 = vrot.lane.b32.xlu0 %v691, 93
      %v1467 = vpop.permute.xlu0 %1466
      %1468 = vrot.lane.b32.xlu0 %v692, 93
      %v1469 = vpop.permute.xlu0 %1468
      %1470 = vrot.lane.b32.xlu0 %v693, 93
      %v1471 = vpop.permute.xlu0 %1470
      %1472 = vrot.lane.b32.xlu0 %v694, 93
      %v1473 = vpop.permute.xlu0 %1472
      %1474 = vrot.lane.b32.xlu0 %v695, 93
      %v1475 = vpop.permute.xlu0 %1474
      %1476 = vrot.lane.b32.xlu0 %v696, 93
      %v1477 = vpop.permute.xlu0 %1476
      %1478 = vrot.lane.b32.xlu0 %v697, 93
      %v1479 = vpop.permute.xlu0 %1478
      %1480 = vrot.lane.b32.xlu0 %v678, 93
      %v1481 = vpop.permute.xlu0 %1480
      %1482 = vrot.lane.b32.xlu0 %v739, 93
      %v1483 = vpop.permute.xlu0 %1482
      %1484 = vrot.lane.b32.xlu0 %v740, 93
      %v1485 = vpop.permute.xlu0 %1484
      %1486 = vrot.lane.b32.xlu0 %v741, 93
      %v1487 = vpop.permute.xlu0 %1486
      %1488 = vrot.lane.b32.xlu0 %v742, 93
      %v1489 = vpop.permute.xlu0 %1488
      %1490 = vrot.lane.b32.xlu0 %v743, 93
      %v1491 = vpop.permute.xlu0 %1490
      %1492 = vrot.lane.b32.xlu0 %v744, 93
      %v1493 = vpop.permute.xlu0 %1492
      %1494 = vrot.lane.b32.xlu0 %v745, 93
      %v1495 = vpop.permute.xlu0 %1494
      %1496 = vrot.lane.b32.xlu0 %v746, 93
      %v1497 = vpop.permute.xlu0 %1496
      %1498 = vrot.lane.b32.xlu0 %v747, 93
      %v1499 = vpop.permute.xlu0 %1498
      %1500 = vrot.lane.b32.xlu0 %v717, 93
      %v1501 = vpop.permute.xlu0 %1500
      %1502 = vrot.lane.b32.xlu0 %v748, 93
      %v1503 = vpop.permute.xlu0 %1502
      %1504 = vrot.lane.b32.xlu0 %v749, 93
      %v1505 = vpop.permute.xlu0 %1504
      %1506 = vrot.lane.b32.xlu0 %v750, 93
      %v1507 = vpop.permute.xlu0 %1506
      %1508 = vrot.lane.b32.xlu0 %v751, 93
      %v1509 = vpop.permute.xlu0 %1508
      %1510 = vrot.lane.b32.xlu0 %v752, 93
      %v1511 = vpop.permute.xlu0 %1510
      %1512 = vrot.lane.b32.xlu0 %v753, 93
      %v1513 = vpop.permute.xlu0 %1512
      %1514 = vrot.lane.b32.xlu0 %v754, 93
      %v1515 = vpop.permute.xlu0 %1514
      %1516 = vrot.lane.b32.xlu0 %v755, 93
      %v1517 = vpop.permute.xlu0 %1516
      %1518 = vrot.lane.b32.xlu0 %v756, 93
      %v1519 = vpop.permute.xlu0 %1518
      %1520 = vrot.lane.b32.xlu0 %v737, 93
      %v1521 = vpop.permute.xlu0 %1520
      %vm1522 = vcmask 760832
      %v1523 = vsel %vm1522, %v1163, %v1165
      %v1524 = vsel %vm1522, %v1165, %v1167
      %v1525 = vsel %vm1522, %v1167, %v1169
      %v1526 = vsel %vm1522, %v1169, %v1171
      %v1527 = vsel %vm1522, %v1171, %v1173
      %v1528 = vsel %vm1522, %v1173, %v1175
      %v1529 = vsel %vm1522, %v1175, %v1177
      %v1530 = vsel %vm1522, %v1177, %v1179
      %v1531 = vsel %vm1522, %v1179, %v1181
      %v1532 = vsel %vm1522, %v1183, %v1185
      %v1533 = vsel %vm1522, %v1185, %v1187
      %v1534 = vsel %vm1522, %v1187, %v1189
      %v1535 = vsel %vm1522, %v1189, %v1191
      %v1536 = vsel %vm1522, %v1191, %v1193
      %v1537 = vsel %vm1522, %v1193, %v1195
      %v1538 = vsel %vm1522, %v1195, %v1197
      %v1539 = vsel %vm1522, %v1197, %v1199
      %v1540 = vsel %vm1522, %v1199, %v1201
      %v1541 = vsel %vm1522, %v1203, %v1205
      %v1542 = vsel %vm1522, %v1205, %v1207
      %v1543 = vsel %vm1522, %v1207, %v1209
      %v1544 = vsel %vm1522, %v1209, %v1211
      %v1545 = vsel %vm1522, %v1211, %v1213
      %v1546 = vsel %vm1522, %v1213, %v1215
      %v1547 = vsel %vm1522, %v1215, %v1217
      %v1548 = vsel %vm1522, %v1217, %v1219
      %v1549 = vsel %vm1522, %v1219, %v1221
      %v1550 = vsel %vm1522, %v1223, %v1225
      %v1551 = vsel %vm1522, %v1225, %v1227
      %v1552 = vsel %vm1522, %v1227, %v1229
      %v1553 = vsel %vm1522, %v1229, %v1231
      %v1554 = vsel %vm1522, %v1231, %v1233
      %v1555 = vsel %vm1522, %v1233, %v1235
      %v1556 = vsel %vm1522, %v1235, %v1237
      %v1557 = vsel %vm1522, %v1237, %v1239
      %v1558 = vsel %vm1522, %v1239, %v1241
      %v1559 = vsel %vm1522, %v1243, %v1245
      %v1560 = vsel %vm1522, %v1245, %v1247
      %v1561 = vsel %vm1522, %v1247, %v1249
      %v1562 = vsel %vm1522, %v1249, %v1251
      %v1563 = vsel %vm1522, %v1251, %v1253
      %v1564 = vsel %vm1522, %v1253, %v1255
      %v1565 = vsel %vm1522, %v1255, %v1257
      %v1566 = vsel %vm1522, %v1257, %v1259
      %v1567 = vsel %vm1522, %v1259, %v1261
      %v1568 = vsel %vm1522, %v1263, %v1265
      %v1569 = vsel %vm1522, %v1265, %v1267
      %v1570 = vsel %vm1522, %v1267, %v1269
      %v1571 = vsel %vm1522, %v1269, %v1271
      %v1572 = vsel %vm1522, %v1271, %v1273
      %v1573 = vsel %vm1522, %v1273, %v1275
      %v1574 = vsel %vm1522, %v1275, %v1277
      %v1575 = vsel %vm1522, %v1277, %v1279
      %v1576 = vsel %vm1522, %v1279, %v1281
      %v1577 = vsel %vm1522, %v1283, %v1285
      %v1578 = vsel %vm1522, %v1285, %v1287
      %v1579 = vsel %vm1522, %v1287, %v1289
      %v1580 = vsel %vm1522, %v1289, %v1291
      %v1581 = vsel %vm1522, %v1291, %v1293
      %v1582 = vsel %vm1522, %v1293, %v1295
      %v1583 = vsel %vm1522, %v1295, %v1297
      %v1584 = vsel %vm1522, %v1297, %v1299
      %v1585 = vsel %vm1522, %v1299, %v1301
      %v1586 = vsel %vm1522, %v1303, %v1305
      %v1587 = vsel %vm1522, %v1305, %v1307
      %v1588 = vsel %vm1522, %v1307, %v1309
      %v1589 = vsel %vm1522, %v1309, %v1311
      %v1590 = vsel %vm1522, %v1311, %v1313
      %v1591 = vsel %vm1522, %v1313, %v1315
      %v1592 = vsel %vm1522, %v1315, %v1317
      %v1593 = vsel %vm1522, %v1317, %v1319
      %v1594 = vsel %vm1522, %v1319, %v1321
      %v1595 = vsel %vm1522, %v1323, %v1325
      %v1596 = vsel %vm1522, %v1325, %v1327
      %v1597 = vsel %vm1522, %v1327, %v1329
      %v1598 = vsel %vm1522, %v1329, %v1331
      %v1599 = vsel %vm1522, %v1331, %v1333
      %v1600 = vsel %vm1522, %v1333, %v1335
      %v1601 = vsel %vm1522, %v1335, %v1337
      %v1602 = vsel %vm1522, %v1337, %v1339
      %v1603 = vsel %vm1522, %v1339, %v1341
      %v1604 = vsel %vm1522, %v1343, %v1345
      %v1605 = vsel %vm1522, %v1345, %v1347
      %v1606 = vsel %vm1522, %v1347, %v1349
      %v1607 = vsel %vm1522, %v1349, %v1351
      %v1608 = vsel %vm1522, %v1351, %v1353
      %v1609 = vsel %vm1522, %v1353, %v1355
      %v1610 = vsel %vm1522, %v1355, %v1357
      %v1611 = vsel %vm1522, %v1357, %v1359
      %v1612 = vsel %vm1522, %v1359, %v1361
      %v1613 = vsel %vm1522, %v1363, %v1365
      %v1614 = vsel %vm1522, %v1365, %v1367
      %v1615 = vsel %vm1522, %v1367, %v1369
      %v1616 = vsel %vm1522, %v1369, %v1371
      %v1617 = vsel %vm1522, %v1371, %v1373
      %v1618 = vsel %vm1522, %v1373, %v1375
      %v1619 = vsel %vm1522, %v1375, %v1377
      %v1620 = vsel %vm1522, %v1377, %v1379
      %v1621 = vsel %vm1522, %v1379, %v1381
      %v1622 = vsel %vm1522, %v1383, %v1385
      %v1623 = vsel %vm1522, %v1385, %v1387
      %v1624 = vsel %vm1522, %v1387, %v1389
      %v1625 = vsel %vm1522, %v1389, %v1391
      %v1626 = vsel %vm1522, %v1391, %v1393
      %v1627 = vsel %vm1522, %v1393, %v1395
      %v1628 = vsel %vm1522, %v1395, %v1397
      %v1629 = vsel %vm1522, %v1397, %v1399
      %v1630 = vsel %vm1522, %v1399, %v1401
      %v1631 = vsel %vm1522, %v1403, %v1405
      %v1632 = vsel %vm1522, %v1405, %v1407
      %v1633 = vsel %vm1522, %v1407, %v1409
      %v1634 = vsel %vm1522, %v1409, %v1411
      %v1635 = vsel %vm1522, %v1411, %v1413
      %v1636 = vsel %vm1522, %v1413, %v1415
      %v1637 = vsel %vm1522, %v1415, %v1417
      %v1638 = vsel %vm1522, %v1417, %v1419
      %v1639 = vsel %vm1522, %v1419, %v1421
      %v1640 = vsel %vm1522, %v1423, %v1425
      %v1641 = vsel %vm1522, %v1425, %v1427
      %v1642 = vsel %vm1522, %v1427, %v1429
      %v1643 = vsel %vm1522, %v1429, %v1431
      %v1644 = vsel %vm1522, %v1431, %v1433
      %v1645 = vsel %vm1522, %v1433, %v1435
      %v1646 = vsel %vm1522, %v1435, %v1437
      %v1647 = vsel %vm1522, %v1437, %v1439
      %v1648 = vsel %vm1522, %v1439, %v1441
      %v1649 = vsel %vm1522, %v1443, %v1445
      %v1650 = vsel %vm1522, %v1445, %v1447
      %v1651 = vsel %vm1522, %v1447, %v1449
      %v1652 = vsel %vm1522, %v1449, %v1451
      %v1653 = vsel %vm1522, %v1451, %v1453
      %v1654 = vsel %vm1522, %v1453, %v1455
      %v1655 = vsel %vm1522, %v1455, %v1457
      %v1656 = vsel %vm1522, %v1457, %v1459
      %v1657 = vsel %vm1522, %v1459, %v1461
      %v1658 = vsel %vm1522, %v1463, %v1465
      %v1659 = vsel %vm1522, %v1465, %v1467
      %v1660 = vsel %vm1522, %v1467, %v1469
      %v1661 = vsel %vm1522, %v1469, %v1471
      %v1662 = vsel %vm1522, %v1471, %v1473
      %v1663 = vsel %vm1522, %v1473, %v1475
      %v1664 = vsel %vm1522, %v1475, %v1477
      %v1665 = vsel %vm1522, %v1477, %v1479
      %v1666 = vsel %vm1522, %v1479, %v1481
      %v1667 = vsel %vm1522, %v1483, %v1485
      %v1668 = vsel %vm1522, %v1485, %v1487
      %v1669 = vsel %vm1522, %v1487, %v1489
      %v1670 = vsel %vm1522, %v1489, %v1491
      %v1671 = vsel %vm1522, %v1491, %v1493
      %v1672 = vsel %vm1522, %v1493, %v1495
      %v1673 = vsel %vm1522, %v1495, %v1497
      %v1674 = vsel %vm1522, %v1497, %v1499
      %v1675 = vsel %vm1522, %v1499, %v1501
      %v1676 = vsel %vm1522, %v1503, %v1505
      %v1677 = vsel %vm1522, %v1505, %v1507
      %v1678 = vsel %vm1522, %v1507, %v1509
      %v1679 = vsel %vm1522, %v1509, %v1511
      %v1680 = vsel %vm1522, %v1511, %v1513
      %v1681 = vsel %vm1522, %v1513, %v1515
      %v1682 = vsel %vm1522, %v1515, %v1517
      %v1683 = vsel %vm1522, %v1517, %v1519
      %v1684 = vsel %vm1522, %v1519, %v1521
      %vm1847 = vcmask 130048
      %v1849 = vsel %vm1847, %v758, 0
      %v1852 = vsel %vm1847, %v760, 0
      %1854 = vmatprep.subr.mxu0 %v1524
      %1855 = vmatpush1.msra.mxu0 %v1523
      %1856 = vmatprep.subr.mxu0 %v1533
      %1857 = vmatpush1.msra.mxu0 %v1532
      %1858 = vmatprep.subr.mxu0 %v1542
      %1859 = vmatpush1.msra.mxu0 %v1541
      %1860 = vmatprep.subr.mxu0 %v1551
      %1861 = vmatpush1.msra.mxu0 %v1550
      %1862 = vmatprep.subr.mxu0 %v1560
      %1863 = vmatpush1.msra.mxu0 %v1559
      %1864 = vmatprep.subr.mxu0 %v1569
      %1865 = vmatpush1.msra.mxu0 %v1568
      %1866 = vmatprep.subr.mxu0 %v1578
      %1867 = vmatpush1.msra.mxu0 %v1577
      %1868 = vmatprep.subr.mxu0 %v1587
      %1869 = vmatpush1.msra.mxu0 %v1586
      %1870 = vmatprep.subr.mxu0 %v1596
      %1871 = vmatpush1.msra.mxu0 %v1595
      %1872 = vmatprep.subr.mxu0 %v1605
      %1873 = vmatpush1.msra.mxu0 %v1604
      %1874 = vmatprep.subr.mxu0 %v1614
      %1875 = vmatpush1.msra.mxu0 %v1613
      %1876 = vmatprep.subr.mxu0 %v1623
      %1877 = vmatpush1.msra.mxu0 %v1622
      %1878 = vmatprep.subr.mxu0 %v1632
      %1879 = vmatpush1.msra.mxu0 %v1631
      %1880 = vmatprep.subr.mxu0 %v1641
      %1881 = vmatpush1.msra.mxu0 %v1640
      %1882 = vmatprep.subr.mxu0 %v1650
      %1883 = vmatpush1.msra.mxu0 %v1649
      %1884 = vmatprep.subr.mxu0 %v1659
      %1885 = vmatpush1.msra.mxu0 %v1658
      %1886 = vmatprep.subr.mxu0 %v1668
      %1887 = vmatpush1.msra.mxu0 %v1667
      %1888 = vmatprep.subr.mxu0 %v1677
      %1889 = vmatpush1.msra.mxu0 %v1676
      %1890 = vmatprep.subr.mxu0 0.0
      %1891 = vmatpush1.msra.mxu0 0.0
      %1892 = vmatprep.subr.mxu0 0.0
      %1893 = vmatpush1.msra.mxu0 0.0
      %1894 = vmatprep.subr.mxu0 0.0
      %1895 = vmatpush1.msra.mxu0 0.0
      %1896 = vmatprep.subr.mxu0 0.0
      %1897 = vmatpush1.msra.mxu0 0.0
      %1898 = vmatprep.subr.mxu0 0.0
      %1899 = vmatpush1.msra.mxu0 0.0
      %1900 = vmatprep.subr.mxu0 0.0
      %1901 = vmatpush1.msra.mxu0 0.0
      %1902 = vmatprep.subr.mxu0 0.0
      %1903 = vmatpush1.msra.mxu0 0.0
      %1904 = vmatprep.subr.mxu0 0.0
      %1905 = vmatpush1.msra.mxu0 0.0
      %1906 = vmatprep.subr.mxu0 0.0
      %1907 = vmatpush1.msra.mxu0 0.0
      %1908 = vmatprep.subr.mxu0 0.0
      %1909 = vmatpush1.msra.mxu0 0.0
      %1910 = vmatprep.subr.mxu0 0.0
      %1911 = vmatpush1.msra.mxu0 0.0
      %1912 = vmatprep.subr.mxu0 0.0
      %1913 = vmatpush1.msra.mxu0 0.0
      %1914 = vmatprep.subr.mxu0 0.0
      %1915 = vmatpush1.msra.mxu0 0.0
      %1916 = vmatprep.subr.mxu0 0.0
      %1917 = vmatpush1.msra.mxu0 0.0
      %1918 = vmatprep.mubr.f32.mxu0 %v1849
      %1919 = vmatmul.mubr.f32.gmra.mrb[0].mxu0 %v757
      %v1920 = vpop.f32.mrb[0].mxu0
      %v1921 = vadd.f32 %v846, %v1920
      %v1922 = vpop.f32.mrb[0].mxu0
      %v1923 = vadd.f32 %v848, %v1922
      %1924 = vmatprep.mubr.f32.mxu0 %v1852
      %1925 = vmatmul.mubr.f32.gmra.mrb[0].mxu0 %v759
      %v1926 = vpop.f32.mrb[0].mxu0
      %v1927 = vadd.f32 %v852, %v1926
      %v1928 = vpop.f32.mrb[0].mxu0
      %v1929 = vadd.f32 %v854, %v1928
      %1930 = vdwg.mxu0
      %1931 = vmatprep.subr.mxu0 %v1526
      %1932 = vmatpush1.msra.mxu0 %v1525
      %1933 = vmatprep.subr.mxu0 %v1535
      %1934 = vmatpush1.msra.mxu0 %v1534
      %1935 = vmatprep.subr.mxu0 %v1544
      %1936 = vmatpush1.msra.mxu0 %v1543
      %1937 = vmatprep.subr.mxu0 %v1553
      %1938 = vmatpush1.msra.mxu0 %v1552
      %1939 = vmatprep.subr.mxu0 %v1562
      %1940 = vmatpush1.msra.mxu0 %v1561
      %1941 = vmatprep.subr.mxu0 %v1571
      %1942 = vmatpush1.msra.mxu0 %v1570
      %1943 = vmatprep.subr.mxu0 %v1580
      %1944 = vmatpush1.msra.mxu0 %v1579
      %1945 = vmatprep.subr.mxu0 %v1589
      %1946 = vmatpush1.msra.mxu0 %v1588
      %1947 = vmatprep.subr.mxu0 %v1598
      %1948 = vmatpush1.msra.mxu0 %v1597
      %1949 = vmatprep.subr.mxu0 %v1607
      %1950 = vmatpush1.msra.mxu0 %v1606
      %1951 = vmatprep.subr.mxu0 %v1616
      %1952 = vmatpush1.msra.mxu0 %v1615
      %1953 = vmatprep.subr.mxu0 %v1625
      %1954 = vmatpush1.msra.mxu0 %v1624
      %1955 = vmatprep.subr.mxu0 %v1634
      %1956 = vmatpush1.msra.mxu0 %v1633
      %1957 = vmatprep.subr.mxu0 %v1643
      %1958 = vmatpush1.msra.mxu0 %v1642
      %1959 = vmatprep.subr.mxu0 %v1652
      %1960 = vmatpush1.msra.mxu0 %v1651
      %1961 = vmatprep.subr.mxu0 %v1661
      %1962 = vmatpush1.msra.mxu0 %v1660
      %1963 = vmatprep.subr.mxu0 %v1670
      %1964 = vmatpush1.msra.mxu0 %v1669
      %1965 = vmatprep.subr.mxu0 %v1679
      %1966 = vmatpush1.msra.mxu0 %v1678
      %1967 = vmatprep.subr.mxu0 0.0
      %1968 = vmatpush1.msra.mxu0 0.0
      %1969 = vmatprep.subr.mxu0 0.0
      %1970 = vmatpush1.msra.mxu0 0.0
      %1971 = vmatprep.subr.mxu0 0.0
      %1972 = vmatpush1.msra.mxu0 0.0
      %1973 = vmatprep.subr.mxu0 0.0
      %1974 = vmatpush1.msra.mxu0 0.0
      %1975 = vmatprep.subr.mxu0 0.0
      %1976 = vmatpush1.msra.mxu0 0.0
      %1977 = vmatprep.subr.mxu0 0.0
      %1978 = vmatpush1.msra.mxu0 0.0
      %1979 = vmatprep.subr.mxu0 0.0
      %1980 = vmatpush1.msra.mxu0 0.0
      %1981 = vmatprep.subr.mxu0 0.0
      %1982 = vmatpush1.msra.mxu0 0.0
      %1983 = vmatprep.subr.mxu0 0.0
      %1984 = vmatpush1.msra.mxu0 0.0
      %1985 = vmatprep.subr.mxu0 0.0
      %1986 = vmatpush1.msra.mxu0 0.0
      %1987 = vmatprep.subr.mxu0 0.0
      %1988 = vmatpush1.msra.mxu0 0.0
      %1989 = vmatprep.subr.mxu0 0.0
      %1990 = vmatpush1.msra.mxu0 0.0
      %1991 = vmatprep.subr.mxu0 0.0
      %1992 = vmatpush1.msra.mxu0 0.0
      %1993 = vmatprep.subr.mxu0 0.0
      %1994 = vmatpush1.msra.mxu0 0.0
      %1995 = vmatprep.mubr.f32.mxu0 %v1849
      %1996 = vmatmul.mubr.f32.gmra.mrb[0].mxu0 %v757
      %v1997 = vpop.f32.mrb[0].mxu0
      %v1998 = vadd.f32 %v923, %v1997
      %v1999 = vpop.f32.mrb[0].mxu0
      %v2000 = vadd.f32 %v925, %v1999
      %2001 = vmatprep.mubr.f32.mxu0 %v1852
      %2002 = vmatmul.mubr.f32.gmra.mrb[0].mxu0 %v759
      %v2003 = vpop.f32.mrb[0].mxu0
      %v2004 = vadd.f32 %v929, %v2003
      %v2005 = vpop.f32.mrb[0].mxu0
      %v2006 = vadd.f32 %v931, %v2005
      %2007 = vdwg.mxu0
      %2008 = vmatprep.subr.mxu0 %v1528
      %2009 = vmatpush1.msra.mxu0 %v1527
      %2010 = vmatprep.subr.mxu0 %v1537
      %2011 = vmatpush1.msra.mxu0 %v1536
      %2012 = vmatprep.subr.mxu0 %v1546
      %2013 = vmatpush1.msra.mxu0 %v1545
      %2014 = vmatprep.subr.mxu0 %v1555
      %2015 = vmatpush1.msra.mxu0 %v1554
      %2016 = vmatprep.subr.mxu0 %v1564
      %2017 = vmatpush1.msra.mxu0 %v1563
      %2018 = vmatprep.subr.mxu0 %v1573
      %2019 = vmatpush1.msra.mxu0 %v1572
      %2020 = vmatprep.subr.mxu0 %v1582
      %2021 = vmatpush1.msra.mxu0 %v1581
      %2022 = vmatprep.subr.mxu0 %v1591
      %2023 = vmatpush1.msra.mxu0 %v1590
      %2024 = vmatprep.subr.mxu0 %v1600
      %2025 = vmatpush1.msra.mxu0 %v1599
      %2026 = vmatprep.subr.mxu0 %v1609
      %2027 = vmatpush1.msra.mxu0 %v1608
      %2028 = vmatprep.subr.mxu0 %v1618
      %2029 = vmatpush1.msra.mxu0 %v1617
      %2030 = vmatprep.subr.mxu0 %v1627
      %2031 = vmatpush1.msra.mxu0 %v1626
      %2032 = vmatprep.subr.mxu0 %v1636
      %2033 = vmatpush1.msra.mxu0 %v1635
      %2034 = vmatprep.subr.mxu0 %v1645
      %2035 = vmatpush1.msra.mxu0 %v1644
      %2036 = vmatprep.subr.mxu0 %v1654
      %2037 = vmatpush1.msra.mxu0 %v1653
      %2038 = vmatprep.subr.mxu0 %v1663
      %2039 = vmatpush1.msra.mxu0 %v1662
      %2040 = vmatprep.subr.mxu0 %v1672
      %2041 = vmatpush1.msra.mxu0 %v1671
      %2042 = vmatprep.subr.mxu0 %v1681
      %2043 = vmatpush1.msra.mxu0 %v1680
      %2044 = vmatprep.subr.mxu0 0.0
      %2045 = vmatpush1.msra.mxu0 0.0
      %2046 = vmatprep.subr.mxu0 0.0
      %2047 = vmatpush1.msra.mxu0 0.0
      %2048 = vmatprep.subr.mxu0 0.0
      %2049 = vmatpush1.msra.mxu0 0.0
      %2050 = vmatprep.subr.mxu0 0.0
      %2051 = vmatpush1.msra.mxu0 0.0
      %2052 = vmatprep.subr.mxu0 0.0
      %2053 = vmatpush1.msra.mxu0 0.0
      %2054 = vmatprep.subr.mxu0 0.0
      %2055 = vmatpush1.msra.mxu0 0.0
      %2056 = vmatprep.subr.mxu0 0.0
      %2057 = vmatpush1.msra.mxu0 0.0
      %2058 = vmatprep.subr.mxu0 0.0
      %2059 = vmatpush1.msra.mxu0 0.0
      %2060 = vmatprep.subr.mxu0 0.0
      %2061 = vmatpush1.msra.mxu0 0.0
      %2062 = vmatprep.subr.mxu0 0.0
      %2063 = vmatpush1.msra.mxu0 0.0
      %2064 = vmatprep.subr.mxu0 0.0
      %2065 = vmatpush1.msra.mxu0 0.0
      %2066 = vmatprep.subr.mxu0 0.0
      %2067 = vmatpush1.msra.mxu0 0.0
      %2068 = vmatprep.subr.mxu0 0.0
      %2069 = vmatpush1.msra.mxu0 0.0
      %2070 = vmatprep.subr.mxu0 0.0
      %2071 = vmatpush1.msra.mxu0 0.0
      %2072 = vmatprep.mubr.f32.mxu0 %v1849
      %2073 = vmatmul.mubr.f32.gmra.mrb[0].mxu0 %v757
      %v2074 = vpop.f32.mrb[0].mxu0
      %v2075 = vadd.f32 %v1000, %v2074
      %v2076 = vpop.f32.mrb[0].mxu0
      %v2077 = vadd.f32 %v1002, %v2076
      %2078 = vmatprep.mubr.f32.mxu0 %v1852
      %2079 = vmatmul.mubr.f32.gmra.mrb[0].mxu0 %v759
      %v2080 = vpop.f32.mrb[0].mxu0
      %v2081 = vadd.f32 %v1006, %v2080
      %v2082 = vpop.f32.mrb[0].mxu0
      %v2083 = vadd.f32 %v1008, %v2082
      %2084 = vdwg.mxu0
      %2085 = vmatprep.subr.mxu0 %v1530
      %2086 = vmatpush1.msra.mxu0 %v1529
      %2087 = vmatprep.subr.mxu0 %v1539
      %2088 = vmatpush1.msra.mxu0 %v1538
      %2089 = vmatprep.subr.mxu0 %v1548
      %2090 = vmatpush1.msra.mxu0 %v1547
      %2091 = vmatprep.subr.mxu0 %v1557
      %2092 = vmatpush1.msra.mxu0 %v1556
      %2093 = vmatprep.subr.mxu0 %v1566
      %2094 = vmatpush1.msra.mxu0 %v1565
      %2095 = vmatprep.subr.mxu0 %v1575
      %2096 = vmatpush1.msra.mxu0 %v1574
      %2097 = vmatprep.subr.mxu0 %v1584
      %2098 = vmatpush1.msra.mxu0 %v1583
      %2099 = vmatprep.subr.mxu0 %v1593
      %2100 = vmatpush1.msra.mxu0 %v1592
      %2101 = vmatprep.subr.mxu0 %v1602
      %2102 = vmatpush1.msra.mxu0 %v1601
      %2103 = vmatprep.subr.mxu0 %v1611
      %2104 = vmatpush1.msra.mxu0 %v1610
      %2105 = vmatprep.subr.mxu0 %v1620
      %2106 = vmatpush1.msra.mxu0 %v1619
      %2107 = vmatprep.subr.mxu0 %v1629
      %2108 = vmatpush1.msra.mxu0 %v1628
      %2109 = vmatprep.subr.mxu0 %v1638
      %2110 = vmatpush1.msra.mxu0 %v1637
      %2111 = vmatprep.subr.mxu0 %v1647
      %2112 = vmatpush1.msra.mxu0 %v1646
      %2113 = vmatprep.subr.mxu0 %v1656
      %2114 = vmatpush1.msra.mxu0 %v1655
      %2115 = vmatprep.subr.mxu0 %v1665
      %2116 = vmatpush1.msra.mxu0 %v1664
      %2117 = vmatprep.subr.mxu0 %v1674
      %2118 = vmatpush1.msra.mxu0 %v1673
      %2119 = vmatprep.subr.mxu0 %v1683
      %2120 = vmatpush1.msra.mxu0 %v1682
      %2121 = vmatprep.subr.mxu0 0.0
      %2122 = vmatpush1.msra.mxu0 0.0
      %2123 = vmatprep.subr.mxu0 0.0
      %2124 = vmatpush1.msra.mxu0 0.0
      %2125 = vmatprep.subr.mxu0 0.0
      %2126 = vmatpush1.msra.mxu0 0.0
      %2127 = vmatprep.subr.mxu0 0.0
      %2128 = vmatpush1.msra.mxu0 0.0
      %2129 = vmatprep.subr.mxu0 0.0
      %2130 = vmatpush1.msra.mxu0 0.0
      %2131 = vmatprep.subr.mxu0 0.0
      %2132 = vmatpush1.msra.mxu0 0.0
      %2133 = vmatprep.subr.mxu0 0.0
      %2134 = vmatpush1.msra.mxu0 0.0
      %2135 = vmatprep.subr.mxu0 0.0
      %2136 = vmatpush1.msra.mxu0 0.0
      %2137 = vmatprep.subr.mxu0 0.0
      %2138 = vmatpush1.msra.mxu0 0.0
      %2139 = vmatprep.subr.mxu0 0.0
      %2140 = vmatpush1.msra.mxu0 0.0
      %2141 = vmatprep.subr.mxu0 0.0
      %2142 = vmatpush1.msra.mxu0 0.0
      %2143 = vmatprep.subr.mxu0 0.0
      %2144 = vmatpush1.msra.mxu0 0.0
      %2145 = vmatprep.subr.mxu0 0.0
      %2146 = vmatpush1.msra.mxu0 0.0
      %2147 = vmatprep.subr.mxu0 0.0
      %2148 = vmatpush1.msra.mxu0 0.0
      %2149 = vmatprep.mubr.f32.mxu0 %v1849
      %2150 = vmatmul.mubr.f32.gmra.mrb[0].mxu0 %v757
      %v2151 = vpop.f32.mrb[0].mxu0
      %v2152 = vadd.f32 %v1077, %v2151
      %v2153 = vpop.f32.mrb[0].mxu0
      %v2154 = vadd.f32 %v1079, %v2153
      %2155 = vmatprep.mubr.f32.mxu0 %v1852
      %2156 = vmatmul.mubr.f32.gmra.mrb[0].mxu0 %v759
      %v2157 = vpop.f32.mrb[0].mxu0
      %v2158 = vadd.f32 %v1083, %v2157
      %v2159 = vpop.f32.mrb[0].mxu0
      %v2160 = vadd.f32 %v1085, %v2159
      %2161 = vdwg.mxu0
      %2162 = vmatprep.subr.mxu0 0.0
      %2163 = vmatpush1.msra.mxu0 %v1531
      %2164 = vmatprep.subr.mxu0 0.0
      %2165 = vmatpush1.msra.mxu0 %v1540
      %2166 = vmatprep.subr.mxu0 0.0
      %2167 = vmatpush1.msra.mxu0 %v1549
      %2168 = vmatprep.subr.mxu0 0.0
      %2169 = vmatpush1.msra.mxu0 %v1558
      %2170 = vmatprep.subr.mxu0 0.0
      %2171 = vmatpush1.msra.mxu0 %v1567
      %2172 = vmatprep.subr.mxu0 0.0
      %2173 = vmatpush1.msra.mxu0 %v1576
      %2174 = vmatprep.subr.mxu0 0.0
      %2175 = vmatpush1.msra.mxu0 %v1585
      %2176 = vmatprep.subr.mxu0 0.0
      %2177 = vmatpush1.msra.mxu0 %v1594
      %2178 = vmatprep.subr.mxu0 0.0
      %2179 = vmatpush1.msra.mxu0 %v1603
      %2180 = vmatprep.subr.mxu0 0.0
      %2181 = vmatpush1.msra.mxu0 %v1612
      %2182 = vmatprep.subr.mxu0 0.0
      %2183 = vmatpush1.msra.mxu0 %v1621
      %2184 = vmatprep.subr.mxu0 0.0
      %2185 = vmatpush1.msra.mxu0 %v1630
      %2186 = vmatprep.subr.mxu0 0.0
      %2187 = vmatpush1.msra.mxu0 %v1639
      %2188 = vmatprep.subr.mxu0 0.0
      %2189 = vmatpush1.msra.mxu0 %v1648
      %2190 = vmatprep.subr.mxu0 0.0
      %2191 = vmatpush1.msra.mxu0 %v1657
      %2192 = vmatprep.subr.mxu0 0.0
      %2193 = vmatpush1.msra.mxu0 %v1666
      %2194 = vmatprep.subr.mxu0 0.0
      %2195 = vmatpush1.msra.mxu0 %v1675
      %2196 = vmatprep.subr.mxu0 0.0
      %2197 = vmatpush1.msra.mxu0 %v1684
      %2198 = vmatprep.subr.mxu0 0.0
      %2199 = vmatpush1.msra.mxu0 0.0
      %2200 = vmatprep.subr.mxu0 0.0
      %2201 = vmatpush1.msra.mxu0 0.0
      %2202 = vmatprep.subr.mxu0 0.0
      %2203 = vmatpush1.msra.mxu0 0.0
      %2204 = vmatprep.subr.mxu0 0.0
      %2205 = vmatpush1.msra.mxu0 0.0
      %2206 = vmatprep.subr.mxu0 0.0
      %2207 = vmatpush1.msra.mxu0 0.0
      %2208 = vmatprep.subr.mxu0 0.0
      %2209 = vmatpush1.msra.mxu0 0.0
      %2210 = vmatprep.subr.mxu0 0.0
      %2211 = vmatpush1.msra.mxu0 0.0
      %2212 = vmatprep.subr.mxu0 0.0
      %2213 = vmatpush1.msra.mxu0 0.0
      %2214 = vmatprep.subr.mxu0 0.0
      %2215 = vmatpush1.msra.mxu0 0.0
      %2216 = vmatprep.subr.mxu0 0.0
      %2217 = vmatpush1.msra.mxu0 0.0
      %2218 = vmatprep.subr.mxu0 0.0
      %2219 = vmatpush1.msra.mxu0 0.0
      %2220 = vmatprep.subr.mxu0 0.0
      %2221 = vmatpush1.msra.mxu0 0.0
      %2222 = vmatprep.subr.mxu0 0.0
      %2223 = vmatpush1.msra.mxu0 0.0
      %2224 = vmatprep.subr.mxu0 0.0
      %2225 = vmatpush1.msra.mxu0 0.0
      %2226 = vmatprep.mubr.f32.mxu0 %v1849
      %2227 = vmatmul.mubr.f32.gmra.mrb[0].mxu0 %v757
      %v2228 = vpop.f32.mrb[0].mxu0
      %v2229 = vadd.f32 %v1154, %v2228
      %v2230 = vpop.f32.mrb[0].mxu0
      %2231 = vmatprep.mubr.f32.mxu0 %v1852
      %2232 = vmatmul.mubr.f32.gmra.mrb[0].mxu0 %v759
      %v2233 = vpop.f32.mrb[0].mxu0
      %v2234 = vadd.f32 %v1159, %v2233
      %v2235 = vpop.f32.mrb[0].mxu0
      %2236 = vdwg.mxu0
      %v2237 = vld [vmem:[%s4] sm:$0xff]
      %v2238 = vld [vmem:[%s4 + $0x8] sm:$0xff]
      %2240 = vset.pattern.permute.xlu0 0
      %2241 = vperm.xlu0 %2240, %v2237
      %v2242 = vpop.permute.xlu0 %2241
      %2245 = vset.pattern.permute.xlu0 0
      %2246 = vperm.xlu0 %2245, %v2238
      %v2247 = vpop.permute.xlu0 %2246
      %v2249 = vadd.f32 %v1921, %v2242
      %v2250 = vadd.f32 %v1923, %v2242
      %v2251 = vadd.f32 %v1998, %v2242
      %v2252 = vadd.f32 %v2000, %v2242
      %v2253 = vadd.f32 %v2075, %v2242
      %v2254 = vadd.f32 %v2077, %v2242
      %v2255 = vadd.f32 %v2152, %v2242
      %v2256 = vadd.f32 %v2154, %v2242
      %v2257 = vadd.f32 %v2229, %v2242
      %v2258 = vadd.f32 %v1927, %v2247
      %v2259 = vadd.f32 %v1929, %v2247
      %v2260 = vadd.f32 %v2004, %v2247
      %v2261 = vadd.f32 %v2006, %v2247
      %v2262 = vadd.f32 %v2081, %v2247
      %v2263 = vadd.f32 %v2083, %v2247
      %v2264 = vadd.f32 %v2158, %v2247
      %v2265 = vadd.f32 %v2160, %v2247
      %v2266 = vadd.f32 %v2234, %v2247
      %v2267 = vxor.u32 %v2249, 2147483648
      %v2268 = vxor.u32 %v2250, 2147483648
      %v2269 = vxor.u32 %v2251, 2147483648
      %v2270 = vxor.u32 %v2252, 2147483648
      %v2271 = vxor.u32 %v2253, 2147483648
      %v2272 = vxor.u32 %v2254, 2147483648
      %v2273 = vxor.u32 %v2255, 2147483648
      %v2274 = vxor.u32 %v2256, 2147483648
      %v2275 = vxor.u32 %v2257, 2147483648
      %v2276 = vxor.u32 %v2258, 2147483648
      %v2277 = vxor.u32 %v2259, 2147483648
      %v2278 = vxor.u32 %v2260, 2147483648
      %v2279 = vxor.u32 %v2261, 2147483648
      %v2280 = vxor.u32 %v2262, 2147483648
      %v2281 = vxor.u32 %v2263, 2147483648
      %v2282 = vxor.u32 %v2264, 2147483648
      %v2283 = vxor.u32 %v2265, 2147483648
      %v2284 = vxor.u32 %v2266, 2147483648
      %v2285 = vmul.f32 %v2267, 1.442695
      %v2286 = vpow.pop %v2285
      %v2287 = vmul.f32 %v2268, 1.442695
      %v2288 = vpow.pop %v2287
      %v2289 = vmul.f32 %v2269, 1.442695
      %v2290 = vpow.pop %v2289
      %v2291 = vmul.f32 %v2270, 1.442695
      %v2292 = vpow.pop %v2291
      %v2293 = vmul.f32 %v2271, 1.442695
      %v2294 = vpow.pop %v2293
      %v2295 = vmul.f32 %v2272, 1.442695
      %v2296 = vpow.pop %v2295
      %v2297 = vmul.f32 %v2273, 1.442695
      %v2298 = vpow.pop %v2297
      %v2299 = vmul.f32 %v2274, 1.442695
      %v2300 = vpow.pop %v2299
      %v2301 = vmul.f32 %v2275, 1.442695
      %v2302 = vpow.pop %v2301
      %v2303 = vmul.f32 %v2276, 1.442695
      %v2304 = vpow.pop %v2303
      %v2305 = vmul.f32 %v2277, 1.442695
      %v2306 = vpow.pop %v2305
      %v2307 = vmul.f32 %v2278, 1.442695
      %v2308 = vpow.pop %v2307
      %v2309 = vmul.f32 %v2279, 1.442695
      %v2310 = vpow.pop %v2309
      %v2311 = vmul.f32 %v2280, 1.442695
      %v2312 = vpow.pop %v2311
      %v2313 = vmul.f32 %v2281, 1.442695
      %v2314 = vpow.pop %v2313
      %v2315 = vmul.f32 %v2282, 1.442695
      %v2316 = vpow.pop %v2315
      %v2317 = vmul.f32 %v2283, 1.442695
      %v2318 = vpow.pop %v2317
      %v2319 = vmul.f32 %v2284, 1.442695
      %v2320 = vpow.pop %v2319
      %v2321 = vadd.f32 %v2286, 1.0
      %v2322 = vadd.f32 %v2288, 1.0
      %v2323 = vadd.f32 %v2290, 1.0
      %v2324 = vadd.f32 %v2292, 1.0
      %v2325 = vadd.f32 %v2294, 1.0
      %v2326 = vadd.f32 %v2296, 1.0
      %v2327 = vadd.f32 %v2298, 1.0
      %v2328 = vadd.f32 %v2300, 1.0
      %v2329 = vadd.f32 %v2302, 1.0
      %v2330 = vadd.f32 %v2304, 1.0
      %v2331 = vadd.f32 %v2306, 1.0
      %v2332 = vadd.f32 %v2308, 1.0
      %v2333 = vadd.f32 %v2310, 1.0
      %v2334 = vadd.f32 %v2312, 1.0
      %v2335 = vadd.f32 %v2314, 1.0
      %v2336 = vadd.f32 %v2316, 1.0
      %v2337 = vadd.f32 %v2318, 1.0
      %v2338 = vadd.f32 %v2320, 1.0
      %v2339 = vrcp.pop %v2321
      %v2340 = vmul.f32 1.0, %v2339
      %v2341 = vrcp.pop %v2322
      %v2342 = vmul.f32 1.0, %v2341
      %v2343 = vrcp.pop %v2323
      %v2344 = vmul.f32 1.0, %v2343
      %v2345 = vrcp.pop %v2324
      %v2346 = vmul.f32 1.0, %v2345
      %v2347 = vrcp.pop %v2325
      %v2348 = vmul.f32 1.0, %v2347
      %v2349 = vrcp.pop %v2326
      %v2350 = vmul.f32 1.0, %v2349
      %v2351 = vrcp.pop %v2327
      %v2352 = vmul.f32 1.0, %v2351
      %v2353 = vrcp.pop %v2328
      %v2354 = vmul.f32 1.0, %v2353
      %v2355 = vrcp.pop %v2329
      %v2356 = vmul.f32 1.0, %v2355
      %v2357 = vrcp.pop %v2330
      %v2358 = vmul.f32 1.0, %v2357
      %v2359 = vrcp.pop %v2331
      %v2360 = vmul.f32 1.0, %v2359
      %v2361 = vrcp.pop %v2332
      %v2362 = vmul.f32 1.0, %v2361
      %v2363 = vrcp.pop %v2333
      %v2364 = vmul.f32 1.0, %v2363
      %v2365 = vrcp.pop %v2334
      %v2366 = vmul.f32 1.0, %v2365
      %v2367 = vrcp.pop %v2335
      %v2368 = vmul.f32 1.0, %v2367
      %v2369 = vrcp.pop %v2336
      %v2370 = vmul.f32 1.0, %v2369
      %v2371 = vrcp.pop %v2337
      %v2372 = vmul.f32 1.0, %v2371
      %v2373 = vrcp.pop %v2338
      %v2374 = vmul.f32 1.0, %v2373
      %v2375 = vmul.f32 %v2249, %v2340
      %v2376 = vmul.f32 %v2250, %v2342
      %v2377 = vmul.f32 %v2251, %v2344
      %v2378 = vmul.f32 %v2252, %v2346
      %v2379 = vmul.f32 %v2253, %v2348
      %v2380 = vmul.f32 %v2254, %v2350
      %v2381 = vmul.f32 %v2255, %v2352
      %v2382 = vmul.f32 %v2256, %v2354
      %v2383 = vmul.f32 %v2257, %v2356
      %v2384 = vmul.f32 %v2258, %v2358
      %v2385 = vmul.f32 %v2259, %v2360
      %v2386 = vmul.f32 %v2260, %v2362
      %v2387 = vmul.f32 %v2261, %v2364
      %v2388 = vmul.f32 %v2262, %v2366
      %v2389 = vmul.f32 %v2263, %v2368
      %v2390 = vmul.f32 %v2264, %v2370
      %v2391 = vmul.f32 %v2265, %v2372
      %v2392 = vmul.f32 %v2266, %v2374
      %2393 = vst [vmem:[%s244] sm:$0xff] %v2375
      %2394 = vst [vmem:[%s244 + $0x8] sm:$0xff] %v2376
      %2395 = vst [vmem:[%s244 + $0x10] sm:$0xff] %v2377
      %2396 = vst [vmem:[%s244 + $0x18] sm:$0xff] %v2378
      %2397 = vst [vmem:[%s244 + $0x20] sm:$0xff] %v2379
      %2398 = vst [vmem:[%s244 + $0x28] sm:$0xff] %v2380
      %2399 = vst [vmem:[%s244 + $0x30] sm:$0xff] %v2381
      %2400 = vst [vmem:[%s244 + $0x38] sm:$0xff] %v2382
      %2401 = vst [vmem:[%s244 + $0x40] sm:$0xff] %v2383
      %2402 = vst [vmem:[%s244 + $0x48] sm:$0xff] %v2384
      %2403 = vst [vmem:[%s244 + $0x50] sm:$0xff] %v2385
      %2404 = vst [vmem:[%s244 + $0x58] sm:$0xff] %v2386
      %2405 = vst [vmem:[%s244 + $0x60] sm:$0xff] %v2387
      %2406 = vst [vmem:[%s244 + $0x68] sm:$0xff] %v2388
      %2407 = vst [vmem:[%s244 + $0x70] sm:$0xff] %v2389
      %2408 = vst [vmem:[%s244 + $0x78] sm:$0xff] %v2390
      %2409 = vst [vmem:[%s244 + $0x80] sm:$0xff] %v2391
      %2410 = vst [vmem:[%s244 + $0x88] sm:$0xff] %v2392
      %p2411 = scmp.lt.s32.totalorder %s16, 1
      %s2412 = scalar_select %p2411, %s16, 1
      %s2413 = smul.addr %s2412, 18
      %s2414 = smul.addr %s2413, 8
      %s2415 = scalar_lea.vmem %s5, %s2414
      // Predicated region
      $region41: #{_decode.6} parent=39 // pred_check
        %p2416 = pneg %p149
      $region42: #{_decode.6} parent=39 // pred_check_branch
        %2418 = sbr.rel (%p2416) target = $region44
      $region43: #{_decode.6} parent=39 // pred_region
        _
      $region44: #{_decode.6} parent=39 // pred_fallthru
        _
    $region40: #{_decode.6} parent=5 // pred_fallthru
      _
    %p2419 = scmp.le.s32.totalorder 2, %s11
    // Predicated region
    $region45: #{_decode.6} parent=5 // pred_check
      %p2420 = pneg %p2419
    $region46: #{_decode.6} parent=5 // pred_check_branch
      %2422 = sbr.rel (%p2420) target = $region48
    $region47: #{_decode.6} parent=5 // pred_region
      %s2423 = ssub.s32 %s11, 2
      // Predicated region
      $region49: #{_decode.6} parent=47 // pred_check
        %p2424 = pneg %p155
      $region50: #{_decode.6} parent=47 // pred_check_branch
        %2426 = sbr.rel (%p2424) target = $region52
      $region51: #{_decode.6} parent=47 // pred_region
        %p2427 = scmp.lt.s32.totalorder %s17, 1
        %s2428 = scalar_select %p2427, %s17, 1
        %s2429 = smul.addr %s2428, 18
        %s2430 = smul.addr %s2429, 8
        %s2431 = scalar_lea.vmem %s5, %s2430
      $region52: #{_decode.6} parent=47 // pred_fallthru
        _
    $region48: #{_decode.6} parent=5 // pred_fallthru
      _
  $region6: #{_decode.6} parent=0 // loop_footer
    %s15 = sadd.s32 1, %s11
  $region7: #{_decode.6} parent=0 // loop_footer_branch
    %10 = sbr.rel target = $region3
  $region8: #{_decode.6} parent=0 // loop_exit
    _

// kernel: _decode.7
$region0: #{_decode.7}
  #allocation0 [shape = 'u32[]', space=smem, size = 0x4, offset = 0x4, fixed_abs, tag = 'smem constant byte address 0x4 - core index']
  #allocation1 [shape = 'u32[144,128]{1,0:T(1,128)}', space=vmem, size = 0x12000, scoped, tag = 'internal scratch']
  %s0 = inlined_call_operand.vmem [shape: f32[2,16,1296], index: 0, kind: input, shape index: {}]
  %s1 = inlined_call_operand.vmem [shape: f32[8,144], index: 1, kind: input, shape index: {}]
  %s2 = inlined_call_operand.vmem [shape: f32[8,1], index: 2, kind: input, shape index: {}]
  %s3 = inlined_call_operand.vmem [shape: f32[2,8,1152], index: 3, kind: output, shape index: {}]
  %s4 = sld [smem:[#allocation0]]
  $region45: #{_decode.7} parent=0
    _
  %s6 = ssub.s32 1, %s4
  %s7 = scalar_select 0, %s6, %s4
  loop: start=0, step=1, limit=4
  $region2: #{_decode.7} parent=0 // loop_pre_header
    _
  $region3: #{_decode.7} parent=0 // loop_header
    %s9 = sphi 0, %s13
    %p10 = scmp.ge.s32.totalorder %s9, 4
    %s19 = sphi 0, %s21
    %s22 = sphi 0, %s19
    %s23 = sphi 0, %s22
    %s39 = sphi 0, %s23
    %s43 = sphi 0, %s43
    %s45 = sphi 0, %s43
    %s46 = sphi 0, %s45
    %s60 = sphi 0, %s46
    %s64 = sphi 0, %s64
    %s66 = sphi 0, %s64
    %s67 = sphi 0, %s66
    %s81 = sphi 0, %s67
    %s87 = sphi 0, %s89
    %s90 = sphi 0, %s87
    %s91 = sphi 0, %s90
    %s107 = sphi 0, %s91
  $region4: #{_decode.7} parent=0 // loop_header_branch
    %12 = sbr.rel (%p10) target = $region8
  $region5: #{_decode.7} parent=0 // loop_body
    %s14 = ssub.s32 %s9, 1
    %s15 = ssub.s32 %s9, 2
    %s16 = sadd.s32 %s9, 1
    %s17 = ssub.s32 %s9, %s16
    %p18 = scmp.eq.s32.totalorder %s17, 0
    %s20 = sadd.s32 %s19, 1
    %s21 = scalar_select %p18, %s19, %s20
    %p24 = pneg %p18
    %p25 = scmp.eq.s32.totalorder %s9, 1
    %p26 = por %p24, %p25
    %p27 = scmp.ne.s32.totalorder %s19, %s22
    %p28 = scmp.eq.s32.totalorder %s9, 0
    %p29 = por %p27, %p28
    %p30 = scmp.ne.s32.totalorder %s19, %s22
    %p31 = scmp.eq.s32.totalorder %s14, 1
    %p32 = por %p30, %p31
    %p33 = scmp.ne.s32.totalorder %s22, %s23
    %p34 = scmp.eq.s32.totalorder %s14, 0
    %p35 = por %p33, %p34
    %p36 = scmp.ne.s32.totalorder %s22, %s23
    %p37 = scmp.eq.s32.totalorder %s15, 1
    %p38 = por %p36, %p37
    %p40 = scmp.ne.s32.totalorder %s23, %s39
    %p41 = scmp.eq.s32.totalorder %s15, 0
    %p42 = por %p40, %p41
    %s44 = sadd.s32 %s43, 1
    %p47 = scmp.eq.s32.totalorder %s9, 1
    %p48 = scmp.ne.s32.totalorder %s43, %s45
    %p49 = scmp.eq.s32.totalorder %s9, 0
    %p50 = por %p48, %p49
    %p51 = scmp.ne.s32.totalorder %s43, %s45
    %p52 = scmp.eq.s32.totalorder %s14, 1
    %p53 = por %p51, %p52
    %p54 = scmp.ne.s32.totalorder %s45, %s46
    %p55 = scmp.eq.s32.totalorder %s14, 0
    %p56 = por %p54, %p55
    %p57 = scmp.ne.s32.totalorder %s45, %s46
    %p58 = scmp.eq.s32.totalorder %s15, 1
    %p59 = por %p57, %p58
    %p61 = scmp.ne.s32.totalorder %s46, %s60
    %p62 = scmp.eq.s32.totalorder %s15, 0
    %p63 = por %p61, %p62
    %s65 = sadd.s32 %s64, 1
    %p68 = scmp.eq.s32.totalorder %s9, 1
    %p69 = scmp.ne.s32.totalorder %s64, %s66
    %p70 = scmp.eq.s32.totalorder %s9, 0
    %p71 = por %p69, %p70
    %p72 = scmp.ne.s32.totalorder %s64, %s66
    %p73 = scmp.eq.s32.totalorder %s14, 1
    %p74 = por %p72, %p73
    %p75 = scmp.ne.s32.totalorder %s66, %s67
    %p76 = scmp.eq.s32.totalorder %s14, 0
    %p77 = por %p75, %p76
    %p78 = scmp.ne.s32.totalorder %s66, %s67
    %p79 = scmp.eq.s32.totalorder %s15, 1
    %p80 = por %p78, %p79
    %p82 = scmp.ne.s32.totalorder %s67, %s81
    %p83 = scmp.eq.s32.totalorder %s15, 0
    %p84 = por %p82, %p83
    %s85 = ssub.s32 %s9, %s16
    %p86 = scmp.eq.s32.totalorder %s85, 0
    %s88 = sadd.s32 %s87, 1
    %s89 = scalar_select %p86, %s87, %s88
    %p92 = pneg %p86
    %p93 = scmp.eq.s32.totalorder %s9, 1
    %p94 = por %p92, %p93
    %p95 = scmp.ne.s32.totalorder %s87, %s90
    %p96 = scmp.eq.s32.totalorder %s9, 0
    %p97 = por %p95, %p96
    %p98 = scmp.ne.s32.totalorder %s87, %s90
    %p99 = scmp.eq.s32.totalorder %s14, 1
    %p100 = por %p98, %p99
    %p101 = scmp.ne.s32.totalorder %s90, %s91
    %p102 = scmp.eq.s32.totalorder %s14, 0
    %p103 = por %p101, %p102
    %p104 = scmp.ne.s32.totalorder %s90, %s91
    %p105 = scmp.eq.s32.totalorder %s15, 1
    %p106 = por %p104, %p105
    %p108 = scmp.ne.s32.totalorder %s91, %s107
    %p109 = scmp.eq.s32.totalorder %s15, 0
    %p110 = por %p108, %p109
    %p111 = scmp.le.s32.totalorder 1, %s9
    %p112 = scmp.lt.s32.totalorder %s9, 3
    %p113 = pnand %p111, %p112
    %p114 = pneg %p113
    // Predicated region
    $region9: #{_decode.7} parent=5 // pred_check
      _
    $region10: #{_decode.7} parent=5 // pred_check_branch
      %116 = sbr.rel (%p113) target = $region12
    $region11: #{_decode.7} parent=5 // pred_region
      %s117 = ssub.s32 %s9, 1
      // Predicated region
      $region13: #{_decode.7} parent=11 // pred_check
        %p118 = pneg %p56
      $region14: #{_decode.7} parent=11 // pred_check_branch
        %120 = sbr.rel (%p118) target = $region16
      $region15: #{_decode.7} parent=11 // pred_region
        _
      $region16: #{_decode.7} parent=11 // pred_fallthru
        _
      // Predicated region
      $region17: #{_decode.7} parent=11 // pred_check
        %p121 = pneg %p77
      $region18: #{_decode.7} parent=11 // pred_check_branch
        %123 = sbr.rel (%p121) target = $region20
      $region19: #{_decode.7} parent=11 // pred_region
        _
      $region20: #{_decode.7} parent=11 // pred_fallthru
        _
    $region12: #{_decode.7} parent=5 // pred_fallthru
      _
    %p124 = scmp.lt.s32.totalorder %s9, 2
    // Predicated region
    $region21: #{_decode.7} parent=5 // pred_check
      %p125 = pneg %p124
    $region22: #{_decode.7} parent=5 // pred_check_branch
      %127 = sbr.rel (%p125) target = $region24
    $region23: #{_decode.7} parent=5 // pred_region
      // Predicated region
      $region25: #{_decode.7} parent=23 // pred_check
        %p128 = pneg %p29
      $region26: #{_decode.7} parent=23 // pred_check_branch
        %130 = sbr.rel (%p128) target = $region28
      $region27: #{_decode.7} parent=23 // pred_region
        %p131 = scmp.lt.s32.totalorder %s9, 1
        %s132 = scalar_select %p131, %s9, 1
        %s133 = smul.addr %s132, 22
        %s134 = smul.addr %s133, 8
        %s135 = scalar_lea.vmem %s0, %s134
      $region28: #{_decode.7} parent=23 // pred_fallthru
        _
    $region24: #{_decode.7} parent=5 // pred_fallthru
      _
    %p136 = scmp.le.s32.totalorder 1, %s9
    %p137 = scmp.lt.s32.totalorder %s9, 3
    %p138 = pnand %p136, %p137
    %p139 = pneg %p138
    // Predicated region
    $region29: #{_decode.7} parent=5 // pred_check
      _
    $region30: #{_decode.7} parent=5 // pred_check_branch
      %141 = sbr.rel (%p138) target = $region32
    $region31: #{_decode.7} parent=5 // pred_region
      %s142 = ssub.s32 %s9, 1
      %p143 = scmp.lt.s32.totalorder %s14, 1
      %s144 = scalar_select %p143, %s14, 1
      %s145 = smul.addr %s144, 22
      %s146 = smul.addr %s145, 8
      %s147 = scalar_lea.vmem %s0, %s146
      %p148 = pneg %p35
      %p149 = pneg %p32
      %p150 = pneg %p56
      %p151 = pneg %p53
      %p152 = pneg %p77
      %p153 = pneg %p74
      %p154 = pneg %p103
      %p155 = pneg %p100
      %p156 = scmp.lt.s32.totalorder %s14, 1
      %s157 = scalar_select %p156, %s14, 1
      %s158 = smul.addr %s157, 9
      %s159 = smul.addr %s158, 8
      %s160 = scalar_lea.vmem %s3, %s159
      %p161 = scmp.lt.s32.totalorder %s14, 1
      %s162 = scalar_select %p161, %s14, 1
      %s163 = smul.addr %s162, 22
      %s164 = smul.addr %s163, 8
      %s165 = scalar_lea.vmem %s0, %s164
      %p166 = scmp.lt.s32.totalorder %s14, 1
      %s167 = scalar_select %p166, %s14, 1
      %s168 = smul.addr %s167, 9
      %s169 = smul.addr %s168, 8
      %s170 = scalar_lea.vmem %s3, %s169
      %v171 = vld [vmem:[%s165] sm:$0xff]
      %v172 = vld [vmem:[%s165 + $0x8] sm:$0xff]
      %v173 = vld [vmem:[%s165 + $0x10] sm:$0xff]
      %v174 = vld [vmem:[%s165 + $0x18] sm:$0xff]
      %v175 = vld [vmem:[%s165 + $0x20] sm:$0xff]
      %v176 = vld [vmem:[%s165 + $0x28] sm:$0xff]
      %v177 = vld [vmem:[%s165 + $0x30] sm:$0xff]
      %v178 = vld [vmem:[%s165 + $0x38] sm:$0xff]
      %v179 = vld [vmem:[%s165 + $0x40] sm:$0xff]
      %v180 = vld [vmem:[%s165 + $0x48] sm:$0xff]
      %v181 = vld [vmem:[%s165 + $0x58] sm:$0xff]
      %v182 = vld [vmem:[%s165 + $0x60] sm:$0xff]
      %v183 = vld [vmem:[%s165 + $0x68] sm:$0xff]
      %v184 = vld [vmem:[%s165 + $0x70] sm:$0xff]
      %v185 = vld [vmem:[%s165 + $0x78] sm:$0xff]
      %v186 = vld [vmem:[%s165 + $0x80] sm:$0xff]
      %v187 = vld [vmem:[%s165 + $0x88] sm:$0xff]
      %v188 = vld [vmem:[%s165 + $0x90] sm:$0xff]
      %v189 = vld [vmem:[%s165 + $0x98] sm:$0xff]
      %v190 = vld [vmem:[%s165 + $0xa0] sm:$0xff]
      %211 = vrot.lane.b32.xlu0 %v171, 127
      %v212 = vpop.permute.xlu0 %211
      %213 = vrot.lane.b32.xlu0 %v172, 127
      %v214 = vpop.permute.xlu0 %213
      %215 = vrot.lane.b32.xlu0 %v173, 127
      %v216 = vpop.permute.xlu0 %215
      %217 = vrot.lane.b32.xlu0 %v174, 127
      %v218 = vpop.permute.xlu0 %217
      %219 = vrot.lane.b32.xlu0 %v175, 127
      %v220 = vpop.permute.xlu0 %219
      %221 = vrot.lane.b32.xlu0 %v176, 127
      %v222 = vpop.permute.xlu0 %221
      %223 = vrot.lane.b32.xlu0 %v177, 127
      %v224 = vpop.permute.xlu0 %223
      %225 = vrot.lane.b32.xlu0 %v178, 127
      %v226 = vpop.permute.xlu0 %225
      %227 = vrot.lane.b32.xlu0 %v179, 127
      %v228 = vpop.permute.xlu0 %227
      %229 = vrot.lane.b32.xlu0 %v180, 127
      %v230 = vpop.permute.xlu0 %229
      %231 = vrot.lane.b32.xlu0 %v181, 127
      %v232 = vpop.permute.xlu0 %231
      %233 = vrot.lane.b32.xlu0 %v182, 127
      %v234 = vpop.permute.xlu0 %233
      %235 = vrot.lane.b32.xlu0 %v183, 127
      %v236 = vpop.permute.xlu0 %235
      %237 = vrot.lane.b32.xlu0 %v184, 127
      %v238 = vpop.permute.xlu0 %237
      %239 = vrot.lane.b32.xlu0 %v185, 127
      %v240 = vpop.permute.xlu0 %239
      %241 = vrot.lane.b32.xlu0 %v186, 127
      %v242 = vpop.permute.xlu0 %241
      %243 = vrot.lane.b32.xlu0 %v187, 127
      %v244 = vpop.permute.xlu0 %243
      %245 = vrot.lane.b32.xlu0 %v188, 127
      %v246 = vpop.permute.xlu0 %245
      %247 = vrot.lane.b32.xlu0 %v189, 127
      %v248 = vpop.permute.xlu0 %247
      %249 = vrot.lane.b32.xlu0 %v190, 127
      %v250 = vpop.permute.xlu0 %249
      %vm251 = vcmask 1039360
      %v252 = vsel %vm251, %v212, %v214
      %v253 = vsel %vm251, %v214, %v216
      %v254 = vsel %vm251, %v216, %v218
      %v255 = vsel %vm251, %v218, %v220
      %v256 = vsel %vm251, %v220, %v222
      %v257 = vsel %vm251, %v222, %v224
      %v258 = vsel %vm251, %v224, %v226
      %v259 = vsel %vm251, %v226, %v228
      %v260 = vsel %vm251, %v228, %v230
      %v261 = vsel %vm251, %v232, %v234
      %v262 = vsel %vm251, %v234, %v236
      %v263 = vsel %vm251, %v236, %v238
      %v264 = vsel %vm251, %v238, %v240
      %v265 = vsel %vm251, %v240, %v242
      %v266 = vsel %vm251, %v242, %v244
      %v267 = vsel %vm251, %v244, %v246
      %v268 = vsel %vm251, %v246, %v248
      %v269 = vsel %vm251, %v248, %v250
      %270 = vrot.lane.b32.xlu0 %v171, 126
      %v271 = vpop.permute.xlu0 %270
      %272 = vrot.lane.b32.xlu0 %v172, 126
      %v273 = vpop.permute.xlu0 %272
      %274 = vrot.lane.b32.xlu0 %v173, 126
      %v275 = vpop.permute.xlu0 %274
      %276 = vrot.lane.b32.xlu0 %v174, 126
      %v277 = vpop.permute.xlu0 %276
      %278 = vrot.lane.b32.xlu0 %v175, 126
      %v279 = vpop.permute.xlu0 %278
      %280 = vrot.lane.b32.xlu0 %v176, 126
      %v281 = vpop.permute.xlu0 %280
      %282 = vrot.lane.b32.xlu0 %v177, 126
      %v283 = vpop.permute.xlu0 %282
      %284 = vrot.lane.b32.xlu0 %v178, 126
      %v285 = vpop.permute.xlu0 %284
      %286 = vrot.lane.b32.xlu0 %v179, 126
      %v287 = vpop.permute.xlu0 %286
      %288 = vrot.lane.b32.xlu0 %v180, 126
      %v289 = vpop.permute.xlu0 %288
      %290 = vrot.lane.b32.xlu0 %v181, 126
      %v291 = vpop.permute.xlu0 %290
      %292 = vrot.lane.b32.xlu0 %v182, 126
      %v293 = vpop.permute.xlu0 %292
      %294 = vrot.lane.b32.xlu0 %v183, 126
      %v295 = vpop.permute.xlu0 %294
      %296 = vrot.lane.b32.xlu0 %v184, 126
      %v297 = vpop.permute.xlu0 %296
      %298 = vrot.lane.b32.xlu0 %v185, 126
      %v299 = vpop.permute.xlu0 %298
      %300 = vrot.lane.b32.xlu0 %v186, 126
      %v301 = vpop.permute.xlu0 %300
      %302 = vrot.lane.b32.xlu0 %v187, 126
      %v303 = vpop.permute.xlu0 %302
      %304 = vrot.lane.b32.xlu0 %v188, 126
      %v305 = vpop.permute.xlu0 %304
      %306 = vrot.lane.b32.xlu0 %v189, 126
      %v307 = vpop.permute.xlu0 %306
      %308 = vrot.lane.b32.xlu0 %v190, 126
      %v309 = vpop.permute.xlu0 %308
      %vm310 = vcmask 1031168
      %v311 = vsel %vm310, %v271, %v273
      %v312 = vsel %vm310, %v273, %v275
      %v313 = vsel %vm310, %v275, %v277
      %v314 = vsel %vm310, %v277, %v279
      %v315 = vsel %vm310, %v279, %v281
      %v316 = vsel %vm310, %v281, %v283
      %v317 = vsel %vm310, %v283, %v285
      %v318 = vsel %vm310, %v285, %v287
      %v319 = vsel %vm310, %v287, %v289
      %v320 = vsel %vm310, %v291, %v293
      %v321 = vsel %vm310, %v293, %v295
      %v322 = vsel %vm310, %v295, %v297
      %v323 = vsel %vm310, %v297, %v299
      %v324 = vsel %vm310, %v299, %v301
      %v325 = vsel %vm310, %v301, %v303
      %v326 = vsel %vm310, %v303, %v305
      %v327 = vsel %vm310, %v305, %v307
      %v328 = vsel %vm310, %v307, %v309
      %329 = vrot.lane.b32.xlu0 %v171, 92
      %v330 = vpop.permute.xlu0 %329
      %331 = vrot.lane.b32.xlu0 %v172, 92
      %v332 = vpop.permute.xlu0 %331
      %333 = vrot.lane.b32.xlu0 %v173, 92
      %v334 = vpop.permute.xlu0 %333
      %335 = vrot.lane.b32.xlu0 %v174, 92
      %v336 = vpop.permute.xlu0 %335
      %337 = vrot.lane.b32.xlu0 %v175, 92
      %v338 = vpop.permute.xlu0 %337
      %339 = vrot.lane.b32.xlu0 %v176, 92
      %v340 = vpop.permute.xlu0 %339
      %341 = vrot.lane.b32.xlu0 %v177, 92
      %v342 = vpop.permute.xlu0 %341
      %343 = vrot.lane.b32.xlu0 %v178, 92
      %v344 = vpop.permute.xlu0 %343
      %345 = vrot.lane.b32.xlu0 %v179, 92
      %v346 = vpop.permute.xlu0 %345
      %347 = vrot.lane.b32.xlu0 %v180, 92
      %v348 = vpop.permute.xlu0 %347
      %349 = vrot.lane.b32.xlu0 %v181, 92
      %v350 = vpop.permute.xlu0 %349
      %351 = vrot.lane.b32.xlu0 %v182, 92
      %v352 = vpop.permute.xlu0 %351
      %353 = vrot.lane.b32.xlu0 %v183, 92
      %v354 = vpop.permute.xlu0 %353
      %355 = vrot.lane.b32.xlu0 %v184, 92
      %v356 = vpop.permute.xlu0 %355
      %357 = vrot.lane.b32.xlu0 %v185, 92
      %v358 = vpop.permute.xlu0 %357
      %359 = vrot.lane.b32.xlu0 %v186, 92
      %v360 = vpop.permute.xlu0 %359
      %361 = vrot.lane.b32.xlu0 %v187, 92
      %v362 = vpop.permute.xlu0 %361
      %363 = vrot.lane.b32.xlu0 %v188, 92
      %v364 = vpop.permute.xlu0 %363
      %365 = vrot.lane.b32.xlu0 %v189, 92
      %v366 = vpop.permute.xlu0 %365
      %367 = vrot.lane.b32.xlu0 %v190, 92
      %v368 = vpop.permute.xlu0 %367
      %vm369 = vcmask 752640
      %v370 = vsel %vm369, %v330, %v332
      %v371 = vsel %vm369, %v332, %v334
      %v372 = vsel %vm369, %v334, %v336
      %v373 = vsel %vm369, %v336, %v338
      %v374 = vsel %vm369, %v338, %v340
      %v375 = vsel %vm369, %v340, %v342
      %v376 = vsel %vm369, %v342, %v344
      %v377 = vsel %vm369, %v344, %v346
      %v378 = vsel %vm369, %v346, %v348
      %v379 = vsel %vm369, %v350, %v352
      %v380 = vsel %vm369, %v352, %v354
      %v381 = vsel %vm369, %v354, %v356
      %v382 = vsel %vm369, %v356, %v358
      %v383 = vsel %vm369, %v358, %v360
      %v384 = vsel %vm369, %v360, %v362
      %v385 = vsel %vm369, %v362, %v364
      %v386 = vsel %vm369, %v364, %v366
      %v387 = vsel %vm369, %v366, %v368
      %388 = vrot.lane.b32.xlu0 %v171, 91
      %v389 = vpop.permute.xlu0 %388
      %390 = vrot.lane.b32.xlu0 %v172, 91
      %v391 = vpop.permute.xlu0 %390
      %392 = vrot.lane.b32.xlu0 %v173, 91
      %v393 = vpop.permute.xlu0 %392
      %394 = vrot.lane.b32.xlu0 %v174, 91
      %v395 = vpop.permute.xlu0 %394
      %396 = vrot.lane.b32.xlu0 %v175, 91
      %v397 = vpop.permute.xlu0 %396
      %398 = vrot.lane.b32.xlu0 %v176, 91
      %v399 = vpop.permute.xlu0 %398
      %400 = vrot.lane.b32.xlu0 %v177, 91
      %v401 = vpop.permute.xlu0 %400
      %402 = vrot.lane.b32.xlu0 %v178, 91
      %v403 = vpop.permute.xlu0 %402
      %404 = vrot.lane.b32.xlu0 %v179, 91
      %v405 = vpop.permute.xlu0 %404
      %406 = vrot.lane.b32.xlu0 %v180, 91
      %v407 = vpop.permute.xlu0 %406
      %408 = vrot.lane.b32.xlu0 %v181, 91
      %v409 = vpop.permute.xlu0 %408
      %410 = vrot.lane.b32.xlu0 %v182, 91
      %v411 = vpop.permute.xlu0 %410
      %412 = vrot.lane.b32.xlu0 %v183, 91
      %v413 = vpop.permute.xlu0 %412
      %414 = vrot.lane.b32.xlu0 %v184, 91
      %v415 = vpop.permute.xlu0 %414
      %416 = vrot.lane.b32.xlu0 %v185, 91
      %v417 = vpop.permute.xlu0 %416
      %418 = vrot.lane.b32.xlu0 %v186, 91
      %v419 = vpop.permute.xlu0 %418
      %420 = vrot.lane.b32.xlu0 %v187, 91
      %v421 = vpop.permute.xlu0 %420
      %422 = vrot.lane.b32.xlu0 %v188, 91
      %v423 = vpop.permute.xlu0 %422
      %424 = vrot.lane.b32.xlu0 %v189, 91
      %v425 = vpop.permute.xlu0 %424
      %426 = vrot.lane.b32.xlu0 %v190, 91
      %v427 = vpop.permute.xlu0 %426
      %vm428 = vcmask 744448
      %v429 = vsel %vm428, %v389, %v391
      %v430 = vsel %vm428, %v391, %v393
      %v431 = vsel %vm428, %v393, %v395
      %v432 = vsel %vm428, %v395, %v397
      %v433 = vsel %vm428, %v397, %v399
      %v434 = vsel %vm428, %v399, %v401
      %v435 = vsel %vm428, %v401, %v403
      %v436 = vsel %vm428, %v403, %v405
      %v437 = vsel %vm428, %v405, %v407
      %v438 = vsel %vm428, %v409, %v411
      %v439 = vsel %vm428, %v411, %v413
      %v440 = vsel %vm428, %v413, %v415
      %v441 = vsel %vm428, %v415, %v417
      %v442 = vsel %vm428, %v417, %v419
      %v443 = vsel %vm428, %v419, %v421
      %v444 = vsel %vm428, %v421, %v423
      %v445 = vsel %vm428, %v423, %v425
      %v446 = vsel %vm428, %v425, %v427
      %447 = vrot.lane.b32.xlu0 %v171, 90
      %v448 = vpop.permute.xlu0 %447
      %449 = vrot.lane.b32.xlu0 %v172, 90
      %v450 = vpop.permute.xlu0 %449
      %451 = vrot.lane.b32.xlu0 %v173, 90
      %v452 = vpop.permute.xlu0 %451
      %453 = vrot.lane.b32.xlu0 %v174, 90
      %v454 = vpop.permute.xlu0 %453
      %455 = vrot.lane.b32.xlu0 %v175, 90
      %v456 = vpop.permute.xlu0 %455
      %457 = vrot.lane.b32.xlu0 %v176, 90
      %v458 = vpop.permute.xlu0 %457
      %459 = vrot.lane.b32.xlu0 %v177, 90
      %v460 = vpop.permute.xlu0 %459
      %461 = vrot.lane.b32.xlu0 %v178, 90
      %v462 = vpop.permute.xlu0 %461
      %463 = vrot.lane.b32.xlu0 %v179, 90
      %v464 = vpop.permute.xlu0 %463
      %465 = vrot.lane.b32.xlu0 %v180, 90
      %v466 = vpop.permute.xlu0 %465
      %467 = vrot.lane.b32.xlu0 %v181, 90
      %v468 = vpop.permute.xlu0 %467
      %469 = vrot.lane.b32.xlu0 %v182, 90
      %v470 = vpop.permute.xlu0 %469
      %471 = vrot.lane.b32.xlu0 %v183, 90
      %v472 = vpop.permute.xlu0 %471
      %473 = vrot.lane.b32.xlu0 %v184, 90
      %v474 = vpop.permute.xlu0 %473
      %475 = vrot.lane.b32.xlu0 %v185, 90
      %v476 = vpop.permute.xlu0 %475
      %477 = vrot.lane.b32.xlu0 %v186, 90
      %v478 = vpop.permute.xlu0 %477
      %479 = vrot.lane.b32.xlu0 %v187, 90
      %v480 = vpop.permute.xlu0 %479
      %481 = vrot.lane.b32.xlu0 %v188, 90
      %v482 = vpop.permute.xlu0 %481
      %483 = vrot.lane.b32.xlu0 %v189, 90
      %v484 = vpop.permute.xlu0 %483
      %485 = vrot.lane.b32.xlu0 %v190, 90
      %v486 = vpop.permute.xlu0 %485
      %vm487 = vcmask 736256
      %v488 = vsel %vm487, %v448, %v450
      %v489 = vsel %vm487, %v450, %v452
      %v490 = vsel %vm487, %v452, %v454
      %v491 = vsel %vm487, %v454, %v456
      %v492 = vsel %vm487, %v456, %v458
      %v493 = vsel %vm487, %v458, %v460
      %v494 = vsel %vm487, %v460, %v462
      %v495 = vsel %vm487, %v462, %v464
      %v496 = vsel %vm487, %v464, %v466
      %v497 = vsel %vm487, %v468, %v470
      %v498 = vsel %vm487, %v470, %v472
      %v499 = vsel %vm487, %v472, %v474
      %v500 = vsel %vm487, %v474, %v476
      %v501 = vsel %vm487, %v476, %v478
      %v502 = vsel %vm487, %v478, %v480
      %v503 = vsel %vm487, %v480, %v482
      %v504 = vsel %vm487, %v482, %v484
      %v505 = vsel %vm487, %v484, %v486
      %506 = vrot.lane.b32.xlu0 %v171, 56
      %v507 = vpop.permute.xlu0 %506
      %508 = vrot.lane.b32.xlu0 %v172, 56
      %v509 = vpop.permute.xlu0 %508
      %510 = vrot.lane.b32.xlu0 %v173, 56
      %v511 = vpop.permute.xlu0 %510
      %512 = vrot.lane.b32.xlu0 %v174, 56
      %v513 = vpop.permute.xlu0 %512
      %514 = vrot.lane.b32.xlu0 %v175, 56
      %v515 = vpop.permute.xlu0 %514
      %516 = vrot.lane.b32.xlu0 %v176, 56
      %v517 = vpop.permute.xlu0 %516
      %518 = vrot.lane.b32.xlu0 %v177, 56
      %v519 = vpop.permute.xlu0 %518
      %520 = vrot.lane.b32.xlu0 %v178, 56
      %v521 = vpop.permute.xlu0 %520
      %522 = vrot.lane.b32.xlu0 %v179, 56
      %v523 = vpop.permute.xlu0 %522
      %524 = vrot.lane.b32.xlu0 %v180, 56
      %v525 = vpop.permute.xlu0 %524
      %526 = vrot.lane.b32.xlu0 %v181, 56
      %v527 = vpop.permute.xlu0 %526
      %528 = vrot.lane.b32.xlu0 %v182, 56
      %v529 = vpop.permute.xlu0 %528
      %530 = vrot.lane.b32.xlu0 %v183, 56
      %v531 = vpop.permute.xlu0 %530
      %532 = vrot.lane.b32.xlu0 %v184, 56
      %v533 = vpop.permute.xlu0 %532
      %534 = vrot.lane.b32.xlu0 %v185, 56
      %v535 = vpop.permute.xlu0 %534
      %536 = vrot.lane.b32.xlu0 %v186, 56
      %v537 = vpop.permute.xlu0 %536
      %538 = vrot.lane.b32.xlu0 %v187, 56
      %v539 = vpop.permute.xlu0 %538
      %540 = vrot.lane.b32.xlu0 %v188, 56
      %v541 = vpop.permute.xlu0 %540
      %542 = vrot.lane.b32.xlu0 %v189, 56
      %v543 = vpop.permute.xlu0 %542
      %544 = vrot.lane.b32.xlu0 %v190, 56
      %v545 = vpop.permute.xlu0 %544
      %vm546 = vcmask 457728
      %v547 = vsel %vm546, %v507, %v509
      %v548 = vsel %vm546, %v509, %v511
      %v549 = vsel %vm546, %v511, %v513
      %v550 = vsel %vm546, %v513, %v515
      %v551 = vsel %vm546, %v515, %v517
      %v552 = vsel %vm546, %v517, %v519
      %v553 = vsel %vm546, %v519, %v521
      %v554 = vsel %vm546, %v521, %v523
      %v555 = vsel %vm546, %v523, %v525
      %v556 = vsel %vm546, %v527, %v529
      %v557 = vsel %vm546, %v529, %v531
      %v558 = vsel %vm546, %v531, %v533
      %v559 = vsel %vm546, %v533, %v535
      %v560 = vsel %vm546, %v535, %v537
      %v561 = vsel %vm546, %v537, %v539
      %v562 = vsel %vm546, %v539, %v541
      %v563 = vsel %vm546, %v541, %v543
      %v564 = vsel %vm546, %v543, %v545
      %565 = vrot.lane.b32.xlu0 %v171, 55
      %v566 = vpop.permute.xlu0 %565
      %567 = vrot.lane.b32.xlu0 %v172, 55
      %v568 = vpop.permute.xlu0 %567
      %569 = vrot.lane.b32.xlu0 %v173, 55
      %v570 = vpop.permute.xlu0 %569
      %571 = vrot.lane.b32.xlu0 %v174, 55
      %v572 = vpop.permute.xlu0 %571
      %573 = vrot.lane.b32.xlu0 %v175, 55
      %v574 = vpop.permute.xlu0 %573
      %575 = vrot.lane.b32.xlu0 %v176, 55
      %v576 = vpop.permute.xlu0 %575
      %577 = vrot.lane.b32.xlu0 %v177, 55
      %v578 = vpop.permute.xlu0 %577
      %579 = vrot.lane.b32.xlu0 %v178, 55
      %v580 = vpop.permute.xlu0 %579
      %581 = vrot.lane.b32.xlu0 %v179, 55
      %v582 = vpop.permute.xlu0 %581
      %583 = vrot.lane.b32.xlu0 %v180, 55
      %v584 = vpop.permute.xlu0 %583
      %585 = vrot.lane.b32.xlu0 %v181, 55
      %v586 = vpop.permute.xlu0 %585
      %587 = vrot.lane.b32.xlu0 %v182, 55
      %v588 = vpop.permute.xlu0 %587
      %589 = vrot.lane.b32.xlu0 %v183, 55
      %v590 = vpop.permute.xlu0 %589
      %591 = vrot.lane.b32.xlu0 %v184, 55
      %v592 = vpop.permute.xlu0 %591
      %593 = vrot.lane.b32.xlu0 %v185, 55
      %v594 = vpop.permute.xlu0 %593
      %595 = vrot.lane.b32.xlu0 %v186, 55
      %v596 = vpop.permute.xlu0 %595
      %597 = vrot.lane.b32.xlu0 %v187, 55
      %v598 = vpop.permute.xlu0 %597
      %599 = vrot.lane.b32.xlu0 %v188, 55
      %v600 = vpop.permute.xlu0 %599
      %601 = vrot.lane.b32.xlu0 %v189, 55
      %v602 = vpop.permute.xlu0 %601
      %603 = vrot.lane.b32.xlu0 %v190, 55
      %v604 = vpop.permute.xlu0 %603
      %vm605 = vcmask 449536
      %v606 = vsel %vm605, %v566, %v568
      %v607 = vsel %vm605, %v568, %v570
      %v608 = vsel %vm605, %v570, %v572
      %v609 = vsel %vm605, %v572, %v574
      %v610 = vsel %vm605, %v574, %v576
      %v611 = vsel %vm605, %v576, %v578
      %v612 = vsel %vm605, %v578, %v580
      %v613 = vsel %vm605, %v580, %v582
      %v614 = vsel %vm605, %v582, %v584
      %v615 = vsel %vm605, %v586, %v588
      %v616 = vsel %vm605, %v588, %v590
      %v617 = vsel %vm605, %v590, %v592
      %v618 = vsel %vm605, %v592, %v594
      %v619 = vsel %vm605, %v594, %v596
      %v620 = vsel %vm605, %v596, %v598
      %v621 = vsel %vm605, %v598, %v600
      %v622 = vsel %vm605, %v600, %v602
      %v623 = vsel %vm605, %v602, %v604
      %624 = vrot.lane.b32.xlu0 %v171, 54
      %v625 = vpop.permute.xlu0 %624
      %626 = vrot.lane.b32.xlu0 %v172, 54
      %v627 = vpop.permute.xlu0 %626
      %628 = vrot.lane.b32.xlu0 %v173, 54
      %v629 = vpop.permute.xlu0 %628
      %630 = vrot.lane.b32.xlu0 %v174, 54
      %v631 = vpop.permute.xlu0 %630
      %632 = vrot.lane.b32.xlu0 %v175, 54
      %v633 = vpop.permute.xlu0 %632
      %634 = vrot.lane.b32.xlu0 %v176, 54
      %v635 = vpop.permute.xlu0 %634
      %636 = vrot.lane.b32.xlu0 %v177, 54
      %v637 = vpop.permute.xlu0 %636
      %638 = vrot.lane.b32.xlu0 %v178, 54
      %v639 = vpop.permute.xlu0 %638
      %640 = vrot.lane.b32.xlu0 %v179, 54
      %v641 = vpop.permute.xlu0 %640
      %642 = vrot.lane.b32.xlu0 %v180, 54
      %v643 = vpop.permute.xlu0 %642
      %644 = vrot.lane.b32.xlu0 %v181, 54
      %v645 = vpop.permute.xlu0 %644
      %646 = vrot.lane.b32.xlu0 %v182, 54
      %v647 = vpop.permute.xlu0 %646
      %648 = vrot.lane.b32.xlu0 %v183, 54
      %v649 = vpop.permute.xlu0 %648
      %650 = vrot.lane.b32.xlu0 %v184, 54
      %v651 = vpop.permute.xlu0 %650
      %652 = vrot.lane.b32.xlu0 %v185, 54
      %v653 = vpop.permute.xlu0 %652
      %654 = vrot.lane.b32.xlu0 %v186, 54
      %v655 = vpop.permute.xlu0 %654
      %656 = vrot.lane.b32.xlu0 %v187, 54
      %v657 = vpop.permute.xlu0 %656
      %658 = vrot.lane.b32.xlu0 %v188, 54
      %v659 = vpop.permute.xlu0 %658
      %660 = vrot.lane.b32.xlu0 %v189, 54
      %v661 = vpop.permute.xlu0 %660
      %662 = vrot.lane.b32.xlu0 %v190, 54
      %v663 = vpop.permute.xlu0 %662
      %vm664 = vcmask 441344
      %v665 = vsel %vm664, %v625, %v627
      %v666 = vsel %vm664, %v627, %v629
      %v667 = vsel %vm664, %v629, %v631
      %v668 = vsel %vm664, %v631, %v633
      %v669 = vsel %vm664, %v633, %v635
      %v670 = vsel %vm664, %v635, %v637
      %v671 = vsel %vm664, %v637, %v639
      %v672 = vsel %vm664, %v639, %v641
      %v673 = vsel %vm664, %v641, %v643
      %v674 = vsel %vm664, %v645, %v647
      %v675 = vsel %vm664, %v647, %v649
      %v676 = vsel %vm664, %v649, %v651
      %v677 = vsel %vm664, %v651, %v653
      %v678 = vsel %vm664, %v653, %v655
      %v679 = vsel %vm664, %v655, %v657
      %v680 = vsel %vm664, %v657, %v659
      %v681 = vsel %vm664, %v659, %v661
      %v682 = vsel %vm664, %v661, %v663
      %v683 = vld [vmem:[%s1] sm:$0xff]
      %v684 = vld [vmem:[%s1 + $0x8] sm:$0xff]
      %v685 = vld [vmem:[%s2] sm:$0xff]
      %687 = vset.pattern.permute.xlu0 0
      %688 = vperm.xlu0 %687, %v685
      %v689 = vpop.permute.xlu0 %688
      %691 = vrot.lane.b32.xlu0 %v171, 93
      %v692 = vpop.permute.xlu0 %691
      %693 = vrot.lane.b32.xlu0 %v172, 93
      %v694 = vpop.permute.xlu0 %693
      %695 = vrot.lane.b32.xlu0 %v173, 93
      %v696 = vpop.permute.xlu0 %695
      %697 = vrot.lane.b32.xlu0 %v174, 93
      %v698 = vpop.permute.xlu0 %697
      %699 = vrot.lane.b32.xlu0 %v175, 93
      %v700 = vpop.permute.xlu0 %699
      %701 = vrot.lane.b32.xlu0 %v176, 93
      %v702 = vpop.permute.xlu0 %701
      %703 = vrot.lane.b32.xlu0 %v177, 93
      %v704 = vpop.permute.xlu0 %703
      %705 = vrot.lane.b32.xlu0 %v178, 93
      %v706 = vpop.permute.xlu0 %705
      %707 = vrot.lane.b32.xlu0 %v179, 93
      %v708 = vpop.permute.xlu0 %707
      %709 = vrot.lane.b32.xlu0 %v180, 93
      %v710 = vpop.permute.xlu0 %709
      %711 = vrot.lane.b32.xlu0 %v181, 93
      %v712 = vpop.permute.xlu0 %711
      %713 = vrot.lane.b32.xlu0 %v182, 93
      %v714 = vpop.permute.xlu0 %713
      %715 = vrot.lane.b32.xlu0 %v183, 93
      %v716 = vpop.permute.xlu0 %715
      %717 = vrot.lane.b32.xlu0 %v184, 93
      %v718 = vpop.permute.xlu0 %717
      %719 = vrot.lane.b32.xlu0 %v185, 93
      %v720 = vpop.permute.xlu0 %719
      %721 = vrot.lane.b32.xlu0 %v186, 93
      %v722 = vpop.permute.xlu0 %721
      %723 = vrot.lane.b32.xlu0 %v187, 93
      %v724 = vpop.permute.xlu0 %723
      %725 = vrot.lane.b32.xlu0 %v188, 93
      %v726 = vpop.permute.xlu0 %725
      %727 = vrot.lane.b32.xlu0 %v189, 93
      %v728 = vpop.permute.xlu0 %727
      %729 = vrot.lane.b32.xlu0 %v190, 93
      %v730 = vpop.permute.xlu0 %729
      %731 = vrot.lane.b32.xlu0 %v252, 93
      %v732 = vpop.permute.xlu0 %731
      %733 = vrot.lane.b32.xlu0 %v253, 93
      %v734 = vpop.permute.xlu0 %733
      %735 = vrot.lane.b32.xlu0 %v254, 93
      %v736 = vpop.permute.xlu0 %735
      %737 = vrot.lane.b32.xlu0 %v255, 93
      %v738 = vpop.permute.xlu0 %737
      %739 = vrot.lane.b32.xlu0 %v256, 93
      %v740 = vpop.permute.xlu0 %739
      %741 = vrot.lane.b32.xlu0 %v257, 93
      %v742 = vpop.permute.xlu0 %741
      %743 = vrot.lane.b32.xlu0 %v258, 93
      %v744 = vpop.permute.xlu0 %743
      %745 = vrot.lane.b32.xlu0 %v259, 93
      %v746 = vpop.permute.xlu0 %745
      %747 = vrot.lane.b32.xlu0 %v260, 93
      %v748 = vpop.permute.xlu0 %747
      %749 = vrot.lane.b32.xlu0 %v230, 93
      %v750 = vpop.permute.xlu0 %749
      %751 = vrot.lane.b32.xlu0 %v261, 93
      %v752 = vpop.permute.xlu0 %751
      %753 = vrot.lane.b32.xlu0 %v262, 93
      %v754 = vpop.permute.xlu0 %753
      %755 = vrot.lane.b32.xlu0 %v263, 93
      %v756 = vpop.permute.xlu0 %755
      %757 = vrot.lane.b32.xlu0 %v264, 93
      %v758 = vpop.permute.xlu0 %757
      %759 = vrot.lane.b32.xlu0 %v265, 93
      %v760 = vpop.permute.xlu0 %759
      %761 = vrot.lane.b32.xlu0 %v266, 93
      %v762 = vpop.permute.xlu0 %761
      %763 = vrot.lane.b32.xlu0 %v267, 93
      %v764 = vpop.permute.xlu0 %763
      %765 = vrot.lane.b32.xlu0 %v268, 93
      %v766 = vpop.permute.xlu0 %765
      %767 = vrot.lane.b32.xlu0 %v269, 93
      %v768 = vpop.permute.xlu0 %767
      %769 = vrot.lane.b32.xlu0 %v250, 93
      %v770 = vpop.permute.xlu0 %769
      %771 = vrot.lane.b32.xlu0 %v311, 93
      %v772 = vpop.permute.xlu0 %771
      %773 = vrot.lane.b32.xlu0 %v312, 93
      %v774 = vpop.permute.xlu0 %773
      %775 = vrot.lane.b32.xlu0 %v313, 93
      %v776 = vpop.permute.xlu0 %775
      %777 = vrot.lane.b32.xlu0 %v314, 93
      %v778 = vpop.permute.xlu0 %777
      %779 = vrot.lane.b32.xlu0 %v315, 93
      %v780 = vpop.permute.xlu0 %779
      %781 = vrot.lane.b32.xlu0 %v316, 93
      %v782 = vpop.permute.xlu0 %781
      %783 = vrot.lane.b32.xlu0 %v317, 93
      %v784 = vpop.permute.xlu0 %783
      %785 = vrot.lane.b32.xlu0 %v318, 93
      %v786 = vpop.permute.xlu0 %785
      %787 = vrot.lane.b32.xlu0 %v319, 93
      %v788 = vpop.permute.xlu0 %787
      %789 = vrot.lane.b32.xlu0 %v289, 93
      %v790 = vpop.permute.xlu0 %789
      %791 = vrot.lane.b32.xlu0 %v320, 93
      %v792 = vpop.permute.xlu0 %791
      %793 = vrot.lane.b32.xlu0 %v321, 93
      %v794 = vpop.permute.xlu0 %793
      %795 = vrot.lane.b32.xlu0 %v322, 93
      %v796 = vpop.permute.xlu0 %795
      %797 = vrot.lane.b32.xlu0 %v323, 93
      %v798 = vpop.permute.xlu0 %797
      %799 = vrot.lane.b32.xlu0 %v324, 93
      %v800 = vpop.permute.xlu0 %799
      %801 = vrot.lane.b32.xlu0 %v325, 93
      %v802 = vpop.permute.xlu0 %801
      %803 = vrot.lane.b32.xlu0 %v326, 93
      %v804 = vpop.permute.xlu0 %803
      %805 = vrot.lane.b32.xlu0 %v327, 93
      %v806 = vpop.permute.xlu0 %805
      %807 = vrot.lane.b32.xlu0 %v328, 93
      %v808 = vpop.permute.xlu0 %807
      %809 = vrot.lane.b32.xlu0 %v309, 93
      %v810 = vpop.permute.xlu0 %809
      %811 = vrot.lane.b32.xlu0 %v370, 93
      %v812 = vpop.permute.xlu0 %811
      %813 = vrot.lane.b32.xlu0 %v371, 93
      %v814 = vpop.permute.xlu0 %813
      %815 = vrot.lane.b32.xlu0 %v372, 93
      %v816 = vpop.permute.xlu0 %815
      %817 = vrot.lane.b32.xlu0 %v373, 93
      %v818 = vpop.permute.xlu0 %817
      %819 = vrot.lane.b32.xlu0 %v374, 93
      %v820 = vpop.permute.xlu0 %819
      %821 = vrot.lane.b32.xlu0 %v375, 93
      %v822 = vpop.permute.xlu0 %821
      %823 = vrot.lane.b32.xlu0 %v376, 93
      %v824 = vpop.permute.xlu0 %823
      %825 = vrot.lane.b32.xlu0 %v377, 93
      %v826 = vpop.permute.xlu0 %825
      %827 = vrot.lane.b32.xlu0 %v378, 93
      %v828 = vpop.permute.xlu0 %827
      %829 = vrot.lane.b32.xlu0 %v348, 93
      %v830 = vpop.permute.xlu0 %829
      %831 = vrot.lane.b32.xlu0 %v379, 93
      %v832 = vpop.permute.xlu0 %831
      %833 = vrot.lane.b32.xlu0 %v380, 93
      %v834 = vpop.permute.xlu0 %833
      %835 = vrot.lane.b32.xlu0 %v381, 93
      %v836 = vpop.permute.xlu0 %835
      %837 = vrot.lane.b32.xlu0 %v382, 93
      %v838 = vpop.permute.xlu0 %837
      %839 = vrot.lane.b32.xlu0 %v383, 93
      %v840 = vpop.permute.xlu0 %839
      %841 = vrot.lane.b32.xlu0 %v384, 93
      %v842 = vpop.permute.xlu0 %841
      %843 = vrot.lane.b32.xlu0 %v385, 93
      %v844 = vpop.permute.xlu0 %843
      %845 = vrot.lane.b32.xlu0 %v386, 93
      %v846 = vpop.permute.xlu0 %845
      %847 = vrot.lane.b32.xlu0 %v387, 93
      %v848 = vpop.permute.xlu0 %847
      %849 = vrot.lane.b32.xlu0 %v368, 93
      %v850 = vpop.permute.xlu0 %849
      %851 = vrot.lane.b32.xlu0 %v429, 93
      %v852 = vpop.permute.xlu0 %851
      %853 = vrot.lane.b32.xlu0 %v430, 93
      %v854 = vpop.permute.xlu0 %853
      %855 = vrot.lane.b32.xlu0 %v431, 93
      %v856 = vpop.permute.xlu0 %855
      %857 = vrot.lane.b32.xlu0 %v432, 93
      %v858 = vpop.permute.xlu0 %857
      %859 = vrot.lane.b32.xlu0 %v433, 93
      %v860 = vpop.permute.xlu0 %859
      %861 = vrot.lane.b32.xlu0 %v434, 93
      %v862 = vpop.permute.xlu0 %861
      %863 = vrot.lane.b32.xlu0 %v435, 93
      %v864 = vpop.permute.xlu0 %863
      %865 = vrot.lane.b32.xlu0 %v436, 93
      %v866 = vpop.permute.xlu0 %865
      %867 = vrot.lane.b32.xlu0 %v437, 93
      %v868 = vpop.permute.xlu0 %867
      %869 = vrot.lane.b32.xlu0 %v407, 93
      %v870 = vpop.permute.xlu0 %869
      %871 = vrot.lane.b32.xlu0 %v438, 93
      %v872 = vpop.permute.xlu0 %871
      %873 = vrot.lane.b32.xlu0 %v439, 93
      %v874 = vpop.permute.xlu0 %873
      %875 = vrot.lane.b32.xlu0 %v440, 93
      %v876 = vpop.permute.xlu0 %875
      %877 = vrot.lane.b32.xlu0 %v441, 93
      %v878 = vpop.permute.xlu0 %877
      %879 = vrot.lane.b32.xlu0 %v442, 93
      %v880 = vpop.permute.xlu0 %879
      %881 = vrot.lane.b32.xlu0 %v443, 93
      %v882 = vpop.permute.xlu0 %881
      %883 = vrot.lane.b32.xlu0 %v444, 93
      %v884 = vpop.permute.xlu0 %883
      %885 = vrot.lane.b32.xlu0 %v445, 93
      %v886 = vpop.permute.xlu0 %885
      %887 = vrot.lane.b32.xlu0 %v446, 93
      %v888 = vpop.permute.xlu0 %887
      %889 = vrot.lane.b32.xlu0 %v427, 93
      %v890 = vpop.permute.xlu0 %889
      %891 = vrot.lane.b32.xlu0 %v488, 93
      %v892 = vpop.permute.xlu0 %891
      %893 = vrot.lane.b32.xlu0 %v489, 93
      %v894 = vpop.permute.xlu0 %893
      %895 = vrot.lane.b32.xlu0 %v490, 93
      %v896 = vpop.permute.xlu0 %895
      %897 = vrot.lane.b32.xlu0 %v491, 93
      %v898 = vpop.permute.xlu0 %897
      %899 = vrot.lane.b32.xlu0 %v492, 93
      %v900 = vpop.permute.xlu0 %899
      %901 = vrot.lane.b32.xlu0 %v493, 93
      %v902 = vpop.permute.xlu0 %901
      %903 = vrot.lane.b32.xlu0 %v494, 93
      %v904 = vpop.permute.xlu0 %903
      %905 = vrot.lane.b32.xlu0 %v495, 93
      %v906 = vpop.permute.xlu0 %905
      %907 = vrot.lane.b32.xlu0 %v496, 93
      %v908 = vpop.permute.xlu0 %907
      %909 = vrot.lane.b32.xlu0 %v466, 93
      %v910 = vpop.permute.xlu0 %909
      %911 = vrot.lane.b32.xlu0 %v497, 93
      %v912 = vpop.permute.xlu0 %911
      %913 = vrot.lane.b32.xlu0 %v498, 93
      %v914 = vpop.permute.xlu0 %913
      %915 = vrot.lane.b32.xlu0 %v499, 93
      %v916 = vpop.permute.xlu0 %915
      %917 = vrot.lane.b32.xlu0 %v500, 93
      %v918 = vpop.permute.xlu0 %917
      %919 = vrot.lane.b32.xlu0 %v501, 93
      %v920 = vpop.permute.xlu0 %919
      %921 = vrot.lane.b32.xlu0 %v502, 93
      %v922 = vpop.permute.xlu0 %921
      %923 = vrot.lane.b32.xlu0 %v503, 93
      %v924 = vpop.permute.xlu0 %923
      %925 = vrot.lane.b32.xlu0 %v504, 93
      %v926 = vpop.permute.xlu0 %925
      %927 = vrot.lane.b32.xlu0 %v505, 93
      %v928 = vpop.permute.xlu0 %927
      %929 = vrot.lane.b32.xlu0 %v486, 93
      %v930 = vpop.permute.xlu0 %929
      %931 = vrot.lane.b32.xlu0 %v547, 93
      %v932 = vpop.permute.xlu0 %931
      %933 = vrot.lane.b32.xlu0 %v548, 93
      %v934 = vpop.permute.xlu0 %933
      %935 = vrot.lane.b32.xlu0 %v549, 93
      %v936 = vpop.permute.xlu0 %935
      %937 = vrot.lane.b32.xlu0 %v550, 93
      %v938 = vpop.permute.xlu0 %937
      %939 = vrot.lane.b32.xlu0 %v551, 93
      %v940 = vpop.permute.xlu0 %939
      %941 = vrot.lane.b32.xlu0 %v552, 93
      %v942 = vpop.permute.xlu0 %941
      %943 = vrot.lane.b32.xlu0 %v553, 93
      %v944 = vpop.permute.xlu0 %943
      %945 = vrot.lane.b32.xlu0 %v554, 93
      %v946 = vpop.permute.xlu0 %945
      %947 = vrot.lane.b32.xlu0 %v555, 93
      %v948 = vpop.permute.xlu0 %947
      %949 = vrot.lane.b32.xlu0 %v525, 93
      %v950 = vpop.permute.xlu0 %949
      %951 = vrot.lane.b32.xlu0 %v556, 93
      %v952 = vpop.permute.xlu0 %951
      %953 = vrot.lane.b32.xlu0 %v557, 93
      %v954 = vpop.permute.xlu0 %953
      %955 = vrot.lane.b32.xlu0 %v558, 93
      %v956 = vpop.permute.xlu0 %955
      %957 = vrot.lane.b32.xlu0 %v559, 93
      %v958 = vpop.permute.xlu0 %957
      %959 = vrot.lane.b32.xlu0 %v560, 93
      %v960 = vpop.permute.xlu0 %959
      %961 = vrot.lane.b32.xlu0 %v561, 93
      %v962 = vpop.permute.xlu0 %961
      %963 = vrot.lane.b32.xlu0 %v562, 93
      %v964 = vpop.permute.xlu0 %963
      %965 = vrot.lane.b32.xlu0 %v563, 93
      %v966 = vpop.permute.xlu0 %965
      %967 = vrot.lane.b32.xlu0 %v564, 93
      %v968 = vpop.permute.xlu0 %967
      %969 = vrot.lane.b32.xlu0 %v545, 93
      %v970 = vpop.permute.xlu0 %969
      %971 = vrot.lane.b32.xlu0 %v606, 93
      %v972 = vpop.permute.xlu0 %971
      %973 = vrot.lane.b32.xlu0 %v607, 93
      %v974 = vpop.permute.xlu0 %973
      %975 = vrot.lane.b32.xlu0 %v608, 93
      %v976 = vpop.permute.xlu0 %975
      %977 = vrot.lane.b32.xlu0 %v609, 93
      %v978 = vpop.permute.xlu0 %977
      %979 = vrot.lane.b32.xlu0 %v610, 93
      %v980 = vpop.permute.xlu0 %979
      %981 = vrot.lane.b32.xlu0 %v611, 93
      %v982 = vpop.permute.xlu0 %981
      %983 = vrot.lane.b32.xlu0 %v612, 93
      %v984 = vpop.permute.xlu0 %983
      %985 = vrot.lane.b32.xlu0 %v613, 93
      %v986 = vpop.permute.xlu0 %985
      %987 = vrot.lane.b32.xlu0 %v614, 93
      %v988 = vpop.permute.xlu0 %987
      %989 = vrot.lane.b32.xlu0 %v584, 93
      %v990 = vpop.permute.xlu0 %989
      %991 = vrot.lane.b32.xlu0 %v615, 93
      %v992 = vpop.permute.xlu0 %991
      %993 = vrot.lane.b32.xlu0 %v616, 93
      %v994 = vpop.permute.xlu0 %993
      %995 = vrot.lane.b32.xlu0 %v617, 93
      %v996 = vpop.permute.xlu0 %995
      %997 = vrot.lane.b32.xlu0 %v618, 93
      %v998 = vpop.permute.xlu0 %997
      %999 = vrot.lane.b32.xlu0 %v619, 93
      %v1000 = vpop.permute.xlu0 %999
      %1001 = vrot.lane.b32.xlu0 %v620, 93
      %v1002 = vpop.permute.xlu0 %1001
      %1003 = vrot.lane.b32.xlu0 %v621, 93
      %v1004 = vpop.permute.xlu0 %1003
      %1005 = vrot.lane.b32.xlu0 %v622, 93
      %v1006 = vpop.permute.xlu0 %1005
      %1007 = vrot.lane.b32.xlu0 %v623, 93
      %v1008 = vpop.permute.xlu0 %1007
      %1009 = vrot.lane.b32.xlu0 %v604, 93
      %v1010 = vpop.permute.xlu0 %1009
      %1011 = vrot.lane.b32.xlu0 %v665, 93
      %v1012 = vpop.permute.xlu0 %1011
      %1013 = vrot.lane.b32.xlu0 %v666, 93
      %v1014 = vpop.permute.xlu0 %1013
      %1015 = vrot.lane.b32.xlu0 %v667, 93
      %v1016 = vpop.permute.xlu0 %1015
      %1017 = vrot.lane.b32.xlu0 %v668, 93
      %v1018 = vpop.permute.xlu0 %1017
      %1019 = vrot.lane.b32.xlu0 %v669, 93
      %v1020 = vpop.permute.xlu0 %1019
      %1021 = vrot.lane.b32.xlu0 %v670, 93
      %v1022 = vpop.permute.xlu0 %1021
      %1023 = vrot.lane.b32.xlu0 %v671, 93
      %v1024 = vpop.permute.xlu0 %1023
      %1025 = vrot.lane.b32.xlu0 %v672, 93
      %v1026 = vpop.permute.xlu0 %1025
      %1027 = vrot.lane.b32.xlu0 %v673, 93
      %v1028 = vpop.permute.xlu0 %1027
      %1029 = vrot.lane.b32.xlu0 %v643, 93
      %v1030 = vpop.permute.xlu0 %1029
      %1031 = vrot.lane.b32.xlu0 %v674, 93
      %v1032 = vpop.permute.xlu0 %1031
      %1033 = vrot.lane.b32.xlu0 %v675, 93
      %v1034 = vpop.permute.xlu0 %1033
      %1035 = vrot.lane.b32.xlu0 %v676, 93
      %v1036 = vpop.permute.xlu0 %1035
      %1037 = vrot.lane.b32.xlu0 %v677, 93
      %v1038 = vpop.permute.xlu0 %1037
      %1039 = vrot.lane.b32.xlu0 %v678, 93
      %v1040 = vpop.permute.xlu0 %1039
      %1041 = vrot.lane.b32.xlu0 %v679, 93
      %v1042 = vpop.permute.xlu0 %1041
      %1043 = vrot.lane.b32.xlu0 %v680, 93
      %v1044 = vpop.permute.xlu0 %1043
      %1045 = vrot.lane.b32.xlu0 %v681, 93
      %v1046 = vpop.permute.xlu0 %1045
      %1047 = vrot.lane.b32.xlu0 %v682, 93
      %v1048 = vpop.permute.xlu0 %1047
      %1049 = vrot.lane.b32.xlu0 %v663, 93
      %v1050 = vpop.permute.xlu0 %1049
      %vm1051 = vcmask 760832
      %v1052 = vsel %vm1051, %v692, %v694
      %v1053 = vsel %vm1051, %v694, %v696
      %v1054 = vsel %vm1051, %v696, %v698
      %v1055 = vsel %vm1051, %v698, %v700
      %v1056 = vsel %vm1051, %v700, %v702
      %v1057 = vsel %vm1051, %v702, %v704
      %v1058 = vsel %vm1051, %v704, %v706
      %v1059 = vsel %vm1051, %v706, %v708
      %v1060 = vsel %vm1051, %v708, %v710
      %v1061 = vsel %vm1051, %v712, %v714
      %v1062 = vsel %vm1051, %v714, %v716
      %v1063 = vsel %vm1051, %v716, %v718
      %v1064 = vsel %vm1051, %v718, %v720
      %v1065 = vsel %vm1051, %v720, %v722
      %v1066 = vsel %vm1051, %v722, %v724
      %v1067 = vsel %vm1051, %v724, %v726
      %v1068 = vsel %vm1051, %v726, %v728
      %v1069 = vsel %vm1051, %v728, %v730
      %v1070 = vsel %vm1051, %v732, %v734
      %v1071 = vsel %vm1051, %v734, %v736
      %v1072 = vsel %vm1051, %v736, %v738
      %v1073 = vsel %vm1051, %v738, %v740
      %v1074 = vsel %vm1051, %v740, %v742
      %v1075 = vsel %vm1051, %v742, %v744
      %v1076 = vsel %vm1051, %v744, %v746
      %v1077 = vsel %vm1051, %v746, %v748
      %v1078 = vsel %vm1051, %v748, %v750
      %v1079 = vsel %vm1051, %v752, %v754
      %v1080 = vsel %vm1051, %v754, %v756
      %v1081 = vsel %vm1051, %v756, %v758
      %v1082 = vsel %vm1051, %v758, %v760
      %v1083 = vsel %vm1051, %v760, %v762
      %v1084 = vsel %vm1051, %v762, %v764
      %v1085 = vsel %vm1051, %v764, %v766
      %v1086 = vsel %vm1051, %v766, %v768
      %v1087 = vsel %vm1051, %v768, %v770
      %v1088 = vsel %vm1051, %v772, %v774
      %v1089 = vsel %vm1051, %v774, %v776
      %v1090 = vsel %vm1051, %v776, %v778
      %v1091 = vsel %vm1051, %v778, %v780
      %v1092 = vsel %vm1051, %v780, %v782
      %v1093 = vsel %vm1051, %v782, %v784
      %v1094 = vsel %vm1051, %v784, %v786
      %v1095 = vsel %vm1051, %v786, %v788
      %v1096 = vsel %vm1051, %v788, %v790
      %v1097 = vsel %vm1051, %v792, %v794
      %v1098 = vsel %vm1051, %v794, %v796
      %v1099 = vsel %vm1051, %v796, %v798
      %v1100 = vsel %vm1051, %v798, %v800
      %v1101 = vsel %vm1051, %v800, %v802
      %v1102 = vsel %vm1051, %v802, %v804
      %v1103 = vsel %vm1051, %v804, %v806
      %v1104 = vsel %vm1051, %v806, %v808
      %v1105 = vsel %vm1051, %v808, %v810
      %v1106 = vsel %vm1051, %v812, %v814
      %v1107 = vsel %vm1051, %v814, %v816
      %v1108 = vsel %vm1051, %v816, %v818
      %v1109 = vsel %vm1051, %v818, %v820
      %v1110 = vsel %vm1051, %v820, %v822
      %v1111 = vsel %vm1051, %v822, %v824
      %v1112 = vsel %vm1051, %v824, %v826
      %v1113 = vsel %vm1051, %v826, %v828
      %v1114 = vsel %vm1051, %v828, %v830
      %v1115 = vsel %vm1051, %v832, %v834
      %v1116 = vsel %vm1051, %v834, %v836
      %v1117 = vsel %vm1051, %v836, %v838
      %v1118 = vsel %vm1051, %v838, %v840
      %v1119 = vsel %vm1051, %v840, %v842
      %v1120 = vsel %vm1051, %v842, %v844
      %v1121 = vsel %vm1051, %v844, %v846
      %v1122 = vsel %vm1051, %v846, %v848
      %v1123 = vsel %vm1051, %v848, %v850
      %v1124 = vsel %vm1051, %v852, %v854
      %v1125 = vsel %vm1051, %v854, %v856
      %v1126 = vsel %vm1051, %v856, %v858
      %v1127 = vsel %vm1051, %v858, %v860
      %v1128 = vsel %vm1051, %v860, %v862
      %v1129 = vsel %vm1051, %v862, %v864
      %v1130 = vsel %vm1051, %v864, %v866
      %v1131 = vsel %vm1051, %v866, %v868
      %v1132 = vsel %vm1051, %v868, %v870
      %v1133 = vsel %vm1051, %v872, %v874
      %v1134 = vsel %vm1051, %v874, %v876
      %v1135 = vsel %vm1051, %v876, %v878
      %v1136 = vsel %vm1051, %v878, %v880
      %v1137 = vsel %vm1051, %v880, %v882
      %v1138 = vsel %vm1051, %v882, %v884
      %v1139 = vsel %vm1051, %v884, %v886
      %v1140 = vsel %vm1051, %v886, %v888
      %v1141 = vsel %vm1051, %v888, %v890
      %v1142 = vsel %vm1051, %v892, %v894
      %v1143 = vsel %vm1051, %v894, %v896
      %v1144 = vsel %vm1051, %v896, %v898
      %v1145 = vsel %vm1051, %v898, %v900
      %v1146 = vsel %vm1051, %v900, %v902
      %v1147 = vsel %vm1051, %v902, %v904
      %v1148 = vsel %vm1051, %v904, %v906
      %v1149 = vsel %vm1051, %v906, %v908
      %v1150 = vsel %vm1051, %v908, %v910
      %v1151 = vsel %vm1051, %v912, %v914
      %v1152 = vsel %vm1051, %v914, %v916
      %v1153 = vsel %vm1051, %v916, %v918
      %v1154 = vsel %vm1051, %v918, %v920
      %v1155 = vsel %vm1051, %v920, %v922
      %v1156 = vsel %vm1051, %v922, %v924
      %v1157 = vsel %vm1051, %v924, %v926
      %v1158 = vsel %vm1051, %v926, %v928
      %v1159 = vsel %vm1051, %v928, %v930
      %v1160 = vsel %vm1051, %v932, %v934
      %v1161 = vsel %vm1051, %v934, %v936
      %v1162 = vsel %vm1051, %v936, %v938
      %v1163 = vsel %vm1051, %v938, %v940
      %v1164 = vsel %vm1051, %v940, %v942
      %v1165 = vsel %vm1051, %v942, %v944
      %v1166 = vsel %vm1051, %v944, %v946
      %v1167 = vsel %vm1051, %v946, %v948
      %v1168 = vsel %vm1051, %v948, %v950
      %v1169 = vsel %vm1051, %v952, %v954
      %v1170 = vsel %vm1051, %v954, %v956
      %v1171 = vsel %vm1051, %v956, %v958
      %v1172 = vsel %vm1051, %v958, %v960
      %v1173 = vsel %vm1051, %v960, %v962
      %v1174 = vsel %vm1051, %v962, %v964
      %v1175 = vsel %vm1051, %v964, %v966
      %v1176 = vsel %vm1051, %v966, %v968
      %v1177 = vsel %vm1051, %v968, %v970
      %v1178 = vsel %vm1051, %v972, %v974
      %v1179 = vsel %vm1051, %v974, %v976
      %v1180 = vsel %vm1051, %v976, %v978
      %v1181 = vsel %vm1051, %v978, %v980
      %v1182 = vsel %vm1051, %v980, %v982
      %v1183 = vsel %vm1051, %v982, %v984
      %v1184 = vsel %vm1051, %v984, %v986
      %v1185 = vsel %vm1051, %v986, %v988
      %v1186 = vsel %vm1051, %v988, %v990
      %v1187 = vsel %vm1051, %v992, %v994
      %v1188 = vsel %vm1051, %v994, %v996
      %v1189 = vsel %vm1051, %v996, %v998
      %v1190 = vsel %vm1051, %v998, %v1000
      %v1191 = vsel %vm1051, %v1000, %v1002
      %v1192 = vsel %vm1051, %v1002, %v1004
      %v1193 = vsel %vm1051, %v1004, %v1006
      %v1194 = vsel %vm1051, %v1006, %v1008
      %v1195 = vsel %vm1051, %v1008, %v1010
      %v1196 = vsel %vm1051, %v1012, %v1014
      %v1197 = vsel %vm1051, %v1014, %v1016
      %v1198 = vsel %vm1051, %v1016, %v1018
      %v1199 = vsel %vm1051, %v1018, %v1020
      %v1200 = vsel %vm1051, %v1020, %v1022
      %v1201 = vsel %vm1051, %v1022, %v1024
      %v1202 = vsel %vm1051, %v1024, %v1026
      %v1203 = vsel %vm1051, %v1026, %v1028
      %v1204 = vsel %vm1051, %v1028, %v1030
      %v1205 = vsel %vm1051, %v1032, %v1034
      %v1206 = vsel %vm1051, %v1034, %v1036
      %v1207 = vsel %vm1051, %v1036, %v1038
      %v1208 = vsel %vm1051, %v1038, %v1040
      %v1209 = vsel %vm1051, %v1040, %v1042
      %v1210 = vsel %vm1051, %v1042, %v1044
      %v1211 = vsel %vm1051, %v1044, %v1046
      %v1212 = vsel %vm1051, %v1046, %v1048
      %v1213 = vsel %vm1051, %v1048, %v1050
      %vm1376 = vcmask 130048
      %v1378 = vsel %vm1376, %v684, 0
      %1380 = vmatprep.subr.mxu0 %v1053
      %1381 = vmatpush1.msra.mxu0 %v1052
      %1382 = vmatprep.subr.mxu0 %v1062
      %1383 = vmatpush1.msra.mxu0 %v1061
      %1384 = vmatprep.subr.mxu0 %v1071
      %1385 = vmatpush1.msra.mxu0 %v1070
      %1386 = vmatprep.subr.mxu0 %v1080
      %1387 = vmatpush1.msra.mxu0 %v1079
      %1388 = vmatprep.subr.mxu0 %v1089
      %1389 = vmatpush1.msra.mxu0 %v1088
      %1390 = vmatprep.subr.mxu0 %v1098
      %1391 = vmatpush1.msra.mxu0 %v1097
      %1392 = vmatprep.subr.mxu0 %v1107
      %1393 = vmatpush1.msra.mxu0 %v1106
      %1394 = vmatprep.subr.mxu0 %v1116
      %1395 = vmatpush1.msra.mxu0 %v1115
      %1396 = vmatprep.subr.mxu0 %v1125
      %1397 = vmatpush1.msra.mxu0 %v1124
      %1398 = vmatprep.subr.mxu0 %v1134
      %1399 = vmatpush1.msra.mxu0 %v1133
      %1400 = vmatprep.subr.mxu0 %v1143
      %1401 = vmatpush1.msra.mxu0 %v1142
      %1402 = vmatprep.subr.mxu0 %v1152
      %1403 = vmatpush1.msra.mxu0 %v1151
      %1404 = vmatprep.subr.mxu0 %v1161
      %1405 = vmatpush1.msra.mxu0 %v1160
      %1406 = vmatprep.subr.mxu0 %v1170
      %1407 = vmatpush1.msra.mxu0 %v1169
      %1408 = vmatprep.subr.mxu0 %v1179
      %1409 = vmatpush1.msra.mxu0 %v1178
      %1410 = vmatprep.subr.mxu0 %v1188
      %1411 = vmatpush1.msra.mxu0 %v1187
      %1412 = vmatprep.subr.mxu0 %v1197
      %1413 = vmatpush1.msra.mxu0 %v1196
      %1414 = vmatprep.subr.mxu0 %v1206
      %1415 = vmatpush1.msra.mxu0 %v1205
      %1416 = vmatprep.subr.mxu0 0.0
      %1417 = vmatpush1.msra.mxu0 0.0
      %1418 = vmatprep.subr.mxu0 0.0
      %1419 = vmatpush1.msra.mxu0 0.0
      %1420 = vmatprep.subr.mxu0 0.0
      %1421 = vmatpush1.msra.mxu0 0.0
      %1422 = vmatprep.subr.mxu0 0.0
      %1423 = vmatpush1.msra.mxu0 0.0
      %1424 = vmatprep.subr.mxu0 0.0
      %1425 = vmatpush1.msra.mxu0 0.0
      %1426 = vmatprep.subr.mxu0 0.0
      %1427 = vmatpush1.msra.mxu0 0.0
      %1428 = vmatprep.subr.mxu0 0.0
      %1429 = vmatpush1.msra.mxu0 0.0
      %1430 = vmatprep.subr.mxu0 0.0
      %1431 = vmatpush1.msra.mxu0 0.0
      %1432 = vmatprep.subr.mxu0 0.0
      %1433 = vmatpush1.msra.mxu0 0.0
      %1434 = vmatprep.subr.mxu0 0.0
      %1435 = vmatpush1.msra.mxu0 0.0
      %1436 = vmatprep.subr.mxu0 0.0
      %1437 = vmatpush1.msra.mxu0 0.0
      %1438 = vmatprep.subr.mxu0 0.0
      %1439 = vmatpush1.msra.mxu0 0.0
      %1440 = vmatprep.subr.mxu0 0.0
      %1441 = vmatpush1.msra.mxu0 0.0
      %1442 = vmatprep.subr.mxu0 0.0
      %1443 = vmatpush1.msra.mxu0 0.0
      %1444 = vmatprep.mubr.f32.mxu0 %v1378
      %1445 = vmatmul.mubr.f32.gmra.mrb[0].mxu0 %v683
      %v1446 = vpop.f32.mrb[0].mxu0
      %v1447 = vadd.f32 %v689, %v1446
      %v1448 = vpop.f32.mrb[0].mxu0
      %v1449 = vadd.f32 %v689, %v1448
      %1450 = vdwg.mxu0
      %1451 = vmatprep.subr.mxu0 %v1055
      %1452 = vmatpush1.msra.mxu0 %v1054
      %1453 = vmatprep.subr.mxu0 %v1064
      %1454 = vmatpush1.msra.mxu0 %v1063
      %1455 = vmatprep.subr.mxu0 %v1073
      %1456 = vmatpush1.msra.mxu0 %v1072
      %1457 = vmatprep.subr.mxu0 %v1082
      %1458 = vmatpush1.msra.mxu0 %v1081
      %1459 = vmatprep.subr.mxu0 %v1091
      %1460 = vmatpush1.msra.mxu0 %v1090
      %1461 = vmatprep.subr.mxu0 %v1100
      %1462 = vmatpush1.msra.mxu0 %v1099
      %1463 = vmatprep.subr.mxu0 %v1109
      %1464 = vmatpush1.msra.mxu0 %v1108
      %1465 = vmatprep.subr.mxu0 %v1118
      %1466 = vmatpush1.msra.mxu0 %v1117
      %1467 = vmatprep.subr.mxu0 %v1127
      %1468 = vmatpush1.msra.mxu0 %v1126
      %1469 = vmatprep.subr.mxu0 %v1136
      %1470 = vmatpush1.msra.mxu0 %v1135
      %1471 = vmatprep.subr.mxu0 %v1145
      %1472 = vmatpush1.msra.mxu0 %v1144
      %1473 = vmatprep.subr.mxu0 %v1154
      %1474 = vmatpush1.msra.mxu0 %v1153
      %1475 = vmatprep.subr.mxu0 %v1163
      %1476 = vmatpush1.msra.mxu0 %v1162
      %1477 = vmatprep.subr.mxu0 %v1172
      %1478 = vmatpush1.msra.mxu0 %v1171
      %1479 = vmatprep.subr.mxu0 %v1181
      %1480 = vmatpush1.msra.mxu0 %v1180
      %1481 = vmatprep.subr.mxu0 %v1190
      %1482 = vmatpush1.msra.mxu0 %v1189
      %1483 = vmatprep.subr.mxu0 %v1199
      %1484 = vmatpush1.msra.mxu0 %v1198
      %1485 = vmatprep.subr.mxu0 %v1208
      %1486 = vmatpush1.msra.mxu0 %v1207
      %1487 = vmatprep.subr.mxu0 0.0
      %1488 = vmatpush1.msra.mxu0 0.0
      %1489 = vmatprep.subr.mxu0 0.0
      %1490 = vmatpush1.msra.mxu0 0.0
      %1491 = vmatprep.subr.mxu0 0.0
      %1492 = vmatpush1.msra.mxu0 0.0
      %1493 = vmatprep.subr.mxu0 0.0
      %1494 = vmatpush1.msra.mxu0 0.0
      %1495 = vmatprep.subr.mxu0 0.0
      %1496 = vmatpush1.msra.mxu0 0.0
      %1497 = vmatprep.subr.mxu0 0.0
      %1498 = vmatpush1.msra.mxu0 0.0
      %1499 = vmatprep.subr.mxu0 0.0
      %1500 = vmatpush1.msra.mxu0 0.0
      %1501 = vmatprep.subr.mxu0 0.0
      %1502 = vmatpush1.msra.mxu0 0.0
      %1503 = vmatprep.subr.mxu0 0.0
      %1504 = vmatpush1.msra.mxu0 0.0
      %1505 = vmatprep.subr.mxu0 0.0
      %1506 = vmatpush1.msra.mxu0 0.0
      %1507 = vmatprep.subr.mxu0 0.0
      %1508 = vmatpush1.msra.mxu0 0.0
      %1509 = vmatprep.subr.mxu0 0.0
      %1510 = vmatpush1.msra.mxu0 0.0
      %1511 = vmatprep.subr.mxu0 0.0
      %1512 = vmatpush1.msra.mxu0 0.0
      %1513 = vmatprep.subr.mxu0 0.0
      %1514 = vmatpush1.msra.mxu0 0.0
      %1515 = vmatprep.mubr.f32.mxu0 %v1378
      %1516 = vmatmul.mubr.f32.gmra.mrb[0].mxu0 %v683
      %v1517 = vpop.f32.mrb[0].mxu0
      %v1518 = vadd.f32 %v689, %v1517
      %v1519 = vpop.f32.mrb[0].mxu0
      %v1520 = vadd.f32 %v689, %v1519
      %1521 = vdwg.mxu0
      %1522 = vmatprep.subr.mxu0 %v1057
      %1523 = vmatpush1.msra.mxu0 %v1056
      %1524 = vmatprep.subr.mxu0 %v1066
      %1525 = vmatpush1.msra.mxu0 %v1065
      %1526 = vmatprep.subr.mxu0 %v1075
      %1527 = vmatpush1.msra.mxu0 %v1074
      %1528 = vmatprep.subr.mxu0 %v1084
      %1529 = vmatpush1.msra.mxu0 %v1083
      %1530 = vmatprep.subr.mxu0 %v1093
      %1531 = vmatpush1.msra.mxu0 %v1092
      %1532 = vmatprep.subr.mxu0 %v1102
      %1533 = vmatpush1.msra.mxu0 %v1101
      %1534 = vmatprep.subr.mxu0 %v1111
      %1535 = vmatpush1.msra.mxu0 %v1110
      %1536 = vmatprep.subr.mxu0 %v1120
      %1537 = vmatpush1.msra.mxu0 %v1119
      %1538 = vmatprep.subr.mxu0 %v1129
      %1539 = vmatpush1.msra.mxu0 %v1128
      %1540 = vmatprep.subr.mxu0 %v1138
      %1541 = vmatpush1.msra.mxu0 %v1137
      %1542 = vmatprep.subr.mxu0 %v1147
      %1543 = vmatpush1.msra.mxu0 %v1146
      %1544 = vmatprep.subr.mxu0 %v1156
      %1545 = vmatpush1.msra.mxu0 %v1155
      %1546 = vmatprep.subr.mxu0 %v1165
      %1547 = vmatpush1.msra.mxu0 %v1164
      %1548 = vmatprep.subr.mxu0 %v1174
      %1549 = vmatpush1.msra.mxu0 %v1173
      %1550 = vmatprep.subr.mxu0 %v1183
      %1551 = vmatpush1.msra.mxu0 %v1182
      %1552 = vmatprep.subr.mxu0 %v1192
      %1553 = vmatpush1.msra.mxu0 %v1191
      %1554 = vmatprep.subr.mxu0 %v1201
      %1555 = vmatpush1.msra.mxu0 %v1200
      %1556 = vmatprep.subr.mxu0 %v1210
      %1557 = vmatpush1.msra.mxu0 %v1209
      %1558 = vmatprep.subr.mxu0 0.0
      %1559 = vmatpush1.msra.mxu0 0.0
      %1560 = vmatprep.subr.mxu0 0.0
      %1561 = vmatpush1.msra.mxu0 0.0
      %1562 = vmatprep.subr.mxu0 0.0
      %1563 = vmatpush1.msra.mxu0 0.0
      %1564 = vmatprep.subr.mxu0 0.0
      %1565 = vmatpush1.msra.mxu0 0.0
      %1566 = vmatprep.subr.mxu0 0.0
      %1567 = vmatpush1.msra.mxu0 0.0
      %1568 = vmatprep.subr.mxu0 0.0
      %1569 = vmatpush1.msra.mxu0 0.0
      %1570 = vmatprep.subr.mxu0 0.0
      %1571 = vmatpush1.msra.mxu0 0.0
      %1572 = vmatprep.subr.mxu0 0.0
      %1573 = vmatpush1.msra.mxu0 0.0
      %1574 = vmatprep.subr.mxu0 0.0
      %1575 = vmatpush1.msra.mxu0 0.0
      %1576 = vmatprep.subr.mxu0 0.0
      %1577 = vmatpush1.msra.mxu0 0.0
      %1578 = vmatprep.subr.mxu0 0.0
      %1579 = vmatpush1.msra.mxu0 0.0
      %1580 = vmatprep.subr.mxu0 0.0
      %1581 = vmatpush1.msra.mxu0 0.0
      %1582 = vmatprep.subr.mxu0 0.0
      %1583 = vmatpush1.msra.mxu0 0.0
      %1584 = vmatprep.subr.mxu0 0.0
      %1585 = vmatpush1.msra.mxu0 0.0
      %1586 = vmatprep.mubr.f32.mxu0 %v1378
      %1587 = vmatmul.mubr.f32.gmra.mrb[0].mxu0 %v683
      %v1588 = vpop.f32.mrb[0].mxu0
      %v1589 = vadd.f32 %v689, %v1588
      %v1590 = vpop.f32.mrb[0].mxu0
      %v1591 = vadd.f32 %v689, %v1590
      %1592 = vdwg.mxu0
      %1593 = vmatprep.subr.mxu0 %v1059
      %1594 = vmatpush1.msra.mxu0 %v1058
      %1595 = vmatprep.subr.mxu0 %v1068
      %1596 = vmatpush1.msra.mxu0 %v1067
      %1597 = vmatprep.subr.mxu0 %v1077
      %1598 = vmatpush1.msra.mxu0 %v1076
      %1599 = vmatprep.subr.mxu0 %v1086
      %1600 = vmatpush1.msra.mxu0 %v1085
      %1601 = vmatprep.subr.mxu0 %v1095
      %1602 = vmatpush1.msra.mxu0 %v1094
      %1603 = vmatprep.subr.mxu0 %v1104
      %1604 = vmatpush1.msra.mxu0 %v1103
      %1605 = vmatprep.subr.mxu0 %v1113
      %1606 = vmatpush1.msra.mxu0 %v1112
      %1607 = vmatprep.subr.mxu0 %v1122
      %1608 = vmatpush1.msra.mxu0 %v1121
      %1609 = vmatprep.subr.mxu0 %v1131
      %1610 = vmatpush1.msra.mxu0 %v1130
      %1611 = vmatprep.subr.mxu0 %v1140
      %1612 = vmatpush1.msra.mxu0 %v1139
      %1613 = vmatprep.subr.mxu0 %v1149
      %1614 = vmatpush1.msra.mxu0 %v1148
      %1615 = vmatprep.subr.mxu0 %v1158
      %1616 = vmatpush1.msra.mxu0 %v1157
      %1617 = vmatprep.subr.mxu0 %v1167
      %1618 = vmatpush1.msra.mxu0 %v1166
      %1619 = vmatprep.subr.mxu0 %v1176
      %1620 = vmatpush1.msra.mxu0 %v1175
      %1621 = vmatprep.subr.mxu0 %v1185
      %1622 = vmatpush1.msra.mxu0 %v1184
      %1623 = vmatprep.subr.mxu0 %v1194
      %1624 = vmatpush1.msra.mxu0 %v1193
      %1625 = vmatprep.subr.mxu0 %v1203
      %1626 = vmatpush1.msra.mxu0 %v1202
      %1627 = vmatprep.subr.mxu0 %v1212
      %1628 = vmatpush1.msra.mxu0 %v1211
      %1629 = vmatprep.subr.mxu0 0.0
      %1630 = vmatpush1.msra.mxu0 0.0
      %1631 = vmatprep.subr.mxu0 0.0
      %1632 = vmatpush1.msra.mxu0 0.0
      %1633 = vmatprep.subr.mxu0 0.0
      %1634 = vmatpush1.msra.mxu0 0.0
      %1635 = vmatprep.subr.mxu0 0.0
      %1636 = vmatpush1.msra.mxu0 0.0
      %1637 = vmatprep.subr.mxu0 0.0
      %1638 = vmatpush1.msra.mxu0 0.0
      %1639 = vmatprep.subr.mxu0 0.0
      %1640 = vmatpush1.msra.mxu0 0.0
      %1641 = vmatprep.subr.mxu0 0.0
      %1642 = vmatpush1.msra.mxu0 0.0
      %1643 = vmatprep.subr.mxu0 0.0
      %1644 = vmatpush1.msra.mxu0 0.0
      %1645 = vmatprep.subr.mxu0 0.0
      %1646 = vmatpush1.msra.mxu0 0.0
      %1647 = vmatprep.subr.mxu0 0.0
      %1648 = vmatpush1.msra.mxu0 0.0
      %1649 = vmatprep.subr.mxu0 0.0
      %1650 = vmatpush1.msra.mxu0 0.0
      %1651 = vmatprep.subr.mxu0 0.0
      %1652 = vmatpush1.msra.mxu0 0.0
      %1653 = vmatprep.subr.mxu0 0.0
      %1654 = vmatpush1.msra.mxu0 0.0
      %1655 = vmatprep.subr.mxu0 0.0
      %1656 = vmatpush1.msra.mxu0 0.0
      %1657 = vmatprep.mubr.f32.mxu0 %v1378
      %1658 = vmatmul.mubr.f32.gmra.mrb[0].mxu0 %v683
      %v1659 = vpop.f32.mrb[0].mxu0
      %v1660 = vadd.f32 %v689, %v1659
      %v1661 = vpop.f32.mrb[0].mxu0
      %v1662 = vadd.f32 %v689, %v1661
      %1663 = vdwg.mxu0
      %1664 = vmatprep.subr.mxu0 0.0
      %1665 = vmatpush1.msra.mxu0 %v1060
      %1666 = vmatprep.subr.mxu0 0.0
      %1667 = vmatpush1.msra.mxu0 %v1069
      %1668 = vmatprep.subr.mxu0 0.0
      %1669 = vmatpush1.msra.mxu0 %v1078
      %1670 = vmatprep.subr.mxu0 0.0
      %1671 = vmatpush1.msra.mxu0 %v1087
      %1672 = vmatprep.subr.mxu0 0.0
      %1673 = vmatpush1.msra.mxu0 %v1096
      %1674 = vmatprep.subr.mxu0 0.0
      %1675 = vmatpush1.msra.mxu0 %v1105
      %1676 = vmatprep.subr.mxu0 0.0
      %1677 = vmatpush1.msra.mxu0 %v1114
      %1678 = vmatprep.subr.mxu0 0.0
      %1679 = vmatpush1.msra.mxu0 %v1123
      %1680 = vmatprep.subr.mxu0 0.0
      %1681 = vmatpush1.msra.mxu0 %v1132
      %1682 = vmatprep.subr.mxu0 0.0
      %1683 = vmatpush1.msra.mxu0 %v1141
      %1684 = vmatprep.subr.mxu0 0.0
      %1685 = vmatpush1.msra.mxu0 %v1150
      %1686 = vmatprep.subr.mxu0 0.0
      %1687 = vmatpush1.msra.mxu0 %v1159
      %1688 = vmatprep.subr.mxu0 0.0
      %1689 = vmatpush1.msra.mxu0 %v1168
      %1690 = vmatprep.subr.mxu0 0.0
      %1691 = vmatpush1.msra.mxu0 %v1177
      %1692 = vmatprep.subr.mxu0 0.0
      %1693 = vmatpush1.msra.mxu0 %v1186
      %1694 = vmatprep.subr.mxu0 0.0
      %1695 = vmatpush1.msra.mxu0 %v1195
      %1696 = vmatprep.subr.mxu0 0.0
      %1697 = vmatpush1.msra.mxu0 %v1204
      %1698 = vmatprep.subr.mxu0 0.0
      %1699 = vmatpush1.msra.mxu0 %v1213
      %1700 = vmatprep.subr.mxu0 0.0
      %1701 = vmatpush1.msra.mxu0 0.0
      %1702 = vmatprep.subr.mxu0 0.0
      %1703 = vmatpush1.msra.mxu0 0.0
      %1704 = vmatprep.subr.mxu0 0.0
      %1705 = vmatpush1.msra.mxu0 0.0
      %1706 = vmatprep.subr.mxu0 0.0
      %1707 = vmatpush1.msra.mxu0 0.0
      %1708 = vmatprep.subr.mxu0 0.0
      %1709 = vmatpush1.msra.mxu0 0.0
      %1710 = vmatprep.subr.mxu0 0.0
      %1711 = vmatpush1.msra.mxu0 0.0
      %1712 = vmatprep.subr.mxu0 0.0
      %1713 = vmatpush1.msra.mxu0 0.0
      %1714 = vmatprep.subr.mxu0 0.0
      %1715 = vmatpush1.msra.mxu0 0.0
      %1716 = vmatprep.subr.mxu0 0.0
      %1717 = vmatpush1.msra.mxu0 0.0
      %1718 = vmatprep.subr.mxu0 0.0
      %1719 = vmatpush1.msra.mxu0 0.0
      %1720 = vmatprep.subr.mxu0 0.0
      %1721 = vmatpush1.msra.mxu0 0.0
      %1722 = vmatprep.subr.mxu0 0.0
      %1723 = vmatpush1.msra.mxu0 0.0
      %1724 = vmatprep.subr.mxu0 0.0
      %1725 = vmatpush1.msra.mxu0 0.0
      %1726 = vmatprep.subr.mxu0 0.0
      %1727 = vmatpush1.msra.mxu0 0.0
      %1728 = vmatprep.mubr.f32.mxu0 %v1378
      %1729 = vmatmul.mubr.f32.gmra.mrb[0].mxu0 %v683
      %v1730 = vpop.f32.mrb[0].mxu0
      %v1731 = vadd.f32 %v689, %v1730
      %v1732 = vpop.f32.mrb[0].mxu0
      %1733 = vdwg.mxu0
      %v1734 = vmax.f32 %v1447, -1.0
      %v1735 = vmax.f32 %v1449, -1.0
      %v1736 = vmax.f32 %v1518, -1.0
      %v1737 = vmax.f32 %v1520, -1.0
      %v1738 = vmax.f32 %v1589, -1.0
      %v1739 = vmax.f32 %v1591, -1.0
      %v1740 = vmax.f32 %v1660, -1.0
      %v1741 = vmax.f32 %v1662, -1.0
      %v1742 = vmax.f32 %v1731, -1.0
      %v1743 = vmin.f32 %v1734, 1.0
      %v1744 = vmin.f32 %v1735, 1.0
      %v1745 = vmin.f32 %v1736, 1.0
      %v1746 = vmin.f32 %v1737, 1.0
      %v1747 = vmin.f32 %v1738, 1.0
      %v1748 = vmin.f32 %v1739, 1.0
      %v1749 = vmin.f32 %v1740, 1.0
      %v1750 = vmin.f32 %v1741, 1.0
      %v1751 = vmin.f32 %v1742, 1.0
      %1752 = vst [vmem:[%s170] sm:$0xff] %v1743
      %1753 = vst [vmem:[%s170 + $0x8] sm:$0xff] %v1744
      %1754 = vst [vmem:[%s170 + $0x10] sm:$0xff] %v1745
      %1755 = vst [vmem:[%s170 + $0x18] sm:$0xff] %v1746
      %1756 = vst [vmem:[%s170 + $0x20] sm:$0xff] %v1747
      %1757 = vst [vmem:[%s170 + $0x28] sm:$0xff] %v1748
      %1758 = vst [vmem:[%s170 + $0x30] sm:$0xff] %v1749
      %1759 = vst [vmem:[%s170 + $0x38] sm:$0xff] %v1750
      %1760 = vst [vmem:[%s170 + $0x40] sm:$0xff] %v1751
      %p1761 = scmp.lt.s32.totalorder %s14, 1
      %s1762 = scalar_select %p1761, %s14, 1
      %s1763 = smul.addr %s1762, 9
      %s1764 = smul.addr %s1763, 8
      %s1765 = scalar_lea.vmem %s3, %s1764
      // Predicated region
      $region33: #{_decode.7} parent=31 // pred_check
        %p1766 = pneg %p100
      $region34: #{_decode.7} parent=31 // pred_check_branch
        %1768 = sbr.rel (%p1766) target = $region36
      $region35: #{_decode.7} parent=31 // pred_region
        _
      $region36: #{_decode.7} parent=31 // pred_fallthru
        _
    $region32: #{_decode.7} parent=5 // pred_fallthru
      _
    %p1769 = scmp.le.s32.totalorder 2, %s9
    // Predicated region
    $region37: #{_decode.7} parent=5 // pred_check
      %p1770 = pneg %p1769
    $region38: #{_decode.7} parent=5 // pred_check_branch
      %1772 = sbr.rel (%p1770) target = $region40
    $region39: #{_decode.7} parent=5 // pred_region
      %s1773 = ssub.s32 %s9, 2
      // Predicated region
      $region41: #{_decode.7} parent=39 // pred_check
        %p1774 = pneg %p106
      $region42: #{_decode.7} parent=39 // pred_check_branch
        %1776 = sbr.rel (%p1774) target = $region44
      $region43: #{_decode.7} parent=39 // pred_region
        %p1777 = scmp.lt.s32.totalorder %s15, 1
        %s1778 = scalar_select %p1777, %s15, 1
        %s1779 = smul.addr %s1778, 9
        %s1780 = smul.addr %s1779, 8
        %s1781 = scalar_lea.vmem %s3, %s1780
      $region44: #{_decode.7} parent=39 // pred_fallthru
        _
    $region40: #{_decode.7} parent=5 // pred_fallthru
      _
  $region6: #{_decode.7} parent=0 // loop_footer
    %s13 = sadd.s32 1, %s9
  $region7: #{_decode.7} parent=0 // loop_footer_branch
    %8 = sbr.rel target = $region3
  $region8: #{_decode.7} parent=0 // loop_exit
    _

</llo_original>
